<compile_context>
chip_gen: v6e
topology: v6e:2x2x1
jax: 0.10.0
libtpu: 0.0.40
codegen_flags: <defaults>
</compile_context>

<pallas_src>
import functools
import numpy as np

import jax
import jax.numpy as jnp
from jax import lax
from jax.experimental import pallas as pl
from jax.experimental.pallas import tpu as pltpu


def _round_up(x, m):
    return (x + m - 1) // m * m


# ----------------------------------------------------------------------------
# Pallas kernels
# ----------------------------------------------------------------------------
def _ln_matmul_kernel(x_ref, g_ref, b_ref, w_ref, wb_ref, o_ref, *, act):
    """Fused LayerNorm -> Linear(+bias) -> optional exact GELU (bf16 MXU)."""
    x = x_ref[...].astype(jnp.float32)
    mu = jnp.mean(x, axis=-1, keepdims=True)
    xc = x - mu
    var = jnp.mean(xc * xc, axis=-1, keepdims=True)
    xn = xc * lax.rsqrt(var + 1e-5) * g_ref[...] + b_ref[...]
    y = jnp.dot(xn.astype(jnp.bfloat16), w_ref[...],
                preferred_element_type=jnp.float32) + wb_ref[...]
    if act == "gelu":
        y = 0.5 * y * (1.0 + lax.erf(y * 0.7071067811865476))
    o_ref[...] = y.astype(o_ref.dtype)


def _matmul_res_kernel(x_ref, w_ref, wb_ref, r_ref, o_ref):
    """Linear(+bias) fused with the residual add (bf16 MXU, f32 residual)."""
    y = jnp.dot(x_ref[...].astype(jnp.bfloat16), w_ref[...],
                preferred_element_type=jnp.float32)
    o_ref[...] = (y + wb_ref[...] + r_ref[...].astype(jnp.float32)).astype(o_ref.dtype)


def _window_attn_kernel(q_ref, k_ref, v_ref, idx_ref, mask_ref,
                        tq_ref, tk_ref, tv_ref, o_ref,
                        *, scale, heads, head_dim, n_axes):
    """One window per grid step, all heads in-kernel, lane-dense (T, C) output.

    cRSE is computed fully in VMEM: a summed one-hot G[T,T,L] is built from the
    int32 relative indices on the VPU; Pq/Pk/Pv = G @ table are MXU matmuls.
    """
    T = q_ref.shape[1]
    L = tq_ref.shape[0]

    # ---- summed one-hot relative-index tensor (bf16 MXU lhs) ----------------
    idx = idx_ref[0]                                            # (n_axes, T, T)
    l_iota = lax.broadcasted_iota(jnp.int32, (T, T, L), 2)
    g = jnp.zeros((T, T, L), jnp.float32)
    for ax in range(n_axes):
        g = g + (idx[ax][:, :, None] == l_iota).astype(jnp.float32)
    gm = g.astype(jnp.bfloat16).reshape(T * T, L)

    # ---- per-pair cRSE table rows for all heads at once: 3 MXU matmuls ------
    pq = jnp.dot(gm, tq_ref[...], preferred_element_type=jnp.float32)  # (T*T, C)
    pk = jnp.dot(gm, tk_ref[...], preferred_element_type=jnp.float32)
    pv = jnp.dot(gm, tv_ref[...], preferred_element_type=jnp.float32)

    q_all = q_ref[0]                                            # (T, C) bf16
    k_all = k_ref[0]
    v_all = v_ref[0]
    mask = mask_ref[0].astype(jnp.float32)                      # (1, T)

    outs = []
    for h in range(heads):
        sl = slice(h * head_dim, (h + 1) * head_dim)
        qh = q_all[:, sl].astype(jnp.float32) * scale           # (T, hd) f32
        kh = k_all[:, sl].astype(jnp.float32)
        qh_b = qh.astype(jnp.bfloat16)
        kh_b = kh.astype(jnp.bfloat16)
        vh_b = v_all[:, sl].astype(jnp.bfloat16)
        pqh = pq[:, sl].reshape(T, T, head_dim)
        pkh = pk[:, sl].reshape(T, T, head_dim)
        pvh = pv[:, sl].reshape(T, T, head_dim)

        # content logits on the MXU (bf16 in, f32 accumulate)
        logits = lax.dot_general(qh_b, kh_b, (((1,), (1,)), ((), ())),
                                 preferred_element_type=jnp.float32)   # (T, T)
        logits = logits + jnp.sum(qh[:, None, :] * pqh, axis=-1)       # q . t_q
        logits = logits + jnp.sum(kh[None, :, :] * pkh, axis=-1)       # k . t_k
        logits = logits + mask                                         # validity

        m = jnp.max(logits, axis=-1, keepdims=True)
        p = jnp.exp(logits - m)
        a = p * pl.reciprocal(jnp.sum(p, axis=-1, keepdims=True), approx=True)

        out_h = jnp.dot(a.astype(jnp.bfloat16), vh_b,
                        preferred_element_type=jnp.float32)            # (T, hd)
        out_h = out_h + jnp.sum(a[:, :, None] * pvh, axis=1)           # value cRSE
        outs.append(out_h)

    o_ref[0] = jnp.concatenate(outs, axis=-1).astype(o_ref.dtype)


# ----------------------------------------------------------------------------
# Pallas wrappers
# ----------------------------------------------------------------------------
def _row_tiling(n):
    tile = min(512, _round_up(n, 16))
    return tile, _round_up(n, tile)


def ln_linear(x, gamma, beta, w, wb, act=None, out_dtype=jnp.float32):
    n, cin = x.shape
    cout = w.shape[1]
    tile, n_pad = _row_tiling(n)
    if n_pad != n:
        x = jnp.pad(x, ((0, n_pad - n), (0, 0)))
    out = pl.pallas_call(
        functools.partial(_ln_matmul_kernel, act=act),
        out_shape=jax.ShapeDtypeStruct((n_pad, cout), out_dtype),
        grid=(n_pad // tile,),
        in_specs=[
            pl.BlockSpec((tile, cin), lambda i: (i, 0)),
            pl.BlockSpec((1, cin), lambda i: (0, 0)),
            pl.BlockSpec((1, cin), lambda i: (0, 0)),
            pl.BlockSpec((cin, cout), lambda i: (0, 0)),
            pl.BlockSpec((1, cout), lambda i: (0, 0)),
        ],
        out_specs=pl.BlockSpec((tile, cout), lambda i: (i, 0)),
        compiler_params=pltpu.CompilerParams(dimension_semantics=("parallel",)),
    )(x, gamma.reshape(1, cin), beta.reshape(1, cin),
      w.astype(jnp.bfloat16), wb.reshape(1, cout))
    return out[:n]


def linear_residual(x, w, wb, residual):
    n, cin = x.shape
    cout = w.shape[1]
    tile, n_pad = _row_tiling(n)
    if n_pad != n:
        x = jnp.pad(x, ((0, n_pad - n), (0, 0)))
        residual = jnp.pad(residual, ((0, n_pad - n), (0, 0)))
    out = pl.pallas_call(
        _matmul_res_kernel,
        out_shape=jax.ShapeDtypeStruct((n_pad, cout), jnp.float32),
        grid=(n_pad // tile,),
        in_specs=[
            pl.BlockSpec((tile, cin), lambda i: (i, 0)),
            pl.BlockSpec((cin, cout), lambda i: (0, 0)),
            pl.BlockSpec((1, cout), lambda i: (0, 0)),
            pl.BlockSpec((tile, cout), lambda i: (i, 0)),
        ],
        out_specs=pl.BlockSpec((tile, cout), lambda i: (i, 0)),
        compiler_params=pltpu.CompilerParams(dimension_semantics=("parallel",)),
    )(x, w.astype(jnp.bfloat16), wb.reshape(1, cout), residual)
    return out[:n]


def _attn_vmem_limit(T, C, L, n_axes):
    # double-buffered per-window blocks + resident tables + in-kernel temps
    blocks = 2 * (3 * T * C * 2 + n_axes * T * T * 4 + T * 4 + T * C * 2)
    blocks += 3 * L * C * 2
    temps = T * T * L * 2 + 3 * T * T * C * 4 + 8 * T * T * 4
    est = blocks + temps + (1 << 20)
    # keep <= 48 MiB so it also fits v7x's 64 MiB VMEM; >= 32 MiB otherwise.
    return int(min(max(est, 32 * 1024 * 1024), 48 * 1024 * 1024))


def window_attention(qw, kw, vw, idx, mask, tq, tk, tv, *, scale, heads, head_dim):
    W, T, C = qw.shape
    n_axes = idx.shape[1]
    L = tq.shape[0]
    kern = functools.partial(_window_attn_kernel, scale=scale, heads=heads,
                             head_dim=head_dim, n_axes=n_axes)
    blk_tok = pl.BlockSpec((1, T, C), lambda i: (i, 0, 0))
    in_specs = [
        blk_tok, blk_tok, blk_tok,
        pl.BlockSpec((1, n_axes, T, T), lambda i: (i, 0, 0, 0)),
        pl.BlockSpec((1, 1, T), lambda i: (i, 0, 0)),
        pl.BlockSpec((L, C), lambda i: (0, 0)),
        pl.BlockSpec((L, C), lambda i: (0, 0)),
        pl.BlockSpec((L, C), lambda i: (0, 0)),
    ]
    cost = pl.CostEstimate(
        flops=int(W * (6 * T * T * L * C + heads * 10 * T * T * head_dim
                       + n_axes * T * T * L)),
        transcendentals=int(W * heads * T * T),
        bytes_accessed=int(4 * W * T * C * 2 + W * n_axes * T * T * 4
                           + W * T * 4 + 3 * L * C * 2),
    )
    # NOTE: "parallel" shards the window axis across TensorCores on dual-TC
    # parts (v7x); pltpu.CORE_PARALLEL / pl.core_map is the explicit variant.
    out = pl.pallas_call(
        kern,
        out_shape=jax.ShapeDtypeStruct((W, T, C), jnp.bfloat16),
        grid=(W,),
        in_specs=in_specs,
        out_specs=blk_tok,
        compiler_params=pltpu.CompilerParams(
            dimension_semantics=("parallel",),
            vmem_limit_bytes=_attn_vmem_limit(T, C, L, n_axes)),
        cost_estimate=cost,
    )(qw, kw, vw, idx, mask,
      tq.astype(jnp.bfloat16), tk.astype(jnp.bfloat16), tv.astype(jnp.bfloat16))
    return out


# ----------------------------------------------------------------------------
# Host-side sparse window bookkeeping (once per window configuration).
# Replaces MinkowskiEngine pooling / sparse_self_attention index construction.
# ----------------------------------------------------------------------------
def build_window_args(coords, local_xyz, colors, window_size, shift, quant_size):
    n = coords.shape[0]
    c = coords + shift
    win_xyz = c // window_size
    w_w_xyz = c % window_size
    _, w_id = np.unique(win_xyz, axis=0, return_inverse=True)
    order = np.argsort(w_id, kind="stable")          # sorted position -> voxel
    w_id_sorted = w_id[order]
    num_w = int(w_id.max()) + 1
    w_sizes = np.bincount(w_id_sorted, minlength=num_w)
    t_pad = int(np.ceil(max(int(w_sizes.max()), 1) / 16) * 16)   # bf16 packing

    tok2sorted = np.zeros((num_w, t_pad), dtype=np.int64)
    valid = np.zeros((num_w, t_pad), dtype=bool)
    vox_win = np.zeros(n, dtype=np.int64)
    vox_slot = np.zeros(n, dtype=np.int64)
    starts = np.concatenate([[0], np.cumsum(w_sizes)[:-1]])
    for w in range(num_w):
        s, st = int(w_sizes[w]), int(starts[w])
        tok2sorted[w, :s] = np.arange(st, st + s)
        valid[w, :s] = True
        vox = order[st:st + s]
        vox_win[vox] = w
        vox_slot[vox] = np.arange(s)
    gather_idx = order[tok2sorted]                   # [W,T] -> original voxel

    # cRSE signals (XYZ_RGB) per sorted voxel -> per-window relative indices.
    color_quant = quant_size * 2
    l_xyz = window_size * quant_size
    l_rgb = 2 * color_quant
    n_xyz = (w_w_xyz[order].astype(np.float32) + local_xyz[order]) * quant_size
    n_rgb = colors[order] * color_quant
    n_crse = np.concatenate([n_xyz, n_rgb], axis=1)              # [N, 6]
    crse = n_crse[tok2sorted]                                    # [W, T, 6]
    delta = crse[:, :, None, :] - crse[:, None, :, :]            # [W, T, T, 6]
    ls = np.array([l_xyz] * 3 + [l_rgb] * 3, dtype=np.int64)
    idx = np.clip(np.floor(delta).astype(np.int64) + ls, 0, 2 * ls - 1)
    offs = np.concatenate([[0], np.cumsum(2 * ls)[:-1]])         # concat offsets
    idx_off = (idx + offs).astype(np.int32)                      # [W, T, T, 6]
    idx_off = np.ascontiguousarray(np.transpose(idx_off, (0, 3, 1, 2)))  # [W,6,T,T]

    mask = np.where(valid, 0.0, -1e9).astype(np.float32)
    return dict(
        gather_idx=jnp.asarray(gather_idx, jnp.int32),
        vox_win=jnp.asarray(vox_win, jnp.int32),
        vox_slot=jnp.asarray(vox_slot, jnp.int32),
        idx=jnp.asarray(idx_off),
        mask=jnp.asarray(mask).reshape(num_w, 1, t_pad),
    )


# ----------------------------------------------------------------------------
# Block forward (jitted device glue around the Pallas kernels)
# ----------------------------------------------------------------------------
def _block_forward(feats, p, args, *, heads, head_dim, scale):
    n, dim = feats.shape
    qkv = ln_linear(feats, p["norm1_g"], p["norm1_b"], p["qkv_w"], p["qkv_b"],
                    out_dtype=jnp.bfloat16)
    qkv = qkv.reshape(n, 3, dim)
    q, k, v = qkv[:, 0], qkv[:, 1], qkv[:, 2]         # [N, C] bf16

    gi = args["gather_idx"]                           # [W, T]
    # TODO(synk): fuse this gather / the final scatter into the attention DMA.
    qw, kw, vw = q[gi], k[gi], v[gi]                  # [W, T, C] bf16

    attn = window_attention(qw, kw, vw, args["idx"], args["mask"],
                            p["tables"]["q"], p["tables"]["k"], p["tables"]["v"],
                            scale=scale, heads=heads, head_dim=head_dim)
    upd = attn[args["vox_win"], args["vox_slot"]]     # [N, dim] back to voxels

    feats = linear_residual(upd, p["proj_w"], p["proj_b"], feats)   # shortcut+proj
    hid = ln_linear(feats, p["norm2_g"], p["norm2_b"],
                    p["fc1_w"], p["fc1_b"], act="gelu", out_dtype=jnp.bfloat16)
    return linear_residual(hid, p["fc2_w"], p["fc2_b"], feats)      # feats + mlp


block_forward = jax.jit(_block_forward,
                        static_argnames=("heads", "head_dim", "scale"))


def basic_layer_forward(feats, block_params, args_list, heads, head_dim, scale):
    x = feats
    for i, p in enumerate(block_params):
        # even blocks: plain windows, odd blocks: shifted windows
        x = block_forward(x, p, args_list[i % 2],
                          heads=heads, head_dim=head_dim, scale=scale)
    return x                                          # downsample=None -> identity


# ----------------------------------------------------------------------------
# Deterministic parameter init (shapes follow the PyTorch __init__)
# ----------------------------------------------------------------------------
def init_block_params(key, dim, heads, head_dim, hidden, window_size, quant_size):
    ks = jax.random.split(key, 10)

    def nrm(k, shape):
        return (0.02 * jax.random.normal(k, shape)).astype(jnp.float32)

    l_xyz = window_size * quant_size         # quant_grid_length_xyz
    l_rgb = 2 * (quant_size * 2)             # color_windowsize * color_quant_size

    def cat(t_xyz, t_rgb):                   # (3,2l,H,hd)x2 -> (L_total, H*hd)
        return jnp.concatenate([t_xyz.reshape(-1, heads * head_dim),
                                t_rgb.reshape(-1, heads * head_dim)], axis=0)

    q_xyz = nrm(ks[4], (3, 2 * l_xyz, heads, head_dim))
    k_xyz = nrm(ks[5], (3, 2 * l_xyz, heads, head_dim))
    v_xyz = nrm(ks[6], (3, 2 * l_xyz, heads, head_dim))
    q_rgb = nrm(ks[7], (3, 2 * l_rgb, heads, head_dim))
    k_rgb = nrm(ks[8], (3, 2 * l_rgb, heads, head_dim))
    v_rgb = nrm(ks[9], (3, 2 * l_rgb, heads, head_dim))
    return dict(
        norm1_g=jnp.ones((dim,), jnp.float32), norm1_b=jnp.zeros((dim,), jnp.float32),
        norm2_g=jnp.ones((dim,), jnp.float32), norm2_b=jnp.zeros((dim,), jnp.float32),
        qkv_w=nrm(ks[0], (dim, 3 * dim)), qkv_b=jnp.zeros((3 * dim,), jnp.float32),
        proj_w=nrm(ks[1], (dim, dim)), proj_b=jnp.zeros((dim,), jnp.float32),
        fc1_w=nrm(ks[2], (dim, hidden)), fc1_b=jnp.zeros((hidden,), jnp.float32),
        fc2_w=nrm(ks[3], (hidden, dim)), fc2_b=jnp.zeros((dim,), jnp.float32),
        tables=dict(q=cat(q_xyz, q_rgb), k=cat(k_xyz, k_rgb), v=cat(v_xyz, v_rgb)),
    )


# ----------------------------------------------------------------------------
if __name__ == "__main__":
    DIM, HEADS, DEPTH = 32, 2, 2
    HEAD_DIM = DIM // HEADS
    HIDDEN = int(DIM * 4.0)
    WINDOW_SIZE, QUANT = 4, 2
    N, GRID = 64, 8
    SCALE = HEAD_DIM ** (-0.5)

    key = jax.random.PRNGKey(0)
    kc, kf, kl, kcol, kp = jax.random.split(key, 5)

    cell = np.asarray(jax.random.permutation(kc, GRID ** 3)[:N])
    coords = np.stack(np.unravel_index(cell, (GRID, GRID, GRID)), axis=1).astype(np.int64)
    feats = jax.random.normal(kf, (N, DIM), dtype=jnp.float32)
    local_xyz = np.asarray(jax.random.uniform(kl, (N, 3), dtype=jnp.float32))
    colors = np.asarray(jax.random.uniform(kcol, (N, 3), dtype=jnp.float32))

    block_keys = jax.random.split(kp, DEPTH)
    blocks = [init_block_params(block_keys[i], DIM, HEADS, HEAD_DIM, HIDDEN,
                                WINDOW_SIZE, QUANT) for i in range(DEPTH)]

    # Window bookkeeping precomputed once per configuration (plain / shifted).
    args_plain = build_window_args(coords, local_xyz, colors, WINDOW_SIZE, 0, QUANT)
    args_shift = build_window_args(coords, local_xyz, colors, WINDOW_SIZE,
                                   WINDOW_SIZE // 2, QUANT)

    out = basic_layer_forward(feats, blocks, [args_plain, args_shift],
                              HEADS, HEAD_DIM, SCALE)
    out = jax.block_until_ready(out)
    assert out.shape == (N, DIM)
    assert bool(jnp.all(jnp.isfinite(out)))
    print("KERNEL_OK")
</pallas_src>

<mosaic_0001>
module attributes {stable_mosaic.version = 11 : i64} {
  func.func @_ln_matmul_kernel(%arg0: i32, %arg1: memref<64x32xf32, #tpu.memory_space<vmem>>, %arg2: memref<1x32xf32, #tpu.memory_space<vmem>>, %arg3: memref<1x32xf32, #tpu.memory_space<vmem>>, %arg4: memref<32x96xbf16, #tpu.memory_space<vmem>>, %arg5: memref<1x96xf32, #tpu.memory_space<vmem>>, %arg6: memref<64x96xbf16, #tpu.memory_space<vmem>>) attributes {dimension_semantics = [#tpu.dimension_semantics<parallel>], iteration_bounds = array<i64: 1>, scalar_prefetch = 0 : i64, scratch_operands = 0 : i64, tpu.core_type = #tpu.core_type<tc>, window_params = [{transform_indices = @transform_0, window_bounds = array<i64: 64, 32>}, {pipeline_mode = #tpu.pipeline_mode<synchronous>, transform_indices = @transform_1, window_bounds = array<i64: 1, 32>}, {pipeline_mode = #tpu.pipeline_mode<synchronous>, transform_indices = @transform_2, window_bounds = array<i64: 1, 32>}, {pipeline_mode = #tpu.pipeline_mode<synchronous>, transform_indices = @transform_3, window_bounds = array<i64: 32, 96>}, {pipeline_mode = #tpu.pipeline_mode<synchronous>, transform_indices = @transform_4, window_bounds = array<i64: 1, 96>}, {transform_indices = @transform_5, window_bounds = array<i64: 64, 96>}]} {
    %c0 = arith.constant 0 : index
    %c0_0 = arith.constant 0 : index
    %0 = vector.load %arg1[%c0, %c0_0] : memref<64x32xf32, #tpu.memory_space<vmem>>, vector<64x32xf32>
    %cst = arith.constant dense<0.000000e+00> : vector<64xf32>
    %1 = vector.multi_reduction <add>, %0, %cst [1] : vector<64x32xf32> to vector<64xf32>
    %2 = vector.shape_cast %1 : vector<64xf32> to vector<64x1xf32>
    %cst_1 = arith.constant 3.200000e+01 : f32
    %3 = vector.broadcast %cst_1 : f32 to vector<64x1xf32>
    %4 = arith.divf %2, %3 : vector<64x1xf32>
    %5 = vector.broadcast %4 : vector<64x1xf32> to vector<64x32xf32>
    %6 = arith.subf %0, %5 : vector<64x32xf32>
    %7 = arith.mulf %6, %6 : vector<64x32xf32>
    %cst_2 = arith.constant dense<0.000000e+00> : vector<64xf32>
    %8 = vector.multi_reduction <add>, %7, %cst_2 [1] : vector<64x32xf32> to vector<64xf32>
    %9 = vector.shape_cast %8 : vector<64xf32> to vector<64x1xf32>
    %cst_3 = arith.constant 3.200000e+01 : f32
    %10 = vector.broadcast %cst_3 : f32 to vector<64x1xf32>
    %11 = arith.divf %9, %10 : vector<64x1xf32>
    %cst_4 = arith.constant 9.99999974E-6 : f32
    %12 = vector.broadcast %cst_4 : f32 to vector<64x1xf32>
    %13 = arith.addf %11, %12 : vector<64x1xf32>
    %14 = math.rsqrt %13 : vector<64x1xf32>
    %15 = vector.broadcast %14 : vector<64x1xf32> to vector<64x32xf32>
    %16 = arith.mulf %6, %15 : vector<64x32xf32>
    %c0_5 = arith.constant 0 : index
    %c0_6 = arith.constant 0 : index
    %17 = vector.load %arg2[%c0_5, %c0_6] : memref<1x32xf32, #tpu.memory_space<vmem>>, vector<1x32xf32>
    %18 = vector.broadcast %17 : vector<1x32xf32> to vector<64x32xf32>
    %19 = arith.mulf %16, %18 : vector<64x32xf32>
    %c0_7 = arith.constant 0 : index
    %c0_8 = arith.constant 0 : index
    %20 = vector.load %arg3[%c0_7, %c0_8] : memref<1x32xf32, #tpu.memory_space<vmem>>, vector<1x32xf32>
    %21 = vector.broadcast %20 : vector<1x32xf32> to vector<64x32xf32>
    %22 = arith.addf %19, %21 : vector<64x32xf32>
    %23 = arith.truncf %22 : vector<64x32xf32> to vector<64x32xbf16>
    %c0_9 = arith.constant 0 : index
    %c0_10 = arith.constant 0 : index
    %24 = vector.load %arg4[%c0_9, %c0_10] : memref<32x96xbf16, #tpu.memory_space<vmem>>, vector<32x96xbf16>
    %cst_11 = arith.constant dense<0.000000e+00> : vector<64x96xf32>
    %25 = tpu.matmul %23, %24, %cst_11 {dimension_numbers = #tpu.dot_dimension_numbers<[1], [0], [0], [1], [0, 0, 1, 1], [], []>} : vector<64x32xbf16>, vector<32x96xbf16>, vector<64x96xf32> -> vector<64x96xf32>
    %c0_12 = arith.constant 0 : index
    %c0_13 = arith.constant 0 : index
    %26 = vector.load %arg5[%c0_12, %c0_13] : memref<1x96xf32, #tpu.memory_space<vmem>>, vector<1x96xf32>
    %27 = vector.broadcast %26 : vector<1x96xf32> to vector<64x96xf32>
    %28 = arith.addf %25, %27 : vector<64x96xf32>
    %29 = arith.truncf %28 : vector<64x96xf32> to vector<64x96xbf16>
    %c0_14 = arith.constant 0 : index
    %c0_15 = arith.constant 0 : index
    %30 = vector.load %arg6[%c0_14, %c0_15] : memref<64x96xbf16, #tpu.memory_space<vmem>>, vector<64x96xbf16>
    tpu.vector_store %arg6[%c0_14, %c0_15], %29 {strides = array<i32>} : memref<64x96xbf16, #tpu.memory_space<vmem>>, vector<64x96xbf16>,
    return
  }
  func.func @transform_0(%arg0: i32) -> (i32, i32) {
    %c0_i32 = arith.constant 0 : i32
    %c0_i32_0 = arith.constant 0 : i32
    return %arg0, %c0_i32 : i32, i32
  }
  func.func @transform_1(%arg0: i32) -> (i32, i32) {
    %c0_i32 = arith.constant 0 : i32
    %c0_i32_0 = arith.constant 0 : i32
    %c0_i32_1 = arith.constant 0 : i32
    return %c0_i32, %c0_i32_0 : i32, i32
  }
  func.func @transform_2(%arg0: i32) -> (i32, i32) {
    %c0_i32 = arith.constant 0 : i32
    %c0_i32_0 = arith.constant 0 : i32
    %c0_i32_1 = arith.constant 0 : i32
    return %c0_i32, %c0_i32_0 : i32, i32
  }
  func.func @transform_3(%arg0: i32) -> (i32, i32) {
    %c0_i32 = arith.constant 0 : i32
    %c0_i32_0 = arith.constant 0 : i32
    %c0_i32_1 = arith.constant 0 : i32
    return %c0_i32, %c0_i32_0 : i32, i32
  }
  func.func @transform_4(%arg0: i32) -> (i32, i32) {
    %c0_i32 = arith.constant 0 : i32
    %c0_i32_0 = arith.constant 0 : i32
    %c0_i32_1 = arith.constant 0 : i32
    return %c0_i32, %c0_i32_0 : i32, i32
  }
  func.func @transform_5(%arg0: i32) -> (i32, i32) {
    %c0_i32 = arith.constant 0 : i32
    %c0_i32_0 = arith.constant 0 : i32
    return %arg0, %c0_i32 : i32, i32
  }
}

module attributes {stable_mosaic.version = 11 : i64} {
  func.func @_window_attn_kernel(%arg0: i32, %arg1: memref<1x16x32xbf16, #tpu.memory_space<vmem>>, %arg2: memref<1x16x32xbf16, #tpu.memory_space<vmem>>, %arg3: memref<1x16x32xbf16, #tpu.memory_space<vmem>>, %arg4: memref<1x6x16x16xi32, #tpu.memory_space<vmem>>, %arg5: memref<1x1x16xf32, #tpu.memory_space<vmem>>, %arg6: memref<96x32xbf16, #tpu.memory_space<vmem>>, %arg7: memref<96x32xbf16, #tpu.memory_space<vmem>>, %arg8: memref<96x32xbf16, #tpu.memory_space<vmem>>, %arg9: memref<1x16x32xbf16, #tpu.memory_space<vmem>>) attributes {dimension_semantics = [#tpu.dimension_semantics<parallel>], iteration_bounds = array<i64: 8>, scalar_prefetch = 0 : i64, scratch_operands = 0 : i64, tpu.core_type = #tpu.core_type<tc>, window_params = [{transform_indices = @transform_0, window_bounds = array<i64: 1, 16, 32>}, {transform_indices = @transform_1, window_bounds = array<i64: 1, 16, 32>}, {transform_indices = @transform_2, window_bounds = array<i64: 1, 16, 32>}, {transform_indices = @transform_3, window_bounds = array<i64: 1, 6, 16, 16>}, {transform_indices = @transform_4, window_bounds = array<i64: 1, 1, 16>}, {pipeline_mode = #tpu.pipeline_mode<synchronous>, transform_indices = @transform_5, window_bounds = array<i64: 96, 32>}, {pipeline_mode = #tpu.pipeline_mode<synchronous>, transform_indices = @transform_6, window_bounds = array<i64: 96, 32>}, {pipeline_mode = #tpu.pipeline_mode<synchronous>, transform_indices = @transform_7, window_bounds = array<i64: 96, 32>}, {transform_indices = @transform_8, window_bounds = array<i64: 1, 16, 32>}]} {
    %c0 = arith.constant 0 : index
    %c0_0 = arith.constant 0 : index
    %c0_1 = arith.constant 0 : index
    %c0_2 = arith.constant 0 : index
    %0 = vector.load %arg4[%c0, %c0_0, %c0_1, %c0_2] : memref<1x6x16x16xi32, #tpu.memory_space<vmem>>, vector<1x6x16x16xi32>
    %1 = vector.shape_cast %0 : vector<1x6x16x16xi32> to vector<6x16x16xi32>
    %2 = tpu.iota {dimensions = array<i32: 2>} : vector<16x16x96xi32>
    %cst = arith.constant 0.000000e+00 : f32
    %3 = vector.broadcast %cst : f32 to vector<16x16x96xf32>
    %4 = vector.extract_strided_slice %1 {offsets = [0, 0, 0], sizes = [1, 16, 16], strides = [1, 1, 1]} : vector<6x16x16xi32> to vector<1x16x16xi32>
    %5 = vector.shape_cast %4 : vector<1x16x16xi32> to vector<16x16xi32>
    %6 = vector.shape_cast %5 : vector<16x16xi32> to vector<16x16x1xi32>
    %7 = vector.broadcast %6 : vector<16x16x1xi32> to vector<16x16x96xi32>
    %8 = arith.cmpi eq, %7, %2 : vector<16x16x96xi32>
    %9 = arith.extui %8 : vector<16x16x96xi1> to vector<16x16x96xi32>
    %10 = arith.sitofp %9 : vector<16x16x96xi32> to vector<16x16x96xf32>
    %11 = arith.addf %3, %10 : vector<16x16x96xf32>
    %12 = vector.extract_strided_slice %1 {offsets = [1, 0, 0], sizes = [1, 16, 16], strides = [1, 1, 1]} : vector<6x16x16xi32> to vector<1x16x16xi32>
    %13 = vector.shape_cast %12 : vector<1x16x16xi32> to vector<16x16xi32>
    %14 = vector.shape_cast %13 : vector<16x16xi32> to vector<16x16x1xi32>
    %15 = vector.broadcast %14 : vector<16x16x1xi32> to vector<16x16x96xi32>
    %16 = arith.cmpi eq, %15, %2 : vector<16x16x96xi32>
    %17 = arith.extui %16 : vector<16x16x96xi1> to vector<16x16x96xi32>
    %18 = arith.sitofp %17 : vector<16x16x96xi32> to vector<16x16x96xf32>
    %19 = arith.addf %11, %18 : vector<16x16x96xf32>
    %20 = vector.extract_strided_slice %1 {offsets = [2, 0, 0], sizes = [1, 16, 16], strides = [1, 1, 1]} : vector<6x16x16xi32> to vector<1x16x16xi32>
    %21 = vector.shape_cast %20 : vector<1x16x16xi32> to vector<16x16xi32>
    %22 = vector.shape_cast %21 : vector<16x16xi32> to vector<16x16x1xi32>
    %23 = vector.broadcast %22 : vector<16x16x1xi32> to vector<16x16x96xi32>
    %24 = arith.cmpi eq, %23, %2 : vector<16x16x96xi32>
    %25 = arith.extui %24 : vector<16x16x96xi1> to vector<16x16x96xi32>
    %26 = arith.sitofp %25 : vector<16x16x96xi32> to vector<16x16x96xf32>
    %27 = arith.addf %19, %26 : vector<16x16x96xf32>
    %28 = vector.extract_strided_slice %1 {offsets = [3, 0, 0], sizes = [1, 16, 16], strides = [1, 1, 1]} : vector<6x16x16xi32> to vector<1x16x16xi32>
    %29 = vector.shape_cast %28 : vector<1x16x16xi32> to vector<16x16xi32>
    %30 = vector.shape_cast %29 : vector<16x16xi32> to vector<16x16x1xi32>
    %31 = vector.broadcast %30 : vector<16x16x1xi32> to vector<16x16x96xi32>
    %32 = arith.cmpi eq, %31, %2 : vector<16x16x96xi32>
    %33 = arith.extui %32 : vector<16x16x96xi1> to vector<16x16x96xi32>
    %34 = arith.sitofp %33 : vector<16x16x96xi32> to vector<16x16x96xf32>
    %35 = arith.addf %27, %34 : vector<16x16x96xf32>
    %36 = vector.extract_strided_slice %1 {offsets = [4, 0, 0], sizes = [1, 16, 16], strides = [1, 1, 1]} : vector<6x16x16xi32> to vector<1x16x16xi32>
    %37 = vector.shape_cast %36 : vector<1x16x16xi32> to vector<16x16xi32>
    %38 = vector.shape_cast %37 : vector<16x16xi32> to vector<16x16x1xi32>
    %39 = vector.broadcast %38 : vector<16x16x1xi32> to vector<16x16x96xi32>
    %40 = arith.cmpi eq, %39, %2 : vector<16x16x96xi32>
    %41 = arith.extui %40 : vector<16x16x96xi1> to vector<16x16x96xi32>
    %42 = arith.sitofp %41 : vector<16x16x96xi32> to vector<16x16x96xf32>
    %43 = arith.addf %35, %42 : vector<16x16x96xf32>
    %44 = vector.extract_strided_slice %1 {offsets = [5, 0, 0], sizes = [1, 16, 16], strides = [1, 1, 1]} : vector<6x16x16xi32> to vector<1x16x16xi32>
    %45 = vector.shape_cast %44 : vector<1x16x16xi32> to vector<16x16xi32>
    %46 = vector.shape_cast %45 : vector<16x16xi32> to vector<16x16x1xi32>
    %47 = vector.broadcast %46 : vector<16x16x1xi32> to vector<16x16x96xi32>
    %48 = arith.cmpi eq, %47, %2 : vector<16x16x96xi32>
    %49 = arith.extui %48 : vector<16x16x96xi1> to vector<16x16x96xi32>
    %50 = arith.sitofp %49 : vector<16x16x96xi32> to vector<16x16x96xf32>
    %51 = arith.addf %43, %50 : vector<16x16x96xf32>
    %52 = arith.truncf %51 : vector<16x16x96xf32> to vector<16x16x96xbf16>
    %53 = vector.shape_cast %52 : vector<16x16x96xbf16> to vector<256x96xbf16>
    %c0_3 = arith.constant 0 : index
    %c0_4 = arith.constant 0 : index
    %54 = vector.load %arg6[%c0_3, %c0_4] : memref<96x32xbf16, #tpu.memory_space<vmem>>, vector<96x32xbf16>
    %cst_5 = arith.constant dense<0.000000e+00> : vector<256x32xf32>
    %55 = tpu.matmul %53, %54, %cst_5 {dimension_numbers = #tpu.dot_dimension_numbers<[1], [0], [0], [1], [0, 0, 1, 1], [], []>} : vector<256x96xbf16>, vector<96x32xbf16>, vector<256x32xf32> -> vector<256x32xf32>
    %c0_6 = arith.constant 0 : index
    %c0_7 = arith.constant 0 : index
    %56 = vector.load %arg7[%c0_6, %c0_7] : memref<96x32xbf16, #tpu.memory_space<vmem>>, vector<96x32xbf16>
    %cst_8 = arith.constant dense<0.000000e+00> : vector<256x32xf32>
    %57 = tpu.matmul %53, %56, %cst_8 {dimension_numbers = #tpu.dot_dimension_numbers<[1], [0], [0], [1], [0, 0, 1, 1], [], []>} : vector<256x96xbf16>, vector<96x32xbf16>, vector<256x32xf32> -> vector<256x32xf32>
    %c0_9 = arith.constant 0 : index
    %c0_10 = arith.constant 0 : index
    %58 = vector.load %arg8[%c0_9, %c0_10] : memref<96x32xbf16, #tpu.memory_space<vmem>>, vector<96x32xbf16>
    %cst_11 = arith.constant dense<0.000000e+00> : vector<256x32xf32>
    %59 = tpu.matmul %53, %58, %cst_11 {dimension_numbers = #tpu.dot_dimension_numbers<[1], [0], [0], [1], [0, 0, 1, 1], [], []>} : vector<256x96xbf16>, vector<96x32xbf16>, vector<256x32xf32> -> vector<256x32xf32>
    %c0_12 = arith.constant 0 : index
    %c0_13 = arith.constant 0 : index
    %c0_14 = arith.constant 0 : index
    %60 = vector.load %arg1[%c0_12, %c0_13, %c0_14] : memref<1x16x32xbf16, #tpu.memory_space<vmem>>, vector<1x16x32xbf16>
    %61 = vector.shape_cast %60 : vector<1x16x32xbf16> to vector<16x32xbf16>
    %c0_15 = arith.constant 0 : index
    %c0_16 = arith.constant 0 : index
    %c0_17 = arith.constant 0 : index
    %62 = vector.load %arg2[%c0_15, %c0_16, %c0_17] : memref<1x16x32xbf16, #tpu.memory_space<vmem>>, vector<1x16x32xbf16>
    %63 = vector.shape_cast %62 : vector<1x16x32xbf16> to vector<16x32xbf16>
    %c0_18 = arith.constant 0 : index
    %c0_19 = arith.constant 0 : index
    %c0_20 = arith.constant 0 : index
    %64 = vector.load %arg3[%c0_18, %c0_19, %c0_20] : memref<1x16x32xbf16, #tpu.memory_space<vmem>>, vector<1x16x32xbf16>
    %65 = vector.shape_cast %64 : vector<1x16x32xbf16> to vector<16x32xbf16>
    %c0_21 = arith.constant 0 : index
    %c0_22 = arith.constant 0 : index
    %c0_23 = arith.constant 0 : index
    %66 = vector.load %arg5[%c0_21, %c0_22, %c0_23] : memref<1x1x16xf32, #tpu.memory_space<vmem>>, vector<1x1x16xf32>
    %67 = vector.shape_cast %66 : vector<1x1x16xf32> to vector<1x16xf32>
    %68 = vector.extract_strided_slice %61 {offsets = [0, 0], sizes = [16, 16], strides = [1, 1]} : vector<16x32xbf16> to vector<16x16xbf16>
    %69 = arith.extf %68 : vector<16x16xbf16> to vector<16x16xf32>
    %cst_24 = arith.constant 2.500000e-01 : f32
    %70 = vector.broadcast %cst_24 : f32 to vector<16x16xf32>
    %71 = arith.mulf %69, %70 : vector<16x16xf32>
    %72 = vector.extract_strided_slice %63 {offsets = [0, 0], sizes = [16, 16], strides = [1, 1]} : vector<16x32xbf16> to vector<16x16xbf16>
    %73 = arith.extf %72 : vector<16x16xbf16> to vector<16x16xf32>
    %74 = arith.truncf %71 : vector<16x16xf32> to vector<16x16xbf16>
    %75 = arith.truncf %73 : vector<16x16xf32> to vector<16x16xbf16>
    %76 = vector.extract_strided_slice %65 {offsets = [0, 0], sizes = [16, 16], strides = [1, 1]} : vector<16x32xbf16> to vector<16x16xbf16>
    %77 = vector.extract_strided_slice %55 {offsets = [0, 0], sizes = [256, 16], strides = [1, 1]} : vector<256x32xf32> to vector<256x16xf32>
    %78 = vector.shape_cast %77 : vector<256x16xf32> to vector<16x16x16xf32>
    %79 = vector.extract_strided_slice %57 {offsets = [0, 0], sizes = [256, 16], strides = [1, 1]} : vector<256x32xf32> to vector<256x16xf32>
    %80 = vector.shape_cast %79 : vector<256x16xf32> to vector<16x16x16xf32>
    %81 = vector.extract_strided_slice %59 {offsets = [0, 0], sizes = [256, 16], strides = [1, 1]} : vector<256x32xf32> to vector<256x16xf32>
    %82 = vector.shape_cast %81 : vector<256x16xf32> to vector<16x16x16xf32>
    %cst_25 = arith.constant dense<0.000000e+00> : vector<16x16xf32>
    %83 = tpu.matmul %74, %75, %cst_25 {dimension_numbers = #tpu.dot_dimension_numbers<[1], [1], [0], [0], [0, 0, 1, 0], [], []>} : vector<16x16xbf16>, vector<16x16xbf16>, vector<16x16xf32> -> vector<16x16xf32>
    %84 = vector.shape_cast %71 : vector<16x16xf32> to vector<16x1x16xf32>
    %85 = vector.broadcast %84 : vector<16x1x16xf32> to vector<16x16x16xf32>
    %86 = arith.mulf %85, %78 : vector<16x16x16xf32>
    %cst_26 = arith.constant dense<0.000000e+00> : vector<16x16xf32>
    %87 = vector.multi_reduction <add>, %86, %cst_26 [2] : vector<16x16x16xf32> to vector<16x16xf32>
    %88 = arith.addf %83, %87 : vector<16x16xf32>
    %89 = vector.shape_cast %73 : vector<16x16xf32> to vector<1x16x16xf32>
    %90 = vector.broadcast %89 : vector<1x16x16xf32> to vector<16x16x16xf32>
    %91 = arith.mulf %90, %80 : vector<16x16x16xf32>
    %cst_27 = arith.constant dense<0.000000e+00> : vector<16x16xf32>
    %92 = vector.multi_reduction <add>, %91, %cst_27 [2] : vector<16x16x16xf32> to vector<16x16xf32>
    %93 = arith.addf %88, %92 : vector<16x16xf32>
    %94 = vector.broadcast %67 : vector<1x16xf32> to vector<16x16xf32>
    %95 = arith.addf %93, %94 : vector<16x16xf32>
    %cst_28 = arith.constant dense<0xFF800000> : vector<16xf32>
    %96 = vector.multi_reduction <maximumf>, %95, %cst_28 [1] : vector<16x16xf32> to vector<16xf32>
    %97 = vector.shape_cast %96 : vector<16xf32> to vector<16x1xf32>
    %98 = vector.broadcast %97 : vector<16x1xf32> to vector<16x16xf32>
    %99 = arith.subf %95, %98 : vector<16x16xf32>
    %100 = math.exp %99 : vector<16x16xf32>
    %cst_29 = arith.constant dense<0.000000e+00> : vector<16xf32>
    %101 = vector.multi_reduction <add>, %100, %cst_29 [1] : vector<16x16xf32> to vector<16xf32>
    %102 = vector.shape_cast %101 : vector<16xf32> to vector<16x1xf32>
    %103 = tpu.reciprocal %102 {approx = true} : vector<16x1xf32> -> vector<16x1xf32>
    %104 = vector.broadcast %103 : vector<16x1xf32> to vector<16x16xf32>
    %105 = arith.mulf %100, %104 : vector<16x16xf32>
    %106 = arith.truncf %105 : vector<16x16xf32> to vector<16x16xbf16>
    %cst_30 = arith.constant dense<0.000000e+00> : vector<16x16xf32>
    %107 = tpu.matmul %106, %76, %cst_30 {dimension_numbers = #tpu.dot_dimension_numbers<[1], [0], [0], [1], [0, 0, 1, 1], [], []>} : vector<16x16xbf16>, vector<16x16xbf16>, vector<16x16xf32> -> vector<16x16xf32>
    %108 = vector.shape_cast %105 : vector<16x16xf32> to vector<16x16x1xf32>
    %109 = vector.broadcast %108 : vector<16x16x1xf32> to vector<16x16x16xf32>
    %110 = arith.mulf %109, %82 : vector<16x16x16xf32>
    %cst_31 = arith.constant dense<0.000000e+00> : vector<16x16xf32>
    %111 = vector.multi_reduction <add>, %110, %cst_31 [1] : vector<16x16x16xf32> to vector<16x16xf32>
    %112 = arith.addf %107, %111 : vector<16x16xf32>
    %113 = vector.extract_strided_slice %61 {offsets = [0, 16], sizes = [16, 16], strides = [1, 1]} : vector<16x32xbf16> to vector<16x16xbf16>
    %114 = arith.extf %113 : vector<16x16xbf16> to vector<16x16xf32>
    %cst_32 = arith.constant 2.500000e-01 : f32
    %115 = vector.broadcast %cst_32 : f32 to vector<16x16xf32>
    %116 = arith.mulf %114, %115 : vector<16x16xf32>
    %117 = vector.extract_strided_slice %63 {offsets = [0, 16], sizes = [16, 16], strides = [1, 1]} : vector<16x32xbf16> to vector<16x16xbf16>
    %118 = arith.extf %117 : vector<16x16xbf16> to vector<16x16xf32>
    %119 = arith.truncf %116 : vector<16x16xf32> to vector<16x16xbf16>
    %120 = arith.truncf %118 : vector<16x16xf32> to vector<16x16xbf16>
    %121 = vector.extract_strided_slice %65 {offsets = [0, 16], sizes = [16, 16], strides = [1, 1]} : vector<16x32xbf16> to vector<16x16xbf16>
    %122 = vector.extract_strided_slice %55 {offsets = [0, 16], sizes = [256, 16], strides = [1, 1]} : vector<256x32xf32> to vector<256x16xf32>
    %123 = vector.shape_cast %122 : vector<256x16xf32> to vector<16x16x16xf32>
    %124 = vector.extract_strided_slice %57 {offsets = [0, 16], sizes = [256, 16], strides = [1, 1]} : vector<256x32xf32> to vector<256x16xf32>
    %125 = vector.shape_cast %124 : vector<256x16xf32> to vector<16x16x16xf32>
    %126 = vector.extract_strided_slice %59 {offsets = [0, 16], sizes = [256, 16], strides = [1, 1]} : vector<256x32xf32> to vector<256x16xf32>
    %127 = vector.shape_cast %126 : vector<256x16xf32> to vector<16x16x16xf32>
    %cst_33 = arith.constant dense<0.000000e+00> : vector<16x16xf32>
    %128 = tpu.matmul %119, %120, %cst_33 {dimension_numbers = #tpu.dot_dimension_numbers<[1], [1], [0], [0], [0, 0, 1, 0], [], []>} : vector<16x16xbf16>, vector<16x16xbf16>, vector<16x16xf32> -> vector<16x16xf32>
    %129 = vector.shape_cast %116 : vector<16x16xf32> to vector<16x1x16xf32>
    %130 = vector.broadcast %129 : vector<16x1x16xf32> to vector<16x16x16xf32>
    %131 = arith.mulf %130, %123 : vector<16x16x16xf32>
    %cst_34 = arith.constant dense<0.000000e+00> : vector<16x16xf32>
    %132 = vector.multi_reduction <add>, %131, %cst_34 [2] : vector<16x16x16xf32> to vector<16x16xf32>
    %133 = arith.addf %128, %132 : vector<16x16xf32>
    %134 = vector.shape_cast %118 : vector<16x16xf32> to vector<1x16x16xf32>
    %135 = vector.broadcast %134 : vector<1x16x16xf32> to vector<16x16x16xf32>
    %136 = arith.mulf %135, %125 : vector<16x16x16xf32>
    %cst_35 = arith.constant dense<0.000000e+00> : vector<16x16xf32>
    %137 = vector.multi_reduction <add>, %136, %cst_35 [2] : vector<16x16x16xf32> to vector<16x16xf32>
    %138 = arith.addf %133, %137 : vector<16x16xf32>
    %139 = vector.broadcast %67 : vector<1x16xf32> to vector<16x16xf32>
    %140 = arith.addf %138, %139 : vector<16x16xf32>
    %cst_36 = arith.constant dense<0xFF800000> : vector<16xf32>
    %141 = vector.multi_reduction <maximumf>, %140, %cst_36 [1] : vector<16x16xf32> to vector<16xf32>
    %142 = vector.shape_cast %141 : vector<16xf32> to vector<16x1xf32>
    %143 = vector.broadcast %142 : vector<16x1xf32> to vector<16x16xf32>
    %144 = arith.subf %140, %143 : vector<16x16xf32>
    %145 = math.exp %144 : vector<16x16xf32>
    %cst_37 = arith.constant dense<0.000000e+00> : vector<16xf32>
    %146 = vector.multi_reduction <add>, %145, %cst_37 [1] : vector<16x16xf32> to vector<16xf32>
    %147 = vector.shape_cast %146 : vector<16xf32> to vector<16x1xf32>
    %148 = tpu.reciprocal %147 {approx = true} : vector<16x1xf32> -> vector<16x1xf32>
    %149 = vector.broadcast %148 : vector<16x1xf32> to vector<16x16xf32>
    %150 = arith.mulf %145, %149 : vector<16x16xf32>
    %151 = arith.truncf %150 : vector<16x16xf32> to vector<16x16xbf16>
    %cst_38 = arith.constant dense<0.000000e+00> : vector<16x16xf32>
    %152 = tpu.matmul %151, %121, %cst_38 {dimension_numbers = #tpu.dot_dimension_numbers<[1], [0], [0], [1], [0, 0, 1, 1], [], []>} : vector<16x16xbf16>, vector<16x16xbf16>, vector<16x16xf32> -> vector<16x16xf32>
    %153 = vector.shape_cast %150 : vector<16x16xf32> to vector<16x16x1xf32>
    %154 = vector.broadcast %153 : vector<16x16x1xf32> to vector<16x16x16xf32>
    %155 = arith.mulf %154, %127 : vector<16x16x16xf32>
    %cst_39 = arith.constant dense<0.000000e+00> : vector<16x16xf32>
    %156 = vector.multi_reduction <add>, %155, %cst_39 [1] : vector<16x16x16xf32> to vector<16x16xf32>
    %157 = arith.addf %152, %156 : vector<16x16xf32>
    %158 = tpu.concatenate %112, %157 in 1 : vector<16x16xf32>, vector<16x16xf32> -> vector<16x32xf32>
    %159 = arith.truncf %158 : vector<16x32xf32> to vector<16x32xbf16>
    %c0_40 = arith.constant 0 : index
    %c0_41 = arith.constant 0 : index
    %c0_42 = arith.constant 0 : index
    %160 = vector.load %arg9[%c0_40, %c0_41, %c0_42] : memref<1x16x32xbf16, #tpu.memory_space<vmem>>, vector<1x16x32xbf16>
    %161 = vector.shape_cast %160 : vector<1x16x32xbf16> to vector<16x32xbf16>
    %162 = vector.shape_cast %159 : vector<16x32xbf16> to vector<1x16x32xbf16>
    tpu.vector_store %arg9[%c0_40, %c0_41, %c0_42], %162 {strides = array<i32>} : memref<1x16x32xbf16, #tpu.memory_space<vmem>>, vector<1x16x32xbf16>,
    return
  }
  func.func @transform_0(%arg0: i32) -> (i32, i32, i32) {
    %c0_i32 = arith.constant 0 : i32
    %c0_i32_0 = arith.constant 0 : i32
    %c0_i32_1 = arith.constant 0 : i32
    return %arg0, %c0_i32, %c0_i32_0 : i32, i32, i32
  }
  func.func @transform_1(%arg0: i32) -> (i32, i32, i32) {
    %c0_i32 = arith.constant 0 : i32
    %c0_i32_0 = arith.constant 0 : i32
    %c0_i32_1 = arith.constant 0 : i32
    return %arg0, %c0_i32, %c0_i32_0 : i32, i32, i32
  }
  func.func @transform_2(%arg0: i32) -> (i32, i32, i32) {
    %c0_i32 = arith.constant 0 : i32
    %c0_i32_0 = arith.constant 0 : i32
    %c0_i32_1 = arith.constant 0 : i32
    return %arg0, %c0_i32, %c0_i32_0 : i32, i32, i32
  }
  func.func @transform_3(%arg0: i32) -> (i32, i32, i32, i32) {
    %c0_i32 = arith.constant 0 : i32
    %c0_i32_0 = arith.constant 0 : i32
    %c0_i32_1 = arith.constant 0 : i32
    %c0_i32_2 = arith.constant 0 : i32
    return %arg0, %c0_i32, %c0_i32_0, %c0_i32_1 : i32, i32, i32, i32
  }
  func.func @transform_4(%arg0: i32) -> (i32, i32, i32) {
    %c0_i32 = arith.constant 0 : i32
    %c0_i32_0 = arith.constant 0 : i32
    %c0_i32_1 = arith.constant 0 : i32
    return %arg0, %c0_i32, %c0_i32_0 : i32, i32, i32
  }
  func.func @transform_5(%arg0: i32) -> (i32, i32) {
    %c0_i32 = arith.constant 0 : i32
    %c0_i32_0 = arith.constant 0 : i32
    %c0_i32_1 = arith.constant 0 : i32
    return %c0_i32, %c0_i32_0 : i32, i32
  }
  func.func @transform_6(%arg0: i32) -> (i32, i32) {
    %c0_i32 = arith.constant 0 : i32
    %c0_i32_0 = arith.constant 0 : i32
    %c0_i32_1 = arith.constant 0 : i32
    return %c0_i32, %c0_i32_0 : i32, i32
  }
  func.func @transform_7(%arg0: i32) -> (i32, i32) {
    %c0_i32 = arith.constant 0 : i32
    %c0_i32_0 = arith.constant 0 : i32
    %c0_i32_1 = arith.constant 0 : i32
    return %c0_i32, %c0_i32_0 : i32, i32
  }
  func.func @transform_8(%arg0: i32) -> (i32, i32, i32) {
    %c0_i32 = arith.constant 0 : i32
    %c0_i32_0 = arith.constant 0 : i32
    %c0_i32_1 = arith.constant 0 : i32
    return %arg0, %c0_i32, %c0_i32_0 : i32, i32, i32
  }
}

module attributes {stable_mosaic.version = 11 : i64} {
  func.func @_matmul_res_kernel(%arg0: i32, %arg1: memref<64x32xbf16, #tpu.memory_space<vmem>>, %arg2: memref<32x32xbf16, #tpu.memory_space<vmem>>, %arg3: memref<1x32xf32, #tpu.memory_space<vmem>>, %arg4: memref<64x32xf32, #tpu.memory_space<vmem>>, %arg5: memref<64x32xf32, #tpu.memory_space<vmem>>) attributes {dimension_semantics = [#tpu.dimension_semantics<parallel>], iteration_bounds = array<i64: 1>, scalar_prefetch = 0 : i64, scratch_operands = 0 : i64, tpu.core_type = #tpu.core_type<tc>, window_params = [{transform_indices = @transform_0, window_bounds = array<i64: 64, 32>}, {pipeline_mode = #tpu.pipeline_mode<synchronous>, transform_indices = @transform_1, window_bounds = array<i64: 32, 32>}, {pipeline_mode = #tpu.pipeline_mode<synchronous>, transform_indices = @transform_2, window_bounds = array<i64: 1, 32>}, {transform_indices = @transform_3, window_bounds = array<i64: 64, 32>}, {transform_indices = @transform_4, window_bounds = array<i64: 64, 32>}]} {
    %c0 = arith.constant 0 : index
    %c0_0 = arith.constant 0 : index
    %0 = vector.load %arg1[%c0, %c0_0] : memref<64x32xbf16, #tpu.memory_space<vmem>>, vector<64x32xbf16>
    %c0_1 = arith.constant 0 : index
    %c0_2 = arith.constant 0 : index
    %1 = vector.load %arg2[%c0_1, %c0_2] : memref<32x32xbf16, #tpu.memory_space<vmem>>, vector<32x32xbf16>
    %cst = arith.constant dense<0.000000e+00> : vector<64x32xf32>
    %2 = tpu.matmul %0, %1, %cst {dimension_numbers = #tpu.dot_dimension_numbers<[1], [0], [0], [1], [0, 0, 1, 1], [], []>} : vector<64x32xbf16>, vector<32x32xbf16>, vector<64x32xf32> -> vector<64x32xf32>
    %c0_3 = arith.constant 0 : index
    %c0_4 = arith.constant 0 : index
    %3 = vector.load %arg3[%c0_3, %c0_4] : memref<1x32xf32, #tpu.memory_space<vmem>>, vector<1x32xf32>
    %4 = vector.broadcast %3 : vector<1x32xf32> to vector<64x32xf32>
    %5 = arith.addf %2, %4 : vector<64x32xf32>
    %c0_5 = arith.constant 0 : index
    %c0_6 = arith.constant 0 : index
    %6 = vector.load %arg4[%c0_5, %c0_6] : memref<64x32xf32, #tpu.memory_space<vmem>>, vector<64x32xf32>
    %7 = arith.addf %5, %6 : vector<64x32xf32>
    %c0_7 = arith.constant 0 : index
    %c0_8 = arith.constant 0 : index
    %8 = vector.load %arg5[%c0_7, %c0_8] : memref<64x32xf32, #tpu.memory_space<vmem>>, vector<64x32xf32>
    tpu.vector_store %arg5[%c0_7, %c0_8], %7 {strides = array<i32>} : memref<64x32xf32, #tpu.memory_space<vmem>>, vector<64x32xf32>,
    return
  }
  func.func @transform_0(%arg0: i32) -> (i32, i32) {
    %c0_i32 = arith.constant 0 : i32
    %c0_i32_0 = arith.constant 0 : i32
    return %arg0, %c0_i32 : i32, i32
  }
  func.func @transform_1(%arg0: i32) -> (i32, i32) {
    %c0_i32 = arith.constant 0 : i32
    %c0_i32_0 = arith.constant 0 : i32
    %c0_i32_1 = arith.constant 0 : i32
    return %c0_i32, %c0_i32_0 : i32, i32
  }
  func.func @transform_2(%arg0: i32) -> (i32, i32) {
    %c0_i32 = arith.constant 0 : i32
    %c0_i32_0 = arith.constant 0 : i32
    %c0_i32_1 = arith.constant 0 : i32
    return %c0_i32, %c0_i32_0 : i32, i32
  }
  func.func @transform_3(%arg0: i32) -> (i32, i32) {
    %c0_i32 = arith.constant 0 : i32
    %c0_i32_0 = arith.constant 0 : i32
    return %arg0, %c0_i32 : i32, i32
  }
  func.func @transform_4(%arg0: i32) -> (i32, i32) {
    %c0_i32 = arith.constant 0 : i32
    %c0_i32_0 = arith.constant 0 : i32
    return %arg0, %c0_i32 : i32, i32
  }
}

module attributes {stable_mosaic.version = 11 : i64} {
  func.func @_ln_matmul_kernel(%arg0: i32, %arg1: memref<64x32xf32, #tpu.memory_space<vmem>>, %arg2: memref<1x32xf32, #tpu.memory_space<vmem>>, %arg3: memref<1x32xf32, #tpu.memory_space<vmem>>, %arg4: memref<32x128xbf16, #tpu.memory_space<vmem>>, %arg5: memref<1x128xf32, #tpu.memory_space<vmem>>, %arg6: memref<64x128xbf16, #tpu.memory_space<vmem>>) attributes {dimension_semantics = [#tpu.dimension_semantics<parallel>], iteration_bounds = array<i64: 1>, scalar_prefetch = 0 : i64, scratch_operands = 0 : i64, tpu.core_type = #tpu.core_type<tc>, window_params = [{transform_indices = @transform_0, window_bounds = array<i64: 64, 32>}, {pipeline_mode = #tpu.pipeline_mode<synchronous>, transform_indices = @transform_1, window_bounds = array<i64: 1, 32>}, {pipeline_mode = #tpu.pipeline_mode<synchronous>, transform_indices = @transform_2, window_bounds = array<i64: 1, 32>}, {pipeline_mode = #tpu.pipeline_mode<synchronous>, transform_indices = @transform_3, window_bounds = array<i64: 32, 128>}, {pipeline_mode = #tpu.pipeline_mode<synchronous>, transform_indices = @transform_4, window_bounds = array<i64: 1, 128>}, {transform_indices = @transform_5, window_bounds = array<i64: 64, 128>}]} {
    %c0 = arith.constant 0 : index
    %c0_0 = arith.constant 0 : index
    %0 = vector.load %arg1[%c0, %c0_0] : memref<64x32xf32, #tpu.memory_space<vmem>>, vector<64x32xf32>
    %cst = arith.constant dense<0.000000e+00> : vector<64xf32>
    %1 = vector.multi_reduction <add>, %0, %cst [1] : vector<64x32xf32> to vector<64xf32>
    %2 = vector.shape_cast %1 : vector<64xf32> to vector<64x1xf32>
    %cst_1 = arith.constant 3.200000e+01 : f32
    %3 = vector.broadcast %cst_1 : f32 to vector<64x1xf32>
    %4 = arith.divf %2, %3 : vector<64x1xf32>
    %5 = vector.broadcast %4 : vector<64x1xf32> to vector<64x32xf32>
    %6 = arith.subf %0, %5 : vector<64x32xf32>
    %7 = arith.mulf %6, %6 : vector<64x32xf32>
    %cst_2 = arith.constant dense<0.000000e+00> : vector<64xf32>
    %8 = vector.multi_reduction <add>, %7, %cst_2 [1] : vector<64x32xf32> to vector<64xf32>
    %9 = vector.shape_cast %8 : vector<64xf32> to vector<64x1xf32>
    %cst_3 = arith.constant 3.200000e+01 : f32
    %10 = vector.broadcast %cst_3 : f32 to vector<64x1xf32>
    %11 = arith.divf %9, %10 : vector<64x1xf32>
    %cst_4 = arith.constant 9.99999974E-6 : f32
    %12 = vector.broadcast %cst_4 : f32 to vector<64x1xf32>
    %13 = arith.addf %11, %12 : vector<64x1xf32>
    %14 = math.rsqrt %13 : vector<64x1xf32>
    %15 = vector.broadcast %14 : vector<64x1xf32> to vector<64x32xf32>
    %16 = arith.mulf %6, %15 : vector<64x32xf32>
    %c0_5 = arith.constant 0 : index
    %c0_6 = arith.constant 0 : index
    %17 = vector.load %arg2[%c0_5, %c0_6] : memref<1x32xf32, #tpu.memory_space<vmem>>, vector<1x32xf32>
    %18 = vector.broadcast %17 : vector<1x32xf32> to vector<64x32xf32>
    %19 = arith.mulf %16, %18 : vector<64x32xf32>
    %c0_7 = arith.constant 0 : index
    %c0_8 = arith.constant 0 : index
    %20 = vector.load %arg3[%c0_7, %c0_8] : memref<1x32xf32, #tpu.memory_space<vmem>>, vector<1x32xf32>
    %21 = vector.broadcast %20 : vector<1x32xf32> to vector<64x32xf32>
    %22 = arith.addf %19, %21 : vector<64x32xf32>
    %23 = arith.truncf %22 : vector<64x32xf32> to vector<64x32xbf16>
    %c0_9 = arith.constant 0 : index
    %c0_10 = arith.constant 0 : index
    %24 = vector.load %arg4[%c0_9, %c0_10] : memref<32x128xbf16, #tpu.memory_space<vmem>>, vector<32x128xbf16>
    %cst_11 = arith.constant dense<0.000000e+00> : vector<64x128xf32>
    %25 = tpu.matmul %23, %24, %cst_11 {dimension_numbers = #tpu.dot_dimension_numbers<[1], [0], [0], [1], [0, 0, 1, 1], [], []>} : vector<64x32xbf16>, vector<32x128xbf16>, vector<64x128xf32> -> vector<64x128xf32>
    %c0_12 = arith.constant 0 : index
    %c0_13 = arith.constant 0 : index
    %26 = vector.load %arg5[%c0_12, %c0_13] : memref<1x128xf32, #tpu.memory_space<vmem>>, vector<1x128xf32>
    %27 = vector.broadcast %26 : vector<1x128xf32> to vector<64x128xf32>
    %28 = arith.addf %25, %27 : vector<64x128xf32>
    %cst_14 = arith.constant 5.000000e-01 : f32
    %29 = vector.broadcast %cst_14 : f32 to vector<64x128xf32>
    %30 = arith.mulf %29, %28 : vector<64x128xf32>
    %cst_15 = arith.constant 0.707106769 : f32
    %31 = vector.broadcast %cst_15 : f32 to vector<64x128xf32>
    %32 = arith.mulf %28, %31 : vector<64x128xf32>
    %33 = math.erf %32 : vector<64x128xf32>
    %cst_16 = arith.constant 1.000000e+00 : f32
    %34 = vector.broadcast %cst_16 : f32 to vector<64x128xf32>
    %35 = arith.addf %34, %33 : vector<64x128xf32>
    %36 = arith.mulf %30, %35 : vector<64x128xf32>
    %37 = arith.truncf %36 : vector<64x128xf32> to vector<64x128xbf16>
    %c0_17 = arith.constant 0 : index
    %c0_18 = arith.constant 0 : index
    %38 = vector.load %arg6[%c0_17, %c0_18] : memref<64x128xbf16, #tpu.memory_space<vmem>>, vector<64x128xbf16>
    tpu.vector_store %arg6[%c0_17, %c0_18], %37 {strides = array<i32>} : memref<64x128xbf16, #tpu.memory_space<vmem>>, vector<64x128xbf16>,
    return
  }
  func.func @transform_0(%arg0: i32) -> (i32, i32) {
    %c0_i32 = arith.constant 0 : i32
    %c0_i32_0 = arith.constant 0 : i32
    return %arg0, %c0_i32 : i32, i32
  }
  func.func @transform_1(%arg0: i32) -> (i32, i32) {
    %c0_i32 = arith.constant 0 : i32
    %c0_i32_0 = arith.constant 0 : i32
    %c0_i32_1 = arith.constant 0 : i32
    return %c0_i32, %c0_i32_0 : i32, i32
  }
  func.func @transform_2(%arg0: i32) -> (i32, i32) {
    %c0_i32 = arith.constant 0 : i32
    %c0_i32_0 = arith.constant 0 : i32
    %c0_i32_1 = arith.constant 0 : i32
    return %c0_i32, %c0_i32_0 : i32, i32
  }
  func.func @transform_3(%arg0: i32) -> (i32, i32) {
    %c0_i32 = arith.constant 0 : i32
    %c0_i32_0 = arith.constant 0 : i32
    %c0_i32_1 = arith.constant 0 : i32
    return %c0_i32, %c0_i32_0 : i32, i32
  }
  func.func @transform_4(%arg0: i32) -> (i32, i32) {
    %c0_i32 = arith.constant 0 : i32
    %c0_i32_0 = arith.constant 0 : i32
    %c0_i32_1 = arith.constant 0 : i32
    return %c0_i32, %c0_i32_0 : i32, i32
  }
  func.func @transform_5(%arg0: i32) -> (i32, i32) {
    %c0_i32 = arith.constant 0 : i32
    %c0_i32_0 = arith.constant 0 : i32
    return %arg0, %c0_i32 : i32, i32
  }
}

module attributes {stable_mosaic.version = 11 : i64} {
  func.func @_matmul_res_kernel(%arg0: i32, %arg1: memref<64x128xbf16, #tpu.memory_space<vmem>>, %arg2: memref<128x32xbf16, #tpu.memory_space<vmem>>, %arg3: memref<1x32xf32, #tpu.memory_space<vmem>>, %arg4: memref<64x32xf32, #tpu.memory_space<vmem>>, %arg5: memref<64x32xf32, #tpu.memory_space<vmem>>) attributes {dimension_semantics = [#tpu.dimension_semantics<parallel>], iteration_bounds = array<i64: 1>, scalar_prefetch = 0 : i64, scratch_operands = 0 : i64, tpu.core_type = #tpu.core_type<tc>, window_params = [{transform_indices = @transform_0, window_bounds = array<i64: 64, 128>}, {pipeline_mode = #tpu.pipeline_mode<synchronous>, transform_indices = @transform_1, window_bounds = array<i64: 128, 32>}, {pipeline_mode = #tpu.pipeline_mode<synchronous>, transform_indices = @transform_2, window_bounds = array<i64: 1, 32>}, {transform_indices = @transform_3, window_bounds = array<i64: 64, 32>}, {transform_indices = @transform_4, window_bounds = array<i64: 64, 32>}]} {
    %c0 = arith.constant 0 : index
    %c0_0 = arith.constant 0 : index
    %0 = vector.load %arg1[%c0, %c0_0] : memref<64x128xbf16, #tpu.memory_space<vmem>>, vector<64x128xbf16>
    %c0_1 = arith.constant 0 : index
    %c0_2 = arith.constant 0 : index
    %1 = vector.load %arg2[%c0_1, %c0_2] : memref<128x32xbf16, #tpu.memory_space<vmem>>, vector<128x32xbf16>
    %cst = arith.constant dense<0.000000e+00> : vector<64x32xf32>
    %2 = tpu.matmul %0, %1, %cst {dimension_numbers = #tpu.dot_dimension_numbers<[1], [0], [0], [1], [0, 0, 1, 1], [], []>} : vector<64x128xbf16>, vector<128x32xbf16>, vector<64x32xf32> -> vector<64x32xf32>
    %c0_3 = arith.constant 0 : index
    %c0_4 = arith.constant 0 : index
    %3 = vector.load %arg3[%c0_3, %c0_4] : memref<1x32xf32, #tpu.memory_space<vmem>>, vector<1x32xf32>
    %4 = vector.broadcast %3 : vector<1x32xf32> to vector<64x32xf32>
    %5 = arith.addf %2, %4 : vector<64x32xf32>
    %c0_5 = arith.constant 0 : index
    %c0_6 = arith.constant 0 : index
    %6 = vector.load %arg4[%c0_5, %c0_6] : memref<64x32xf32, #tpu.memory_space<vmem>>, vector<64x32xf32>
    %7 = arith.addf %5, %6 : vector<64x32xf32>
    %c0_7 = arith.constant 0 : index
    %c0_8 = arith.constant 0 : index
    %8 = vector.load %arg5[%c0_7, %c0_8] : memref<64x32xf32, #tpu.memory_space<vmem>>, vector<64x32xf32>
    tpu.vector_store %arg5[%c0_7, %c0_8], %7 {strides = array<i32>} : memref<64x32xf32, #tpu.memory_space<vmem>>, vector<64x32xf32>,
    return
  }
  func.func @transform_0(%arg0: i32) -> (i32, i32) {
    %c0_i32 = arith.constant 0 : i32
    %c0_i32_0 = arith.constant 0 : i32
    return %arg0, %c0_i32 : i32, i32
  }
  func.func @transform_1(%arg0: i32) -> (i32, i32) {
    %c0_i32 = arith.constant 0 : i32
    %c0_i32_0 = arith.constant 0 : i32
    %c0_i32_1 = arith.constant 0 : i32
    return %c0_i32, %c0_i32_0 : i32, i32
  }
  func.func @transform_2(%arg0: i32) -> (i32, i32) {
    %c0_i32 = arith.constant 0 : i32
    %c0_i32_0 = arith.constant 0 : i32
    %c0_i32_1 = arith.constant 0 : i32
    return %c0_i32, %c0_i32_0 : i32, i32
  }
  func.func @transform_3(%arg0: i32) -> (i32, i32) {
    %c0_i32 = arith.constant 0 : i32
    %c0_i32_0 = arith.constant 0 : i32
    return %arg0, %c0_i32 : i32, i32
  }
  func.func @transform_4(%arg0: i32) -> (i32, i32) {
    %c0_i32 = arith.constant 0 : i32
    %c0_i32_0 = arith.constant 0 : i32
    return %arg0, %c0_i32 : i32, i32
  }
}

</mosaic_0001>

<llo_original>
// kernel: _block_forward.5
$region0: #{_block_forward.5}
  #allocation0 [shape = 'u32[]', space=smem, size = 0x4, offset = 0x4, fixed_abs, tag = 'smem constant byte address 0x4 - core index']
  #allocation1 [shape = 'u32[144,128]{1,0:T(1,128)}', space=vmem, size = 0x12000, scoped, tag = 'internal scratch']
  %s0 = inlined_call_operand.vmem [shape: f32[64,32], index: 0, kind: input, shape index: {}]
  %s1 = inlined_call_operand.vmem [shape: f32[1,32], index: 1, kind: input, shape index: {}]
  %s2 = inlined_call_operand.vmem [shape: f32[1,32], index: 2, kind: input, shape index: {}]
  %s3 = inlined_call_operand.vmem [shape: bf16[32,96], index: 3, kind: input, shape index: {}]
  %s4 = inlined_call_operand.vmem [shape: f32[1,96], index: 4, kind: input, shape index: {}]
  %s5 = inlined_call_operand.vmem [shape: bf16[64,96], index: 5, kind: output, shape index: {}]
  %s6 = sld [smem:[#allocation0]]
  $region30: #{_block_forward.5} parent=0
    _
  %s8 = ssub.s32 1, %s6
  %s9 = scalar_select 0, %s8, %s6
  // Predicated region
  $region2: #{_block_forward.5} parent=0 // pred_check
    _
  $region3: #{_block_forward.5} parent=0 // pred_check_branch
    %11 = sbr.rel (0) target = $region5
  $region4: #{_block_forward.5} parent=0 // pred_region
    _
  $region5: #{_block_forward.5} parent=0 // pred_fallthru
    _
  // Predicated region
  $region6: #{_block_forward.5} parent=0 // pred_check
    _
  $region7: #{_block_forward.5} parent=0 // pred_check_branch
    %13 = sbr.rel (0) target = $region9
  $region8: #{_block_forward.5} parent=0 // pred_region
    _
  $region9: #{_block_forward.5} parent=0 // pred_fallthru
    _
  // Predicated region
  $region10: #{_block_forward.5} parent=0 // pred_check
    _
  $region11: #{_block_forward.5} parent=0 // pred_check_branch
    %15 = sbr.rel (0) target = $region13
  $region12: #{_block_forward.5} parent=0 // pred_region
    _
  $region13: #{_block_forward.5} parent=0 // pred_fallthru
    _
  // Predicated region
  $region14: #{_block_forward.5} parent=0 // pred_check
    _
  $region15: #{_block_forward.5} parent=0 // pred_check_branch
    %17 = sbr.rel (0) target = $region17
  $region16: #{_block_forward.5} parent=0 // pred_region
    _
  $region17: #{_block_forward.5} parent=0 // pred_fallthru
    _
  // Predicated region
  $region18: #{_block_forward.5} parent=0 // pred_check
    _
  $region19: #{_block_forward.5} parent=0 // pred_check_branch
    %19 = sbr.rel (0) target = $region21
  $region20: #{_block_forward.5} parent=0 // pred_region
    _
  $region21: #{_block_forward.5} parent=0 // pred_fallthru
    _
  %v21 = vld [vmem:[%s0] sm:$0xff]
  %v22 = vld [vmem:[%s0 + $0x8] sm:$0xff]
  %v23 = vld [vmem:[%s0 + $0x10] sm:$0xff]
  %v24 = vld [vmem:[%s0 + $0x18] sm:$0xff]
  %v25 = vld [vmem:[%s0 + $0x20] sm:$0xff]
  %v26 = vld [vmem:[%s0 + $0x28] sm:$0xff]
  %v27 = vld [vmem:[%s0 + $0x30] sm:$0xff]
  %v28 = vld [vmem:[%s0 + $0x38] sm:$0xff]
  %vm29 = vcmask 261120
  %v30 = vsel %vm29, %v21, 0.0
  %31 = vadd.xlane.f32.xlu0 %v30
  %v32 = vpop.xlane.xlu0 %31
  %v33 = vsel %vm29, %v22, 0.0
  %34 = vadd.xlane.f32.xlu0 %v33
  %v35 = vpop.xlane.xlu0 %34
  %v36 = vsel %vm29, %v23, 0.0
  %37 = vadd.xlane.f32.xlu0 %v36
  %v38 = vpop.xlane.xlu0 %37
  %v39 = vsel %vm29, %v24, 0.0
  %40 = vadd.xlane.f32.xlu0 %v39
  %v41 = vpop.xlane.xlu0 %40
  %v42 = vsel %vm29, %v25, 0.0
  %43 = vadd.xlane.f32.xlu0 %v42
  %v44 = vpop.xlane.xlu0 %43
  %v45 = vsel %vm29, %v26, 0.0
  %46 = vadd.xlane.f32.xlu0 %v45
  %v47 = vpop.xlane.xlu0 %46
  %v48 = vsel %vm29, %v27, 0.0
  %49 = vadd.xlane.f32.xlu0 %v48
  %v50 = vpop.xlane.xlu0 %49
  %v51 = vsel %vm29, %v28, 0.0
  %52 = vadd.xlane.f32.xlu0 %v51
  %v53 = vpop.xlane.xlu0 %52
  %v54 = vrcp.pop 32.0
  %v55 = vmul.f32 %v32, %v54
  %v56 = vmul.f32 %v35, %v54
  %v57 = vmul.f32 %v38, %v54
  %v58 = vmul.f32 %v41, %v54
  %v59 = vmul.f32 %v44, %v54
  %v60 = vmul.f32 %v47, %v54
  %v61 = vmul.f32 %v50, %v54
  %v62 = vmul.f32 %v53, %v54
  %v63 = vsub.f32 %v21, %v55
  %v64 = vsub.f32 %v22, %v56
  %v65 = vsub.f32 %v23, %v57
  %v66 = vsub.f32 %v24, %v58
  %v67 = vsub.f32 %v25, %v59
  %v68 = vsub.f32 %v26, %v60
  %v69 = vsub.f32 %v27, %v61
  %v70 = vsub.f32 %v28, %v62
  %v71 = vmul.f32 %v63, %v63
  %v72 = vmul.f32 %v64, %v64
  %v73 = vmul.f32 %v65, %v65
  %v74 = vmul.f32 %v66, %v66
  %v75 = vmul.f32 %v67, %v67
  %v76 = vmul.f32 %v68, %v68
  %v77 = vmul.f32 %v69, %v69
  %v78 = vmul.f32 %v70, %v70
  %v79 = vsel %vm29, %v71, 0.0
  %80 = vadd.xlane.f32.xlu0 %v79
  %v81 = vpop.xlane.xlu0 %80
  %v82 = vsel %vm29, %v72, 0.0
  %83 = vadd.xlane.f32.xlu0 %v82
  %v84 = vpop.xlane.xlu0 %83
  %v85 = vsel %vm29, %v73, 0.0
  %86 = vadd.xlane.f32.xlu0 %v85
  %v87 = vpop.xlane.xlu0 %86
  %v88 = vsel %vm29, %v74, 0.0
  %89 = vadd.xlane.f32.xlu0 %v88
  %v90 = vpop.xlane.xlu0 %89
  %v91 = vsel %vm29, %v75, 0.0
  %92 = vadd.xlane.f32.xlu0 %v91
  %v93 = vpop.xlane.xlu0 %92
  %v94 = vsel %vm29, %v76, 0.0
  %95 = vadd.xlane.f32.xlu0 %v94
  %v96 = vpop.xlane.xlu0 %95
  %v97 = vsel %vm29, %v77, 0.0
  %98 = vadd.xlane.f32.xlu0 %v97
  %v99 = vpop.xlane.xlu0 %98
  %v100 = vsel %vm29, %v78, 0.0
  %101 = vadd.xlane.f32.xlu0 %v100
  %v102 = vpop.xlane.xlu0 %101
  %v103 = vmul.f32 %v81, %v54
  %v104 = vmul.f32 %v84, %v54
  %v105 = vmul.f32 %v87, %v54
  %v106 = vmul.f32 %v90, %v54
  %v107 = vmul.f32 %v93, %v54
  %v108 = vmul.f32 %v96, %v54
  %v109 = vmul.f32 %v99, %v54
  %v110 = vmul.f32 %v102, %v54
  %v111 = vadd.f32 %v103, 1e-05
  %v112 = vadd.f32 %v104, 1e-05
  %v113 = vadd.f32 %v105, 1e-05
  %v114 = vadd.f32 %v106, 1e-05
  %v115 = vadd.f32 %v107, 1e-05
  %v116 = vadd.f32 %v108, 1e-05
  %v117 = vadd.f32 %v109, 1e-05
  %v118 = vadd.f32 %v110, 1e-05
  %v119 = vrsqrt.pop %v111
  %v120 = vrsqrt.pop %v112
  %v121 = vrsqrt.pop %v113
  %v122 = vrsqrt.pop %v114
  %v123 = vrsqrt.pop %v115
  %v124 = vrsqrt.pop %v116
  %v125 = vrsqrt.pop %v117
  %v126 = vrsqrt.pop %v118
  %v127 = vmul.f32 %v63, %v119
  %v128 = vmul.f32 %v64, %v120
  %v129 = vmul.f32 %v65, %v121
  %v130 = vmul.f32 %v66, %v122
  %v131 = vmul.f32 %v67, %v123
  %v132 = vmul.f32 %v68, %v124
  %v133 = vmul.f32 %v69, %v125
  %v134 = vmul.f32 %v70, %v126
  %v135 = vld [vmem:[%s1] sm:$0x1]
  %v137 = vlaneseq
  %v138 = vshrl.u32 %v137, 7
  %v139 = vsub.s32 0, %v138
  %v140 = vrot.slane %v135, %v139
  %v142 = vmul.f32 %v127, %v140
  %v143 = vmul.f32 %v128, %v140
  %v144 = vmul.f32 %v129, %v140
  %v145 = vmul.f32 %v130, %v140
  %v146 = vmul.f32 %v131, %v140
  %v147 = vmul.f32 %v132, %v140
  %v148 = vmul.f32 %v133, %v140
  %v149 = vmul.f32 %v134, %v140
  %v150 = vld [vmem:[%s2] sm:$0x1]
  %v152 = vlaneseq
  %v153 = vshrl.u32 %v152, 7
  %v154 = vsub.s32 0, %v153
  %v155 = vrot.slane %v150, %v154
  %v157 = vadd.f32 %v142, %v155
  %v158 = vadd.f32 %v143, %v155
  %v159 = vadd.f32 %v144, %v155
  %v160 = vadd.f32 %v145, %v155
  %v161 = vadd.f32 %v146, %v155
  %v162 = vadd.f32 %v147, %v155
  %v163 = vadd.f32 %v148, %v155
  %v164 = vadd.f32 %v149, %v155
  %v165 = vpack.c.bf16 %v158, %v157
  %v166 = vpack.c.bf16 %v160, %v159
  %v167 = vpack.c.bf16 %v162, %v161
  %v168 = vpack.c.bf16 %v164, %v163
  %v169 = vld [vmem:[%s3] sm:$0xf]
  %v170 = vld [vmem:[%s3 + $0x4] sm:$0xf]
  %v171 = vld [vmem:[%s3 + $0x8] sm:$0xf]
  %v172 = vld [vmem:[%s3 + $0xc] sm:$0xf]
  %v173 = vld [vmem:[%s4] sm:$0x1]
  %v175 = vlaneseq
  %v176 = vshrl.u32 %v175, 7
  %v177 = vsub.s32 0, %v176
  %v178 = vrot.slane %v173, %v177
  %v184 = vunpack.c.l.b16 %v169
  %v185 = vunpack.c.l.b16 %v170
  %v186 = vunpack.c.l.b16 %v171
  %v187 = vunpack.c.l.b16 %v172
  %v188 = vpack.c.b16 %v185, %v184
  %v189 = vpack.c.b16 %v187, %v186
  %v193 = vsel %vm29, %v165, 0
  %v196 = vsel %vm29, %v166, 0
  %v199 = vsel %vm29, %v167, 0
  %v202 = vsel %vm29, %v168, 0
  %204 = vmatprep.subr.bf16.mxu0 0
  %205 = vmatpush1.bf16.msra.mxu0 0
  %206 = vmatprep.subr.bf16.mxu0 0
  %207 = vmatpush1.bf16.msra.mxu0 0
  %208 = vmatprep.subr.bf16.mxu0 0
  %209 = vmatpush1.bf16.msra.mxu0 0
  %210 = vmatprep.subr.bf16.mxu0 0
  %211 = vmatpush1.bf16.msra.mxu0 0
  %212 = vmatprep.subr.bf16.mxu0 0
  %213 = vmatpush1.bf16.msra.mxu0 0
  %214 = vmatprep.subr.bf16.mxu0 0
  %215 = vmatpush1.bf16.msra.mxu0 0
  %216 = vmatprep.subr.bf16.mxu0 0
  %217 = vmatpush1.bf16.msra.mxu0 %v189
  %218 = vmatprep.subr.bf16.mxu0 0
  %219 = vmatpush1.bf16.msra.mxu0 %v188
  %220 = vmatprep.subr.bf16.mxu0 0
  %221 = vmatpush2.bf16.msra.mxu0 0
  %222 = vmatprep.subr.bf16.mxu0 0
  %223 = vmatpush2.bf16.msra.mxu0 0
  %224 = vmatprep.subr.bf16.mxu0 0
  %225 = vmatpush2.bf16.msra.mxu0 0
  %226 = vmatprep.subr.bf16.mxu0 0
  %227 = vmatpush2.bf16.msra.mxu0 0
  %228 = vmatprep.subr.bf16.mxu0 0
  %229 = vmatpush2.bf16.msra.mxu0 0
  %230 = vmatprep.subr.bf16.mxu0 0
  %231 = vmatpush2.bf16.msra.mxu0 0
  %232 = vmatprep.subr.bf16.mxu0 0
  %233 = vmatpush2.bf16.msra.mxu0 0
  %234 = vmatprep.subr.bf16.mxu0 0
  %235 = vmatpush2.bf16.msra.mxu0 0
  %236 = vmatprep.mubr.bf16.mxu0 0
  %237 = vmatmul.mubr.bf16.gmra.mxu0 %v193
  %v238 = vpop.f32.mrf.mxu0
  %v239 = vadd.f32 %v178, %v238
  %v240 = vpop.f32.mrf.mxu0
  %v241 = vpop.f32.mrf.mxu0
  %v242 = vadd.f32 %v178, %v241
  %v243 = vpop.f32.mrf.mxu0
  %244 = vmatprep.mubr.bf16.mxu0 0
  %245 = vmatmul.mubr.bf16.gmra.mxu0 %v196
  %v246 = vpop.f32.mrf.mxu0
  %v247 = vadd.f32 %v178, %v246
  %v248 = vpop.f32.mrf.mxu0
  %v249 = vpop.f32.mrf.mxu0
  %v250 = vadd.f32 %v178, %v249
  %v251 = vpop.f32.mrf.mxu0
  %252 = vmatprep.mubr.bf16.mxu0 0
  %253 = vmatmul.mubr.bf16.gmra.mxu0 %v199
  %v254 = vpop.f32.mrf.mxu0
  %v255 = vadd.f32 %v178, %v254
  %v256 = vpop.f32.mrf.mxu0
  %v257 = vpop.f32.mrf.mxu0
  %v258 = vadd.f32 %v178, %v257
  %v259 = vpop.f32.mrf.mxu0
  %260 = vmatprep.mubr.bf16.mxu0 0
  %261 = vmatmul.mubr.bf16.gmra.mxu0 %v202
  %v262 = vpop.f32.mrf.mxu0
  %v263 = vadd.f32 %v178, %v262
  %v264 = vpop.f32.mrf.mxu0
  %v265 = vpop.f32.mrf.mxu0
  %v266 = vadd.f32 %v178, %v265
  %v267 = vpop.f32.mrf.mxu0
  %268 = vdwg.mxu0
  %v269 = vpack.c.bf16 %v242, %v239
  %v270 = vpack.c.bf16 %v250, %v247
  %v271 = vpack.c.bf16 %v258, %v255
  %v272 = vpack.c.bf16 %v266, %v263
  %v277 = vunpack.c.l.b16 %v269
  %v278 = vunpack.c.h.b16 %v269
  %v279 = vunpack.c.l.b16 %v270
  %v280 = vunpack.c.h.b16 %v270
  %v281 = vunpack.c.l.b16 %v271
  %v282 = vunpack.c.h.b16 %v271
  %v283 = vunpack.c.l.b16 %v272
  %v284 = vunpack.c.h.b16 %v272
  %v285 = vpack.c.b16 %v277, %v277
  %v286 = vpack.c.b16 %v278, %v278
  %v287 = vpack.c.b16 %v279, %v279
  %v288 = vpack.c.b16 %v280, %v280
  %v289 = vpack.c.b16 %v281, %v281
  %v290 = vpack.c.b16 %v282, %v282
  %v291 = vpack.c.b16 %v283, %v283
  %v292 = vpack.c.b16 %v284, %v284
  %vm301 = vcmask 781312
  %302 = vst.msk [vmem:[%s5] sm:$0xf] %vm301, %v285
  %303 = vst.msk [vmem:[%s5 + $0x4] sm:$0xf] %vm301, %v286
  %304 = vst.msk [vmem:[%s5 + $0x8] sm:$0xf] %vm301, %v287
  %305 = vst.msk [vmem:[%s5 + $0xc] sm:$0xf] %vm301, %v288
  %306 = vst.msk [vmem:[%s5 + $0x10] sm:$0xf] %vm301, %v289
  %307 = vst.msk [vmem:[%s5 + $0x14] sm:$0xf] %vm301, %v290
  %308 = vst.msk [vmem:[%s5 + $0x18] sm:$0xf] %vm301, %v291
  %309 = vst.msk [vmem:[%s5 + $0x1c] sm:$0xf] %vm301, %v292
  // Predicated region
  $region22: #{_block_forward.5} parent=0 // pred_check
    _
  $region23: #{_block_forward.5} parent=0 // pred_check_branch
    %311 = sbr.rel (0) target = $region25
  $region24: #{_block_forward.5} parent=0 // pred_region
    _
  $region25: #{_block_forward.5} parent=0 // pred_fallthru
    _
  // Predicated region
  $region26: #{_block_forward.5} parent=0 // pred_check
    _
  $region27: #{_block_forward.5} parent=0 // pred_check_branch
    %313 = sbr.rel (0) target = $region29
  $region28: #{_block_forward.5} parent=0 // pred_region
    _
  $region29: #{_block_forward.5} parent=0 // pred_fallthru
    _

// kernel: _block_forward.7
$region0: #{_block_forward.7}
  #allocation0 [shape = 'u32[]', space=smem, size = 0x4, offset = 0x4, fixed_abs, tag = 'smem constant byte address 0x4 - core index']
  #allocation1 [shape = 'u32[144,128]{1,0:T(1,128)}', space=vmem, size = 0x12000, scoped, tag = 'internal scratch']
  %s0 = inlined_call_operand.vmem [shape: bf16[64,32], index: 0, kind: input, shape index: {}]
  %s1 = inlined_call_operand.vmem [shape: bf16[32,32], index: 1, kind: input, shape index: {}]
  %s2 = inlined_call_operand.vmem [shape: f32[1,32], index: 2, kind: input, shape index: {}]
  %s3 = inlined_call_operand.vmem [shape: f32[64,32], index: 3, kind: input, shape index: {}]
  %s4 = inlined_call_operand.vmem [shape: f32[64,32], index: 4, kind: output, shape index: {}]
  %s5 = sld [smem:[#allocation0]]
  $region26: #{_block_forward.7} parent=0
    _
  %s7 = ssub.s32 1, %s5
  %s8 = scalar_select 0, %s7, %s5
  // Predicated region
  $region2: #{_block_forward.7} parent=0 // pred_check
    _
  $region3: #{_block_forward.7} parent=0 // pred_check_branch
    %10 = sbr.rel (0) target = $region5
  $region4: #{_block_forward.7} parent=0 // pred_region
    _
  $region5: #{_block_forward.7} parent=0 // pred_fallthru
    _
  // Predicated region
  $region6: #{_block_forward.7} parent=0 // pred_check
    _
  $region7: #{_block_forward.7} parent=0 // pred_check_branch
    %12 = sbr.rel (0) target = $region9
  $region8: #{_block_forward.7} parent=0 // pred_region
    _
  $region9: #{_block_forward.7} parent=0 // pred_fallthru
    _
  // Predicated region
  $region10: #{_block_forward.7} parent=0 // pred_check
    _
  $region11: #{_block_forward.7} parent=0 // pred_check_branch
    %14 = sbr.rel (0) target = $region13
  $region12: #{_block_forward.7} parent=0 // pred_region
    _
  $region13: #{_block_forward.7} parent=0 // pred_fallthru
    _
  // Predicated region
  $region14: #{_block_forward.7} parent=0 // pred_check
    _
  $region15: #{_block_forward.7} parent=0 // pred_check_branch
    %16 = sbr.rel (0) target = $region17
  $region16: #{_block_forward.7} parent=0 // pred_region
    _
  $region17: #{_block_forward.7} parent=0 // pred_fallthru
    _
  %v18 = vld [vmem:[%s0] sm:$0xf]
  %v19 = vld [vmem:[%s0 + $0x4] sm:$0xf]
  %v20 = vld [vmem:[%s0 + $0x8] sm:$0xf]
  %v21 = vld [vmem:[%s0 + $0xc] sm:$0xf]
  %v22 = vld [vmem:[%s0 + $0x10] sm:$0xf]
  %v23 = vld [vmem:[%s0 + $0x14] sm:$0xf]
  %v24 = vld [vmem:[%s0 + $0x18] sm:$0xf]
  %v25 = vld [vmem:[%s0 + $0x1c] sm:$0xf]
  %v26 = vld [vmem:[%s1] sm:$0xf]
  %v27 = vld [vmem:[%s1 + $0x4] sm:$0xf]
  %v28 = vld [vmem:[%s1 + $0x8] sm:$0xf]
  %v29 = vld [vmem:[%s1 + $0xc] sm:$0xf]
  %v30 = vld [vmem:[%s2] sm:$0x1]
  %v32 = vlaneseq
  %v33 = vshrl.u32 %v32, 7
  %v34 = vsub.s32 0, %v33
  %v35 = vrot.slane %v30, %v34
  %v45 = vunpack.c.l.b16 %v18
  %v46 = vunpack.c.l.b16 %v19
  %v47 = vunpack.c.l.b16 %v20
  %v48 = vunpack.c.l.b16 %v21
  %v49 = vunpack.c.l.b16 %v22
  %v50 = vunpack.c.l.b16 %v23
  %v51 = vunpack.c.l.b16 %v24
  %v52 = vunpack.c.l.b16 %v25
  %v53 = vpack.c.b16 %v46, %v45
  %v54 = vpack.c.b16 %v48, %v47
  %v55 = vpack.c.b16 %v50, %v49
  %v56 = vpack.c.b16 %v52, %v51
  %v61 = vunpack.c.l.b16 %v26
  %v62 = vunpack.c.l.b16 %v27
  %v63 = vunpack.c.l.b16 %v28
  %v64 = vunpack.c.l.b16 %v29
  %v65 = vpack.c.b16 %v62, %v61
  %v66 = vpack.c.b16 %v64, %v63
  %vm69 = vcmask 261120
  %v71 = vsel %vm69, %v53, 0
  %v74 = vsel %vm69, %v54, 0
  %v77 = vsel %vm69, %v55, 0
  %v80 = vsel %vm69, %v56, 0
  %82 = vmatprep.subr.bf16.mxu0 0
  %83 = vmatpush1.bf16.msra.mxu0 0
  %84 = vmatprep.subr.bf16.mxu0 0
  %85 = vmatpush1.bf16.msra.mxu0 0
  %86 = vmatprep.subr.bf16.mxu0 0
  %87 = vmatpush1.bf16.msra.mxu0 0
  %88 = vmatprep.subr.bf16.mxu0 0
  %89 = vmatpush1.bf16.msra.mxu0 0
  %90 = vmatprep.subr.bf16.mxu0 0
  %91 = vmatpush1.bf16.msra.mxu0 0
  %92 = vmatprep.subr.bf16.mxu0 0
  %93 = vmatpush1.bf16.msra.mxu0 0
  %94 = vmatprep.subr.bf16.mxu0 0
  %95 = vmatpush1.bf16.msra.mxu0 %v66
  %96 = vmatprep.subr.bf16.mxu0 0
  %97 = vmatpush1.bf16.msra.mxu0 %v65
  %98 = vmatprep.subr.bf16.mxu0 0
  %99 = vmatpush2.bf16.msra.mxu0 0
  %100 = vmatprep.subr.bf16.mxu0 0
  %101 = vmatpush2.bf16.msra.mxu0 0
  %102 = vmatprep.subr.bf16.mxu0 0
  %103 = vmatpush2.bf16.msra.mxu0 0
  %104 = vmatprep.subr.bf16.mxu0 0
  %105 = vmatpush2.bf16.msra.mxu0 0
  %106 = vmatprep.subr.bf16.mxu0 0
  %107 = vmatpush2.bf16.msra.mxu0 0
  %108 = vmatprep.subr.bf16.mxu0 0
  %109 = vmatpush2.bf16.msra.mxu0 0
  %110 = vmatprep.subr.bf16.mxu0 0
  %111 = vmatpush2.bf16.msra.mxu0 0
  %112 = vmatprep.subr.bf16.mxu0 0
  %113 = vmatpush2.bf16.msra.mxu0 0
  %114 = vmatprep.mubr.bf16.mxu0 0
  %115 = vmatmul.mubr.bf16.gmra.mxu0 %v71
  %v116 = vpop.f32.mrf.mxu0
  %v117 = vadd.f32 %v35, %v116
  %v118 = vpop.f32.mrf.mxu0
  %v119 = vpop.f32.mrf.mxu0
  %v120 = vadd.f32 %v35, %v119
  %v121 = vpop.f32.mrf.mxu0
  %122 = vmatprep.mubr.bf16.mxu0 0
  %123 = vmatmul.mubr.bf16.gmra.mxu0 %v74
  %v124 = vpop.f32.mrf.mxu0
  %v125 = vadd.f32 %v35, %v124
  %v126 = vpop.f32.mrf.mxu0
  %v127 = vpop.f32.mrf.mxu0
  %v128 = vadd.f32 %v35, %v127
  %v129 = vpop.f32.mrf.mxu0
  %130 = vmatprep.mubr.bf16.mxu0 0
  %131 = vmatmul.mubr.bf16.gmra.mxu0 %v77
  %v132 = vpop.f32.mrf.mxu0
  %v133 = vadd.f32 %v35, %v132
  %v134 = vpop.f32.mrf.mxu0
  %v135 = vpop.f32.mrf.mxu0
  %v136 = vadd.f32 %v35, %v135
  %v137 = vpop.f32.mrf.mxu0
  %138 = vmatprep.mubr.bf16.mxu0 0
  %139 = vmatmul.mubr.bf16.gmra.mxu0 %v80
  %v140 = vpop.f32.mrf.mxu0
  %v141 = vadd.f32 %v35, %v140
  %v142 = vpop.f32.mrf.mxu0
  %v143 = vpop.f32.mrf.mxu0
  %v144 = vadd.f32 %v35, %v143
  %v145 = vpop.f32.mrf.mxu0
  %146 = vdwg.mxu0
  %v147 = vld [vmem:[%s3] sm:$0xff]
  %v148 = vld [vmem:[%s3 + $0x8] sm:$0xff]
  %v149 = vld [vmem:[%s3 + $0x10] sm:$0xff]
  %v150 = vld [vmem:[%s3 + $0x18] sm:$0xff]
  %v151 = vld [vmem:[%s3 + $0x20] sm:$0xff]
  %v152 = vld [vmem:[%s3 + $0x28] sm:$0xff]
  %v153 = vld [vmem:[%s3 + $0x30] sm:$0xff]
  %v154 = vld [vmem:[%s3 + $0x38] sm:$0xff]
  %v155 = vadd.f32 %v117, %v147
  %v156 = vadd.f32 %v120, %v148
  %v157 = vadd.f32 %v125, %v149
  %v158 = vadd.f32 %v128, %v150
  %v159 = vadd.f32 %v133, %v151
  %v160 = vadd.f32 %v136, %v152
  %v161 = vadd.f32 %v141, %v153
  %v162 = vadd.f32 %v144, %v154
  %163 = vst.msk [vmem:[%s4] sm:$0xff] %vm69, %v155
  %164 = vst.msk [vmem:[%s4 + $0x8] sm:$0xff] %vm69, %v156
  %165 = vst.msk [vmem:[%s4 + $0x10] sm:$0xff] %vm69, %v157
  %166 = vst.msk [vmem:[%s4 + $0x18] sm:$0xff] %vm69, %v158
  %167 = vst.msk [vmem:[%s4 + $0x20] sm:$0xff] %vm69, %v159
  %168 = vst.msk [vmem:[%s4 + $0x28] sm:$0xff] %vm69, %v160
  %169 = vst.msk [vmem:[%s4 + $0x30] sm:$0xff] %vm69, %v161
  %170 = vst.msk [vmem:[%s4 + $0x38] sm:$0xff] %vm69, %v162
  // Predicated region
  $region18: #{_block_forward.7} parent=0 // pred_check
    _
  $region19: #{_block_forward.7} parent=0 // pred_check_branch
    %172 = sbr.rel (0) target = $region21
  $region20: #{_block_forward.7} parent=0 // pred_region
    _
  $region21: #{_block_forward.7} parent=0 // pred_fallthru
    _
  // Predicated region
  $region22: #{_block_forward.7} parent=0 // pred_check
    _
  $region23: #{_block_forward.7} parent=0 // pred_check_branch
    %174 = sbr.rel (0) target = $region25
  $region24: #{_block_forward.7} parent=0 // pred_region
    _
  $region25: #{_block_forward.7} parent=0 // pred_fallthru
    _

// kernel: _block_forward.8
$region0: #{_block_forward.8}
  #allocation0 [shape = 'u32[]', space=smem, size = 0x4, offset = 0x4, fixed_abs, tag = 'smem constant byte address 0x4 - core index']
  #allocation1 [shape = 'u32[144,128]{1,0:T(1,128)}', space=vmem, size = 0x12000, scoped, tag = 'internal scratch']
  %s0 = inlined_call_operand.vmem [shape: f32[64,32], index: 0, kind: input, shape index: {}]
  %s1 = inlined_call_operand.vmem [shape: f32[1,32], index: 1, kind: input, shape index: {}]
  %s2 = inlined_call_operand.vmem [shape: f32[1,32], index: 2, kind: input, shape index: {}]
  %s3 = inlined_call_operand.vmem [shape: bf16[32,128], index: 3, kind: input, shape index: {}]
  %s4 = inlined_call_operand.vmem [shape: f32[1,128], index: 4, kind: input, shape index: {}]
  %s5 = inlined_call_operand.vmem [shape: bf16[64,128], index: 5, kind: output, shape index: {}]
  %s6 = sld [smem:[#allocation0]]
  $region30: #{_block_forward.8} parent=0
    _
  %s8 = ssub.s32 1, %s6
  %s9 = scalar_select 0, %s8, %s6
  // Predicated region
  $region2: #{_block_forward.8} parent=0 // pred_check
    _
  $region3: #{_block_forward.8} parent=0 // pred_check_branch
    %11 = sbr.rel (0) target = $region5
  $region4: #{_block_forward.8} parent=0 // pred_region
    _
  $region5: #{_block_forward.8} parent=0 // pred_fallthru
    _
  // Predicated region
  $region6: #{_block_forward.8} parent=0 // pred_check
    _
  $region7: #{_block_forward.8} parent=0 // pred_check_branch
    %13 = sbr.rel (0) target = $region9
  $region8: #{_block_forward.8} parent=0 // pred_region
    _
  $region9: #{_block_forward.8} parent=0 // pred_fallthru
    _
  // Predicated region
  $region10: #{_block_forward.8} parent=0 // pred_check
    _
  $region11: #{_block_forward.8} parent=0 // pred_check_branch
    %15 = sbr.rel (0) target = $region13
  $region12: #{_block_forward.8} parent=0 // pred_region
    _
  $region13: #{_block_forward.8} parent=0 // pred_fallthru
    _
  // Predicated region
  $region14: #{_block_forward.8} parent=0 // pred_check
    _
  $region15: #{_block_forward.8} parent=0 // pred_check_branch
    %17 = sbr.rel (0) target = $region17
  $region16: #{_block_forward.8} parent=0 // pred_region
    _
  $region17: #{_block_forward.8} parent=0 // pred_fallthru
    _
  // Predicated region
  $region18: #{_block_forward.8} parent=0 // pred_check
    _
  $region19: #{_block_forward.8} parent=0 // pred_check_branch
    %19 = sbr.rel (0) target = $region21
  $region20: #{_block_forward.8} parent=0 // pred_region
    _
  $region21: #{_block_forward.8} parent=0 // pred_fallthru
    _
  %v21 = vld [vmem:[%s0] sm:$0xff]
  %v22 = vld [vmem:[%s0 + $0x8] sm:$0xff]
  %v23 = vld [vmem:[%s0 + $0x10] sm:$0xff]
  %v24 = vld [vmem:[%s0 + $0x18] sm:$0xff]
  %v25 = vld [vmem:[%s0 + $0x20] sm:$0xff]
  %v26 = vld [vmem:[%s0 + $0x28] sm:$0xff]
  %v27 = vld [vmem:[%s0 + $0x30] sm:$0xff]
  %v28 = vld [vmem:[%s0 + $0x38] sm:$0xff]
  %vm29 = vcmask 261120
  %v30 = vsel %vm29, %v21, 0.0
  %31 = vadd.xlane.f32.xlu0 %v30
  %v32 = vpop.xlane.xlu0 %31
  %v33 = vsel %vm29, %v22, 0.0
  %34 = vadd.xlane.f32.xlu0 %v33
  %v35 = vpop.xlane.xlu0 %34
  %v36 = vsel %vm29, %v23, 0.0
  %37 = vadd.xlane.f32.xlu0 %v36
  %v38 = vpop.xlane.xlu0 %37
  %v39 = vsel %vm29, %v24, 0.0
  %40 = vadd.xlane.f32.xlu0 %v39
  %v41 = vpop.xlane.xlu0 %40
  %v42 = vsel %vm29, %v25, 0.0
  %43 = vadd.xlane.f32.xlu0 %v42
  %v44 = vpop.xlane.xlu0 %43
  %v45 = vsel %vm29, %v26, 0.0
  %46 = vadd.xlane.f32.xlu0 %v45
  %v47 = vpop.xlane.xlu0 %46
  %v48 = vsel %vm29, %v27, 0.0
  %49 = vadd.xlane.f32.xlu0 %v48
  %v50 = vpop.xlane.xlu0 %49
  %v51 = vsel %vm29, %v28, 0.0
  %52 = vadd.xlane.f32.xlu0 %v51
  %v53 = vpop.xlane.xlu0 %52
  %v54 = vrcp.pop 32.0
  %v55 = vmul.f32 %v32, %v54
  %v56 = vmul.f32 %v35, %v54
  %v57 = vmul.f32 %v38, %v54
  %v58 = vmul.f32 %v41, %v54
  %v59 = vmul.f32 %v44, %v54
  %v60 = vmul.f32 %v47, %v54
  %v61 = vmul.f32 %v50, %v54
  %v62 = vmul.f32 %v53, %v54
  %v63 = vsub.f32 %v21, %v55
  %v64 = vsub.f32 %v22, %v56
  %v65 = vsub.f32 %v23, %v57
  %v66 = vsub.f32 %v24, %v58
  %v67 = vsub.f32 %v25, %v59
  %v68 = vsub.f32 %v26, %v60
  %v69 = vsub.f32 %v27, %v61
  %v70 = vsub.f32 %v28, %v62
  %v71 = vmul.f32 %v63, %v63
  %v72 = vmul.f32 %v64, %v64
  %v73 = vmul.f32 %v65, %v65
  %v74 = vmul.f32 %v66, %v66
  %v75 = vmul.f32 %v67, %v67
  %v76 = vmul.f32 %v68, %v68
  %v77 = vmul.f32 %v69, %v69
  %v78 = vmul.f32 %v70, %v70
  %v79 = vsel %vm29, %v71, 0.0
  %80 = vadd.xlane.f32.xlu0 %v79
  %v81 = vpop.xlane.xlu0 %80
  %v82 = vsel %vm29, %v72, 0.0
  %83 = vadd.xlane.f32.xlu0 %v82
  %v84 = vpop.xlane.xlu0 %83
  %v85 = vsel %vm29, %v73, 0.0
  %86 = vadd.xlane.f32.xlu0 %v85
  %v87 = vpop.xlane.xlu0 %86
  %v88 = vsel %vm29, %v74, 0.0
  %89 = vadd.xlane.f32.xlu0 %v88
  %v90 = vpop.xlane.xlu0 %89
  %v91 = vsel %vm29, %v75, 0.0
  %92 = vadd.xlane.f32.xlu0 %v91
  %v93 = vpop.xlane.xlu0 %92
  %v94 = vsel %vm29, %v76, 0.0
  %95 = vadd.xlane.f32.xlu0 %v94
  %v96 = vpop.xlane.xlu0 %95
  %v97 = vsel %vm29, %v77, 0.0
  %98 = vadd.xlane.f32.xlu0 %v97
  %v99 = vpop.xlane.xlu0 %98
  %v100 = vsel %vm29, %v78, 0.0
  %101 = vadd.xlane.f32.xlu0 %v100
  %v102 = vpop.xlane.xlu0 %101
  %v103 = vmul.f32 %v81, %v54
  %v104 = vmul.f32 %v84, %v54
  %v105 = vmul.f32 %v87, %v54
  %v106 = vmul.f32 %v90, %v54
  %v107 = vmul.f32 %v93, %v54
  %v108 = vmul.f32 %v96, %v54
  %v109 = vmul.f32 %v99, %v54
  %v110 = vmul.f32 %v102, %v54
  %v111 = vadd.f32 %v103, 1e-05
  %v112 = vadd.f32 %v104, 1e-05
  %v113 = vadd.f32 %v105, 1e-05
  %v114 = vadd.f32 %v106, 1e-05
  %v115 = vadd.f32 %v107, 1e-05
  %v116 = vadd.f32 %v108, 1e-05
  %v117 = vadd.f32 %v109, 1e-05
  %v118 = vadd.f32 %v110, 1e-05
  %v119 = vrsqrt.pop %v111
  %v120 = vrsqrt.pop %v112
  %v121 = vrsqrt.pop %v113
  %v122 = vrsqrt.pop %v114
  %v123 = vrsqrt.pop %v115
  %v124 = vrsqrt.pop %v116
  %v125 = vrsqrt.pop %v117
  %v126 = vrsqrt.pop %v118
  %v127 = vmul.f32 %v63, %v119
  %v128 = vmul.f32 %v64, %v120
  %v129 = vmul.f32 %v65, %v121
  %v130 = vmul.f32 %v66, %v122
  %v131 = vmul.f32 %v67, %v123
  %v132 = vmul.f32 %v68, %v124
  %v133 = vmul.f32 %v69, %v125
  %v134 = vmul.f32 %v70, %v126
  %v135 = vld [vmem:[%s1] sm:$0x1]
  %v137 = vlaneseq
  %v138 = vshrl.u32 %v137, 7
  %v139 = vsub.s32 0, %v138
  %v140 = vrot.slane %v135, %v139
  %v142 = vmul.f32 %v127, %v140
  %v143 = vmul.f32 %v128, %v140
  %v144 = vmul.f32 %v129, %v140
  %v145 = vmul.f32 %v130, %v140
  %v146 = vmul.f32 %v131, %v140
  %v147 = vmul.f32 %v132, %v140
  %v148 = vmul.f32 %v133, %v140
  %v149 = vmul.f32 %v134, %v140
  %v150 = vld [vmem:[%s2] sm:$0x1]
  %v152 = vlaneseq
  %v153 = vshrl.u32 %v152, 7
  %v154 = vsub.s32 0, %v153
  %v155 = vrot.slane %v150, %v154
  %v157 = vadd.f32 %v142, %v155
  %v158 = vadd.f32 %v143, %v155
  %v159 = vadd.f32 %v144, %v155
  %v160 = vadd.f32 %v145, %v155
  %v161 = vadd.f32 %v146, %v155
  %v162 = vadd.f32 %v147, %v155
  %v163 = vadd.f32 %v148, %v155
  %v164 = vadd.f32 %v149, %v155
  %v165 = vpack.c.bf16 %v158, %v157
  %v166 = vpack.c.bf16 %v160, %v159
  %v167 = vpack.c.bf16 %v162, %v161
  %v168 = vpack.c.bf16 %v164, %v163
  %v169 = vld [vmem:[%s3] sm:$0xf]
  %v170 = vld [vmem:[%s3 + $0x4] sm:$0xf]
  %v171 = vld [vmem:[%s3 + $0x8] sm:$0xf]
  %v172 = vld [vmem:[%s3 + $0xc] sm:$0xf]
  %v173 = vld [vmem:[%s4] sm:$0x1]
  %v175 = vlaneseq
  %v176 = vshrl.u32 %v175, 7
  %v177 = vsub.s32 0, %v176
  %v178 = vrot.slane %v173, %v177
  %v184 = vunpack.c.l.b16 %v169
  %v185 = vunpack.c.l.b16 %v170
  %v186 = vunpack.c.l.b16 %v171
  %v187 = vunpack.c.l.b16 %v172
  %v188 = vpack.c.b16 %v185, %v184
  %v189 = vpack.c.b16 %v187, %v186
  %v193 = vsel %vm29, %v165, 0
  %v196 = vsel %vm29, %v166, 0
  %v199 = vsel %vm29, %v167, 0
  %v202 = vsel %vm29, %v168, 0
  %204 = vmatprep.subr.bf16.mxu0 0
  %205 = vmatpush1.bf16.msra.mxu0 0
  %206 = vmatprep.subr.bf16.mxu0 0
  %207 = vmatpush1.bf16.msra.mxu0 0
  %208 = vmatprep.subr.bf16.mxu0 0
  %209 = vmatpush1.bf16.msra.mxu0 0
  %210 = vmatprep.subr.bf16.mxu0 0
  %211 = vmatpush1.bf16.msra.mxu0 0
  %212 = vmatprep.subr.bf16.mxu0 0
  %213 = vmatpush1.bf16.msra.mxu0 0
  %214 = vmatprep.subr.bf16.mxu0 0
  %215 = vmatpush1.bf16.msra.mxu0 0
  %216 = vmatprep.subr.bf16.mxu0 0
  %217 = vmatpush1.bf16.msra.mxu0 %v189
  %218 = vmatprep.subr.bf16.mxu0 0
  %219 = vmatpush1.bf16.msra.mxu0 %v188
  %220 = vmatprep.subr.bf16.mxu0 0
  %221 = vmatpush2.bf16.msra.mxu0 0
  %222 = vmatprep.subr.bf16.mxu0 0
  %223 = vmatpush2.bf16.msra.mxu0 0
  %224 = vmatprep.subr.bf16.mxu0 0
  %225 = vmatpush2.bf16.msra.mxu0 0
  %226 = vmatprep.subr.bf16.mxu0 0
  %227 = vmatpush2.bf16.msra.mxu0 0
  %228 = vmatprep.subr.bf16.mxu0 0
  %229 = vmatpush2.bf16.msra.mxu0 0
  %230 = vmatprep.subr.bf16.mxu0 0
  %231 = vmatpush2.bf16.msra.mxu0 0
  %232 = vmatprep.subr.bf16.mxu0 0
  %233 = vmatpush2.bf16.msra.mxu0 0
  %234 = vmatprep.subr.bf16.mxu0 0
  %235 = vmatpush2.bf16.msra.mxu0 0
  %236 = vmatprep.mubr.bf16.mxu0 0
  %237 = vmatmul.mubr.bf16.gmra.mxu0 %v193
  %v238 = vpop.f32.mrf.mxu0
  %v239 = vadd.f32 %v178, %v238
  %v240 = vpop.f32.mrf.mxu0
  %v241 = vpop.f32.mrf.mxu0
  %v242 = vadd.f32 %v178, %v241
  %v243 = vpop.f32.mrf.mxu0
  %244 = vmatprep.mubr.bf16.mxu0 0
  %245 = vmatmul.mubr.bf16.gmra.mxu0 %v196
  %v246 = vpop.f32.mrf.mxu0
  %v247 = vadd.f32 %v178, %v246
  %v248 = vpop.f32.mrf.mxu0
  %v249 = vpop.f32.mrf.mxu0
  %v250 = vadd.f32 %v178, %v249
  %v251 = vpop.f32.mrf.mxu0
  %252 = vmatprep.mubr.bf16.mxu0 0
  %253 = vmatmul.mubr.bf16.gmra.mxu0 %v199
  %v254 = vpop.f32.mrf.mxu0
  %v255 = vadd.f32 %v178, %v254
  %v256 = vpop.f32.mrf.mxu0
  %v257 = vpop.f32.mrf.mxu0
  %v258 = vadd.f32 %v178, %v257
  %v259 = vpop.f32.mrf.mxu0
  %260 = vmatprep.mubr.bf16.mxu0 0
  %261 = vmatmul.mubr.bf16.gmra.mxu0 %v202
  %v262 = vpop.f32.mrf.mxu0
  %v263 = vadd.f32 %v178, %v262
  %v264 = vpop.f32.mrf.mxu0
  %v265 = vpop.f32.mrf.mxu0
  %v266 = vadd.f32 %v178, %v265
  %v267 = vpop.f32.mrf.mxu0
  %268 = vdwg.mxu0
  %v269 = vmul.f32 %v239, 0.5
  %v270 = vmul.f32 %v242, 0.5
  %v271 = vmul.f32 %v247, 0.5
  %v272 = vmul.f32 %v250, 0.5
  %v273 = vmul.f32 %v255, 0.5
  %v274 = vmul.f32 %v258, 0.5
  %v275 = vmul.f32 %v263, 0.5
  %v276 = vmul.f32 %v266, 0.5
  %v277 = vmul.f32 %v239, 0.70710677
  %v278 = vmul.f32 %v242, 0.70710677
  %v279 = vmul.f32 %v247, 0.70710677
  %v280 = vmul.f32 %v250, 0.70710677
  %v281 = vmul.f32 %v255, 0.70710677
  %v282 = vmul.f32 %v258, 0.70710677
  %v283 = vmul.f32 %v263, 0.70710677
  %v284 = vmul.f32 %v266, 0.70710677
  %v285 = verf.f32.pop %v277
  %v286 = verf.f32.pop %v278
  %v287 = verf.f32.pop %v279
  %v288 = verf.f32.pop %v280
  %v289 = verf.f32.pop %v281
  %v290 = verf.f32.pop %v282
  %v291 = verf.f32.pop %v283
  %v292 = verf.f32.pop %v284
  %v293 = vadd.f32 %v285, 1.0
  %v294 = vadd.f32 %v286, 1.0
  %v295 = vadd.f32 %v287, 1.0
  %v296 = vadd.f32 %v288, 1.0
  %v297 = vadd.f32 %v289, 1.0
  %v298 = vadd.f32 %v290, 1.0
  %v299 = vadd.f32 %v291, 1.0
  %v300 = vadd.f32 %v292, 1.0
  %v301 = vmul.f32 %v269, %v293
  %v302 = vmul.f32 %v270, %v294
  %v303 = vmul.f32 %v271, %v295
  %v304 = vmul.f32 %v272, %v296
  %v305 = vmul.f32 %v273, %v297
  %v306 = vmul.f32 %v274, %v298
  %v307 = vmul.f32 %v275, %v299
  %v308 = vmul.f32 %v276, %v300
  %v309 = vpack.c.bf16 %v302, %v301
  %v310 = vpack.c.bf16 %v304, %v303
  %v311 = vpack.c.bf16 %v306, %v305
  %v312 = vpack.c.bf16 %v308, %v307
  %v317 = vunpack.c.l.b16 %v309
  %v318 = vunpack.c.h.b16 %v309
  %v319 = vunpack.c.l.b16 %v310
  %v320 = vunpack.c.h.b16 %v310
  %v321 = vunpack.c.l.b16 %v311
  %v322 = vunpack.c.h.b16 %v311
  %v323 = vunpack.c.l.b16 %v312
  %v324 = vunpack.c.h.b16 %v312
  %v325 = vpack.c.b16 %v317, %v317
  %v326 = vpack.c.b16 %v318, %v318
  %v327 = vpack.c.b16 %v319, %v319
  %v328 = vpack.c.b16 %v320, %v320
  %v329 = vpack.c.b16 %v321, %v321
  %v330 = vpack.c.b16 %v322, %v322
  %v331 = vpack.c.b16 %v323, %v323
  %v332 = vpack.c.b16 %v324, %v324
  %341 = vst [vmem:[%s5] sm:$0xf] %v325
  %342 = vst [vmem:[%s5 + $0x4] sm:$0xf] %v326
  %343 = vst [vmem:[%s5 + $0x8] sm:$0xf] %v327
  %344 = vst [vmem:[%s5 + $0xc] sm:$0xf] %v328
  %345 = vst [vmem:[%s5 + $0x10] sm:$0xf] %v329
  %346 = vst [vmem:[%s5 + $0x14] sm:$0xf] %v330
  %347 = vst [vmem:[%s5 + $0x18] sm:$0xf] %v331
  %348 = vst [vmem:[%s5 + $0x1c] sm:$0xf] %v332
  // Predicated region
  $region22: #{_block_forward.8} parent=0 // pred_check
    _
  $region23: #{_block_forward.8} parent=0 // pred_check_branch
    %350 = sbr.rel (0) target = $region25
  $region24: #{_block_forward.8} parent=0 // pred_region
    _
  $region25: #{_block_forward.8} parent=0 // pred_fallthru
    _
  // Predicated region
  $region26: #{_block_forward.8} parent=0 // pred_check
    _
  $region27: #{_block_forward.8} parent=0 // pred_check_branch
    %352 = sbr.rel (0) target = $region29
  $region28: #{_block_forward.8} parent=0 // pred_region
    _
  $region29: #{_block_forward.8} parent=0 // pred_fallthru
    _

// kernel: _block_forward.9
$region0: #{_block_forward.9}
  #allocation0 [shape = 'u32[]', space=smem, size = 0x4, offset = 0x4, fixed_abs, tag = 'smem constant byte address 0x4 - core index']
  #allocation1 [shape = 'u32[144,128]{1,0:T(1,128)}', space=vmem, size = 0x12000, scoped, tag = 'internal scratch']
  %s0 = inlined_call_operand.vmem [shape: bf16[64,128], index: 0, kind: input, shape index: {}]
  %s1 = inlined_call_operand.vmem [shape: bf16[128,32], index: 1, kind: input, shape index: {}]
  %s2 = inlined_call_operand.vmem [shape: f32[1,32], index: 2, kind: input, shape index: {}]
  %s3 = inlined_call_operand.vmem [shape: f32[64,32], index: 3, kind: input, shape index: {}]
  %s4 = inlined_call_operand.vmem [shape: f32[64,32], index: 4, kind: output, shape index: {}]
  %s5 = sld [smem:[#allocation0]]
  $region26: #{_block_forward.9} parent=0
    _
  %s7 = ssub.s32 1, %s5
  %s8 = scalar_select 0, %s7, %s5
  // Predicated region
  $region2: #{_block_forward.9} parent=0 // pred_check
    _
  $region3: #{_block_forward.9} parent=0 // pred_check_branch
    %10 = sbr.rel (0) target = $region5
  $region4: #{_block_forward.9} parent=0 // pred_region
    _
  $region5: #{_block_forward.9} parent=0 // pred_fallthru
    _
  // Predicated region
  $region6: #{_block_forward.9} parent=0 // pred_check
    _
  $region7: #{_block_forward.9} parent=0 // pred_check_branch
    %12 = sbr.rel (0) target = $region9
  $region8: #{_block_forward.9} parent=0 // pred_region
    _
  $region9: #{_block_forward.9} parent=0 // pred_fallthru
    _
  // Predicated region
  $region10: #{_block_forward.9} parent=0 // pred_check
    _
  $region11: #{_block_forward.9} parent=0 // pred_check_branch
    %14 = sbr.rel (0) target = $region13
  $region12: #{_block_forward.9} parent=0 // pred_region
    _
  $region13: #{_block_forward.9} parent=0 // pred_fallthru
    _
  // Predicated region
  $region14: #{_block_forward.9} parent=0 // pred_check
    _
  $region15: #{_block_forward.9} parent=0 // pred_check_branch
    %16 = sbr.rel (0) target = $region17
  $region16: #{_block_forward.9} parent=0 // pred_region
    _
  $region17: #{_block_forward.9} parent=0 // pred_fallthru
    _
  %v18 = vld [vmem:[%s0] sm:$0xf]
  %v19 = vld [vmem:[%s0 + $0x4] sm:$0xf]
  %v20 = vld [vmem:[%s0 + $0x8] sm:$0xf]
  %v21 = vld [vmem:[%s0 + $0xc] sm:$0xf]
  %v22 = vld [vmem:[%s0 + $0x10] sm:$0xf]
  %v23 = vld [vmem:[%s0 + $0x14] sm:$0xf]
  %v24 = vld [vmem:[%s0 + $0x18] sm:$0xf]
  %v25 = vld [vmem:[%s0 + $0x1c] sm:$0xf]
  %v26 = vld [vmem:[%s1] sm:$0xf]
  %v27 = vld [vmem:[%s1 + $0x4] sm:$0xf]
  %v28 = vld [vmem:[%s1 + $0x8] sm:$0xf]
  %v29 = vld [vmem:[%s1 + $0xc] sm:$0xf]
  %v30 = vld [vmem:[%s1 + $0x10] sm:$0xf]
  %v31 = vld [vmem:[%s1 + $0x14] sm:$0xf]
  %v32 = vld [vmem:[%s1 + $0x18] sm:$0xf]
  %v33 = vld [vmem:[%s1 + $0x1c] sm:$0xf]
  %v34 = vld [vmem:[%s1 + $0x20] sm:$0xf]
  %v35 = vld [vmem:[%s1 + $0x24] sm:$0xf]
  %v36 = vld [vmem:[%s1 + $0x28] sm:$0xf]
  %v37 = vld [vmem:[%s1 + $0x2c] sm:$0xf]
  %v38 = vld [vmem:[%s1 + $0x30] sm:$0xf]
  %v39 = vld [vmem:[%s1 + $0x34] sm:$0xf]
  %v40 = vld [vmem:[%s1 + $0x38] sm:$0xf]
  %v41 = vld [vmem:[%s1 + $0x3c] sm:$0xf]
  %v42 = vld [vmem:[%s2] sm:$0x1]
  %v44 = vlaneseq
  %v45 = vshrl.u32 %v44, 7
  %v46 = vsub.s32 0, %v45
  %v47 = vrot.slane %v42, %v46
  %v57 = vunpack.c.l.b16 %v18
  %v58 = vunpack.c.l.b16 %v19
  %v59 = vunpack.c.l.b16 %v20
  %v60 = vunpack.c.l.b16 %v21
  %v61 = vunpack.c.l.b16 %v22
  %v62 = vunpack.c.l.b16 %v23
  %v63 = vunpack.c.l.b16 %v24
  %v64 = vunpack.c.l.b16 %v25
  %v65 = vpack.c.b16 %v58, %v57
  %v66 = vpack.c.b16 %v60, %v59
  %v67 = vpack.c.b16 %v62, %v61
  %v68 = vpack.c.b16 %v64, %v63
  %v89 = vunpack.c.l.b16 %v26
  %v90 = vunpack.c.l.b16 %v27
  %v91 = vunpack.c.l.b16 %v28
  %v92 = vunpack.c.l.b16 %v29
  %v93 = vunpack.c.l.b16 %v30
  %v94 = vunpack.c.l.b16 %v31
  %v95 = vunpack.c.l.b16 %v32
  %v96 = vunpack.c.l.b16 %v33
  %v97 = vunpack.c.l.b16 %v34
  %v98 = vunpack.c.l.b16 %v35
  %v99 = vunpack.c.l.b16 %v36
  %v100 = vunpack.c.l.b16 %v37
  %v101 = vunpack.c.l.b16 %v38
  %v102 = vunpack.c.l.b16 %v39
  %v103 = vunpack.c.l.b16 %v40
  %v104 = vunpack.c.l.b16 %v41
  %v105 = vpack.c.b16 %v90, %v89
  %v106 = vpack.c.b16 %v92, %v91
  %v107 = vpack.c.b16 %v94, %v93
  %v108 = vpack.c.b16 %v96, %v95
  %v109 = vpack.c.b16 %v98, %v97
  %v110 = vpack.c.b16 %v100, %v99
  %v111 = vpack.c.b16 %v102, %v101
  %v112 = vpack.c.b16 %v104, %v103
  %121 = vmatprep.subr.bf16.mxu0 0
  %122 = vmatpush1.bf16.msra.mxu0 %v112
  %123 = vmatprep.subr.bf16.mxu0 0
  %124 = vmatpush1.bf16.msra.mxu0 %v111
  %125 = vmatprep.subr.bf16.mxu0 0
  %126 = vmatpush1.bf16.msra.mxu0 %v110
  %127 = vmatprep.subr.bf16.mxu0 0
  %128 = vmatpush1.bf16.msra.mxu0 %v109
  %129 = vmatprep.subr.bf16.mxu0 0
  %130 = vmatpush1.bf16.msra.mxu0 %v108
  %131 = vmatprep.subr.bf16.mxu0 0
  %132 = vmatpush1.bf16.msra.mxu0 %v107
  %133 = vmatprep.subr.bf16.mxu0 0
  %134 = vmatpush1.bf16.msra.mxu0 %v106
  %135 = vmatprep.subr.bf16.mxu0 0
  %136 = vmatpush1.bf16.msra.mxu0 %v105
  %137 = vmatprep.subr.bf16.mxu0 0
  %138 = vmatpush2.bf16.msra.mxu0 0
  %139 = vmatprep.subr.bf16.mxu0 0
  %140 = vmatpush2.bf16.msra.mxu0 0
  %141 = vmatprep.subr.bf16.mxu0 0
  %142 = vmatpush2.bf16.msra.mxu0 0
  %143 = vmatprep.subr.bf16.mxu0 0
  %144 = vmatpush2.bf16.msra.mxu0 0
  %145 = vmatprep.subr.bf16.mxu0 0
  %146 = vmatpush2.bf16.msra.mxu0 0
  %147 = vmatprep.subr.bf16.mxu0 0
  %148 = vmatpush2.bf16.msra.mxu0 0
  %149 = vmatprep.subr.bf16.mxu0 0
  %150 = vmatpush2.bf16.msra.mxu0 0
  %151 = vmatprep.subr.bf16.mxu0 0
  %152 = vmatpush2.bf16.msra.mxu0 0
  %153 = vmatprep.mubr.bf16.mxu0 0
  %154 = vmatmul.mubr.bf16.gmra.mxu0 %v65
  %v155 = vpop.f32.mrf.mxu0
  %v156 = vadd.f32 %v47, %v155
  %v157 = vpop.f32.mrf.mxu0
  %v158 = vpop.f32.mrf.mxu0
  %v159 = vadd.f32 %v47, %v158
  %v160 = vpop.f32.mrf.mxu0
  %161 = vmatprep.mubr.bf16.mxu0 0
  %162 = vmatmul.mubr.bf16.gmra.mxu0 %v66
  %v163 = vpop.f32.mrf.mxu0
  %v164 = vadd.f32 %v47, %v163
  %v165 = vpop.f32.mrf.mxu0
  %v166 = vpop.f32.mrf.mxu0
  %v167 = vadd.f32 %v47, %v166
  %v168 = vpop.f32.mrf.mxu0
  %169 = vmatprep.mubr.bf16.mxu0 0
  %170 = vmatmul.mubr.bf16.gmra.mxu0 %v67
  %v171 = vpop.f32.mrf.mxu0
  %v172 = vadd.f32 %v47, %v171
  %v173 = vpop.f32.mrf.mxu0
  %v174 = vpop.f32.mrf.mxu0
  %v175 = vadd.f32 %v47, %v174
  %v176 = vpop.f32.mrf.mxu0
  %177 = vmatprep.mubr.bf16.mxu0 0
  %178 = vmatmul.mubr.bf16.gmra.mxu0 %v68
  %v179 = vpop.f32.mrf.mxu0
  %v180 = vadd.f32 %v47, %v179
  %v181 = vpop.f32.mrf.mxu0
  %v182 = vpop.f32.mrf.mxu0
  %v183 = vadd.f32 %v47, %v182
  %v184 = vpop.f32.mrf.mxu0
  %185 = vdwg.mxu0
  %v186 = vld [vmem:[%s3] sm:$0xff]
  %v187 = vld [vmem:[%s3 + $0x8] sm:$0xff]
  %v188 = vld [vmem:[%s3 + $0x10] sm:$0xff]
  %v189 = vld [vmem:[%s3 + $0x18] sm:$0xff]
  %v190 = vld [vmem:[%s3 + $0x20] sm:$0xff]
  %v191 = vld [vmem:[%s3 + $0x28] sm:$0xff]
  %v192 = vld [vmem:[%s3 + $0x30] sm:$0xff]
  %v193 = vld [vmem:[%s3 + $0x38] sm:$0xff]
  %v194 = vadd.f32 %v156, %v186
  %v195 = vadd.f32 %v159, %v187
  %v196 = vadd.f32 %v164, %v188
  %v197 = vadd.f32 %v167, %v189
  %v198 = vadd.f32 %v172, %v190
  %v199 = vadd.f32 %v175, %v191
  %v200 = vadd.f32 %v180, %v192
  %v201 = vadd.f32 %v183, %v193
  %vm202 = vcmask 261120
  %203 = vst.msk [vmem:[%s4] sm:$0xff] %vm202, %v194
  %204 = vst.msk [vmem:[%s4 + $0x8] sm:$0xff] %vm202, %v195
  %205 = vst.msk [vmem:[%s4 + $0x10] sm:$0xff] %vm202, %v196
  %206 = vst.msk [vmem:[%s4 + $0x18] sm:$0xff] %vm202, %v197
  %207 = vst.msk [vmem:[%s4 + $0x20] sm:$0xff] %vm202, %v198
  %208 = vst.msk [vmem:[%s4 + $0x28] sm:$0xff] %vm202, %v199
  %209 = vst.msk [vmem:[%s4 + $0x30] sm:$0xff] %vm202, %v200
  %210 = vst.msk [vmem:[%s4 + $0x38] sm:$0xff] %vm202, %v201
  // Predicated region
  $region18: #{_block_forward.9} parent=0 // pred_check
    _
  $region19: #{_block_forward.9} parent=0 // pred_check_branch
    %212 = sbr.rel (0) target = $region21
  $region20: #{_block_forward.9} parent=0 // pred_region
    _
  $region21: #{_block_forward.9} parent=0 // pred_fallthru
    _
  // Predicated region
  $region22: #{_block_forward.9} parent=0 // pred_check
    _
  $region23: #{_block_forward.9} parent=0 // pred_check_branch
    %214 = sbr.rel (0) target = $region25
  $region24: #{_block_forward.9} parent=0 // pred_region
    _
  $region25: #{_block_forward.9} parent=0 // pred_fallthru
    _

// kernel: _block_forward.6
$region0: #{_block_forward.6}
  #allocation0 [shape = 'u32[]', space=smem, size = 0x4, offset = 0x4, fixed_abs, tag = 'smem constant byte address 0x4 - core index']
  #allocation1 [shape = 'u32[144,128]{1,0:T(1,128)}', space=vmem, size = 0x12000, scoped, tag = 'internal scratch']
  %s0 = inlined_call_operand.vmem [shape: bf16[8,16,32], index: 0, kind: input, shape index: {}]
  %s1 = inlined_call_operand.vmem [shape: bf16[8,16,32], index: 1, kind: input, shape index: {}]
  %s2 = inlined_call_operand.vmem [shape: bf16[8,16,32], index: 2, kind: input, shape index: {}]
  %s3 = inlined_call_operand.vmem [shape: s32[8,6,16,16], index: 3, kind: input, shape index: {}]
  %s4 = inlined_call_operand.vmem [shape: f32[8,1,16], index: 4, kind: input, shape index: {}]
  %s5 = inlined_call_operand.vmem [shape: bf16[96,32], index: 5, kind: input, shape index: {}]
  %s6 = inlined_call_operand.vmem [shape: bf16[96,32], index: 6, kind: input, shape index: {}]
  %s7 = inlined_call_operand.vmem [shape: bf16[96,32], index: 7, kind: input, shape index: {}]
  %s8 = inlined_call_operand.vmem [shape: bf16[8,16,32], index: 8, kind: output, shape index: {}]
  %s9 = sld [smem:[#allocation0]]
  $region65: #{_block_forward.6} parent=0
    _
  %s11 = ssub.s32 1, %s9
  %s12 = scalar_select 0, %s11, %s9
  loop: start=0, step=1, limit=10
  $region2: #{_block_forward.6} parent=0 // loop_pre_header
    _
  $region3: #{_block_forward.6} parent=0 // loop_header
    %s14 = sphi 0, %s18
    %p15 = scmp.ge.s32.totalorder %s14, 10
    %s24 = sphi 0, %s26
    %s27 = sphi 0, %s24
    %s28 = sphi 0, %s27
    %s44 = sphi 0, %s28
    %s50 = sphi 0, %s52
    %s53 = sphi 0, %s50
    %s54 = sphi 0, %s53
    %s70 = sphi 0, %s54
    %s76 = sphi 0, %s78
    %s79 = sphi 0, %s76
    %s80 = sphi 0, %s79
    %s96 = sphi 0, %s80
    %s102 = sphi 0, %s104
    %s105 = sphi 0, %s102
    %s106 = sphi 0, %s105
    %s122 = sphi 0, %s106
    %s128 = sphi 0, %s130
    %s131 = sphi 0, %s128
    %s132 = sphi 0, %s131
    %s148 = sphi 0, %s132
    %s152 = sphi 0, %s152
    %s154 = sphi 0, %s152
    %s155 = sphi 0, %s154
    %s169 = sphi 0, %s155
    %s173 = sphi 0, %s173
    %s175 = sphi 0, %s173
    %s176 = sphi 0, %s175
    %s190 = sphi 0, %s176
    %s194 = sphi 0, %s194
    %s196 = sphi 0, %s194
    %s197 = sphi 0, %s196
    %s211 = sphi 0, %s197
    %s217 = sphi 0, %s219
    %s220 = sphi 0, %s217
    %s221 = sphi 0, %s220
    %s237 = sphi 0, %s221
  $region4: #{_block_forward.6} parent=0 // loop_header_branch
    %17 = sbr.rel (%p15) target = $region8
  $region5: #{_block_forward.6} parent=0 // loop_body
    %s19 = ssub.s32 %s14, 1
    %s20 = ssub.s32 %s14, 2
    %s21 = sadd.s32 %s14, 1
    %s22 = ssub.s32 %s14, %s21
    %p23 = scmp.eq.s32.totalorder %s22, 0
    %s25 = sadd.s32 %s24, 1
    %s26 = scalar_select %p23, %s24, %s25
    %p29 = pneg %p23
    %p30 = scmp.eq.s32.totalorder %s14, 7
    %p31 = por %p29, %p30
    %p32 = scmp.ne.s32.totalorder %s24, %s27
    %p33 = scmp.eq.s32.totalorder %s14, 0
    %p34 = por %p32, %p33
    %p35 = scmp.ne.s32.totalorder %s24, %s27
    %p36 = scmp.eq.s32.totalorder %s19, 7
    %p37 = por %p35, %p36
    %p38 = scmp.ne.s32.totalorder %s27, %s28
    %p39 = scmp.eq.s32.totalorder %s19, 0
    %p40 = por %p38, %p39
    %p41 = scmp.ne.s32.totalorder %s27, %s28
    %p42 = scmp.eq.s32.totalorder %s20, 7
    %p43 = por %p41, %p42
    %p45 = scmp.ne.s32.totalorder %s28, %s44
    %p46 = scmp.eq.s32.totalorder %s20, 0
    %p47 = por %p45, %p46
    %s48 = ssub.s32 %s14, %s21
    %p49 = scmp.eq.s32.totalorder %s48, 0
    %s51 = sadd.s32 %s50, 1
    %s52 = scalar_select %p49, %s50, %s51
    %p55 = pneg %p49
    %p56 = scmp.eq.s32.totalorder %s14, 7
    %p57 = por %p55, %p56
    %p58 = scmp.ne.s32.totalorder %s50, %s53
    %p59 = scmp.eq.s32.totalorder %s14, 0
    %p60 = por %p58, %p59
    %p61 = scmp.ne.s32.totalorder %s50, %s53
    %p62 = scmp.eq.s32.totalorder %s19, 7
    %p63 = por %p61, %p62
    %p64 = scmp.ne.s32.totalorder %s53, %s54
    %p65 = scmp.eq.s32.totalorder %s19, 0
    %p66 = por %p64, %p65
    %p67 = scmp.ne.s32.totalorder %s53, %s54
    %p68 = scmp.eq.s32.totalorder %s20, 7
    %p69 = por %p67, %p68
    %p71 = scmp.ne.s32.totalorder %s54, %s70
    %p72 = scmp.eq.s32.totalorder %s20, 0
    %p73 = por %p71, %p72
    %s74 = ssub.s32 %s14, %s21
    %p75 = scmp.eq.s32.totalorder %s74, 0
    %s77 = sadd.s32 %s76, 1
    %s78 = scalar_select %p75, %s76, %s77
    %p81 = pneg %p75
    %p82 = scmp.eq.s32.totalorder %s14, 7
    %p83 = por %p81, %p82
    %p84 = scmp.ne.s32.totalorder %s76, %s79
    %p85 = scmp.eq.s32.totalorder %s14, 0
    %p86 = por %p84, %p85
    %p87 = scmp.ne.s32.totalorder %s76, %s79
    %p88 = scmp.eq.s32.totalorder %s19, 7
    %p89 = por %p87, %p88
    %p90 = scmp.ne.s32.totalorder %s79, %s80
    %p91 = scmp.eq.s32.totalorder %s19, 0
    %p92 = por %p90, %p91
    %p93 = scmp.ne.s32.totalorder %s79, %s80
    %p94 = scmp.eq.s32.totalorder %s20, 7
    %p95 = por %p93, %p94
    %p97 = scmp.ne.s32.totalorder %s80, %s96
    %p98 = scmp.eq.s32.totalorder %s20, 0
    %p99 = por %p97, %p98
    %s100 = ssub.s32 %s14, %s21
    %p101 = scmp.eq.s32.totalorder %s100, 0
    %s103 = sadd.s32 %s102, 1
    %s104 = scalar_select %p101, %s102, %s103
    %p107 = pneg %p101
    %p108 = scmp.eq.s32.totalorder %s14, 7
    %p109 = por %p107, %p108
    %p110 = scmp.ne.s32.totalorder %s102, %s105
    %p111 = scmp.eq.s32.totalorder %s14, 0
    %p112 = por %p110, %p111
    %p113 = scmp.ne.s32.totalorder %s102, %s105
    %p114 = scmp.eq.s32.totalorder %s19, 7
    %p115 = por %p113, %p114
    %p116 = scmp.ne.s32.totalorder %s105, %s106
    %p117 = scmp.eq.s32.totalorder %s19, 0
    %p118 = por %p116, %p117
    %p119 = scmp.ne.s32.totalorder %s105, %s106
    %p120 = scmp.eq.s32.totalorder %s20, 7
    %p121 = por %p119, %p120
    %p123 = scmp.ne.s32.totalorder %s106, %s122
    %p124 = scmp.eq.s32.totalorder %s20, 0
    %p125 = por %p123, %p124
    %s126 = ssub.s32 %s14, %s21
    %p127 = scmp.eq.s32.totalorder %s126, 0
    %s129 = sadd.s32 %s128, 1
    %s130 = scalar_select %p127, %s128, %s129
    %p133 = pneg %p127
    %p134 = scmp.eq.s32.totalorder %s14, 7
    %p135 = por %p133, %p134
    %p136 = scmp.ne.s32.totalorder %s128, %s131
    %p137 = scmp.eq.s32.totalorder %s14, 0
    %p138 = por %p136, %p137
    %p139 = scmp.ne.s32.totalorder %s128, %s131
    %p140 = scmp.eq.s32.totalorder %s19, 7
    %p141 = por %p139, %p140
    %p142 = scmp.ne.s32.totalorder %s131, %s132
    %p143 = scmp.eq.s32.totalorder %s19, 0
    %p144 = por %p142, %p143
    %p145 = scmp.ne.s32.totalorder %s131, %s132
    %p146 = scmp.eq.s32.totalorder %s20, 7
    %p147 = por %p145, %p146
    %p149 = scmp.ne.s32.totalorder %s132, %s148
    %p150 = scmp.eq.s32.totalorder %s20, 0
    %p151 = por %p149, %p150
    %s153 = sadd.s32 %s152, 1
    %p156 = scmp.eq.s32.totalorder %s14, 7
    %p157 = scmp.ne.s32.totalorder %s152, %s154
    %p158 = scmp.eq.s32.totalorder %s14, 0
    %p159 = por %p157, %p158
    %p160 = scmp.ne.s32.totalorder %s152, %s154
    %p161 = scmp.eq.s32.totalorder %s19, 7
    %p162 = por %p160, %p161
    %p163 = scmp.ne.s32.totalorder %s154, %s155
    %p164 = scmp.eq.s32.totalorder %s19, 0
    %p165 = por %p163, %p164
    %p166 = scmp.ne.s32.totalorder %s154, %s155
    %p167 = scmp.eq.s32.totalorder %s20, 7
    %p168 = por %p166, %p167
    %p170 = scmp.ne.s32.totalorder %s155, %s169
    %p171 = scmp.eq.s32.totalorder %s20, 0
    %p172 = por %p170, %p171
    %s174 = sadd.s32 %s173, 1
    %p177 = scmp.eq.s32.totalorder %s14, 7
    %p178 = scmp.ne.s32.totalorder %s173, %s175
    %p179 = scmp.eq.s32.totalorder %s14, 0
    %p180 = por %p178, %p179
    %p181 = scmp.ne.s32.totalorder %s173, %s175
    %p182 = scmp.eq.s32.totalorder %s19, 7
    %p183 = por %p181, %p182
    %p184 = scmp.ne.s32.totalorder %s175, %s176
    %p185 = scmp.eq.s32.totalorder %s19, 0
    %p186 = por %p184, %p185
    %p187 = scmp.ne.s32.totalorder %s175, %s176
    %p188 = scmp.eq.s32.totalorder %s20, 7
    %p189 = por %p187, %p188
    %p191 = scmp.ne.s32.totalorder %s176, %s190
    %p192 = scmp.eq.s32.totalorder %s20, 0
    %p193 = por %p191, %p192
    %s195 = sadd.s32 %s194, 1
    %p198 = scmp.eq.s32.totalorder %s14, 7
    %p199 = scmp.ne.s32.totalorder %s194, %s196
    %p200 = scmp.eq.s32.totalorder %s14, 0
    %p201 = por %p199, %p200
    %p202 = scmp.ne.s32.totalorder %s194, %s196
    %p203 = scmp.eq.s32.totalorder %s19, 7
    %p204 = por %p202, %p203
    %p205 = scmp.ne.s32.totalorder %s196, %s197
    %p206 = scmp.eq.s32.totalorder %s19, 0
    %p207 = por %p205, %p206
    %p208 = scmp.ne.s32.totalorder %s196, %s197
    %p209 = scmp.eq.s32.totalorder %s20, 7
    %p210 = por %p208, %p209
    %p212 = scmp.ne.s32.totalorder %s197, %s211
    %p213 = scmp.eq.s32.totalorder %s20, 0
    %p214 = por %p212, %p213
    %s215 = ssub.s32 %s14, %s21
    %p216 = scmp.eq.s32.totalorder %s215, 0
    %s218 = sadd.s32 %s217, 1
    %s219 = scalar_select %p216, %s217, %s218
    %p222 = pneg %p216
    %p223 = scmp.eq.s32.totalorder %s14, 7
    %p224 = por %p222, %p223
    %p225 = scmp.ne.s32.totalorder %s217, %s220
    %p226 = scmp.eq.s32.totalorder %s14, 0
    %p227 = por %p225, %p226
    %p228 = scmp.ne.s32.totalorder %s217, %s220
    %p229 = scmp.eq.s32.totalorder %s19, 7
    %p230 = por %p228, %p229
    %p231 = scmp.ne.s32.totalorder %s220, %s221
    %p232 = scmp.eq.s32.totalorder %s19, 0
    %p233 = por %p231, %p232
    %p234 = scmp.ne.s32.totalorder %s220, %s221
    %p235 = scmp.eq.s32.totalorder %s20, 7
    %p236 = por %p234, %p235
    %p238 = scmp.ne.s32.totalorder %s221, %s237
    %p239 = scmp.eq.s32.totalorder %s20, 0
    %p240 = por %p238, %p239
    %p241 = scmp.le.s32.totalorder 1, %s14
    %p242 = scmp.lt.s32.totalorder %s14, 9
    %p243 = pnand %p241, %p242
    %p244 = pneg %p243
    // Predicated region
    $region9: #{_block_forward.6} parent=5 // pred_check
      _
    $region10: #{_block_forward.6} parent=5 // pred_check_branch
      %246 = sbr.rel (%p243) target = $region12
    $region11: #{_block_forward.6} parent=5 // pred_region
      %s247 = ssub.s32 %s14, 1
      // Predicated region
      $region13: #{_block_forward.6} parent=11 // pred_check
        %p248 = pneg %p165
      $region14: #{_block_forward.6} parent=11 // pred_check_branch
        %250 = sbr.rel (%p248) target = $region16
      $region15: #{_block_forward.6} parent=11 // pred_region
        _
      $region16: #{_block_forward.6} parent=11 // pred_fallthru
        _
      // Predicated region
      $region17: #{_block_forward.6} parent=11 // pred_check
        %p251 = pneg %p186
      $region18: #{_block_forward.6} parent=11 // pred_check_branch
        %253 = sbr.rel (%p251) target = $region20
      $region19: #{_block_forward.6} parent=11 // pred_region
        _
      $region20: #{_block_forward.6} parent=11 // pred_fallthru
        _
      // Predicated region
      $region21: #{_block_forward.6} parent=11 // pred_check
        %p254 = pneg %p207
      $region22: #{_block_forward.6} parent=11 // pred_check_branch
        %256 = sbr.rel (%p254) target = $region24
      $region23: #{_block_forward.6} parent=11 // pred_region
        _
      $region24: #{_block_forward.6} parent=11 // pred_fallthru
        _
    $region12: #{_block_forward.6} parent=5 // pred_fallthru
      _
    %p257 = scmp.lt.s32.totalorder %s14, 8
    // Predicated region
    $region25: #{_block_forward.6} parent=5 // pred_check
      %p258 = pneg %p257
    $region26: #{_block_forward.6} parent=5 // pred_check_branch
      %260 = sbr.rel (%p258) target = $region28
    $region27: #{_block_forward.6} parent=5 // pred_region
      // Predicated region
      $region29: #{_block_forward.6} parent=27 // pred_check
        %p261 = pneg %p34
      $region30: #{_block_forward.6} parent=27 // pred_check_branch
        %263 = sbr.rel (%p261) target = $region32
      $region31: #{_block_forward.6} parent=27 // pred_region
        %p264 = scmp.lt.s32.totalorder %s14, 7
        %s265 = scalar_select %p264, %s14, 7
        %s266 = smul.addr %s265, 2
        %s267 = smul.addr %s266, 4
        %s268 = scalar_lea.vmem %s0, %s267
      $region32: #{_block_forward.6} parent=27 // pred_fallthru
        _
      // Predicated region
      $region33: #{_block_forward.6} parent=27 // pred_check
        %p269 = pneg %p60
      $region34: #{_block_forward.6} parent=27 // pred_check_branch
        %271 = sbr.rel (%p269) target = $region36
      $region35: #{_block_forward.6} parent=27 // pred_region
        %p272 = scmp.lt.s32.totalorder %s14, 7
        %s273 = scalar_select %p272, %s14, 7
        %s274 = smul.addr %s273, 2
        %s275 = smul.addr %s274, 4
        %s276 = scalar_lea.vmem %s1, %s275
      $region36: #{_block_forward.6} parent=27 // pred_fallthru
        _
      // Predicated region
      $region37: #{_block_forward.6} parent=27 // pred_check
        %p277 = pneg %p86
      $region38: #{_block_forward.6} parent=27 // pred_check_branch
        %279 = sbr.rel (%p277) target = $region40
      $region39: #{_block_forward.6} parent=27 // pred_region
        %p280 = scmp.lt.s32.totalorder %s14, 7
        %s281 = scalar_select %p280, %s14, 7
        %s282 = smul.addr %s281, 2
        %s283 = smul.addr %s282, 4
        %s284 = scalar_lea.vmem %s2, %s283
      $region40: #{_block_forward.6} parent=27 // pred_fallthru
        _
      // Predicated region
      $region41: #{_block_forward.6} parent=27 // pred_check
        %p285 = pneg %p112
      $region42: #{_block_forward.6} parent=27 // pred_check_branch
        %287 = sbr.rel (%p285) target = $region44
      $region43: #{_block_forward.6} parent=27 // pred_region
        %p288 = scmp.lt.s32.totalorder %s14, 7
        %s289 = scalar_select %p288, %s14, 7
        %s290 = smul.addr %s289, 12
        %s291 = smul.addr %s290, 8
        %s292 = scalar_lea.vmem %s3, %s291
      $region44: #{_block_forward.6} parent=27 // pred_fallthru
        _
      // Predicated region
      $region45: #{_block_forward.6} parent=27 // pred_check
        %p293 = pneg %p138
      $region46: #{_block_forward.6} parent=27 // pred_check_branch
        %295 = sbr.rel (%p293) target = $region48
      $region47: #{_block_forward.6} parent=27 // pred_region
        %p296 = scmp.lt.s32.totalorder %s14, 7
        %s297 = scalar_select %p296, %s14, 7
        %s298 = scalar_lea.vmem %s4, %s297
      $region48: #{_block_forward.6} parent=27 // pred_fallthru
        _
    $region28: #{_block_forward.6} parent=5 // pred_fallthru
      _
    %p299 = scmp.le.s32.totalorder 1, %s14
    %p300 = scmp.lt.s32.totalorder %s14, 9
    %p301 = pnand %p299, %p300
    %p302 = pneg %p301
    // Predicated region
    $region49: #{_block_forward.6} parent=5 // pred_check
      _
    $region50: #{_block_forward.6} parent=5 // pred_check_branch
      %304 = sbr.rel (%p301) target = $region52
    $region51: #{_block_forward.6} parent=5 // pred_region
      %s305 = ssub.s32 %s14, 1
      %p306 = scmp.lt.s32.totalorder %s19, 7
      %s307 = scalar_select %p306, %s19, 7
      %s308 = smul.addr %s307, 2
      %s309 = smul.addr %s308, 4
      %s310 = scalar_lea.vmem %s0, %s309
      %p311 = pneg %p40
      %p312 = pneg %p37
      %p313 = scmp.lt.s32.totalorder %s19, 7
      %s314 = scalar_select %p313, %s19, 7
      %s315 = smul.addr %s314, 2
      %s316 = smul.addr %s315, 4
      %s317 = scalar_lea.vmem %s1, %s316
      %p318 = pneg %p66
      %p319 = pneg %p63
      %p320 = scmp.lt.s32.totalorder %s19, 7
      %s321 = scalar_select %p320, %s19, 7
      %s322 = smul.addr %s321, 2
      %s323 = smul.addr %s322, 4
      %s324 = scalar_lea.vmem %s2, %s323
      %p325 = pneg %p92
      %p326 = pneg %p89
      %p327 = scmp.lt.s32.totalorder %s19, 7
      %s328 = scalar_select %p327, %s19, 7
      %s329 = smul.addr %s328, 12
      %s330 = smul.addr %s329, 8
      %s331 = scalar_lea.vmem %s3, %s330
      %p332 = pneg %p118
      %p333 = pneg %p115
      %p334 = scmp.lt.s32.totalorder %s19, 7
      %s335 = scalar_select %p334, %s19, 7
      %s336 = scalar_lea.vmem %s4, %s335
      %p337 = pneg %p144
      %p338 = pneg %p141
      %p339 = pneg %p165
      %p340 = pneg %p162
      %p341 = pneg %p186
      %p342 = pneg %p183
      %p343 = pneg %p207
      %p344 = pneg %p204
      %p345 = pneg %p233
      %p346 = pneg %p230
      %p347 = scmp.lt.s32.totalorder %s19, 7
      %s348 = scalar_select %p347, %s19, 7
      %s349 = smul.addr %s348, 2
      %s350 = smul.addr %s349, 4
      %s351 = scalar_lea.vmem %s8, %s350
      %p352 = scmp.lt.s32.totalorder %s19, 7
      %s353 = scalar_select %p352, %s19, 7
      %s354 = smul.addr %s353, 2
      %s355 = smul.addr %s354, 4
      %s356 = scalar_lea.vmem %s0, %s355
      %p357 = scmp.lt.s32.totalorder %s19, 7
      %s358 = scalar_select %p357, %s19, 7
      %s359 = smul.addr %s358, 2
      %s360 = smul.addr %s359, 4
      %s361 = scalar_lea.vmem %s1, %s360
      %p362 = scmp.lt.s32.totalorder %s19, 7
      %s363 = scalar_select %p362, %s19, 7
      %s364 = smul.addr %s363, 2
      %s365 = smul.addr %s364, 4
      %s366 = scalar_lea.vmem %s2, %s365
      %p367 = scmp.lt.s32.totalorder %s19, 7
      %s368 = scalar_select %p367, %s19, 7
      %s369 = smul.addr %s368, 12
      %s370 = smul.addr %s369, 8
      %s371 = scalar_lea.vmem %s3, %s370
      %p372 = scmp.lt.s32.totalorder %s19, 7
      %s373 = scalar_select %p372, %s19, 7
      %s374 = scalar_lea.vmem %s4, %s373
      %p375 = scmp.lt.s32.totalorder %s19, 7
      %s376 = scalar_select %p375, %s19, 7
      %s377 = smul.addr %s376, 2
      %s378 = smul.addr %s377, 4
      %s379 = scalar_lea.vmem %s8, %s378
      %v381 = vld [vmem:[%s371] sm:$0xff]
      %v382 = vld [vmem:[%s371 + $0x8] sm:$0xff]
      %v383 = vld [vmem:[%s371 + $0x10] sm:$0xff]
      %v384 = vld [vmem:[%s371 + $0x18] sm:$0xff]
      %v385 = vld [vmem:[%s371 + $0x20] sm:$0xff]
      %v386 = vld [vmem:[%s371 + $0x28] sm:$0xff]
      %v387 = vld [vmem:[%s371 + $0x30] sm:$0xff]
      %v388 = vld [vmem:[%s371 + $0x38] sm:$0xff]
      %v389 = vld [vmem:[%s371 + $0x40] sm:$0xff]
      %v390 = vld [vmem:[%s371 + $0x48] sm:$0xff]
      %v391 = vld [vmem:[%s371 + $0x50] sm:$0xff]
      %v392 = vld [vmem:[%s371 + $0x58] sm:$0xff]
      %v393 = vlaneseq
      %v394 = vand.u32 %v393, 127
      %v395 = vlaneseq
      %v396 = vshrl.u32 %v395, 7
      %v397 = vsub.s32 0, %v396
      %v398 = vrot.slane %v381, %v397
      %400 = vbcast.lane.b32.xlu0 %v398, 256
      %v401 = vpop.permute.xlu0 %400
      %s403 = sor.u32 256, 8
      %404 = vbcast.lane.b32.xlu0 %v398, %s403
      %v405 = vpop.permute.xlu0 %404
      %v406 = vlaneseq
      %v407 = vshrl.u32 %v406, 7
      %v408 = vsub.s32 1, %v407
      %v409 = vrot.slane %v381, %v408
      %411 = vbcast.lane.b32.xlu0 %v409, 256
      %v412 = vpop.permute.xlu0 %411
      %s414 = sor.u32 256, 8
      %415 = vbcast.lane.b32.xlu0 %v409, %s414
      %v416 = vpop.permute.xlu0 %415
      %v417 = vlaneseq
      %v418 = vshrl.u32 %v417, 7
      %v419 = vsub.s32 2, %v418
      %v420 = vrot.slane %v381, %v419
      %422 = vbcast.lane.b32.xlu0 %v420, 256
      %v423 = vpop.permute.xlu0 %422
      %s425 = sor.u32 256, 8
      %426 = vbcast.lane.b32.xlu0 %v420, %s425
      %v427 = vpop.permute.xlu0 %426
      %v428 = vlaneseq
      %v429 = vshrl.u32 %v428, 7
      %v430 = vsub.s32 3, %v429
      %v431 = vrot.slane %v381, %v430
      %433 = vbcast.lane.b32.xlu0 %v431, 256
      %v434 = vpop.permute.xlu0 %433
      %s436 = sor.u32 256, 8
      %437 = vbcast.lane.b32.xlu0 %v431, %s436
      %v438 = vpop.permute.xlu0 %437
      %v439 = vlaneseq
      %v440 = vshrl.u32 %v439, 7
      %v441 = vsub.s32 4, %v440
      %v442 = vrot.slane %v381, %v441
      %444 = vbcast.lane.b32.xlu0 %v442, 256
      %v445 = vpop.permute.xlu0 %444
      %s447 = sor.u32 256, 8
      %448 = vbcast.lane.b32.xlu0 %v442, %s447
      %v449 = vpop.permute.xlu0 %448
      %v450 = vlaneseq
      %v451 = vshrl.u32 %v450, 7
      %v452 = vsub.s32 5, %v451
      %v453 = vrot.slane %v381, %v452
      %455 = vbcast.lane.b32.xlu0 %v453, 256
      %v456 = vpop.permute.xlu0 %455
      %s458 = sor.u32 256, 8
      %459 = vbcast.lane.b32.xlu0 %v453, %s458
      %v460 = vpop.permute.xlu0 %459
      %v461 = vlaneseq
      %v462 = vshrl.u32 %v461, 7
      %v463 = vsub.s32 6, %v462
      %v464 = vrot.slane %v381, %v463
      %466 = vbcast.lane.b32.xlu0 %v464, 256
      %v467 = vpop.permute.xlu0 %466
      %s469 = sor.u32 256, 8
      %470 = vbcast.lane.b32.xlu0 %v464, %s469
      %v471 = vpop.permute.xlu0 %470
      %v472 = vlaneseq
      %v473 = vshrl.u32 %v472, 7
      %v474 = vsub.s32 7, %v473
      %v475 = vrot.slane %v381, %v474
      %477 = vbcast.lane.b32.xlu0 %v475, 256
      %v478 = vpop.permute.xlu0 %477
      %s480 = sor.u32 256, 8
      %481 = vbcast.lane.b32.xlu0 %v475, %s480
      %v482 = vpop.permute.xlu0 %481
      %v483 = vlaneseq
      %v484 = vshrl.u32 %v483, 7
      %v485 = vsub.s32 0, %v484
      %v486 = vrot.slane %v382, %v485
      %488 = vbcast.lane.b32.xlu0 %v486, 256
      %v489 = vpop.permute.xlu0 %488
      %s491 = sor.u32 256, 8
      %492 = vbcast.lane.b32.xlu0 %v486, %s491
      %v493 = vpop.permute.xlu0 %492
      %v494 = vlaneseq
      %v495 = vshrl.u32 %v494, 7
      %v496 = vsub.s32 1, %v495
      %v497 = vrot.slane %v382, %v496
      %499 = vbcast.lane.b32.xlu0 %v497, 256
      %v500 = vpop.permute.xlu0 %499
      %s502 = sor.u32 256, 8
      %503 = vbcast.lane.b32.xlu0 %v497, %s502
      %v504 = vpop.permute.xlu0 %503
      %v505 = vlaneseq
      %v506 = vshrl.u32 %v505, 7
      %v507 = vsub.s32 2, %v506
      %v508 = vrot.slane %v382, %v507
      %510 = vbcast.lane.b32.xlu0 %v508, 256
      %v511 = vpop.permute.xlu0 %510
      %s513 = sor.u32 256, 8
      %514 = vbcast.lane.b32.xlu0 %v508, %s513
      %v515 = vpop.permute.xlu0 %514
      %v516 = vlaneseq
      %v517 = vshrl.u32 %v516, 7
      %v518 = vsub.s32 3, %v517
      %v519 = vrot.slane %v382, %v518
      %521 = vbcast.lane.b32.xlu0 %v519, 256
      %v522 = vpop.permute.xlu0 %521
      %s524 = sor.u32 256, 8
      %525 = vbcast.lane.b32.xlu0 %v519, %s524
      %v526 = vpop.permute.xlu0 %525
      %v527 = vlaneseq
      %v528 = vshrl.u32 %v527, 7
      %v529 = vsub.s32 4, %v528
      %v530 = vrot.slane %v382, %v529
      %532 = vbcast.lane.b32.xlu0 %v530, 256
      %v533 = vpop.permute.xlu0 %532
      %s535 = sor.u32 256, 8
      %536 = vbcast.lane.b32.xlu0 %v530, %s535
      %v537 = vpop.permute.xlu0 %536
      %v538 = vlaneseq
      %v539 = vshrl.u32 %v538, 7
      %v540 = vsub.s32 5, %v539
      %v541 = vrot.slane %v382, %v540
      %543 = vbcast.lane.b32.xlu0 %v541, 256
      %v544 = vpop.permute.xlu0 %543
      %s546 = sor.u32 256, 8
      %547 = vbcast.lane.b32.xlu0 %v541, %s546
      %v548 = vpop.permute.xlu0 %547
      %v549 = vlaneseq
      %v550 = vshrl.u32 %v549, 7
      %v551 = vsub.s32 6, %v550
      %v552 = vrot.slane %v382, %v551
      %554 = vbcast.lane.b32.xlu0 %v552, 256
      %v555 = vpop.permute.xlu0 %554
      %s557 = sor.u32 256, 8
      %558 = vbcast.lane.b32.xlu0 %v552, %s557
      %v559 = vpop.permute.xlu0 %558
      %v560 = vlaneseq
      %v561 = vshrl.u32 %v560, 7
      %v562 = vsub.s32 7, %v561
      %v563 = vrot.slane %v382, %v562
      %565 = vbcast.lane.b32.xlu0 %v563, 256
      %v566 = vpop.permute.xlu0 %565
      %s568 = sor.u32 256, 8
      %569 = vbcast.lane.b32.xlu0 %v563, %s568
      %v570 = vpop.permute.xlu0 %569
      %vm571 = vcmp.eq.s32.totalorder %v401, %v394
      %vm572 = vcmp.eq.s32.totalorder %v405, %v394
      %vm573 = vcmp.eq.s32.totalorder %v412, %v394
      %vm574 = vcmp.eq.s32.totalorder %v416, %v394
      %vm575 = vcmp.eq.s32.totalorder %v423, %v394
      %vm576 = vcmp.eq.s32.totalorder %v427, %v394
      %vm577 = vcmp.eq.s32.totalorder %v434, %v394
      %vm578 = vcmp.eq.s32.totalorder %v438, %v394
      %vm579 = vcmp.eq.s32.totalorder %v445, %v394
      %vm580 = vcmp.eq.s32.totalorder %v449, %v394
      %vm581 = vcmp.eq.s32.totalorder %v456, %v394
      %vm582 = vcmp.eq.s32.totalorder %v460, %v394
      %vm583 = vcmp.eq.s32.totalorder %v467, %v394
      %vm584 = vcmp.eq.s32.totalorder %v471, %v394
      %vm585 = vcmp.eq.s32.totalorder %v478, %v394
      %vm586 = vcmp.eq.s32.totalorder %v482, %v394
      %vm587 = vcmp.eq.s32.totalorder %v489, %v394
      %vm588 = vcmp.eq.s32.totalorder %v493, %v394
      %vm589 = vcmp.eq.s32.totalorder %v500, %v394
      %vm590 = vcmp.eq.s32.totalorder %v504, %v394
      %vm591 = vcmp.eq.s32.totalorder %v511, %v394
      %vm592 = vcmp.eq.s32.totalorder %v515, %v394
      %vm593 = vcmp.eq.s32.totalorder %v522, %v394
      %vm594 = vcmp.eq.s32.totalorder %v526, %v394
      %vm595 = vcmp.eq.s32.totalorder %v533, %v394
      %vm596 = vcmp.eq.s32.totalorder %v537, %v394
      %vm597 = vcmp.eq.s32.totalorder %v544, %v394
      %vm598 = vcmp.eq.s32.totalorder %v548, %v394
      %vm599 = vcmp.eq.s32.totalorder %v555, %v394
      %vm600 = vcmp.eq.s32.totalorder %v559, %v394
      %vm601 = vcmp.eq.s32.totalorder %v566, %v394
      %vm602 = vcmp.eq.s32.totalorder %v570, %v394
      %v603 = vsel %vm571, 1, 0
      %v604 = vsel %vm572, 1, 0
      %v605 = vsel %vm573, 1, 0
      %v606 = vsel %vm574, 1, 0
      %v607 = vsel %vm575, 1, 0
      %v608 = vsel %vm576, 1, 0
      %v609 = vsel %vm577, 1, 0
      %v610 = vsel %vm578, 1, 0
      %v611 = vsel %vm579, 1, 0
      %v612 = vsel %vm580, 1, 0
      %v613 = vsel %vm581, 1, 0
      %v614 = vsel %vm582, 1, 0
      %v615 = vsel %vm583, 1, 0
      %v616 = vsel %vm584, 1, 0
      %v617 = vsel %vm585, 1, 0
      %v618 = vsel %vm586, 1, 0
      %v619 = vsel %vm587, 1, 0
      %v620 = vsel %vm588, 1, 0
      %v621 = vsel %vm589, 1, 0
      %v622 = vsel %vm590, 1, 0
      %v623 = vsel %vm591, 1, 0
      %v624 = vsel %vm592, 1, 0
      %v625 = vsel %vm593, 1, 0
      %v626 = vsel %vm594, 1, 0
      %v627 = vsel %vm595, 1, 0
      %v628 = vsel %vm596, 1, 0
      %v629 = vsel %vm597, 1, 0
      %v630 = vsel %vm598, 1, 0
      %v631 = vsel %vm599, 1, 0
      %v632 = vsel %vm600, 1, 0
      %v633 = vsel %vm601, 1, 0
      %v634 = vsel %vm602, 1, 0
      %v635 = vcvt.s32.f32 %v603
      %v636 = vcvt.s32.f32 %v604
      %v637 = vcvt.s32.f32 %v605
      %v638 = vcvt.s32.f32 %v606
      %v639 = vcvt.s32.f32 %v607
      %v640 = vcvt.s32.f32 %v608
      %v641 = vcvt.s32.f32 %v609
      %v642 = vcvt.s32.f32 %v610
      %v643 = vcvt.s32.f32 %v611
      %v644 = vcvt.s32.f32 %v612
      %v645 = vcvt.s32.f32 %v613
      %v646 = vcvt.s32.f32 %v614
      %v647 = vcvt.s32.f32 %v615
      %v648 = vcvt.s32.f32 %v616
      %v649 = vcvt.s32.f32 %v617
      %v650 = vcvt.s32.f32 %v618
      %v651 = vcvt.s32.f32 %v619
      %v652 = vcvt.s32.f32 %v620
      %v653 = vcvt.s32.f32 %v621
      %v654 = vcvt.s32.f32 %v622
      %v655 = vcvt.s32.f32 %v623
      %v656 = vcvt.s32.f32 %v624
      %v657 = vcvt.s32.f32 %v625
      %v658 = vcvt.s32.f32 %v626
      %v659 = vcvt.s32.f32 %v627
      %v660 = vcvt.s32.f32 %v628
      %v661 = vcvt.s32.f32 %v629
      %v662 = vcvt.s32.f32 %v630
      %v663 = vcvt.s32.f32 %v631
      %v664 = vcvt.s32.f32 %v632
      %v665 = vcvt.s32.f32 %v633
      %v666 = vcvt.s32.f32 %v634
      %v667 = vadd.f32 %v635, 0.0
      %v668 = vadd.f32 %v636, 0.0
      %v669 = vadd.f32 %v637, 0.0
      %v670 = vadd.f32 %v638, 0.0
      %v671 = vadd.f32 %v639, 0.0
      %v672 = vadd.f32 %v640, 0.0
      %v673 = vadd.f32 %v641, 0.0
      %v674 = vadd.f32 %v642, 0.0
      %v675 = vadd.f32 %v643, 0.0
      %v676 = vadd.f32 %v644, 0.0
      %v677 = vadd.f32 %v645, 0.0
      %v678 = vadd.f32 %v646, 0.0
      %v679 = vadd.f32 %v647, 0.0
      %v680 = vadd.f32 %v648, 0.0
      %v681 = vadd.f32 %v649, 0.0
      %v682 = vadd.f32 %v650, 0.0
      %v683 = vadd.f32 %v651, 0.0
      %v684 = vadd.f32 %v652, 0.0
      %v685 = vadd.f32 %v653, 0.0
      %v686 = vadd.f32 %v654, 0.0
      %v687 = vadd.f32 %v655, 0.0
      %v688 = vadd.f32 %v656, 0.0
      %v689 = vadd.f32 %v657, 0.0
      %v690 = vadd.f32 %v658, 0.0
      %v691 = vadd.f32 %v659, 0.0
      %v692 = vadd.f32 %v660, 0.0
      %v693 = vadd.f32 %v661, 0.0
      %v694 = vadd.f32 %v662, 0.0
      %v695 = vadd.f32 %v663, 0.0
      %v696 = vadd.f32 %v664, 0.0
      %v697 = vadd.f32 %v665, 0.0
      %v698 = vadd.f32 %v666, 0.0
      %v699 = vlaneseq
      %v700 = vshrl.u32 %v699, 7
      %v701 = vsub.s32 0, %v700
      %v702 = vrot.slane %v383, %v701
      %704 = vbcast.lane.b32.xlu0 %v702, 256
      %v705 = vpop.permute.xlu0 %704
      %s707 = sor.u32 256, 8
      %708 = vbcast.lane.b32.xlu0 %v702, %s707
      %v709 = vpop.permute.xlu0 %708
      %v710 = vlaneseq
      %v711 = vshrl.u32 %v710, 7
      %v712 = vsub.s32 1, %v711
      %v713 = vrot.slane %v383, %v712
      %715 = vbcast.lane.b32.xlu0 %v713, 256
      %v716 = vpop.permute.xlu0 %715
      %s718 = sor.u32 256, 8
      %719 = vbcast.lane.b32.xlu0 %v713, %s718
      %v720 = vpop.permute.xlu0 %719
      %v721 = vlaneseq
      %v722 = vshrl.u32 %v721, 7
      %v723 = vsub.s32 2, %v722
      %v724 = vrot.slane %v383, %v723
      %726 = vbcast.lane.b32.xlu0 %v724, 256
      %v727 = vpop.permute.xlu0 %726
      %s729 = sor.u32 256, 8
      %730 = vbcast.lane.b32.xlu0 %v724, %s729
      %v731 = vpop.permute.xlu0 %730
      %v732 = vlaneseq
      %v733 = vshrl.u32 %v732, 7
      %v734 = vsub.s32 3, %v733
      %v735 = vrot.slane %v383, %v734
      %737 = vbcast.lane.b32.xlu0 %v735, 256
      %v738 = vpop.permute.xlu0 %737
      %s740 = sor.u32 256, 8
      %741 = vbcast.lane.b32.xlu0 %v735, %s740
      %v742 = vpop.permute.xlu0 %741
      %v743 = vlaneseq
      %v744 = vshrl.u32 %v743, 7
      %v745 = vsub.s32 4, %v744
      %v746 = vrot.slane %v383, %v745
      %748 = vbcast.lane.b32.xlu0 %v746, 256
      %v749 = vpop.permute.xlu0 %748
      %s751 = sor.u32 256, 8
      %752 = vbcast.lane.b32.xlu0 %v746, %s751
      %v753 = vpop.permute.xlu0 %752
      %v754 = vlaneseq
      %v755 = vshrl.u32 %v754, 7
      %v756 = vsub.s32 5, %v755
      %v757 = vrot.slane %v383, %v756
      %759 = vbcast.lane.b32.xlu0 %v757, 256
      %v760 = vpop.permute.xlu0 %759
      %s762 = sor.u32 256, 8
      %763 = vbcast.lane.b32.xlu0 %v757, %s762
      %v764 = vpop.permute.xlu0 %763
      %v765 = vlaneseq
      %v766 = vshrl.u32 %v765, 7
      %v767 = vsub.s32 6, %v766
      %v768 = vrot.slane %v383, %v767
      %770 = vbcast.lane.b32.xlu0 %v768, 256
      %v771 = vpop.permute.xlu0 %770
      %s773 = sor.u32 256, 8
      %774 = vbcast.lane.b32.xlu0 %v768, %s773
      %v775 = vpop.permute.xlu0 %774
      %v776 = vlaneseq
      %v777 = vshrl.u32 %v776, 7
      %v778 = vsub.s32 7, %v777
      %v779 = vrot.slane %v383, %v778
      %781 = vbcast.lane.b32.xlu0 %v779, 256
      %v782 = vpop.permute.xlu0 %781
      %s784 = sor.u32 256, 8
      %785 = vbcast.lane.b32.xlu0 %v779, %s784
      %v786 = vpop.permute.xlu0 %785
      %v787 = vlaneseq
      %v788 = vshrl.u32 %v787, 7
      %v789 = vsub.s32 0, %v788
      %v790 = vrot.slane %v384, %v789
      %792 = vbcast.lane.b32.xlu0 %v790, 256
      %v793 = vpop.permute.xlu0 %792
      %s795 = sor.u32 256, 8
      %796 = vbcast.lane.b32.xlu0 %v790, %s795
      %v797 = vpop.permute.xlu0 %796
      %v798 = vlaneseq
      %v799 = vshrl.u32 %v798, 7
      %v800 = vsub.s32 1, %v799
      %v801 = vrot.slane %v384, %v800
      %803 = vbcast.lane.b32.xlu0 %v801, 256
      %v804 = vpop.permute.xlu0 %803
      %s806 = sor.u32 256, 8
      %807 = vbcast.lane.b32.xlu0 %v801, %s806
      %v808 = vpop.permute.xlu0 %807
      %v809 = vlaneseq
      %v810 = vshrl.u32 %v809, 7
      %v811 = vsub.s32 2, %v810
      %v812 = vrot.slane %v384, %v811
      %814 = vbcast.lane.b32.xlu0 %v812, 256
      %v815 = vpop.permute.xlu0 %814
      %s817 = sor.u32 256, 8
      %818 = vbcast.lane.b32.xlu0 %v812, %s817
      %v819 = vpop.permute.xlu0 %818
      %v820 = vlaneseq
      %v821 = vshrl.u32 %v820, 7
      %v822 = vsub.s32 3, %v821
      %v823 = vrot.slane %v384, %v822
      %825 = vbcast.lane.b32.xlu0 %v823, 256
      %v826 = vpop.permute.xlu0 %825
      %s828 = sor.u32 256, 8
      %829 = vbcast.lane.b32.xlu0 %v823, %s828
      %v830 = vpop.permute.xlu0 %829
      %v831 = vlaneseq
      %v832 = vshrl.u32 %v831, 7
      %v833 = vsub.s32 4, %v832
      %v834 = vrot.slane %v384, %v833
      %836 = vbcast.lane.b32.xlu0 %v834, 256
      %v837 = vpop.permute.xlu0 %836
      %s839 = sor.u32 256, 8
      %840 = vbcast.lane.b32.xlu0 %v834, %s839
      %v841 = vpop.permute.xlu0 %840
      %v842 = vlaneseq
      %v843 = vshrl.u32 %v842, 7
      %v844 = vsub.s32 5, %v843
      %v845 = vrot.slane %v384, %v844
      %847 = vbcast.lane.b32.xlu0 %v845, 256
      %v848 = vpop.permute.xlu0 %847
      %s850 = sor.u32 256, 8
      %851 = vbcast.lane.b32.xlu0 %v845, %s850
      %v852 = vpop.permute.xlu0 %851
      %v853 = vlaneseq
      %v854 = vshrl.u32 %v853, 7
      %v855 = vsub.s32 6, %v854
      %v856 = vrot.slane %v384, %v855
      %858 = vbcast.lane.b32.xlu0 %v856, 256
      %v859 = vpop.permute.xlu0 %858
      %s861 = sor.u32 256, 8
      %862 = vbcast.lane.b32.xlu0 %v856, %s861
      %v863 = vpop.permute.xlu0 %862
      %v864 = vlaneseq
      %v865 = vshrl.u32 %v864, 7
      %v866 = vsub.s32 7, %v865
      %v867 = vrot.slane %v384, %v866
      %869 = vbcast.lane.b32.xlu0 %v867, 256
      %v870 = vpop.permute.xlu0 %869
      %s872 = sor.u32 256, 8
      %873 = vbcast.lane.b32.xlu0 %v867, %s872
      %v874 = vpop.permute.xlu0 %873
      %vm875 = vcmp.eq.s32.totalorder %v705, %v394
      %vm876 = vcmp.eq.s32.totalorder %v709, %v394
      %vm877 = vcmp.eq.s32.totalorder %v716, %v394
      %vm878 = vcmp.eq.s32.totalorder %v720, %v394
      %vm879 = vcmp.eq.s32.totalorder %v727, %v394
      %vm880 = vcmp.eq.s32.totalorder %v731, %v394
      %vm881 = vcmp.eq.s32.totalorder %v738, %v394
      %vm882 = vcmp.eq.s32.totalorder %v742, %v394
      %vm883 = vcmp.eq.s32.totalorder %v749, %v394
      %vm884 = vcmp.eq.s32.totalorder %v753, %v394
      %vm885 = vcmp.eq.s32.totalorder %v760, %v394
      %vm886 = vcmp.eq.s32.totalorder %v764, %v394
      %vm887 = vcmp.eq.s32.totalorder %v771, %v394
      %vm888 = vcmp.eq.s32.totalorder %v775, %v394
      %vm889 = vcmp.eq.s32.totalorder %v782, %v394
      %vm890 = vcmp.eq.s32.totalorder %v786, %v394
      %vm891 = vcmp.eq.s32.totalorder %v793, %v394
      %vm892 = vcmp.eq.s32.totalorder %v797, %v394
      %vm893 = vcmp.eq.s32.totalorder %v804, %v394
      %vm894 = vcmp.eq.s32.totalorder %v808, %v394
      %vm895 = vcmp.eq.s32.totalorder %v815, %v394
      %vm896 = vcmp.eq.s32.totalorder %v819, %v394
      %vm897 = vcmp.eq.s32.totalorder %v826, %v394
      %vm898 = vcmp.eq.s32.totalorder %v830, %v394
      %vm899 = vcmp.eq.s32.totalorder %v837, %v394
      %vm900 = vcmp.eq.s32.totalorder %v841, %v394
      %vm901 = vcmp.eq.s32.totalorder %v848, %v394
      %vm902 = vcmp.eq.s32.totalorder %v852, %v394
      %vm903 = vcmp.eq.s32.totalorder %v859, %v394
      %vm904 = vcmp.eq.s32.totalorder %v863, %v394
      %vm905 = vcmp.eq.s32.totalorder %v870, %v394
      %vm906 = vcmp.eq.s32.totalorder %v874, %v394
      %v907 = vsel %vm875, 1, 0
      %v908 = vsel %vm876, 1, 0
      %v909 = vsel %vm877, 1, 0
      %v910 = vsel %vm878, 1, 0
      %v911 = vsel %vm879, 1, 0
      %v912 = vsel %vm880, 1, 0
      %v913 = vsel %vm881, 1, 0
      %v914 = vsel %vm882, 1, 0
      %v915 = vsel %vm883, 1, 0
      %v916 = vsel %vm884, 1, 0
      %v917 = vsel %vm885, 1, 0
      %v918 = vsel %vm886, 1, 0
      %v919 = vsel %vm887, 1, 0
      %v920 = vsel %vm888, 1, 0
      %v921 = vsel %vm889, 1, 0
      %v922 = vsel %vm890, 1, 0
      %v923 = vsel %vm891, 1, 0
      %v924 = vsel %vm892, 1, 0
      %v925 = vsel %vm893, 1, 0
      %v926 = vsel %vm894, 1, 0
      %v927 = vsel %vm895, 1, 0
      %v928 = vsel %vm896, 1, 0
      %v929 = vsel %vm897, 1, 0
      %v930 = vsel %vm898, 1, 0
      %v931 = vsel %vm899, 1, 0
      %v932 = vsel %vm900, 1, 0
      %v933 = vsel %vm901, 1, 0
      %v934 = vsel %vm902, 1, 0
      %v935 = vsel %vm903, 1, 0
      %v936 = vsel %vm904, 1, 0
      %v937 = vsel %vm905, 1, 0
      %v938 = vsel %vm906, 1, 0
      %v939 = vcvt.s32.f32 %v907
      %v940 = vcvt.s32.f32 %v908
      %v941 = vcvt.s32.f32 %v909
      %v942 = vcvt.s32.f32 %v910
      %v943 = vcvt.s32.f32 %v911
      %v944 = vcvt.s32.f32 %v912
      %v945 = vcvt.s32.f32 %v913
      %v946 = vcvt.s32.f32 %v914
      %v947 = vcvt.s32.f32 %v915
      %v948 = vcvt.s32.f32 %v916
      %v949 = vcvt.s32.f32 %v917
      %v950 = vcvt.s32.f32 %v918
      %v951 = vcvt.s32.f32 %v919
      %v952 = vcvt.s32.f32 %v920
      %v953 = vcvt.s32.f32 %v921
      %v954 = vcvt.s32.f32 %v922
      %v955 = vcvt.s32.f32 %v923
      %v956 = vcvt.s32.f32 %v924
      %v957 = vcvt.s32.f32 %v925
      %v958 = vcvt.s32.f32 %v926
      %v959 = vcvt.s32.f32 %v927
      %v960 = vcvt.s32.f32 %v928
      %v961 = vcvt.s32.f32 %v929
      %v962 = vcvt.s32.f32 %v930
      %v963 = vcvt.s32.f32 %v931
      %v964 = vcvt.s32.f32 %v932
      %v965 = vcvt.s32.f32 %v933
      %v966 = vcvt.s32.f32 %v934
      %v967 = vcvt.s32.f32 %v935
      %v968 = vcvt.s32.f32 %v936
      %v969 = vcvt.s32.f32 %v937
      %v970 = vcvt.s32.f32 %v938
      %v971 = vadd.f32 %v667, %v939
      %v972 = vadd.f32 %v668, %v940
      %v973 = vadd.f32 %v669, %v941
      %v974 = vadd.f32 %v670, %v942
      %v975 = vadd.f32 %v671, %v943
      %v976 = vadd.f32 %v672, %v944
      %v977 = vadd.f32 %v673, %v945
      %v978 = vadd.f32 %v674, %v946
      %v979 = vadd.f32 %v675, %v947
      %v980 = vadd.f32 %v676, %v948
      %v981 = vadd.f32 %v677, %v949
      %v982 = vadd.f32 %v678, %v950
      %v983 = vadd.f32 %v679, %v951
      %v984 = vadd.f32 %v680, %v952
      %v985 = vadd.f32 %v681, %v953
      %v986 = vadd.f32 %v682, %v954
      %v987 = vadd.f32 %v683, %v955
      %v988 = vadd.f32 %v684, %v956
      %v989 = vadd.f32 %v685, %v957
      %v990 = vadd.f32 %v686, %v958
      %v991 = vadd.f32 %v687, %v959
      %v992 = vadd.f32 %v688, %v960
      %v993 = vadd.f32 %v689, %v961
      %v994 = vadd.f32 %v690, %v962
      %v995 = vadd.f32 %v691, %v963
      %v996 = vadd.f32 %v692, %v964
      %v997 = vadd.f32 %v693, %v965
      %v998 = vadd.f32 %v694, %v966
      %v999 = vadd.f32 %v695, %v967
      %v1000 = vadd.f32 %v696, %v968
      %v1001 = vadd.f32 %v697, %v969
      %v1002 = vadd.f32 %v698, %v970
      %v1003 = vlaneseq
      %v1004 = vshrl.u32 %v1003, 7
      %v1005 = vsub.s32 0, %v1004
      %v1006 = vrot.slane %v385, %v1005
      %1008 = vbcast.lane.b32.xlu0 %v1006, 256
      %v1009 = vpop.permute.xlu0 %1008
      %s1011 = sor.u32 256, 8
      %1012 = vbcast.lane.b32.xlu0 %v1006, %s1011
      %v1013 = vpop.permute.xlu0 %1012
      %v1014 = vlaneseq
      %v1015 = vshrl.u32 %v1014, 7
      %v1016 = vsub.s32 1, %v1015
      %v1017 = vrot.slane %v385, %v1016
      %1019 = vbcast.lane.b32.xlu0 %v1017, 256
      %v1020 = vpop.permute.xlu0 %1019
      %s1022 = sor.u32 256, 8
      %1023 = vbcast.lane.b32.xlu0 %v1017, %s1022
      %v1024 = vpop.permute.xlu0 %1023
      %v1025 = vlaneseq
      %v1026 = vshrl.u32 %v1025, 7
      %v1027 = vsub.s32 2, %v1026
      %v1028 = vrot.slane %v385, %v1027
      %1030 = vbcast.lane.b32.xlu0 %v1028, 256
      %v1031 = vpop.permute.xlu0 %1030
      %s1033 = sor.u32 256, 8
      %1034 = vbcast.lane.b32.xlu0 %v1028, %s1033
      %v1035 = vpop.permute.xlu0 %1034
      %v1036 = vlaneseq
      %v1037 = vshrl.u32 %v1036, 7
      %v1038 = vsub.s32 3, %v1037
      %v1039 = vrot.slane %v385, %v1038
      %1041 = vbcast.lane.b32.xlu0 %v1039, 256
      %v1042 = vpop.permute.xlu0 %1041
      %s1044 = sor.u32 256, 8
      %1045 = vbcast.lane.b32.xlu0 %v1039, %s1044
      %v1046 = vpop.permute.xlu0 %1045
      %v1047 = vlaneseq
      %v1048 = vshrl.u32 %v1047, 7
      %v1049 = vsub.s32 4, %v1048
      %v1050 = vrot.slane %v385, %v1049
      %1052 = vbcast.lane.b32.xlu0 %v1050, 256
      %v1053 = vpop.permute.xlu0 %1052
      %s1055 = sor.u32 256, 8
      %1056 = vbcast.lane.b32.xlu0 %v1050, %s1055
      %v1057 = vpop.permute.xlu0 %1056
      %v1058 = vlaneseq
      %v1059 = vshrl.u32 %v1058, 7
      %v1060 = vsub.s32 5, %v1059
      %v1061 = vrot.slane %v385, %v1060
      %1063 = vbcast.lane.b32.xlu0 %v1061, 256
      %v1064 = vpop.permute.xlu0 %1063
      %s1066 = sor.u32 256, 8
      %1067 = vbcast.lane.b32.xlu0 %v1061, %s1066
      %v1068 = vpop.permute.xlu0 %1067
      %v1069 = vlaneseq
      %v1070 = vshrl.u32 %v1069, 7
      %v1071 = vsub.s32 6, %v1070
      %v1072 = vrot.slane %v385, %v1071
      %1074 = vbcast.lane.b32.xlu0 %v1072, 256
      %v1075 = vpop.permute.xlu0 %1074
      %s1077 = sor.u32 256, 8
      %1078 = vbcast.lane.b32.xlu0 %v1072, %s1077
      %v1079 = vpop.permute.xlu0 %1078
      %v1080 = vlaneseq
      %v1081 = vshrl.u32 %v1080, 7
      %v1082 = vsub.s32 7, %v1081
      %v1083 = vrot.slane %v385, %v1082
      %1085 = vbcast.lane.b32.xlu0 %v1083, 256
      %v1086 = vpop.permute.xlu0 %1085
      %s1088 = sor.u32 256, 8
      %1089 = vbcast.lane.b32.xlu0 %v1083, %s1088
      %v1090 = vpop.permute.xlu0 %1089
      %v1091 = vlaneseq
      %v1092 = vshrl.u32 %v1091, 7
      %v1093 = vsub.s32 0, %v1092
      %v1094 = vrot.slane %v386, %v1093
      %1096 = vbcast.lane.b32.xlu0 %v1094, 256
      %v1097 = vpop.permute.xlu0 %1096
      %s1099 = sor.u32 256, 8
      %1100 = vbcast.lane.b32.xlu0 %v1094, %s1099
      %v1101 = vpop.permute.xlu0 %1100
      %v1102 = vlaneseq
      %v1103 = vshrl.u32 %v1102, 7
      %v1104 = vsub.s32 1, %v1103
      %v1105 = vrot.slane %v386, %v1104
      %1107 = vbcast.lane.b32.xlu0 %v1105, 256
      %v1108 = vpop.permute.xlu0 %1107
      %s1110 = sor.u32 256, 8
      %1111 = vbcast.lane.b32.xlu0 %v1105, %s1110
      %v1112 = vpop.permute.xlu0 %1111
      %v1113 = vlaneseq
      %v1114 = vshrl.u32 %v1113, 7
      %v1115 = vsub.s32 2, %v1114
      %v1116 = vrot.slane %v386, %v1115
      %1118 = vbcast.lane.b32.xlu0 %v1116, 256
      %v1119 = vpop.permute.xlu0 %1118
      %s1121 = sor.u32 256, 8
      %1122 = vbcast.lane.b32.xlu0 %v1116, %s1121
      %v1123 = vpop.permute.xlu0 %1122
      %v1124 = vlaneseq
      %v1125 = vshrl.u32 %v1124, 7
      %v1126 = vsub.s32 3, %v1125
      %v1127 = vrot.slane %v386, %v1126
      %1129 = vbcast.lane.b32.xlu0 %v1127, 256
      %v1130 = vpop.permute.xlu0 %1129
      %s1132 = sor.u32 256, 8
      %1133 = vbcast.lane.b32.xlu0 %v1127, %s1132
      %v1134 = vpop.permute.xlu0 %1133
      %v1135 = vlaneseq
      %v1136 = vshrl.u32 %v1135, 7
      %v1137 = vsub.s32 4, %v1136
      %v1138 = vrot.slane %v386, %v1137
      %1140 = vbcast.lane.b32.xlu0 %v1138, 256
      %v1141 = vpop.permute.xlu0 %1140
      %s1143 = sor.u32 256, 8
      %1144 = vbcast.lane.b32.xlu0 %v1138, %s1143
      %v1145 = vpop.permute.xlu0 %1144
      %v1146 = vlaneseq
      %v1147 = vshrl.u32 %v1146, 7
      %v1148 = vsub.s32 5, %v1147
      %v1149 = vrot.slane %v386, %v1148
      %1151 = vbcast.lane.b32.xlu0 %v1149, 256
      %v1152 = vpop.permute.xlu0 %1151
      %s1154 = sor.u32 256, 8
      %1155 = vbcast.lane.b32.xlu0 %v1149, %s1154
      %v1156 = vpop.permute.xlu0 %1155
      %v1157 = vlaneseq
      %v1158 = vshrl.u32 %v1157, 7
      %v1159 = vsub.s32 6, %v1158
      %v1160 = vrot.slane %v386, %v1159
      %1162 = vbcast.lane.b32.xlu0 %v1160, 256
      %v1163 = vpop.permute.xlu0 %1162
      %s1165 = sor.u32 256, 8
      %1166 = vbcast.lane.b32.xlu0 %v1160, %s1165
      %v1167 = vpop.permute.xlu0 %1166
      %v1168 = vlaneseq
      %v1169 = vshrl.u32 %v1168, 7
      %v1170 = vsub.s32 7, %v1169
      %v1171 = vrot.slane %v386, %v1170
      %1173 = vbcast.lane.b32.xlu0 %v1171, 256
      %v1174 = vpop.permute.xlu0 %1173
      %s1176 = sor.u32 256, 8
      %1177 = vbcast.lane.b32.xlu0 %v1171, %s1176
      %v1178 = vpop.permute.xlu0 %1177
      %vm1179 = vcmp.eq.s32.totalorder %v1009, %v394
      %vm1180 = vcmp.eq.s32.totalorder %v1013, %v394
      %vm1181 = vcmp.eq.s32.totalorder %v1020, %v394
      %vm1182 = vcmp.eq.s32.totalorder %v1024, %v394
      %vm1183 = vcmp.eq.s32.totalorder %v1031, %v394
      %vm1184 = vcmp.eq.s32.totalorder %v1035, %v394
      %vm1185 = vcmp.eq.s32.totalorder %v1042, %v394
      %vm1186 = vcmp.eq.s32.totalorder %v1046, %v394
      %vm1187 = vcmp.eq.s32.totalorder %v1053, %v394
      %vm1188 = vcmp.eq.s32.totalorder %v1057, %v394
      %vm1189 = vcmp.eq.s32.totalorder %v1064, %v394
      %vm1190 = vcmp.eq.s32.totalorder %v1068, %v394
      %vm1191 = vcmp.eq.s32.totalorder %v1075, %v394
      %vm1192 = vcmp.eq.s32.totalorder %v1079, %v394
      %vm1193 = vcmp.eq.s32.totalorder %v1086, %v394
      %vm1194 = vcmp.eq.s32.totalorder %v1090, %v394
      %vm1195 = vcmp.eq.s32.totalorder %v1097, %v394
      %vm1196 = vcmp.eq.s32.totalorder %v1101, %v394
      %vm1197 = vcmp.eq.s32.totalorder %v1108, %v394
      %vm1198 = vcmp.eq.s32.totalorder %v1112, %v394
      %vm1199 = vcmp.eq.s32.totalorder %v1119, %v394
      %vm1200 = vcmp.eq.s32.totalorder %v1123, %v394
      %vm1201 = vcmp.eq.s32.totalorder %v1130, %v394
      %vm1202 = vcmp.eq.s32.totalorder %v1134, %v394
      %vm1203 = vcmp.eq.s32.totalorder %v1141, %v394
      %vm1204 = vcmp.eq.s32.totalorder %v1145, %v394
      %vm1205 = vcmp.eq.s32.totalorder %v1152, %v394
      %vm1206 = vcmp.eq.s32.totalorder %v1156, %v394
      %vm1207 = vcmp.eq.s32.totalorder %v1163, %v394
      %vm1208 = vcmp.eq.s32.totalorder %v1167, %v394
      %vm1209 = vcmp.eq.s32.totalorder %v1174, %v394
      %vm1210 = vcmp.eq.s32.totalorder %v1178, %v394
      %v1211 = vsel %vm1179, 1, 0
      %v1212 = vsel %vm1180, 1, 0
      %v1213 = vsel %vm1181, 1, 0
      %v1214 = vsel %vm1182, 1, 0
      %v1215 = vsel %vm1183, 1, 0
      %v1216 = vsel %vm1184, 1, 0
      %v1217 = vsel %vm1185, 1, 0
      %v1218 = vsel %vm1186, 1, 0
      %v1219 = vsel %vm1187, 1, 0
      %v1220 = vsel %vm1188, 1, 0
      %v1221 = vsel %vm1189, 1, 0
      %v1222 = vsel %vm1190, 1, 0
      %v1223 = vsel %vm1191, 1, 0
      %v1224 = vsel %vm1192, 1, 0
      %v1225 = vsel %vm1193, 1, 0
      %v1226 = vsel %vm1194, 1, 0
      %v1227 = vsel %vm1195, 1, 0
      %v1228 = vsel %vm1196, 1, 0
      %v1229 = vsel %vm1197, 1, 0
      %v1230 = vsel %vm1198, 1, 0
      %v1231 = vsel %vm1199, 1, 0
      %v1232 = vsel %vm1200, 1, 0
      %v1233 = vsel %vm1201, 1, 0
      %v1234 = vsel %vm1202, 1, 0
      %v1235 = vsel %vm1203, 1, 0
      %v1236 = vsel %vm1204, 1, 0
      %v1237 = vsel %vm1205, 1, 0
      %v1238 = vsel %vm1206, 1, 0
      %v1239 = vsel %vm1207, 1, 0
      %v1240 = vsel %vm1208, 1, 0
      %v1241 = vsel %vm1209, 1, 0
      %v1242 = vsel %vm1210, 1, 0
      %v1243 = vcvt.s32.f32 %v1211
      %v1244 = vcvt.s32.f32 %v1212
      %v1245 = vcvt.s32.f32 %v1213
      %v1246 = vcvt.s32.f32 %v1214
      %v1247 = vcvt.s32.f32 %v1215
      %v1248 = vcvt.s32.f32 %v1216
      %v1249 = vcvt.s32.f32 %v1217
      %v1250 = vcvt.s32.f32 %v1218
      %v1251 = vcvt.s32.f32 %v1219
      %v1252 = vcvt.s32.f32 %v1220
      %v1253 = vcvt.s32.f32 %v1221
      %v1254 = vcvt.s32.f32 %v1222
      %v1255 = vcvt.s32.f32 %v1223
      %v1256 = vcvt.s32.f32 %v1224
      %v1257 = vcvt.s32.f32 %v1225
      %v1258 = vcvt.s32.f32 %v1226
      %v1259 = vcvt.s32.f32 %v1227
      %v1260 = vcvt.s32.f32 %v1228
      %v1261 = vcvt.s32.f32 %v1229
      %v1262 = vcvt.s32.f32 %v1230
      %v1263 = vcvt.s32.f32 %v1231
      %v1264 = vcvt.s32.f32 %v1232
      %v1265 = vcvt.s32.f32 %v1233
      %v1266 = vcvt.s32.f32 %v1234
      %v1267 = vcvt.s32.f32 %v1235
      %v1268 = vcvt.s32.f32 %v1236
      %v1269 = vcvt.s32.f32 %v1237
      %v1270 = vcvt.s32.f32 %v1238
      %v1271 = vcvt.s32.f32 %v1239
      %v1272 = vcvt.s32.f32 %v1240
      %v1273 = vcvt.s32.f32 %v1241
      %v1274 = vcvt.s32.f32 %v1242
      %v1275 = vadd.f32 %v971, %v1243
      %v1276 = vadd.f32 %v972, %v1244
      %v1277 = vadd.f32 %v973, %v1245
      %v1278 = vadd.f32 %v974, %v1246
      %v1279 = vadd.f32 %v975, %v1247
      %v1280 = vadd.f32 %v976, %v1248
      %v1281 = vadd.f32 %v977, %v1249
      %v1282 = vadd.f32 %v978, %v1250
      %v1283 = vadd.f32 %v979, %v1251
      %v1284 = vadd.f32 %v980, %v1252
      %v1285 = vadd.f32 %v981, %v1253
      %v1286 = vadd.f32 %v982, %v1254
      %v1287 = vadd.f32 %v983, %v1255
      %v1288 = vadd.f32 %v984, %v1256
      %v1289 = vadd.f32 %v985, %v1257
      %v1290 = vadd.f32 %v986, %v1258
      %v1291 = vadd.f32 %v987, %v1259
      %v1292 = vadd.f32 %v988, %v1260
      %v1293 = vadd.f32 %v989, %v1261
      %v1294 = vadd.f32 %v990, %v1262
      %v1295 = vadd.f32 %v991, %v1263
      %v1296 = vadd.f32 %v992, %v1264
      %v1297 = vadd.f32 %v993, %v1265
      %v1298 = vadd.f32 %v994, %v1266
      %v1299 = vadd.f32 %v995, %v1267
      %v1300 = vadd.f32 %v996, %v1268
      %v1301 = vadd.f32 %v997, %v1269
      %v1302 = vadd.f32 %v998, %v1270
      %v1303 = vadd.f32 %v999, %v1271
      %v1304 = vadd.f32 %v1000, %v1272
      %v1305 = vadd.f32 %v1001, %v1273
      %v1306 = vadd.f32 %v1002, %v1274
      %v1307 = vlaneseq
      %v1308 = vshrl.u32 %v1307, 7
      %v1309 = vsub.s32 0, %v1308
      %v1310 = vrot.slane %v387, %v1309
      %1312 = vbcast.lane.b32.xlu0 %v1310, 256
      %v1313 = vpop.permute.xlu0 %1312
      %s1315 = sor.u32 256, 8
      %1316 = vbcast.lane.b32.xlu0 %v1310, %s1315
      %v1317 = vpop.permute.xlu0 %1316
      %v1318 = vlaneseq
      %v1319 = vshrl.u32 %v1318, 7
      %v1320 = vsub.s32 1, %v1319
      %v1321 = vrot.slane %v387, %v1320
      %1323 = vbcast.lane.b32.xlu0 %v1321, 256
      %v1324 = vpop.permute.xlu0 %1323
      %s1326 = sor.u32 256, 8
      %1327 = vbcast.lane.b32.xlu0 %v1321, %s1326
      %v1328 = vpop.permute.xlu0 %1327
      %v1329 = vlaneseq
      %v1330 = vshrl.u32 %v1329, 7
      %v1331 = vsub.s32 2, %v1330
      %v1332 = vrot.slane %v387, %v1331
      %1334 = vbcast.lane.b32.xlu0 %v1332, 256
      %v1335 = vpop.permute.xlu0 %1334
      %s1337 = sor.u32 256, 8
      %1338 = vbcast.lane.b32.xlu0 %v1332, %s1337
      %v1339 = vpop.permute.xlu0 %1338
      %v1340 = vlaneseq
      %v1341 = vshrl.u32 %v1340, 7
      %v1342 = vsub.s32 3, %v1341
      %v1343 = vrot.slane %v387, %v1342
      %1345 = vbcast.lane.b32.xlu0 %v1343, 256
      %v1346 = vpop.permute.xlu0 %1345
      %s1348 = sor.u32 256, 8
      %1349 = vbcast.lane.b32.xlu0 %v1343, %s1348
      %v1350 = vpop.permute.xlu0 %1349
      %v1351 = vlaneseq
      %v1352 = vshrl.u32 %v1351, 7
      %v1353 = vsub.s32 4, %v1352
      %v1354 = vrot.slane %v387, %v1353
      %1356 = vbcast.lane.b32.xlu0 %v1354, 256
      %v1357 = vpop.permute.xlu0 %1356
      %s1359 = sor.u32 256, 8
      %1360 = vbcast.lane.b32.xlu0 %v1354, %s1359
      %v1361 = vpop.permute.xlu0 %1360
      %v1362 = vlaneseq
      %v1363 = vshrl.u32 %v1362, 7
      %v1364 = vsub.s32 5, %v1363
      %v1365 = vrot.slane %v387, %v1364
      %1367 = vbcast.lane.b32.xlu0 %v1365, 256
      %v1368 = vpop.permute.xlu0 %1367
      %s1370 = sor.u32 256, 8
      %1371 = vbcast.lane.b32.xlu0 %v1365, %s1370
      %v1372 = vpop.permute.xlu0 %1371
      %v1373 = vlaneseq
      %v1374 = vshrl.u32 %v1373, 7
      %v1375 = vsub.s32 6, %v1374
      %v1376 = vrot.slane %v387, %v1375
      %1378 = vbcast.lane.b32.xlu0 %v1376, 256
      %v1379 = vpop.permute.xlu0 %1378
      %s1381 = sor.u32 256, 8
      %1382 = vbcast.lane.b32.xlu0 %v1376, %s1381
      %v1383 = vpop.permute.xlu0 %1382
      %v1384 = vlaneseq
      %v1385 = vshrl.u32 %v1384, 7
      %v1386 = vsub.s32 7, %v1385
      %v1387 = vrot.slane %v387, %v1386
      %1389 = vbcast.lane.b32.xlu0 %v1387, 256
      %v1390 = vpop.permute.xlu0 %1389
      %s1392 = sor.u32 256, 8
      %1393 = vbcast.lane.b32.xlu0 %v1387, %s1392
      %v1394 = vpop.permute.xlu0 %1393
      %v1395 = vlaneseq
      %v1396 = vshrl.u32 %v1395, 7
      %v1397 = vsub.s32 0, %v1396
      %v1398 = vrot.slane %v388, %v1397
      %1400 = vbcast.lane.b32.xlu0 %v1398, 256
      %v1401 = vpop.permute.xlu0 %1400
      %s1403 = sor.u32 256, 8
      %1404 = vbcast.lane.b32.xlu0 %v1398, %s1403
      %v1405 = vpop.permute.xlu0 %1404
      %v1406 = vlaneseq
      %v1407 = vshrl.u32 %v1406, 7
      %v1408 = vsub.s32 1, %v1407
      %v1409 = vrot.slane %v388, %v1408
      %1411 = vbcast.lane.b32.xlu0 %v1409, 256
      %v1412 = vpop.permute.xlu0 %1411
      %s1414 = sor.u32 256, 8
      %1415 = vbcast.lane.b32.xlu0 %v1409, %s1414
      %v1416 = vpop.permute.xlu0 %1415
      %v1417 = vlaneseq
      %v1418 = vshrl.u32 %v1417, 7
      %v1419 = vsub.s32 2, %v1418
      %v1420 = vrot.slane %v388, %v1419
      %1422 = vbcast.lane.b32.xlu0 %v1420, 256
      %v1423 = vpop.permute.xlu0 %1422
      %s1425 = sor.u32 256, 8
      %1426 = vbcast.lane.b32.xlu0 %v1420, %s1425
      %v1427 = vpop.permute.xlu0 %1426
      %v1428 = vlaneseq
      %v1429 = vshrl.u32 %v1428, 7
      %v1430 = vsub.s32 3, %v1429
      %v1431 = vrot.slane %v388, %v1430
      %1433 = vbcast.lane.b32.xlu0 %v1431, 256
      %v1434 = vpop.permute.xlu0 %1433
      %s1436 = sor.u32 256, 8
      %1437 = vbcast.lane.b32.xlu0 %v1431, %s1436
      %v1438 = vpop.permute.xlu0 %1437
      %v1439 = vlaneseq
      %v1440 = vshrl.u32 %v1439, 7
      %v1441 = vsub.s32 4, %v1440
      %v1442 = vrot.slane %v388, %v1441
      %1444 = vbcast.lane.b32.xlu0 %v1442, 256
      %v1445 = vpop.permute.xlu0 %1444
      %s1447 = sor.u32 256, 8
      %1448 = vbcast.lane.b32.xlu0 %v1442, %s1447
      %v1449 = vpop.permute.xlu0 %1448
      %v1450 = vlaneseq
      %v1451 = vshrl.u32 %v1450, 7
      %v1452 = vsub.s32 5, %v1451
      %v1453 = vrot.slane %v388, %v1452
      %1455 = vbcast.lane.b32.xlu0 %v1453, 256
      %v1456 = vpop.permute.xlu0 %1455
      %s1458 = sor.u32 256, 8
      %1459 = vbcast.lane.b32.xlu0 %v1453, %s1458
      %v1460 = vpop.permute.xlu0 %1459
      %v1461 = vlaneseq
      %v1462 = vshrl.u32 %v1461, 7
      %v1463 = vsub.s32 6, %v1462
      %v1464 = vrot.slane %v388, %v1463
      %1466 = vbcast.lane.b32.xlu0 %v1464, 256
      %v1467 = vpop.permute.xlu0 %1466
      %s1469 = sor.u32 256, 8
      %1470 = vbcast.lane.b32.xlu0 %v1464, %s1469
      %v1471 = vpop.permute.xlu0 %1470
      %v1472 = vlaneseq
      %v1473 = vshrl.u32 %v1472, 7
      %v1474 = vsub.s32 7, %v1473
      %v1475 = vrot.slane %v388, %v1474
      %1477 = vbcast.lane.b32.xlu0 %v1475, 256
      %v1478 = vpop.permute.xlu0 %1477
      %s1480 = sor.u32 256, 8
      %1481 = vbcast.lane.b32.xlu0 %v1475, %s1480
      %v1482 = vpop.permute.xlu0 %1481
      %vm1483 = vcmp.eq.s32.totalorder %v1313, %v394
      %vm1484 = vcmp.eq.s32.totalorder %v1317, %v394
      %vm1485 = vcmp.eq.s32.totalorder %v1324, %v394
      %vm1486 = vcmp.eq.s32.totalorder %v1328, %v394
      %vm1487 = vcmp.eq.s32.totalorder %v1335, %v394
      %vm1488 = vcmp.eq.s32.totalorder %v1339, %v394
      %vm1489 = vcmp.eq.s32.totalorder %v1346, %v394
      %vm1490 = vcmp.eq.s32.totalorder %v1350, %v394
      %vm1491 = vcmp.eq.s32.totalorder %v1357, %v394
      %vm1492 = vcmp.eq.s32.totalorder %v1361, %v394
      %vm1493 = vcmp.eq.s32.totalorder %v1368, %v394
      %vm1494 = vcmp.eq.s32.totalorder %v1372, %v394
      %vm1495 = vcmp.eq.s32.totalorder %v1379, %v394
      %vm1496 = vcmp.eq.s32.totalorder %v1383, %v394
      %vm1497 = vcmp.eq.s32.totalorder %v1390, %v394
      %vm1498 = vcmp.eq.s32.totalorder %v1394, %v394
      %vm1499 = vcmp.eq.s32.totalorder %v1401, %v394
      %vm1500 = vcmp.eq.s32.totalorder %v1405, %v394
      %vm1501 = vcmp.eq.s32.totalorder %v1412, %v394
      %vm1502 = vcmp.eq.s32.totalorder %v1416, %v394
      %vm1503 = vcmp.eq.s32.totalorder %v1423, %v394
      %vm1504 = vcmp.eq.s32.totalorder %v1427, %v394
      %vm1505 = vcmp.eq.s32.totalorder %v1434, %v394
      %vm1506 = vcmp.eq.s32.totalorder %v1438, %v394
      %vm1507 = vcmp.eq.s32.totalorder %v1445, %v394
      %vm1508 = vcmp.eq.s32.totalorder %v1449, %v394
      %vm1509 = vcmp.eq.s32.totalorder %v1456, %v394
      %vm1510 = vcmp.eq.s32.totalorder %v1460, %v394
      %vm1511 = vcmp.eq.s32.totalorder %v1467, %v394
      %vm1512 = vcmp.eq.s32.totalorder %v1471, %v394
      %vm1513 = vcmp.eq.s32.totalorder %v1478, %v394
      %vm1514 = vcmp.eq.s32.totalorder %v1482, %v394
      %v1515 = vsel %vm1483, 1, 0
      %v1516 = vsel %vm1484, 1, 0
      %v1517 = vsel %vm1485, 1, 0
      %v1518 = vsel %vm1486, 1, 0
      %v1519 = vsel %vm1487, 1, 0
      %v1520 = vsel %vm1488, 1, 0
      %v1521 = vsel %vm1489, 1, 0
      %v1522 = vsel %vm1490, 1, 0
      %v1523 = vsel %vm1491, 1, 0
      %v1524 = vsel %vm1492, 1, 0
      %v1525 = vsel %vm1493, 1, 0
      %v1526 = vsel %vm1494, 1, 0
      %v1527 = vsel %vm1495, 1, 0
      %v1528 = vsel %vm1496, 1, 0
      %v1529 = vsel %vm1497, 1, 0
      %v1530 = vsel %vm1498, 1, 0
      %v1531 = vsel %vm1499, 1, 0
      %v1532 = vsel %vm1500, 1, 0
      %v1533 = vsel %vm1501, 1, 0
      %v1534 = vsel %vm1502, 1, 0
      %v1535 = vsel %vm1503, 1, 0
      %v1536 = vsel %vm1504, 1, 0
      %v1537 = vsel %vm1505, 1, 0
      %v1538 = vsel %vm1506, 1, 0
      %v1539 = vsel %vm1507, 1, 0
      %v1540 = vsel %vm1508, 1, 0
      %v1541 = vsel %vm1509, 1, 0
      %v1542 = vsel %vm1510, 1, 0
      %v1543 = vsel %vm1511, 1, 0
      %v1544 = vsel %vm1512, 1, 0
      %v1545 = vsel %vm1513, 1, 0
      %v1546 = vsel %vm1514, 1, 0
      %v1547 = vcvt.s32.f32 %v1515
      %v1548 = vcvt.s32.f32 %v1516
      %v1549 = vcvt.s32.f32 %v1517
      %v1550 = vcvt.s32.f32 %v1518
      %v1551 = vcvt.s32.f32 %v1519
      %v1552 = vcvt.s32.f32 %v1520
      %v1553 = vcvt.s32.f32 %v1521
      %v1554 = vcvt.s32.f32 %v1522
      %v1555 = vcvt.s32.f32 %v1523
      %v1556 = vcvt.s32.f32 %v1524
      %v1557 = vcvt.s32.f32 %v1525
      %v1558 = vcvt.s32.f32 %v1526
      %v1559 = vcvt.s32.f32 %v1527
      %v1560 = vcvt.s32.f32 %v1528
      %v1561 = vcvt.s32.f32 %v1529
      %v1562 = vcvt.s32.f32 %v1530
      %v1563 = vcvt.s32.f32 %v1531
      %v1564 = vcvt.s32.f32 %v1532
      %v1565 = vcvt.s32.f32 %v1533
      %v1566 = vcvt.s32.f32 %v1534
      %v1567 = vcvt.s32.f32 %v1535
      %v1568 = vcvt.s32.f32 %v1536
      %v1569 = vcvt.s32.f32 %v1537
      %v1570 = vcvt.s32.f32 %v1538
      %v1571 = vcvt.s32.f32 %v1539
      %v1572 = vcvt.s32.f32 %v1540
      %v1573 = vcvt.s32.f32 %v1541
      %v1574 = vcvt.s32.f32 %v1542
      %v1575 = vcvt.s32.f32 %v1543
      %v1576 = vcvt.s32.f32 %v1544
      %v1577 = vcvt.s32.f32 %v1545
      %v1578 = vcvt.s32.f32 %v1546
      %v1579 = vadd.f32 %v1275, %v1547
      %v1580 = vadd.f32 %v1276, %v1548
      %v1581 = vadd.f32 %v1277, %v1549
      %v1582 = vadd.f32 %v1278, %v1550
      %v1583 = vadd.f32 %v1279, %v1551
      %v1584 = vadd.f32 %v1280, %v1552
      %v1585 = vadd.f32 %v1281, %v1553
      %v1586 = vadd.f32 %v1282, %v1554
      %v1587 = vadd.f32 %v1283, %v1555
      %v1588 = vadd.f32 %v1284, %v1556
      %v1589 = vadd.f32 %v1285, %v1557
      %v1590 = vadd.f32 %v1286, %v1558
      %v1591 = vadd.f32 %v1287, %v1559
      %v1592 = vadd.f32 %v1288, %v1560
      %v1593 = vadd.f32 %v1289, %v1561
      %v1594 = vadd.f32 %v1290, %v1562
      %v1595 = vadd.f32 %v1291, %v1563
      %v1596 = vadd.f32 %v1292, %v1564
      %v1597 = vadd.f32 %v1293, %v1565
      %v1598 = vadd.f32 %v1294, %v1566
      %v1599 = vadd.f32 %v1295, %v1567
      %v1600 = vadd.f32 %v1296, %v1568
      %v1601 = vadd.f32 %v1297, %v1569
      %v1602 = vadd.f32 %v1298, %v1570
      %v1603 = vadd.f32 %v1299, %v1571
      %v1604 = vadd.f32 %v1300, %v1572
      %v1605 = vadd.f32 %v1301, %v1573
      %v1606 = vadd.f32 %v1302, %v1574
      %v1607 = vadd.f32 %v1303, %v1575
      %v1608 = vadd.f32 %v1304, %v1576
      %v1609 = vadd.f32 %v1305, %v1577
      %v1610 = vadd.f32 %v1306, %v1578
      %v1611 = vlaneseq
      %v1612 = vshrl.u32 %v1611, 7
      %v1613 = vsub.s32 0, %v1612
      %v1614 = vrot.slane %v389, %v1613
      %1616 = vbcast.lane.b32.xlu0 %v1614, 256
      %v1617 = vpop.permute.xlu0 %1616
      %s1619 = sor.u32 256, 8
      %1620 = vbcast.lane.b32.xlu0 %v1614, %s1619
      %v1621 = vpop.permute.xlu0 %1620
      %v1622 = vlaneseq
      %v1623 = vshrl.u32 %v1622, 7
      %v1624 = vsub.s32 1, %v1623
      %v1625 = vrot.slane %v389, %v1624
      %1627 = vbcast.lane.b32.xlu0 %v1625, 256
      %v1628 = vpop.permute.xlu0 %1627
      %s1630 = sor.u32 256, 8
      %1631 = vbcast.lane.b32.xlu0 %v1625, %s1630
      %v1632 = vpop.permute.xlu0 %1631
      %v1633 = vlaneseq
      %v1634 = vshrl.u32 %v1633, 7
      %v1635 = vsub.s32 2, %v1634
      %v1636 = vrot.slane %v389, %v1635
      %1638 = vbcast.lane.b32.xlu0 %v1636, 256
      %v1639 = vpop.permute.xlu0 %1638
      %s1641 = sor.u32 256, 8
      %1642 = vbcast.lane.b32.xlu0 %v1636, %s1641
      %v1643 = vpop.permute.xlu0 %1642
      %v1644 = vlaneseq
      %v1645 = vshrl.u32 %v1644, 7
      %v1646 = vsub.s32 3, %v1645
      %v1647 = vrot.slane %v389, %v1646
      %1649 = vbcast.lane.b32.xlu0 %v1647, 256
      %v1650 = vpop.permute.xlu0 %1649
      %s1652 = sor.u32 256, 8
      %1653 = vbcast.lane.b32.xlu0 %v1647, %s1652
      %v1654 = vpop.permute.xlu0 %1653
      %v1655 = vlaneseq
      %v1656 = vshrl.u32 %v1655, 7
      %v1657 = vsub.s32 4, %v1656
      %v1658 = vrot.slane %v389, %v1657
      %1660 = vbcast.lane.b32.xlu0 %v1658, 256
      %v1661 = vpop.permute.xlu0 %1660
      %s1663 = sor.u32 256, 8
      %1664 = vbcast.lane.b32.xlu0 %v1658, %s1663
      %v1665 = vpop.permute.xlu0 %1664
      %v1666 = vlaneseq
      %v1667 = vshrl.u32 %v1666, 7
      %v1668 = vsub.s32 5, %v1667
      %v1669 = vrot.slane %v389, %v1668
      %1671 = vbcast.lane.b32.xlu0 %v1669, 256
      %v1672 = vpop.permute.xlu0 %1671
      %s1674 = sor.u32 256, 8
      %1675 = vbcast.lane.b32.xlu0 %v1669, %s1674
      %v1676 = vpop.permute.xlu0 %1675
      %v1677 = vlaneseq
      %v1678 = vshrl.u32 %v1677, 7
      %v1679 = vsub.s32 6, %v1678
      %v1680 = vrot.slane %v389, %v1679
      %1682 = vbcast.lane.b32.xlu0 %v1680, 256
      %v1683 = vpop.permute.xlu0 %1682
      %s1685 = sor.u32 256, 8
      %1686 = vbcast.lane.b32.xlu0 %v1680, %s1685
      %v1687 = vpop.permute.xlu0 %1686
      %v1688 = vlaneseq
      %v1689 = vshrl.u32 %v1688, 7
      %v1690 = vsub.s32 7, %v1689
      %v1691 = vrot.slane %v389, %v1690
      %1693 = vbcast.lane.b32.xlu0 %v1691, 256
      %v1694 = vpop.permute.xlu0 %1693
      %s1696 = sor.u32 256, 8
      %1697 = vbcast.lane.b32.xlu0 %v1691, %s1696
      %v1698 = vpop.permute.xlu0 %1697
      %v1699 = vlaneseq
      %v1700 = vshrl.u32 %v1699, 7
      %v1701 = vsub.s32 0, %v1700
      %v1702 = vrot.slane %v390, %v1701
      %1704 = vbcast.lane.b32.xlu0 %v1702, 256
      %v1705 = vpop.permute.xlu0 %1704
      %s1707 = sor.u32 256, 8
      %1708 = vbcast.lane.b32.xlu0 %v1702, %s1707
      %v1709 = vpop.permute.xlu0 %1708
      %v1710 = vlaneseq
      %v1711 = vshrl.u32 %v1710, 7
      %v1712 = vsub.s32 1, %v1711
      %v1713 = vrot.slane %v390, %v1712
      %1715 = vbcast.lane.b32.xlu0 %v1713, 256
      %v1716 = vpop.permute.xlu0 %1715
      %s1718 = sor.u32 256, 8
      %1719 = vbcast.lane.b32.xlu0 %v1713, %s1718
      %v1720 = vpop.permute.xlu0 %1719
      %v1721 = vlaneseq
      %v1722 = vshrl.u32 %v1721, 7
      %v1723 = vsub.s32 2, %v1722
      %v1724 = vrot.slane %v390, %v1723
      %1726 = vbcast.lane.b32.xlu0 %v1724, 256
      %v1727 = vpop.permute.xlu0 %1726
      %s1729 = sor.u32 256, 8
      %1730 = vbcast.lane.b32.xlu0 %v1724, %s1729
      %v1731 = vpop.permute.xlu0 %1730
      %v1732 = vlaneseq
      %v1733 = vshrl.u32 %v1732, 7
      %v1734 = vsub.s32 3, %v1733
      %v1735 = vrot.slane %v390, %v1734
      %1737 = vbcast.lane.b32.xlu0 %v1735, 256
      %v1738 = vpop.permute.xlu0 %1737
      %s1740 = sor.u32 256, 8
      %1741 = vbcast.lane.b32.xlu0 %v1735, %s1740
      %v1742 = vpop.permute.xlu0 %1741
      %v1743 = vlaneseq
      %v1744 = vshrl.u32 %v1743, 7
      %v1745 = vsub.s32 4, %v1744
      %v1746 = vrot.slane %v390, %v1745
      %1748 = vbcast.lane.b32.xlu0 %v1746, 256
      %v1749 = vpop.permute.xlu0 %1748
      %s1751 = sor.u32 256, 8
      %1752 = vbcast.lane.b32.xlu0 %v1746, %s1751
      %v1753 = vpop.permute.xlu0 %1752
      %v1754 = vlaneseq
      %v1755 = vshrl.u32 %v1754, 7
      %v1756 = vsub.s32 5, %v1755
      %v1757 = vrot.slane %v390, %v1756
      %1759 = vbcast.lane.b32.xlu0 %v1757, 256
      %v1760 = vpop.permute.xlu0 %1759
      %s1762 = sor.u32 256, 8
      %1763 = vbcast.lane.b32.xlu0 %v1757, %s1762
      %v1764 = vpop.permute.xlu0 %1763
      %v1765 = vlaneseq
      %v1766 = vshrl.u32 %v1765, 7
      %v1767 = vsub.s32 6, %v1766
      %v1768 = vrot.slane %v390, %v1767
      %1770 = vbcast.lane.b32.xlu0 %v1768, 256
      %v1771 = vpop.permute.xlu0 %1770
      %s1773 = sor.u32 256, 8
      %1774 = vbcast.lane.b32.xlu0 %v1768, %s1773
      %v1775 = vpop.permute.xlu0 %1774
      %v1776 = vlaneseq
      %v1777 = vshrl.u32 %v1776, 7
      %v1778 = vsub.s32 7, %v1777
      %v1779 = vrot.slane %v390, %v1778
      %1781 = vbcast.lane.b32.xlu0 %v1779, 256
      %v1782 = vpop.permute.xlu0 %1781
      %s1784 = sor.u32 256, 8
      %1785 = vbcast.lane.b32.xlu0 %v1779, %s1784
      %v1786 = vpop.permute.xlu0 %1785
      %vm1787 = vcmp.eq.s32.totalorder %v1617, %v394
      %vm1788 = vcmp.eq.s32.totalorder %v1621, %v394
      %vm1789 = vcmp.eq.s32.totalorder %v1628, %v394
      %vm1790 = vcmp.eq.s32.totalorder %v1632, %v394
      %vm1791 = vcmp.eq.s32.totalorder %v1639, %v394
      %vm1792 = vcmp.eq.s32.totalorder %v1643, %v394
      %vm1793 = vcmp.eq.s32.totalorder %v1650, %v394
      %vm1794 = vcmp.eq.s32.totalorder %v1654, %v394
      %vm1795 = vcmp.eq.s32.totalorder %v1661, %v394
      %vm1796 = vcmp.eq.s32.totalorder %v1665, %v394
      %vm1797 = vcmp.eq.s32.totalorder %v1672, %v394
      %vm1798 = vcmp.eq.s32.totalorder %v1676, %v394
      %vm1799 = vcmp.eq.s32.totalorder %v1683, %v394
      %vm1800 = vcmp.eq.s32.totalorder %v1687, %v394
      %vm1801 = vcmp.eq.s32.totalorder %v1694, %v394
      %vm1802 = vcmp.eq.s32.totalorder %v1698, %v394
      %vm1803 = vcmp.eq.s32.totalorder %v1705, %v394
      %vm1804 = vcmp.eq.s32.totalorder %v1709, %v394
      %vm1805 = vcmp.eq.s32.totalorder %v1716, %v394
      %vm1806 = vcmp.eq.s32.totalorder %v1720, %v394
      %vm1807 = vcmp.eq.s32.totalorder %v1727, %v394
      %vm1808 = vcmp.eq.s32.totalorder %v1731, %v394
      %vm1809 = vcmp.eq.s32.totalorder %v1738, %v394
      %vm1810 = vcmp.eq.s32.totalorder %v1742, %v394
      %vm1811 = vcmp.eq.s32.totalorder %v1749, %v394
      %vm1812 = vcmp.eq.s32.totalorder %v1753, %v394
      %vm1813 = vcmp.eq.s32.totalorder %v1760, %v394
      %vm1814 = vcmp.eq.s32.totalorder %v1764, %v394
      %vm1815 = vcmp.eq.s32.totalorder %v1771, %v394
      %vm1816 = vcmp.eq.s32.totalorder %v1775, %v394
      %vm1817 = vcmp.eq.s32.totalorder %v1782, %v394
      %vm1818 = vcmp.eq.s32.totalorder %v1786, %v394
      %v1819 = vsel %vm1787, 1, 0
      %v1820 = vsel %vm1788, 1, 0
      %v1821 = vsel %vm1789, 1, 0
      %v1822 = vsel %vm1790, 1, 0
      %v1823 = vsel %vm1791, 1, 0
      %v1824 = vsel %vm1792, 1, 0
      %v1825 = vsel %vm1793, 1, 0
      %v1826 = vsel %vm1794, 1, 0
      %v1827 = vsel %vm1795, 1, 0
      %v1828 = vsel %vm1796, 1, 0
      %v1829 = vsel %vm1797, 1, 0
      %v1830 = vsel %vm1798, 1, 0
      %v1831 = vsel %vm1799, 1, 0
      %v1832 = vsel %vm1800, 1, 0
      %v1833 = vsel %vm1801, 1, 0
      %v1834 = vsel %vm1802, 1, 0
      %v1835 = vsel %vm1803, 1, 0
      %v1836 = vsel %vm1804, 1, 0
      %v1837 = vsel %vm1805, 1, 0
      %v1838 = vsel %vm1806, 1, 0
      %v1839 = vsel %vm1807, 1, 0
      %v1840 = vsel %vm1808, 1, 0
      %v1841 = vsel %vm1809, 1, 0
      %v1842 = vsel %vm1810, 1, 0
      %v1843 = vsel %vm1811, 1, 0
      %v1844 = vsel %vm1812, 1, 0
      %v1845 = vsel %vm1813, 1, 0
      %v1846 = vsel %vm1814, 1, 0
      %v1847 = vsel %vm1815, 1, 0
      %v1848 = vsel %vm1816, 1, 0
      %v1849 = vsel %vm1817, 1, 0
      %v1850 = vsel %vm1818, 1, 0
      %v1851 = vcvt.s32.f32 %v1819
      %v1852 = vcvt.s32.f32 %v1820
      %v1853 = vcvt.s32.f32 %v1821
      %v1854 = vcvt.s32.f32 %v1822
      %v1855 = vcvt.s32.f32 %v1823
      %v1856 = vcvt.s32.f32 %v1824
      %v1857 = vcvt.s32.f32 %v1825
      %v1858 = vcvt.s32.f32 %v1826
      %v1859 = vcvt.s32.f32 %v1827
      %v1860 = vcvt.s32.f32 %v1828
      %v1861 = vcvt.s32.f32 %v1829
      %v1862 = vcvt.s32.f32 %v1830
      %v1863 = vcvt.s32.f32 %v1831
      %v1864 = vcvt.s32.f32 %v1832
      %v1865 = vcvt.s32.f32 %v1833
      %v1866 = vcvt.s32.f32 %v1834
      %v1867 = vcvt.s32.f32 %v1835
      %v1868 = vcvt.s32.f32 %v1836
      %v1869 = vcvt.s32.f32 %v1837
      %v1870 = vcvt.s32.f32 %v1838
      %v1871 = vcvt.s32.f32 %v1839
      %v1872 = vcvt.s32.f32 %v1840
      %v1873 = vcvt.s32.f32 %v1841
      %v1874 = vcvt.s32.f32 %v1842
      %v1875 = vcvt.s32.f32 %v1843
      %v1876 = vcvt.s32.f32 %v1844
      %v1877 = vcvt.s32.f32 %v1845
      %v1878 = vcvt.s32.f32 %v1846
      %v1879 = vcvt.s32.f32 %v1847
      %v1880 = vcvt.s32.f32 %v1848
      %v1881 = vcvt.s32.f32 %v1849
      %v1882 = vcvt.s32.f32 %v1850
      %v1883 = vadd.f32 %v1579, %v1851
      %v1884 = vadd.f32 %v1580, %v1852
      %v1885 = vadd.f32 %v1581, %v1853
      %v1886 = vadd.f32 %v1582, %v1854
      %v1887 = vadd.f32 %v1583, %v1855
      %v1888 = vadd.f32 %v1584, %v1856
      %v1889 = vadd.f32 %v1585, %v1857
      %v1890 = vadd.f32 %v1586, %v1858
      %v1891 = vadd.f32 %v1587, %v1859
      %v1892 = vadd.f32 %v1588, %v1860
      %v1893 = vadd.f32 %v1589, %v1861
      %v1894 = vadd.f32 %v1590, %v1862
      %v1895 = vadd.f32 %v1591, %v1863
      %v1896 = vadd.f32 %v1592, %v1864
      %v1897 = vadd.f32 %v1593, %v1865
      %v1898 = vadd.f32 %v1594, %v1866
      %v1899 = vadd.f32 %v1595, %v1867
      %v1900 = vadd.f32 %v1596, %v1868
      %v1901 = vadd.f32 %v1597, %v1869
      %v1902 = vadd.f32 %v1598, %v1870
      %v1903 = vadd.f32 %v1599, %v1871
      %v1904 = vadd.f32 %v1600, %v1872
      %v1905 = vadd.f32 %v1601, %v1873
      %v1906 = vadd.f32 %v1602, %v1874
      %v1907 = vadd.f32 %v1603, %v1875
      %v1908 = vadd.f32 %v1604, %v1876
      %v1909 = vadd.f32 %v1605, %v1877
      %v1910 = vadd.f32 %v1606, %v1878
      %v1911 = vadd.f32 %v1607, %v1879
      %v1912 = vadd.f32 %v1608, %v1880
      %v1913 = vadd.f32 %v1609, %v1881
      %v1914 = vadd.f32 %v1610, %v1882
      %v1915 = vlaneseq
      %v1916 = vshrl.u32 %v1915, 7
      %v1917 = vsub.s32 0, %v1916
      %v1918 = vrot.slane %v391, %v1917
      %1920 = vbcast.lane.b32.xlu0 %v1918, 256
      %v1921 = vpop.permute.xlu0 %1920
      %s1923 = sor.u32 256, 8
      %1924 = vbcast.lane.b32.xlu0 %v1918, %s1923
      %v1925 = vpop.permute.xlu0 %1924
      %v1926 = vlaneseq
      %v1927 = vshrl.u32 %v1926, 7
      %v1928 = vsub.s32 1, %v1927
      %v1929 = vrot.slane %v391, %v1928
      %1931 = vbcast.lane.b32.xlu0 %v1929, 256
      %v1932 = vpop.permute.xlu0 %1931
      %s1934 = sor.u32 256, 8
      %1935 = vbcast.lane.b32.xlu0 %v1929, %s1934
      %v1936 = vpop.permute.xlu0 %1935
      %v1937 = vlaneseq
      %v1938 = vshrl.u32 %v1937, 7
      %v1939 = vsub.s32 2, %v1938
      %v1940 = vrot.slane %v391, %v1939
      %1942 = vbcast.lane.b32.xlu0 %v1940, 256
      %v1943 = vpop.permute.xlu0 %1942
      %s1945 = sor.u32 256, 8
      %1946 = vbcast.lane.b32.xlu0 %v1940, %s1945
      %v1947 = vpop.permute.xlu0 %1946
      %v1948 = vlaneseq
      %v1949 = vshrl.u32 %v1948, 7
      %v1950 = vsub.s32 3, %v1949
      %v1951 = vrot.slane %v391, %v1950
      %1953 = vbcast.lane.b32.xlu0 %v1951, 256
      %v1954 = vpop.permute.xlu0 %1953
      %s1956 = sor.u32 256, 8
      %1957 = vbcast.lane.b32.xlu0 %v1951, %s1956
      %v1958 = vpop.permute.xlu0 %1957
      %v1959 = vlaneseq
      %v1960 = vshrl.u32 %v1959, 7
      %v1961 = vsub.s32 4, %v1960
      %v1962 = vrot.slane %v391, %v1961
      %1964 = vbcast.lane.b32.xlu0 %v1962, 256
      %v1965 = vpop.permute.xlu0 %1964
      %s1967 = sor.u32 256, 8
      %1968 = vbcast.lane.b32.xlu0 %v1962, %s1967
      %v1969 = vpop.permute.xlu0 %1968
      %v1970 = vlaneseq
      %v1971 = vshrl.u32 %v1970, 7
      %v1972 = vsub.s32 5, %v1971
      %v1973 = vrot.slane %v391, %v1972
      %1975 = vbcast.lane.b32.xlu0 %v1973, 256
      %v1976 = vpop.permute.xlu0 %1975
      %s1978 = sor.u32 256, 8
      %1979 = vbcast.lane.b32.xlu0 %v1973, %s1978
      %v1980 = vpop.permute.xlu0 %1979
      %v1981 = vlaneseq
      %v1982 = vshrl.u32 %v1981, 7
      %v1983 = vsub.s32 6, %v1982
      %v1984 = vrot.slane %v391, %v1983
      %1986 = vbcast.lane.b32.xlu0 %v1984, 256
      %v1987 = vpop.permute.xlu0 %1986
      %s1989 = sor.u32 256, 8
      %1990 = vbcast.lane.b32.xlu0 %v1984, %s1989
      %v1991 = vpop.permute.xlu0 %1990
      %v1992 = vlaneseq
      %v1993 = vshrl.u32 %v1992, 7
      %v1994 = vsub.s32 7, %v1993
      %v1995 = vrot.slane %v391, %v1994
      %1997 = vbcast.lane.b32.xlu0 %v1995, 256
      %v1998 = vpop.permute.xlu0 %1997
      %s2000 = sor.u32 256, 8
      %2001 = vbcast.lane.b32.xlu0 %v1995, %s2000
      %v2002 = vpop.permute.xlu0 %2001
      %v2003 = vlaneseq
      %v2004 = vshrl.u32 %v2003, 7
      %v2005 = vsub.s32 0, %v2004
      %v2006 = vrot.slane %v392, %v2005
      %2008 = vbcast.lane.b32.xlu0 %v2006, 256
      %v2009 = vpop.permute.xlu0 %2008
      %s2011 = sor.u32 256, 8
      %2012 = vbcast.lane.b32.xlu0 %v2006, %s2011
      %v2013 = vpop.permute.xlu0 %2012
      %v2014 = vlaneseq
      %v2015 = vshrl.u32 %v2014, 7
      %v2016 = vsub.s32 1, %v2015
      %v2017 = vrot.slane %v392, %v2016
      %2019 = vbcast.lane.b32.xlu0 %v2017, 256
      %v2020 = vpop.permute.xlu0 %2019
      %s2022 = sor.u32 256, 8
      %2023 = vbcast.lane.b32.xlu0 %v2017, %s2022
      %v2024 = vpop.permute.xlu0 %2023
      %v2025 = vlaneseq
      %v2026 = vshrl.u32 %v2025, 7
      %v2027 = vsub.s32 2, %v2026
      %v2028 = vrot.slane %v392, %v2027
      %2030 = vbcast.lane.b32.xlu0 %v2028, 256
      %v2031 = vpop.permute.xlu0 %2030
      %s2033 = sor.u32 256, 8
      %2034 = vbcast.lane.b32.xlu0 %v2028, %s2033
      %v2035 = vpop.permute.xlu0 %2034
      %v2036 = vlaneseq
      %v2037 = vshrl.u32 %v2036, 7
      %v2038 = vsub.s32 3, %v2037
      %v2039 = vrot.slane %v392, %v2038
      %2041 = vbcast.lane.b32.xlu0 %v2039, 256
      %v2042 = vpop.permute.xlu0 %2041
      %s2044 = sor.u32 256, 8
      %2045 = vbcast.lane.b32.xlu0 %v2039, %s2044
      %v2046 = vpop.permute.xlu0 %2045
      %v2047 = vlaneseq
      %v2048 = vshrl.u32 %v2047, 7
      %v2049 = vsub.s32 4, %v2048
      %v2050 = vrot.slane %v392, %v2049
      %2052 = vbcast.lane.b32.xlu0 %v2050, 256
      %v2053 = vpop.permute.xlu0 %2052
      %s2055 = sor.u32 256, 8
      %2056 = vbcast.lane.b32.xlu0 %v2050, %s2055
      %v2057 = vpop.permute.xlu0 %2056
      %v2058 = vlaneseq
      %v2059 = vshrl.u32 %v2058, 7
      %v2060 = vsub.s32 5, %v2059
      %v2061 = vrot.slane %v392, %v2060
      %2063 = vbcast.lane.b32.xlu0 %v2061, 256
      %v2064 = vpop.permute.xlu0 %2063
      %s2066 = sor.u32 256, 8
      %2067 = vbcast.lane.b32.xlu0 %v2061, %s2066
      %v2068 = vpop.permute.xlu0 %2067
      %v2069 = vlaneseq
      %v2070 = vshrl.u32 %v2069, 7
      %v2071 = vsub.s32 6, %v2070
      %v2072 = vrot.slane %v392, %v2071
      %2074 = vbcast.lane.b32.xlu0 %v2072, 256
      %v2075 = vpop.permute.xlu0 %2074
      %s2077 = sor.u32 256, 8
      %2078 = vbcast.lane.b32.xlu0 %v2072, %s2077
      %v2079 = vpop.permute.xlu0 %2078
      %v2080 = vlaneseq
      %v2081 = vshrl.u32 %v2080, 7
      %v2082 = vsub.s32 7, %v2081
      %v2083 = vrot.slane %v392, %v2082
      %2085 = vbcast.lane.b32.xlu0 %v2083, 256
      %v2086 = vpop.permute.xlu0 %2085
      %s2088 = sor.u32 256, 8
      %2089 = vbcast.lane.b32.xlu0 %v2083, %s2088
      %v2090 = vpop.permute.xlu0 %2089
      %vm2091 = vcmp.eq.s32.totalorder %v1921, %v394
      %vm2092 = vcmp.eq.s32.totalorder %v1925, %v394
      %vm2093 = vcmp.eq.s32.totalorder %v1932, %v394
      %vm2094 = vcmp.eq.s32.totalorder %v1936, %v394
      %vm2095 = vcmp.eq.s32.totalorder %v1943, %v394
      %vm2096 = vcmp.eq.s32.totalorder %v1947, %v394
      %vm2097 = vcmp.eq.s32.totalorder %v1954, %v394
      %vm2098 = vcmp.eq.s32.totalorder %v1958, %v394
      %vm2099 = vcmp.eq.s32.totalorder %v1965, %v394
      %vm2100 = vcmp.eq.s32.totalorder %v1969, %v394
      %vm2101 = vcmp.eq.s32.totalorder %v1976, %v394
      %vm2102 = vcmp.eq.s32.totalorder %v1980, %v394
      %vm2103 = vcmp.eq.s32.totalorder %v1987, %v394
      %vm2104 = vcmp.eq.s32.totalorder %v1991, %v394
      %vm2105 = vcmp.eq.s32.totalorder %v1998, %v394
      %vm2106 = vcmp.eq.s32.totalorder %v2002, %v394
      %vm2107 = vcmp.eq.s32.totalorder %v2009, %v394
      %vm2108 = vcmp.eq.s32.totalorder %v2013, %v394
      %vm2109 = vcmp.eq.s32.totalorder %v2020, %v394
      %vm2110 = vcmp.eq.s32.totalorder %v2024, %v394
      %vm2111 = vcmp.eq.s32.totalorder %v2031, %v394
      %vm2112 = vcmp.eq.s32.totalorder %v2035, %v394
      %vm2113 = vcmp.eq.s32.totalorder %v2042, %v394
      %vm2114 = vcmp.eq.s32.totalorder %v2046, %v394
      %vm2115 = vcmp.eq.s32.totalorder %v2053, %v394
      %vm2116 = vcmp.eq.s32.totalorder %v2057, %v394
      %vm2117 = vcmp.eq.s32.totalorder %v2064, %v394
      %vm2118 = vcmp.eq.s32.totalorder %v2068, %v394
      %vm2119 = vcmp.eq.s32.totalorder %v2075, %v394
      %vm2120 = vcmp.eq.s32.totalorder %v2079, %v394
      %vm2121 = vcmp.eq.s32.totalorder %v2086, %v394
      %vm2122 = vcmp.eq.s32.totalorder %v2090, %v394
      %v2123 = vsel %vm2091, 1, 0
      %v2124 = vsel %vm2092, 1, 0
      %v2125 = vsel %vm2093, 1, 0
      %v2126 = vsel %vm2094, 1, 0
      %v2127 = vsel %vm2095, 1, 0
      %v2128 = vsel %vm2096, 1, 0
      %v2129 = vsel %vm2097, 1, 0
      %v2130 = vsel %vm2098, 1, 0
      %v2131 = vsel %vm2099, 1, 0
      %v2132 = vsel %vm2100, 1, 0
      %v2133 = vsel %vm2101, 1, 0
      %v2134 = vsel %vm2102, 1, 0
      %v2135 = vsel %vm2103, 1, 0
      %v2136 = vsel %vm2104, 1, 0
      %v2137 = vsel %vm2105, 1, 0
      %v2138 = vsel %vm2106, 1, 0
      %v2139 = vsel %vm2107, 1, 0
      %v2140 = vsel %vm2108, 1, 0
      %v2141 = vsel %vm2109, 1, 0
      %v2142 = vsel %vm2110, 1, 0
      %v2143 = vsel %vm2111, 1, 0
      %v2144 = vsel %vm2112, 1, 0
      %v2145 = vsel %vm2113, 1, 0
      %v2146 = vsel %vm2114, 1, 0
      %v2147 = vsel %vm2115, 1, 0
      %v2148 = vsel %vm2116, 1, 0
      %v2149 = vsel %vm2117, 1, 0
      %v2150 = vsel %vm2118, 1, 0
      %v2151 = vsel %vm2119, 1, 0
      %v2152 = vsel %vm2120, 1, 0
      %v2153 = vsel %vm2121, 1, 0
      %v2154 = vsel %vm2122, 1, 0
      %v2155 = vcvt.s32.f32 %v2123
      %v2156 = vcvt.s32.f32 %v2124
      %v2157 = vcvt.s32.f32 %v2125
      %v2158 = vcvt.s32.f32 %v2126
      %v2159 = vcvt.s32.f32 %v2127
      %v2160 = vcvt.s32.f32 %v2128
      %v2161 = vcvt.s32.f32 %v2129
      %v2162 = vcvt.s32.f32 %v2130
      %v2163 = vcvt.s32.f32 %v2131
      %v2164 = vcvt.s32.f32 %v2132
      %v2165 = vcvt.s32.f32 %v2133
      %v2166 = vcvt.s32.f32 %v2134
      %v2167 = vcvt.s32.f32 %v2135
      %v2168 = vcvt.s32.f32 %v2136
      %v2169 = vcvt.s32.f32 %v2137
      %v2170 = vcvt.s32.f32 %v2138
      %v2171 = vcvt.s32.f32 %v2139
      %v2172 = vcvt.s32.f32 %v2140
      %v2173 = vcvt.s32.f32 %v2141
      %v2174 = vcvt.s32.f32 %v2142
      %v2175 = vcvt.s32.f32 %v2143
      %v2176 = vcvt.s32.f32 %v2144
      %v2177 = vcvt.s32.f32 %v2145
      %v2178 = vcvt.s32.f32 %v2146
      %v2179 = vcvt.s32.f32 %v2147
      %v2180 = vcvt.s32.f32 %v2148
      %v2181 = vcvt.s32.f32 %v2149
      %v2182 = vcvt.s32.f32 %v2150
      %v2183 = vcvt.s32.f32 %v2151
      %v2184 = vcvt.s32.f32 %v2152
      %v2185 = vcvt.s32.f32 %v2153
      %v2186 = vcvt.s32.f32 %v2154
      %v2187 = vadd.f32 %v1883, %v2155
      %v2188 = vadd.f32 %v1884, %v2156
      %v2189 = vadd.f32 %v1885, %v2157
      %v2190 = vadd.f32 %v1886, %v2158
      %v2191 = vadd.f32 %v1887, %v2159
      %v2192 = vadd.f32 %v1888, %v2160
      %v2193 = vadd.f32 %v1889, %v2161
      %v2194 = vadd.f32 %v1890, %v2162
      %v2195 = vadd.f32 %v1891, %v2163
      %v2196 = vadd.f32 %v1892, %v2164
      %v2197 = vadd.f32 %v1893, %v2165
      %v2198 = vadd.f32 %v1894, %v2166
      %v2199 = vadd.f32 %v1895, %v2167
      %v2200 = vadd.f32 %v1896, %v2168
      %v2201 = vadd.f32 %v1897, %v2169
      %v2202 = vadd.f32 %v1898, %v2170
      %v2203 = vadd.f32 %v1899, %v2171
      %v2204 = vadd.f32 %v1900, %v2172
      %v2205 = vadd.f32 %v1901, %v2173
      %v2206 = vadd.f32 %v1902, %v2174
      %v2207 = vadd.f32 %v1903, %v2175
      %v2208 = vadd.f32 %v1904, %v2176
      %v2209 = vadd.f32 %v1905, %v2177
      %v2210 = vadd.f32 %v1906, %v2178
      %v2211 = vadd.f32 %v1907, %v2179
      %v2212 = vadd.f32 %v1908, %v2180
      %v2213 = vadd.f32 %v1909, %v2181
      %v2214 = vadd.f32 %v1910, %v2182
      %v2215 = vadd.f32 %v1911, %v2183
      %v2216 = vadd.f32 %v1912, %v2184
      %v2217 = vadd.f32 %v1913, %v2185
      %v2218 = vadd.f32 %v1914, %v2186
      %v2219 = vpack.c.bf16 %v2188, %v2187
      %v2220 = vpack.c.bf16 %v2190, %v2189
      %v2221 = vpack.c.bf16 %v2192, %v2191
      %v2222 = vpack.c.bf16 %v2194, %v2193
      %v2223 = vpack.c.bf16 %v2196, %v2195
      %v2224 = vpack.c.bf16 %v2198, %v2197
      %v2225 = vpack.c.bf16 %v2200, %v2199
      %v2226 = vpack.c.bf16 %v2202, %v2201
      %v2227 = vpack.c.bf16 %v2204, %v2203
      %v2228 = vpack.c.bf16 %v2206, %v2205
      %v2229 = vpack.c.bf16 %v2208, %v2207
      %v2230 = vpack.c.bf16 %v2210, %v2209
      %v2231 = vpack.c.bf16 %v2212, %v2211
      %v2232 = vpack.c.bf16 %v2214, %v2213
      %v2233 = vpack.c.bf16 %v2216, %v2215
      %v2234 = vpack.c.bf16 %v2218, %v2217
      %v2235 = vld [vmem:[%s5] sm:$0xf]
      %v2236 = vld [vmem:[%s5 + $0x4] sm:$0xf]
      %v2237 = vld [vmem:[%s5 + $0x8] sm:$0xf]
      %v2238 = vld [vmem:[%s5 + $0xc] sm:$0xf]
      %v2239 = vld [vmem:[%s5 + $0x10] sm:$0xf]
      %v2240 = vld [vmem:[%s5 + $0x14] sm:$0xf]
      %v2241 = vld [vmem:[%s5 + $0x18] sm:$0xf]
      %v2242 = vld [vmem:[%s5 + $0x1c] sm:$0xf]
      %v2243 = vld [vmem:[%s5 + $0x20] sm:$0xf]
      %v2244 = vld [vmem:[%s5 + $0x24] sm:$0xf]
      %v2245 = vld [vmem:[%s5 + $0x28] sm:$0xf]
      %v2246 = vld [vmem:[%s5 + $0x2c] sm:$0xf]
      %v2259 = vunpack.c.l.b16 %v2235
      %v2260 = vunpack.c.l.b16 %v2236
      %v2261 = vunpack.c.l.b16 %v2237
      %v2262 = vunpack.c.l.b16 %v2238
      %v2263 = vunpack.c.l.b16 %v2239
      %v2264 = vunpack.c.l.b16 %v2240
      %v2265 = vunpack.c.l.b16 %v2241
      %v2266 = vunpack.c.l.b16 %v2242
      %v2267 = vunpack.c.l.b16 %v2243
      %v2268 = vunpack.c.l.b16 %v2244
      %v2269 = vunpack.c.l.b16 %v2245
      %v2270 = vunpack.c.l.b16 %v2246
      %v2271 = vpack.c.b16 %v2260, %v2259
      %v2272 = vpack.c.b16 %v2262, %v2261
      %v2273 = vpack.c.b16 %v2264, %v2263
      %v2274 = vpack.c.b16 %v2266, %v2265
      %v2275 = vpack.c.b16 %v2268, %v2267
      %v2276 = vpack.c.b16 %v2270, %v2269
      %vm2283 = vcmask 785408
      %v2285 = vsel %vm2283, %v2219, 0
      %v2288 = vsel %vm2283, %v2220, 0
      %v2291 = vsel %vm2283, %v2221, 0
      %v2294 = vsel %vm2283, %v2222, 0
      %v2297 = vsel %vm2283, %v2223, 0
      %v2300 = vsel %vm2283, %v2224, 0
      %v2303 = vsel %vm2283, %v2225, 0
      %v2306 = vsel %vm2283, %v2226, 0
      %v2309 = vsel %vm2283, %v2227, 0
      %v2312 = vsel %vm2283, %v2228, 0
      %v2315 = vsel %vm2283, %v2229, 0
      %v2318 = vsel %vm2283, %v2230, 0
      %v2321 = vsel %vm2283, %v2231, 0
      %v2324 = vsel %vm2283, %v2232, 0
      %v2327 = vsel %vm2283, %v2233, 0
      %v2330 = vsel %vm2283, %v2234, 0
      %2332 = vmatprep.subr.bf16.mxu0 0
      %2333 = vmatpush1.bf16.msra.mxu0 0
      %2334 = vmatprep.subr.bf16.mxu0 0
      %2335 = vmatpush1.bf16.msra.mxu0 0
      %2336 = vmatprep.subr.bf16.mxu0 0
      %2337 = vmatpush1.bf16.msra.mxu0 %v2276
      %2338 = vmatprep.subr.bf16.mxu0 0
      %2339 = vmatpush1.bf16.msra.mxu0 %v2275
      %2340 = vmatprep.subr.bf16.mxu0 0
      %2341 = vmatpush1.bf16.msra.mxu0 %v2274
      %2342 = vmatprep.subr.bf16.mxu0 0
      %2343 = vmatpush1.bf16.msra.mxu0 %v2273
      %2344 = vmatprep.subr.bf16.mxu0 0
      %2345 = vmatpush1.bf16.msra.mxu0 %v2272
      %2346 = vmatprep.subr.bf16.mxu0 0
      %2347 = vmatpush1.bf16.msra.mxu0 %v2271
      %2348 = vmatprep.subr.bf16.mxu0 0
      %2349 = vmatpush2.bf16.msra.mxu0 0
      %2350 = vmatprep.subr.bf16.mxu0 0
      %2351 = vmatpush2.bf16.msra.mxu0 0
      %2352 = vmatprep.subr.bf16.mxu0 0
      %2353 = vmatpush2.bf16.msra.mxu0 0
      %2354 = vmatprep.subr.bf16.mxu0 0
      %2355 = vmatpush2.bf16.msra.mxu0 0
      %2356 = vmatprep.subr.bf16.mxu0 0
      %2357 = vmatpush2.bf16.msra.mxu0 0
      %2358 = vmatprep.subr.bf16.mxu0 0
      %2359 = vmatpush2.bf16.msra.mxu0 0
      %2360 = vmatprep.subr.bf16.mxu0 0
      %2361 = vmatpush2.bf16.msra.mxu0 0
      %2362 = vmatprep.subr.bf16.mxu0 0
      %2363 = vmatpush2.bf16.msra.mxu0 0
      %2364 = vmatprep.mubr.bf16.mxu0 0
      %2365 = vmatmul.mubr.bf16.gmra.mxu0 %v2285
      %v2366 = vpop.f32.mrf.mxu0
      %v2367 = vadd.f32 0.0, %v2366
      %v2368 = vpop.f32.mrf.mxu0
      %v2369 = vpop.f32.mrf.mxu0
      %v2370 = vadd.f32 0.0, %v2369
      %v2371 = vpop.f32.mrf.mxu0
      %2372 = vmatprep.mubr.bf16.mxu0 0
      %2373 = vmatmul.mubr.bf16.gmra.mxu0 %v2288
      %v2374 = vpop.f32.mrf.mxu0
      %v2375 = vadd.f32 0.0, %v2374
      %v2376 = vpop.f32.mrf.mxu0
      %v2377 = vpop.f32.mrf.mxu0
      %v2378 = vadd.f32 0.0, %v2377
      %v2379 = vpop.f32.mrf.mxu0
      %2380 = vmatprep.mubr.bf16.mxu0 0
      %2381 = vmatmul.mubr.bf16.gmra.mxu0 %v2291
      %v2382 = vpop.f32.mrf.mxu0
      %v2383 = vadd.f32 0.0, %v2382
      %v2384 = vpop.f32.mrf.mxu0
      %v2385 = vpop.f32.mrf.mxu0
      %v2386 = vadd.f32 0.0, %v2385
      %v2387 = vpop.f32.mrf.mxu0
      %2388 = vmatprep.mubr.bf16.mxu0 0
      %2389 = vmatmul.mubr.bf16.gmra.mxu0 %v2294
      %v2390 = vpop.f32.mrf.mxu0
      %v2391 = vadd.f32 0.0, %v2390
      %v2392 = vpop.f32.mrf.mxu0
      %v2393 = vpop.f32.mrf.mxu0
      %v2394 = vadd.f32 0.0, %v2393
      %v2395 = vpop.f32.mrf.mxu0
      %2396 = vmatprep.mubr.bf16.mxu0 0
      %2397 = vmatmul.mubr.bf16.gmra.mxu0 %v2297
      %v2398 = vpop.f32.mrf.mxu0
      %v2399 = vadd.f32 0.0, %v2398
      %v2400 = vpop.f32.mrf.mxu0
      %v2401 = vpop.f32.mrf.mxu0
      %v2402 = vadd.f32 0.0, %v2401
      %v2403 = vpop.f32.mrf.mxu0
      %2404 = vmatprep.mubr.bf16.mxu0 0
      %2405 = vmatmul.mubr.bf16.gmra.mxu0 %v2300
      %v2406 = vpop.f32.mrf.mxu0
      %v2407 = vadd.f32 0.0, %v2406
      %v2408 = vpop.f32.mrf.mxu0
      %v2409 = vpop.f32.mrf.mxu0
      %v2410 = vadd.f32 0.0, %v2409
      %v2411 = vpop.f32.mrf.mxu0
      %2412 = vmatprep.mubr.bf16.mxu0 0
      %2413 = vmatmul.mubr.bf16.gmra.mxu0 %v2303
      %v2414 = vpop.f32.mrf.mxu0
      %v2415 = vadd.f32 0.0, %v2414
      %v2416 = vpop.f32.mrf.mxu0
      %v2417 = vpop.f32.mrf.mxu0
      %v2418 = vadd.f32 0.0, %v2417
      %v2419 = vpop.f32.mrf.mxu0
      %2420 = vmatprep.mubr.bf16.mxu0 0
      %2421 = vmatmul.mubr.bf16.gmra.mxu0 %v2306
      %v2422 = vpop.f32.mrf.mxu0
      %v2423 = vadd.f32 0.0, %v2422
      %v2424 = vpop.f32.mrf.mxu0
      %v2425 = vpop.f32.mrf.mxu0
      %v2426 = vadd.f32 0.0, %v2425
      %v2427 = vpop.f32.mrf.mxu0
      %2428 = vmatprep.mubr.bf16.mxu0 0
      %2429 = vmatmul.mubr.bf16.gmra.mxu0 %v2309
      %v2430 = vpop.f32.mrf.mxu0
      %v2431 = vadd.f32 0.0, %v2430
      %v2432 = vpop.f32.mrf.mxu0
      %v2433 = vpop.f32.mrf.mxu0
      %v2434 = vadd.f32 0.0, %v2433
      %v2435 = vpop.f32.mrf.mxu0
      %2436 = vmatprep.mubr.bf16.mxu0 0
      %2437 = vmatmul.mubr.bf16.gmra.mxu0 %v2312
      %v2438 = vpop.f32.mrf.mxu0
      %v2439 = vadd.f32 0.0, %v2438
      %v2440 = vpop.f32.mrf.mxu0
      %v2441 = vpop.f32.mrf.mxu0
      %v2442 = vadd.f32 0.0, %v2441
      %v2443 = vpop.f32.mrf.mxu0
      %2444 = vmatprep.mubr.bf16.mxu0 0
      %2445 = vmatmul.mubr.bf16.gmra.mxu0 %v2315
      %v2446 = vpop.f32.mrf.mxu0
      %v2447 = vadd.f32 0.0, %v2446
      %v2448 = vpop.f32.mrf.mxu0
      %v2449 = vpop.f32.mrf.mxu0
      %v2450 = vadd.f32 0.0, %v2449
      %v2451 = vpop.f32.mrf.mxu0
      %2452 = vmatprep.mubr.bf16.mxu0 0
      %2453 = vmatmul.mubr.bf16.gmra.mxu0 %v2318
      %v2454 = vpop.f32.mrf.mxu0
      %v2455 = vadd.f32 0.0, %v2454
      %v2456 = vpop.f32.mrf.mxu0
      %v2457 = vpop.f32.mrf.mxu0
      %v2458 = vadd.f32 0.0, %v2457
      %v2459 = vpop.f32.mrf.mxu0
      %2460 = vmatprep.mubr.bf16.mxu0 0
      %2461 = vmatmul.mubr.bf16.gmra.mxu0 %v2321
      %v2462 = vpop.f32.mrf.mxu0
      %v2463 = vadd.f32 0.0, %v2462
      %v2464 = vpop.f32.mrf.mxu0
      %v2465 = vpop.f32.mrf.mxu0
      %v2466 = vadd.f32 0.0, %v2465
      %v2467 = vpop.f32.mrf.mxu0
      %2468 = vmatprep.mubr.bf16.mxu0 0
      %2469 = vmatmul.mubr.bf16.gmra.mxu0 %v2324
      %v2470 = vpop.f32.mrf.mxu0
      %v2471 = vadd.f32 0.0, %v2470
      %v2472 = vpop.f32.mrf.mxu0
      %v2473 = vpop.f32.mrf.mxu0
      %v2474 = vadd.f32 0.0, %v2473
      %v2475 = vpop.f32.mrf.mxu0
      %2476 = vmatprep.mubr.bf16.mxu0 0
      %2477 = vmatmul.mubr.bf16.gmra.mxu0 %v2327
      %v2478 = vpop.f32.mrf.mxu0
      %v2479 = vadd.f32 0.0, %v2478
      %v2480 = vpop.f32.mrf.mxu0
      %v2481 = vpop.f32.mrf.mxu0
      %v2482 = vadd.f32 0.0, %v2481
      %v2483 = vpop.f32.mrf.mxu0
      %2484 = vmatprep.mubr.bf16.mxu0 0
      %2485 = vmatmul.mubr.bf16.gmra.mxu0 %v2330
      %v2486 = vpop.f32.mrf.mxu0
      %v2487 = vadd.f32 0.0, %v2486
      %v2488 = vpop.f32.mrf.mxu0
      %v2489 = vpop.f32.mrf.mxu0
      %v2490 = vadd.f32 0.0, %v2489
      %v2491 = vpop.f32.mrf.mxu0
      %2492 = vdwg.mxu0
      %v2493 = vld [vmem:[%s6] sm:$0xf]
      %v2494 = vld [vmem:[%s6 + $0x4] sm:$0xf]
      %v2495 = vld [vmem:[%s6 + $0x8] sm:$0xf]
      %v2496 = vld [vmem:[%s6 + $0xc] sm:$0xf]
      %v2497 = vld [vmem:[%s6 + $0x10] sm:$0xf]
      %v2498 = vld [vmem:[%s6 + $0x14] sm:$0xf]
      %v2499 = vld [vmem:[%s6 + $0x18] sm:$0xf]
      %v2500 = vld [vmem:[%s6 + $0x1c] sm:$0xf]
      %v2501 = vld [vmem:[%s6 + $0x20] sm:$0xf]
      %v2502 = vld [vmem:[%s6 + $0x24] sm:$0xf]
      %v2503 = vld [vmem:[%s6 + $0x28] sm:$0xf]
      %v2504 = vld [vmem:[%s6 + $0x2c] sm:$0xf]
      %v2517 = vunpack.c.l.b16 %v2493
      %v2518 = vunpack.c.l.b16 %v2494
      %v2519 = vunpack.c.l.b16 %v2495
      %v2520 = vunpack.c.l.b16 %v2496
      %v2521 = vunpack.c.l.b16 %v2497
      %v2522 = vunpack.c.l.b16 %v2498
      %v2523 = vunpack.c.l.b16 %v2499
      %v2524 = vunpack.c.l.b16 %v2500
      %v2525 = vunpack.c.l.b16 %v2501
      %v2526 = vunpack.c.l.b16 %v2502
      %v2527 = vunpack.c.l.b16 %v2503
      %v2528 = vunpack.c.l.b16 %v2504
      %v2529 = vpack.c.b16 %v2518, %v2517
      %v2530 = vpack.c.b16 %v2520, %v2519
      %v2531 = vpack.c.b16 %v2522, %v2521
      %v2532 = vpack.c.b16 %v2524, %v2523
      %v2533 = vpack.c.b16 %v2526, %v2525
      %v2534 = vpack.c.b16 %v2528, %v2527
      %2541 = vmatprep.subr.bf16.mxu0 0
      %2542 = vmatpush1.bf16.msra.mxu0 0
      %2543 = vmatprep.subr.bf16.mxu0 0
      %2544 = vmatpush1.bf16.msra.mxu0 0
      %2545 = vmatprep.subr.bf16.mxu0 0
      %2546 = vmatpush1.bf16.msra.mxu0 %v2534
      %2547 = vmatprep.subr.bf16.mxu0 0
      %2548 = vmatpush1.bf16.msra.mxu0 %v2533
      %2549 = vmatprep.subr.bf16.mxu0 0
      %2550 = vmatpush1.bf16.msra.mxu0 %v2532
      %2551 = vmatprep.subr.bf16.mxu0 0
      %2552 = vmatpush1.bf16.msra.mxu0 %v2531
      %2553 = vmatprep.subr.bf16.mxu0 0
      %2554 = vmatpush1.bf16.msra.mxu0 %v2530
      %2555 = vmatprep.subr.bf16.mxu0 0
      %2556 = vmatpush1.bf16.msra.mxu0 %v2529
      %2557 = vmatprep.subr.bf16.mxu0 0
      %2558 = vmatpush2.bf16.msra.mxu0 0
      %2559 = vmatprep.subr.bf16.mxu0 0
      %2560 = vmatpush2.bf16.msra.mxu0 0
      %2561 = vmatprep.subr.bf16.mxu0 0
      %2562 = vmatpush2.bf16.msra.mxu0 0
      %2563 = vmatprep.subr.bf16.mxu0 0
      %2564 = vmatpush2.bf16.msra.mxu0 0
      %2565 = vmatprep.subr.bf16.mxu0 0
      %2566 = vmatpush2.bf16.msra.mxu0 0
      %2567 = vmatprep.subr.bf16.mxu0 0
      %2568 = vmatpush2.bf16.msra.mxu0 0
      %2569 = vmatprep.subr.bf16.mxu0 0
      %2570 = vmatpush2.bf16.msra.mxu0 0
      %2571 = vmatprep.subr.bf16.mxu0 0
      %2572 = vmatpush2.bf16.msra.mxu0 0
      %2573 = vmatprep.mubr.bf16.mxu0 0
      %2574 = vmatmul.mubr.bf16.gmra.mxu0 %v2285
      %v2575 = vpop.f32.mrf.mxu0
      %v2576 = vadd.f32 0.0, %v2575
      %v2577 = vpop.f32.mrf.mxu0
      %v2578 = vpop.f32.mrf.mxu0
      %v2579 = vadd.f32 0.0, %v2578
      %v2580 = vpop.f32.mrf.mxu0
      %2581 = vmatprep.mubr.bf16.mxu0 0
      %2582 = vmatmul.mubr.bf16.gmra.mxu0 %v2288
      %v2583 = vpop.f32.mrf.mxu0
      %v2584 = vadd.f32 0.0, %v2583
      %v2585 = vpop.f32.mrf.mxu0
      %v2586 = vpop.f32.mrf.mxu0
      %v2587 = vadd.f32 0.0, %v2586
      %v2588 = vpop.f32.mrf.mxu0
      %2589 = vmatprep.mubr.bf16.mxu0 0
      %2590 = vmatmul.mubr.bf16.gmra.mxu0 %v2291
      %v2591 = vpop.f32.mrf.mxu0
      %v2592 = vadd.f32 0.0, %v2591
      %v2593 = vpop.f32.mrf.mxu0
      %v2594 = vpop.f32.mrf.mxu0
      %v2595 = vadd.f32 0.0, %v2594
      %v2596 = vpop.f32.mrf.mxu0
      %2597 = vmatprep.mubr.bf16.mxu0 0
      %2598 = vmatmul.mubr.bf16.gmra.mxu0 %v2294
      %v2599 = vpop.f32.mrf.mxu0
      %v2600 = vadd.f32 0.0, %v2599
      %v2601 = vpop.f32.mrf.mxu0
      %v2602 = vpop.f32.mrf.mxu0
      %v2603 = vadd.f32 0.0, %v2602
      %v2604 = vpop.f32.mrf.mxu0
      %2605 = vmatprep.mubr.bf16.mxu0 0
      %2606 = vmatmul.mubr.bf16.gmra.mxu0 %v2297
      %v2607 = vpop.f32.mrf.mxu0
      %v2608 = vadd.f32 0.0, %v2607
      %v2609 = vpop.f32.mrf.mxu0
      %v2610 = vpop.f32.mrf.mxu0
      %v2611 = vadd.f32 0.0, %v2610
      %v2612 = vpop.f32.mrf.mxu0
      %2613 = vmatprep.mubr.bf16.mxu0 0
      %2614 = vmatmul.mubr.bf16.gmra.mxu0 %v2300
      %v2615 = vpop.f32.mrf.mxu0
      %v2616 = vadd.f32 0.0, %v2615
      %v2617 = vpop.f32.mrf.mxu0
      %v2618 = vpop.f32.mrf.mxu0
      %v2619 = vadd.f32 0.0, %v2618
      %v2620 = vpop.f32.mrf.mxu0
      %2621 = vmatprep.mubr.bf16.mxu0 0
      %2622 = vmatmul.mubr.bf16.gmra.mxu0 %v2303
      %v2623 = vpop.f32.mrf.mxu0
      %v2624 = vadd.f32 0.0, %v2623
      %v2625 = vpop.f32.mrf.mxu0
      %v2626 = vpop.f32.mrf.mxu0
      %v2627 = vadd.f32 0.0, %v2626
      %v2628 = vpop.f32.mrf.mxu0
      %2629 = vmatprep.mubr.bf16.mxu0 0
      %2630 = vmatmul.mubr.bf16.gmra.mxu0 %v2306
      %v2631 = vpop.f32.mrf.mxu0
      %v2632 = vadd.f32 0.0, %v2631
      %v2633 = vpop.f32.mrf.mxu0
      %v2634 = vpop.f32.mrf.mxu0
      %v2635 = vadd.f32 0.0, %v2634
      %v2636 = vpop.f32.mrf.mxu0
      %2637 = vmatprep.mubr.bf16.mxu0 0
      %2638 = vmatmul.mubr.bf16.gmra.mxu0 %v2309
      %v2639 = vpop.f32.mrf.mxu0
      %v2640 = vadd.f32 0.0, %v2639
      %v2641 = vpop.f32.mrf.mxu0
      %v2642 = vpop.f32.mrf.mxu0
      %v2643 = vadd.f32 0.0, %v2642
      %v2644 = vpop.f32.mrf.mxu0
      %2645 = vmatprep.mubr.bf16.mxu0 0
      %2646 = vmatmul.mubr.bf16.gmra.mxu0 %v2312
      %v2647 = vpop.f32.mrf.mxu0
      %v2648 = vadd.f32 0.0, %v2647
      %v2649 = vpop.f32.mrf.mxu0
      %v2650 = vpop.f32.mrf.mxu0
      %v2651 = vadd.f32 0.0, %v2650
      %v2652 = vpop.f32.mrf.mxu0
      %2653 = vmatprep.mubr.bf16.mxu0 0
      %2654 = vmatmul.mubr.bf16.gmra.mxu0 %v2315
      %v2655 = vpop.f32.mrf.mxu0
      %v2656 = vadd.f32 0.0, %v2655
      %v2657 = vpop.f32.mrf.mxu0
      %v2658 = vpop.f32.mrf.mxu0
      %v2659 = vadd.f32 0.0, %v2658
      %v2660 = vpop.f32.mrf.mxu0
      %2661 = vmatprep.mubr.bf16.mxu0 0
      %2662 = vmatmul.mubr.bf16.gmra.mxu0 %v2318
      %v2663 = vpop.f32.mrf.mxu0
      %v2664 = vadd.f32 0.0, %v2663
      %v2665 = vpop.f32.mrf.mxu0
      %v2666 = vpop.f32.mrf.mxu0
      %v2667 = vadd.f32 0.0, %v2666
      %v2668 = vpop.f32.mrf.mxu0
      %2669 = vmatprep.mubr.bf16.mxu0 0
      %2670 = vmatmul.mubr.bf16.gmra.mxu0 %v2321
      %v2671 = vpop.f32.mrf.mxu0
      %v2672 = vadd.f32 0.0, %v2671
      %v2673 = vpop.f32.mrf.mxu0
      %v2674 = vpop.f32.mrf.mxu0
      %v2675 = vadd.f32 0.0, %v2674
      %v2676 = vpop.f32.mrf.mxu0
      %2677 = vmatprep.mubr.bf16.mxu0 0
      %2678 = vmatmul.mubr.bf16.gmra.mxu0 %v2324
      %v2679 = vpop.f32.mrf.mxu0
      %v2680 = vadd.f32 0.0, %v2679
      %v2681 = vpop.f32.mrf.mxu0
      %v2682 = vpop.f32.mrf.mxu0
      %v2683 = vadd.f32 0.0, %v2682
      %v2684 = vpop.f32.mrf.mxu0
      %2685 = vmatprep.mubr.bf16.mxu0 0
      %2686 = vmatmul.mubr.bf16.gmra.mxu0 %v2327
      %v2687 = vpop.f32.mrf.mxu0
      %v2688 = vadd.f32 0.0, %v2687
      %v2689 = vpop.f32.mrf.mxu0
      %v2690 = vpop.f32.mrf.mxu0
      %v2691 = vadd.f32 0.0, %v2690
      %v2692 = vpop.f32.mrf.mxu0
      %2693 = vmatprep.mubr.bf16.mxu0 0
      %2694 = vmatmul.mubr.bf16.gmra.mxu0 %v2330
      %v2695 = vpop.f32.mrf.mxu0
      %v2696 = vadd.f32 0.0, %v2695
      %v2697 = vpop.f32.mrf.mxu0
      %v2698 = vpop.f32.mrf.mxu0
      %v2699 = vadd.f32 0.0, %v2698
      %v2700 = vpop.f32.mrf.mxu0
      %2701 = vdwg.mxu0
      %v2702 = vld [vmem:[%s7] sm:$0xf]
      %v2703 = vld [vmem:[%s7 + $0x4] sm:$0xf]
      %v2704 = vld [vmem:[%s7 + $0x8] sm:$0xf]
      %v2705 = vld [vmem:[%s7 + $0xc] sm:$0xf]
      %v2706 = vld [vmem:[%s7 + $0x10] sm:$0xf]
      %v2707 = vld [vmem:[%s7 + $0x14] sm:$0xf]
      %v2708 = vld [vmem:[%s7 + $0x18] sm:$0xf]
      %v2709 = vld [vmem:[%s7 + $0x1c] sm:$0xf]
      %v2710 = vld [vmem:[%s7 + $0x20] sm:$0xf]
      %v2711 = vld [vmem:[%s7 + $0x24] sm:$0xf]
      %v2712 = vld [vmem:[%s7 + $0x28] sm:$0xf]
      %v2713 = vld [vmem:[%s7 + $0x2c] sm:$0xf]
      %v2726 = vunpack.c.l.b16 %v2702
      %v2727 = vunpack.c.l.b16 %v2703
      %v2728 = vunpack.c.l.b16 %v2704
      %v2729 = vunpack.c.l.b16 %v2705
      %v2730 = vunpack.c.l.b16 %v2706
      %v2731 = vunpack.c.l.b16 %v2707
      %v2732 = vunpack.c.l.b16 %v2708
      %v2733 = vunpack.c.l.b16 %v2709
      %v2734 = vunpack.c.l.b16 %v2710
      %v2735 = vunpack.c.l.b16 %v2711
      %v2736 = vunpack.c.l.b16 %v2712
      %v2737 = vunpack.c.l.b16 %v2713
      %v2738 = vpack.c.b16 %v2727, %v2726
      %v2739 = vpack.c.b16 %v2729, %v2728
      %v2740 = vpack.c.b16 %v2731, %v2730
      %v2741 = vpack.c.b16 %v2733, %v2732
      %v2742 = vpack.c.b16 %v2735, %v2734
      %v2743 = vpack.c.b16 %v2737, %v2736
      %2750 = vmatprep.subr.bf16.mxu0 0
      %2751 = vmatpush1.bf16.msra.mxu0 0
      %2752 = vmatprep.subr.bf16.mxu0 0
      %2753 = vmatpush1.bf16.msra.mxu0 0
      %2754 = vmatprep.subr.bf16.mxu0 0
      %2755 = vmatpush1.bf16.msra.mxu0 %v2743
      %2756 = vmatprep.subr.bf16.mxu0 0
      %2757 = vmatpush1.bf16.msra.mxu0 %v2742
      %2758 = vmatprep.subr.bf16.mxu0 0
      %2759 = vmatpush1.bf16.msra.mxu0 %v2741
      %2760 = vmatprep.subr.bf16.mxu0 0
      %2761 = vmatpush1.bf16.msra.mxu0 %v2740
      %2762 = vmatprep.subr.bf16.mxu0 0
      %2763 = vmatpush1.bf16.msra.mxu0 %v2739
      %2764 = vmatprep.subr.bf16.mxu0 0
      %2765 = vmatpush1.bf16.msra.mxu0 %v2738
      %2766 = vmatprep.subr.bf16.mxu0 0
      %2767 = vmatpush2.bf16.msra.mxu0 0
      %2768 = vmatprep.subr.bf16.mxu0 0
      %2769 = vmatpush2.bf16.msra.mxu0 0
      %2770 = vmatprep.subr.bf16.mxu0 0
      %2771 = vmatpush2.bf16.msra.mxu0 0
      %2772 = vmatprep.subr.bf16.mxu0 0
      %2773 = vmatpush2.bf16.msra.mxu0 0
      %2774 = vmatprep.subr.bf16.mxu0 0
      %2775 = vmatpush2.bf16.msra.mxu0 0
      %2776 = vmatprep.subr.bf16.mxu0 0
      %2777 = vmatpush2.bf16.msra.mxu0 0
      %2778 = vmatprep.subr.bf16.mxu0 0
      %2779 = vmatpush2.bf16.msra.mxu0 0
      %2780 = vmatprep.subr.bf16.mxu0 0
      %2781 = vmatpush2.bf16.msra.mxu0 0
      %2782 = vmatprep.mubr.bf16.mxu0 0
      %2783 = vmatmul.mubr.bf16.gmra.mxu0 %v2285
      %v2784 = vpop.f32.mrf.mxu0
      %v2785 = vadd.f32 0.0, %v2784
      %v2786 = vpop.f32.mrf.mxu0
      %v2787 = vpop.f32.mrf.mxu0
      %v2788 = vadd.f32 0.0, %v2787
      %v2789 = vpop.f32.mrf.mxu0
      %2790 = vmatprep.mubr.bf16.mxu0 0
      %2791 = vmatmul.mubr.bf16.gmra.mxu0 %v2288
      %v2792 = vpop.f32.mrf.mxu0
      %v2793 = vadd.f32 0.0, %v2792
      %v2794 = vpop.f32.mrf.mxu0
      %v2795 = vpop.f32.mrf.mxu0
      %v2796 = vadd.f32 0.0, %v2795
      %v2797 = vpop.f32.mrf.mxu0
      %2798 = vmatprep.mubr.bf16.mxu0 0
      %2799 = vmatmul.mubr.bf16.gmra.mxu0 %v2291
      %v2800 = vpop.f32.mrf.mxu0
      %v2801 = vadd.f32 0.0, %v2800
      %v2802 = vpop.f32.mrf.mxu0
      %v2803 = vpop.f32.mrf.mxu0
      %v2804 = vadd.f32 0.0, %v2803
      %v2805 = vpop.f32.mrf.mxu0
      %2806 = vmatprep.mubr.bf16.mxu0 0
      %2807 = vmatmul.mubr.bf16.gmra.mxu0 %v2294
      %v2808 = vpop.f32.mrf.mxu0
      %v2809 = vadd.f32 0.0, %v2808
      %v2810 = vpop.f32.mrf.mxu0
      %v2811 = vpop.f32.mrf.mxu0
      %v2812 = vadd.f32 0.0, %v2811
      %v2813 = vpop.f32.mrf.mxu0
      %2814 = vmatprep.mubr.bf16.mxu0 0
      %2815 = vmatmul.mubr.bf16.gmra.mxu0 %v2297
      %v2816 = vpop.f32.mrf.mxu0
      %v2817 = vadd.f32 0.0, %v2816
      %v2818 = vpop.f32.mrf.mxu0
      %v2819 = vpop.f32.mrf.mxu0
      %v2820 = vadd.f32 0.0, %v2819
      %v2821 = vpop.f32.mrf.mxu0
      %2822 = vmatprep.mubr.bf16.mxu0 0
      %2823 = vmatmul.mubr.bf16.gmra.mxu0 %v2300
      %v2824 = vpop.f32.mrf.mxu0
      %v2825 = vadd.f32 0.0, %v2824
      %v2826 = vpop.f32.mrf.mxu0
      %v2827 = vpop.f32.mrf.mxu0
      %v2828 = vadd.f32 0.0, %v2827
      %v2829 = vpop.f32.mrf.mxu0
      %2830 = vmatprep.mubr.bf16.mxu0 0
      %2831 = vmatmul.mubr.bf16.gmra.mxu0 %v2303
      %v2832 = vpop.f32.mrf.mxu0
      %v2833 = vadd.f32 0.0, %v2832
      %v2834 = vpop.f32.mrf.mxu0
      %v2835 = vpop.f32.mrf.mxu0
      %v2836 = vadd.f32 0.0, %v2835
      %v2837 = vpop.f32.mrf.mxu0
      %2838 = vmatprep.mubr.bf16.mxu0 0
      %2839 = vmatmul.mubr.bf16.gmra.mxu0 %v2306
      %v2840 = vpop.f32.mrf.mxu0
      %v2841 = vadd.f32 0.0, %v2840
      %v2842 = vpop.f32.mrf.mxu0
      %v2843 = vpop.f32.mrf.mxu0
      %v2844 = vadd.f32 0.0, %v2843
      %v2845 = vpop.f32.mrf.mxu0
      %2846 = vmatprep.mubr.bf16.mxu0 0
      %2847 = vmatmul.mubr.bf16.gmra.mxu0 %v2309
      %v2848 = vpop.f32.mrf.mxu0
      %v2849 = vadd.f32 0.0, %v2848
      %v2850 = vpop.f32.mrf.mxu0
      %v2851 = vpop.f32.mrf.mxu0
      %v2852 = vadd.f32 0.0, %v2851
      %v2853 = vpop.f32.mrf.mxu0
      %2854 = vmatprep.mubr.bf16.mxu0 0
      %2855 = vmatmul.mubr.bf16.gmra.mxu0 %v2312
      %v2856 = vpop.f32.mrf.mxu0
      %v2857 = vadd.f32 0.0, %v2856
      %v2858 = vpop.f32.mrf.mxu0
      %v2859 = vpop.f32.mrf.mxu0
      %v2860 = vadd.f32 0.0, %v2859
      %v2861 = vpop.f32.mrf.mxu0
      %2862 = vmatprep.mubr.bf16.mxu0 0
      %2863 = vmatmul.mubr.bf16.gmra.mxu0 %v2315
      %v2864 = vpop.f32.mrf.mxu0
      %v2865 = vadd.f32 0.0, %v2864
      %v2866 = vpop.f32.mrf.mxu0
      %v2867 = vpop.f32.mrf.mxu0
      %v2868 = vadd.f32 0.0, %v2867
      %v2869 = vpop.f32.mrf.mxu0
      %2870 = vmatprep.mubr.bf16.mxu0 0
      %2871 = vmatmul.mubr.bf16.gmra.mxu0 %v2318
      %v2872 = vpop.f32.mrf.mxu0
      %v2873 = vadd.f32 0.0, %v2872
      %v2874 = vpop.f32.mrf.mxu0
      %v2875 = vpop.f32.mrf.mxu0
      %v2876 = vadd.f32 0.0, %v2875
      %v2877 = vpop.f32.mrf.mxu0
      %2878 = vmatprep.mubr.bf16.mxu0 0
      %2879 = vmatmul.mubr.bf16.gmra.mxu0 %v2321
      %v2880 = vpop.f32.mrf.mxu0
      %v2881 = vadd.f32 0.0, %v2880
      %v2882 = vpop.f32.mrf.mxu0
      %v2883 = vpop.f32.mrf.mxu0
      %v2884 = vadd.f32 0.0, %v2883
      %v2885 = vpop.f32.mrf.mxu0
      %2886 = vmatprep.mubr.bf16.mxu0 0
      %2887 = vmatmul.mubr.bf16.gmra.mxu0 %v2324
      %v2888 = vpop.f32.mrf.mxu0
      %v2889 = vadd.f32 0.0, %v2888
      %v2890 = vpop.f32.mrf.mxu0
      %v2891 = vpop.f32.mrf.mxu0
      %v2892 = vadd.f32 0.0, %v2891
      %v2893 = vpop.f32.mrf.mxu0
      %2894 = vmatprep.mubr.bf16.mxu0 0
      %2895 = vmatmul.mubr.bf16.gmra.mxu0 %v2327
      %v2896 = vpop.f32.mrf.mxu0
      %v2897 = vadd.f32 0.0, %v2896
      %v2898 = vpop.f32.mrf.mxu0
      %v2899 = vpop.f32.mrf.mxu0
      %v2900 = vadd.f32 0.0, %v2899
      %v2901 = vpop.f32.mrf.mxu0
      %2902 = vmatprep.mubr.bf16.mxu0 0
      %2903 = vmatmul.mubr.bf16.gmra.mxu0 %v2330
      %v2904 = vpop.f32.mrf.mxu0
      %v2905 = vadd.f32 0.0, %v2904
      %v2906 = vpop.f32.mrf.mxu0
      %v2907 = vpop.f32.mrf.mxu0
      %v2908 = vadd.f32 0.0, %v2907
      %v2909 = vpop.f32.mrf.mxu0
      %2910 = vdwg.mxu0
      %v2911 = vld [vmem:[%s356] sm:$0xf]
      %v2912 = vld [vmem:[%s356 + $0x4] sm:$0xf]
      %v2913 = vld [vmem:[%s361] sm:$0xf]
      %v2914 = vld [vmem:[%s361 + $0x4] sm:$0xf]
      %v2915 = vld [vmem:[%s366] sm:$0xf]
      %v2916 = vld [vmem:[%s366 + $0x4] sm:$0xf]
      %v2917 = vld [vmem:[%s374] sm:$0x1]
      %v2918 = vunpack.c.l.bf16 %v2911
      %v2919 = vunpack.c.l.bf16 %v2912
      %v2920 = vmul.f32 %v2918, 0.25
      %v2921 = vmul.f32 %v2919, 0.25
      %v2922 = vunpack.c.l.bf16 %v2913
      %v2923 = vunpack.c.l.bf16 %v2914
      %v2924 = vpack.c.bf16 %v2921, %v2920
      %v2927 = vcombine.high %v2920, %v2920
      %v2929 = vunpack.c.l.s4 1966171168
      %v2930 = vunpack.c.0.s8 %v2929
      %v2931 = vlaneseq
      %v2932 = vshrl.u32 %v2931, 7
      %v2933 = vsub.s32 %v2930, %v2932
      %v2934 = vrot.slane %v2920, %v2933
      %v2936 = vunpack.c.l.s4 1966171168
      %v2937 = vunpack.c.0.s8 %v2936
      %v2938 = vlaneseq
      %v2939 = vshrl.u32 %v2938, 7
      %v2940 = vsub.s32 %v2937, %v2939
      %v2941 = vrot.slane %v2927, %v2940
      %v2942 = vcombine.high %v2934, %v2934
      %v2943 = vcombine.high %v2941, %v2941
      %v2945 = vunpack.c.l.s4 1966171168
      %v2946 = vunpack.c.0.s8 %v2945
      %v2947 = vlaneseq
      %v2948 = vshrl.u32 %v2947, 7
      %v2949 = vsub.s32 %v2946, %v2948
      %v2950 = vrot.slane %v2934, %v2949
      %v2952 = vunpack.c.l.s4 1966171168
      %v2953 = vunpack.c.0.s8 %v2952
      %v2954 = vlaneseq
      %v2955 = vshrl.u32 %v2954, 7
      %v2956 = vsub.s32 %v2953, %v2955
      %v2957 = vrot.slane %v2941, %v2956
      %v2959 = vunpack.c.l.s4 1966171168
      %v2960 = vunpack.c.0.s8 %v2959
      %v2961 = vlaneseq
      %v2962 = vshrl.u32 %v2961, 7
      %v2963 = vsub.s32 %v2960, %v2962
      %v2964 = vrot.slane %v2942, %v2963
      %v2966 = vunpack.c.l.s4 1966171168
      %v2967 = vunpack.c.0.s8 %v2966
      %v2968 = vlaneseq
      %v2969 = vshrl.u32 %v2968, 7
      %v2970 = vsub.s32 %v2967, %v2969
      %v2971 = vrot.slane %v2943, %v2970
      %v2972 = vcombine.high %v2950, %v2950
      %v2973 = vcombine.high %v2957, %v2957
      %v2974 = vcombine.high %v2964, %v2964
      %v2975 = vcombine.high %v2971, %v2971
      %v2976 = vcombine.high %v2921, %v2921
      %v2978 = vunpack.c.l.s4 1966171168
      %v2979 = vunpack.c.0.s8 %v2978
      %v2980 = vlaneseq
      %v2981 = vshrl.u32 %v2980, 7
      %v2982 = vsub.s32 %v2979, %v2981
      %v2983 = vrot.slane %v2921, %v2982
      %v2985 = vunpack.c.l.s4 1966171168
      %v2986 = vunpack.c.0.s8 %v2985
      %v2987 = vlaneseq
      %v2988 = vshrl.u32 %v2987, 7
      %v2989 = vsub.s32 %v2986, %v2988
      %v2990 = vrot.slane %v2976, %v2989
      %v2991 = vcombine.high %v2983, %v2983
      %v2992 = vcombine.high %v2990, %v2990
      %v2994 = vunpack.c.l.s4 1966171168
      %v2995 = vunpack.c.0.s8 %v2994
      %v2996 = vlaneseq
      %v2997 = vshrl.u32 %v2996, 7
      %v2998 = vsub.s32 %v2995, %v2997
      %v2999 = vrot.slane %v2983, %v2998
      %v3001 = vunpack.c.l.s4 1966171168
      %v3002 = vunpack.c.0.s8 %v3001
      %v3003 = vlaneseq
      %v3004 = vshrl.u32 %v3003, 7
      %v3005 = vsub.s32 %v3002, %v3004
      %v3006 = vrot.slane %v2990, %v3005
      %v3008 = vunpack.c.l.s4 1966171168
      %v3009 = vunpack.c.0.s8 %v3008
      %v3010 = vlaneseq
      %v3011 = vshrl.u32 %v3010, 7
      %v3012 = vsub.s32 %v3009, %v3011
      %v3013 = vrot.slane %v2991, %v3012
      %v3015 = vunpack.c.l.s4 1966171168
      %v3016 = vunpack.c.0.s8 %v3015
      %v3017 = vlaneseq
      %v3018 = vshrl.u32 %v3017, 7
      %v3019 = vsub.s32 %v3016, %v3018
      %v3020 = vrot.slane %v2992, %v3019
      %v3021 = vcombine.high %v2999, %v2999
      %v3022 = vcombine.high %v3006, %v3006
      %v3023 = vcombine.high %v3013, %v3013
      %v3024 = vcombine.high %v3020, %v3020
      %v3025 = vlaneseq
      %v3026 = vshrl.u32 %v3025, 7
      %v3027 = vsub.s32 0, %v3026
      %v3028 = vrot.slane %v2950, %v3027
      %v3029 = vlaneseq
      %v3030 = vshrl.u32 %v3029, 7
      %v3031 = vsub.s32 0, %v3030
      %v3032 = vrot.slane %v2964, %v3031
      %v3033 = vlaneseq
      %v3034 = vshrl.u32 %v3033, 7
      %v3035 = vsub.s32 0, %v3034
      %v3036 = vrot.slane %v2972, %v3035
      %v3037 = vlaneseq
      %v3038 = vshrl.u32 %v3037, 7
      %v3039 = vsub.s32 0, %v3038
      %v3040 = vrot.slane %v2974, %v3039
      %v3041 = vlaneseq
      %v3042 = vshrl.u32 %v3041, 7
      %v3043 = vsub.s32 0, %v3042
      %v3044 = vrot.slane %v2957, %v3043
      %v3045 = vlaneseq
      %v3046 = vshrl.u32 %v3045, 7
      %v3047 = vsub.s32 0, %v3046
      %v3048 = vrot.slane %v2971, %v3047
      %v3049 = vlaneseq
      %v3050 = vshrl.u32 %v3049, 7
      %v3051 = vsub.s32 0, %v3050
      %v3052 = vrot.slane %v2973, %v3051
      %v3053 = vlaneseq
      %v3054 = vshrl.u32 %v3053, 7
      %v3055 = vsub.s32 0, %v3054
      %v3056 = vrot.slane %v2975, %v3055
      %v3057 = vlaneseq
      %v3058 = vshrl.u32 %v3057, 7
      %v3059 = vsub.s32 0, %v3058
      %v3060 = vrot.slane %v2999, %v3059
      %v3061 = vlaneseq
      %v3062 = vshrl.u32 %v3061, 7
      %v3063 = vsub.s32 0, %v3062
      %v3064 = vrot.slane %v3013, %v3063
      %v3065 = vlaneseq
      %v3066 = vshrl.u32 %v3065, 7
      %v3067 = vsub.s32 0, %v3066
      %v3068 = vrot.slane %v3021, %v3067
      %v3069 = vlaneseq
      %v3070 = vshrl.u32 %v3069, 7
      %v3071 = vsub.s32 0, %v3070
      %v3072 = vrot.slane %v3023, %v3071
      %v3073 = vlaneseq
      %v3074 = vshrl.u32 %v3073, 7
      %v3075 = vsub.s32 0, %v3074
      %v3076 = vrot.slane %v3006, %v3075
      %v3077 = vlaneseq
      %v3078 = vshrl.u32 %v3077, 7
      %v3079 = vsub.s32 0, %v3078
      %v3080 = vrot.slane %v3020, %v3079
      %v3081 = vlaneseq
      %v3082 = vshrl.u32 %v3081, 7
      %v3083 = vsub.s32 0, %v3082
      %v3084 = vrot.slane %v3022, %v3083
      %v3085 = vlaneseq
      %v3086 = vshrl.u32 %v3085, 7
      %v3087 = vsub.s32 0, %v3086
      %v3088 = vrot.slane %v3024, %v3087
      %v3105 = vmul.f32 %v3028, %v2367
      %v3106 = vmul.f32 %v3028, %v2370
      %v3107 = vmul.f32 %v3032, %v2375
      %v3108 = vmul.f32 %v3032, %v2378
      %v3109 = vmul.f32 %v3036, %v2383
      %v3110 = vmul.f32 %v3036, %v2386
      %v3111 = vmul.f32 %v3040, %v2391
      %v3112 = vmul.f32 %v3040, %v2394
      %v3113 = vmul.f32 %v3044, %v2399
      %v3114 = vmul.f32 %v3044, %v2402
      %v3115 = vmul.f32 %v3048, %v2407
      %v3116 = vmul.f32 %v3048, %v2410
      %v3117 = vmul.f32 %v3052, %v2415
      %v3118 = vmul.f32 %v3052, %v2418
      %v3119 = vmul.f32 %v3056, %v2423
      %v3120 = vmul.f32 %v3056, %v2426
      %v3121 = vmul.f32 %v3060, %v2431
      %v3122 = vmul.f32 %v3060, %v2434
      %v3123 = vmul.f32 %v3064, %v2439
      %v3124 = vmul.f32 %v3064, %v2442
      %v3125 = vmul.f32 %v3068, %v2447
      %v3126 = vmul.f32 %v3068, %v2450
      %v3127 = vmul.f32 %v3072, %v2455
      %v3128 = vmul.f32 %v3072, %v2458
      %v3129 = vmul.f32 %v3076, %v2463
      %v3130 = vmul.f32 %v3076, %v2466
      %v3131 = vmul.f32 %v3080, %v2471
      %v3132 = vmul.f32 %v3080, %v2474
      %v3133 = vmul.f32 %v3084, %v2479
      %v3134 = vmul.f32 %v3084, %v2482
      %v3135 = vmul.f32 %v3088, %v2487
      %v3136 = vmul.f32 %v3088, %v2490
      %vm3137 = vcmask 130048
      %v3138 = vsel %vm3137, %v3105, 0.0
      %3139 = vadd.xlane.f32.xlu0 %v3138
      %v3140 = vpop.xlane.xlu0 %3139
      %v3141 = vsel %vm3137, %v3106, 0.0
      %3142 = vadd.xlane.f32.xlu0 %v3141
      %v3143 = vpop.xlane.xlu0 %3142
      %v3144 = vsel %vm3137, %v3107, 0.0
      %3145 = vadd.xlane.f32.xlu0 %v3144
      %v3146 = vpop.xlane.xlu0 %3145
      %v3147 = vsel %vm3137, %v3108, 0.0
      %3148 = vadd.xlane.f32.xlu0 %v3147
      %v3149 = vpop.xlane.xlu0 %3148
      %v3150 = vsel %vm3137, %v3109, 0.0
      %3151 = vadd.xlane.f32.xlu0 %v3150
      %v3152 = vpop.xlane.xlu0 %3151
      %v3153 = vsel %vm3137, %v3110, 0.0
      %3154 = vadd.xlane.f32.xlu0 %v3153
      %v3155 = vpop.xlane.xlu0 %3154
      %v3156 = vsel %vm3137, %v3111, 0.0
      %3157 = vadd.xlane.f32.xlu0 %v3156
      %v3158 = vpop.xlane.xlu0 %3157
      %v3159 = vsel %vm3137, %v3112, 0.0
      %3160 = vadd.xlane.f32.xlu0 %v3159
      %v3161 = vpop.xlane.xlu0 %3160
      %v3162 = vsel %vm3137, %v3113, 0.0
      %3163 = vadd.xlane.f32.xlu0 %v3162
      %v3164 = vpop.xlane.xlu0 %3163
      %v3165 = vsel %vm3137, %v3114, 0.0
      %3166 = vadd.xlane.f32.xlu0 %v3165
      %v3167 = vpop.xlane.xlu0 %3166
      %v3168 = vsel %vm3137, %v3115, 0.0
      %3169 = vadd.xlane.f32.xlu0 %v3168
      %v3170 = vpop.xlane.xlu0 %3169
      %v3171 = vsel %vm3137, %v3116, 0.0
      %3172 = vadd.xlane.f32.xlu0 %v3171
      %v3173 = vpop.xlane.xlu0 %3172
      %v3174 = vsel %vm3137, %v3117, 0.0
      %3175 = vadd.xlane.f32.xlu0 %v3174
      %v3176 = vpop.xlane.xlu0 %3175
      %v3177 = vsel %vm3137, %v3118, 0.0
      %3178 = vadd.xlane.f32.xlu0 %v3177
      %v3179 = vpop.xlane.xlu0 %3178
      %v3180 = vsel %vm3137, %v3119, 0.0
      %3181 = vadd.xlane.f32.xlu0 %v3180
      %v3182 = vpop.xlane.xlu0 %3181
      %v3183 = vsel %vm3137, %v3120, 0.0
      %3184 = vadd.xlane.f32.xlu0 %v3183
      %v3185 = vpop.xlane.xlu0 %3184
      %v3186 = vsel %vm3137, %v3121, 0.0
      %3187 = vadd.xlane.f32.xlu0 %v3186
      %v3188 = vpop.xlane.xlu0 %3187
      %v3189 = vsel %vm3137, %v3122, 0.0
      %3190 = vadd.xlane.f32.xlu0 %v3189
      %v3191 = vpop.xlane.xlu0 %3190
      %v3192 = vsel %vm3137, %v3123, 0.0
      %3193 = vadd.xlane.f32.xlu0 %v3192
      %v3194 = vpop.xlane.xlu0 %3193
      %v3195 = vsel %vm3137, %v3124, 0.0
      %3196 = vadd.xlane.f32.xlu0 %v3195
      %v3197 = vpop.xlane.xlu0 %3196
      %v3198 = vsel %vm3137, %v3125, 0.0
      %3199 = vadd.xlane.f32.xlu0 %v3198
      %v3200 = vpop.xlane.xlu0 %3199
      %v3201 = vsel %vm3137, %v3126, 0.0
      %3202 = vadd.xlane.f32.xlu0 %v3201
      %v3203 = vpop.xlane.xlu0 %3202
      %v3204 = vsel %vm3137, %v3127, 0.0
      %3205 = vadd.xlane.f32.xlu0 %v3204
      %v3206 = vpop.xlane.xlu0 %3205
      %v3207 = vsel %vm3137, %v3128, 0.0
      %3208 = vadd.xlane.f32.xlu0 %v3207
      %v3209 = vpop.xlane.xlu0 %3208
      %v3210 = vsel %vm3137, %v3129, 0.0
      %3211 = vadd.xlane.f32.xlu0 %v3210
      %v3212 = vpop.xlane.xlu0 %3211
      %v3213 = vsel %vm3137, %v3130, 0.0
      %3214 = vadd.xlane.f32.xlu0 %v3213
      %v3215 = vpop.xlane.xlu0 %3214
      %v3216 = vsel %vm3137, %v3131, 0.0
      %3217 = vadd.xlane.f32.xlu0 %v3216
      %v3218 = vpop.xlane.xlu0 %3217
      %v3219 = vsel %vm3137, %v3132, 0.0
      %3220 = vadd.xlane.f32.xlu0 %v3219
      %v3221 = vpop.xlane.xlu0 %3220
      %v3222 = vsel %vm3137, %v3133, 0.0
      %3223 = vadd.xlane.f32.xlu0 %v3222
      %v3224 = vpop.xlane.xlu0 %3223
      %v3225 = vsel %vm3137, %v3134, 0.0
      %3226 = vadd.xlane.f32.xlu0 %v3225
      %v3227 = vpop.xlane.xlu0 %3226
      %v3228 = vsel %vm3137, %v3135, 0.0
      %3229 = vadd.xlane.f32.xlu0 %v3228
      %v3230 = vpop.xlane.xlu0 %3229
      %v3231 = vsel %vm3137, %v3136, 0.0
      %3232 = vadd.xlane.f32.xlu0 %v3231
      %v3233 = vpop.xlane.xlu0 %3232
      %v3236 = vunpack.c.l.b16 %v2913
      %v3237 = vunpack.c.l.b16 %v2914
      %v3238 = vpack.c.b16 %v3237, %v3236
      %v3271 = vlaneseq
      %v3272 = vshrl.u32 %v3271, 7
      %v3273 = vsub.s32 %v394, %v3272
      %v3274 = vrot.slane %v3140, %v3273
      %v3275 = vadd.s32 %v394, 4294967288
      %v3276 = vlaneseq
      %v3277 = vshrl.u32 %v3276, 7
      %v3278 = vsub.s32 %v3275, %v3277
      %v3279 = vrot.slane %v3143, %v3278
      %vm3280 = vcmask 130112
      %v3281 = vsel %vm3280, %v3279, %v3274
      %v3282 = vlaneseq
      %v3283 = vshrl.u32 %v3282, 7
      %v3284 = vsub.s32 %v394, %v3283
      %v3285 = vrot.slane %v3146, %v3284
      %v3286 = vlaneseq
      %v3287 = vshrl.u32 %v3286, 7
      %v3288 = vsub.s32 %v3275, %v3287
      %v3289 = vrot.slane %v3149, %v3288
      %v3290 = vsel %vm3280, %v3289, %v3285
      %v3291 = vlaneseq
      %v3292 = vshrl.u32 %v3291, 7
      %v3293 = vsub.s32 %v394, %v3292
      %v3294 = vrot.slane %v3152, %v3293
      %v3295 = vlaneseq
      %v3296 = vshrl.u32 %v3295, 7
      %v3297 = vsub.s32 %v3275, %v3296
      %v3298 = vrot.slane %v3155, %v3297
      %v3299 = vsel %vm3280, %v3298, %v3294
      %v3300 = vlaneseq
      %v3301 = vshrl.u32 %v3300, 7
      %v3302 = vsub.s32 %v394, %v3301
      %v3303 = vrot.slane %v3158, %v3302
      %v3304 = vlaneseq
      %v3305 = vshrl.u32 %v3304, 7
      %v3306 = vsub.s32 %v3275, %v3305
      %v3307 = vrot.slane %v3161, %v3306
      %v3308 = vsel %vm3280, %v3307, %v3303
      %v3309 = vlaneseq
      %v3310 = vshrl.u32 %v3309, 7
      %v3311 = vsub.s32 %v394, %v3310
      %v3312 = vrot.slane %v3164, %v3311
      %v3313 = vlaneseq
      %v3314 = vshrl.u32 %v3313, 7
      %v3315 = vsub.s32 %v3275, %v3314
      %v3316 = vrot.slane %v3167, %v3315
      %v3317 = vsel %vm3280, %v3316, %v3312
      %v3318 = vlaneseq
      %v3319 = vshrl.u32 %v3318, 7
      %v3320 = vsub.s32 %v394, %v3319
      %v3321 = vrot.slane %v3170, %v3320
      %v3322 = vlaneseq
      %v3323 = vshrl.u32 %v3322, 7
      %v3324 = vsub.s32 %v3275, %v3323
      %v3325 = vrot.slane %v3173, %v3324
      %v3326 = vsel %vm3280, %v3325, %v3321
      %v3327 = vlaneseq
      %v3328 = vshrl.u32 %v3327, 7
      %v3329 = vsub.s32 %v394, %v3328
      %v3330 = vrot.slane %v3176, %v3329
      %v3331 = vlaneseq
      %v3332 = vshrl.u32 %v3331, 7
      %v3333 = vsub.s32 %v3275, %v3332
      %v3334 = vrot.slane %v3179, %v3333
      %v3335 = vsel %vm3280, %v3334, %v3330
      %v3336 = vlaneseq
      %v3337 = vshrl.u32 %v3336, 7
      %v3338 = vsub.s32 %v394, %v3337
      %v3339 = vrot.slane %v3182, %v3338
      %v3340 = vlaneseq
      %v3341 = vshrl.u32 %v3340, 7
      %v3342 = vsub.s32 %v3275, %v3341
      %v3343 = vrot.slane %v3185, %v3342
      %v3344 = vsel %vm3280, %v3343, %v3339
      %v3345 = vlaneseq
      %v3346 = vshrl.u32 %v3345, 7
      %v3347 = vsub.s32 %v394, %v3346
      %v3348 = vrot.slane %v3188, %v3347
      %v3349 = vlaneseq
      %v3350 = vshrl.u32 %v3349, 7
      %v3351 = vsub.s32 %v3275, %v3350
      %v3352 = vrot.slane %v3191, %v3351
      %v3353 = vsel %vm3280, %v3352, %v3348
      %v3354 = vlaneseq
      %v3355 = vshrl.u32 %v3354, 7
      %v3356 = vsub.s32 %v394, %v3355
      %v3357 = vrot.slane %v3194, %v3356
      %v3358 = vlaneseq
      %v3359 = vshrl.u32 %v3358, 7
      %v3360 = vsub.s32 %v3275, %v3359
      %v3361 = vrot.slane %v3197, %v3360
      %v3362 = vsel %vm3280, %v3361, %v3357
      %v3363 = vlaneseq
      %v3364 = vshrl.u32 %v3363, 7
      %v3365 = vsub.s32 %v394, %v3364
      %v3366 = vrot.slane %v3200, %v3365
      %v3367 = vlaneseq
      %v3368 = vshrl.u32 %v3367, 7
      %v3369 = vsub.s32 %v3275, %v3368
      %v3370 = vrot.slane %v3203, %v3369
      %v3371 = vsel %vm3280, %v3370, %v3366
      %v3372 = vlaneseq
      %v3373 = vshrl.u32 %v3372, 7
      %v3374 = vsub.s32 %v394, %v3373
      %v3375 = vrot.slane %v3206, %v3374
      %v3376 = vlaneseq
      %v3377 = vshrl.u32 %v3376, 7
      %v3378 = vsub.s32 %v3275, %v3377
      %v3379 = vrot.slane %v3209, %v3378
      %v3380 = vsel %vm3280, %v3379, %v3375
      %v3381 = vlaneseq
      %v3382 = vshrl.u32 %v3381, 7
      %v3383 = vsub.s32 %v394, %v3382
      %v3384 = vrot.slane %v3212, %v3383
      %v3385 = vlaneseq
      %v3386 = vshrl.u32 %v3385, 7
      %v3387 = vsub.s32 %v3275, %v3386
      %v3388 = vrot.slane %v3215, %v3387
      %v3389 = vsel %vm3280, %v3388, %v3384
      %v3390 = vlaneseq
      %v3391 = vshrl.u32 %v3390, 7
      %v3392 = vsub.s32 %v394, %v3391
      %v3393 = vrot.slane %v3218, %v3392
      %v3394 = vlaneseq
      %v3395 = vshrl.u32 %v3394, 7
      %v3396 = vsub.s32 %v3275, %v3395
      %v3397 = vrot.slane %v3221, %v3396
      %v3398 = vsel %vm3280, %v3397, %v3393
      %v3399 = vlaneseq
      %v3400 = vshrl.u32 %v3399, 7
      %v3401 = vsub.s32 %v394, %v3400
      %v3402 = vrot.slane %v3224, %v3401
      %v3403 = vlaneseq
      %v3404 = vshrl.u32 %v3403, 7
      %v3405 = vsub.s32 %v3275, %v3404
      %v3406 = vrot.slane %v3227, %v3405
      %v3407 = vsel %vm3280, %v3406, %v3402
      %v3408 = vlaneseq
      %v3409 = vshrl.u32 %v3408, 7
      %v3410 = vsub.s32 %v394, %v3409
      %v3411 = vrot.slane %v3230, %v3410
      %v3412 = vlaneseq
      %v3413 = vshrl.u32 %v3412, 7
      %v3414 = vsub.s32 %v3275, %v3413
      %v3415 = vrot.slane %v3233, %v3414
      %v3416 = vsel %vm3280, %v3415, %v3411
      %vm3417 = vcmask 1041409
      %v3418 = vsel %vm3417, %v3290, %v3281
      %vm3419 = vcmask 1042434
      %v3420 = vsel %vm3419, %v3299, %v3418
      %vm3421 = vcmask 1043459
      %v3422 = vsel %vm3421, %v3308, %v3420
      %vm3423 = vcmask 1044484
      %v3424 = vsel %vm3423, %v3317, %v3422
      %vm3425 = vcmask 1045509
      %v3426 = vsel %vm3425, %v3326, %v3424
      %vm3427 = vcmask 1046534
      %v3428 = vsel %vm3427, %v3335, %v3426
      %vm3429 = vcmask 1047559
      %v3430 = vsel %vm3429, %v3344, %v3428
      %v3431 = vsel %vm3417, %v3362, %v3353
      %v3432 = vsel %vm3419, %v3371, %v3431
      %v3433 = vsel %vm3421, %v3380, %v3432
      %v3434 = vsel %vm3423, %v3389, %v3433
      %v3435 = vsel %vm3425, %v3398, %v3434
      %v3436 = vsel %vm3427, %v3407, %v3435
      %v3437 = vsel %vm3429, %v3416, %v3436
      %v3441 = vsel %vm3137, %v2924, 0
      %v3444 = vsel %vm3137, %v3238, 0
      %3446 = vmatprep.subr.bf16.mxu0 0
      %3447 = vmatpush1.bf16.xpose.msra.mxu0 0
      %3448 = vmatprep.subr.bf16.mxu0 0
      %3449 = vmatpush1.bf16.xpose.msra.mxu0 0
      %3450 = vmatprep.subr.bf16.mxu0 0
      %3451 = vmatpush1.bf16.xpose.msra.mxu0 0
      %3452 = vmatprep.subr.bf16.mxu0 0
      %3453 = vmatpush1.bf16.xpose.msra.mxu0 0
      %3454 = vmatprep.subr.bf16.mxu0 0
      %3455 = vmatpush1.bf16.xpose.msra.mxu0 0
      %3456 = vmatprep.subr.bf16.mxu0 0
      %3457 = vmatpush1.bf16.xpose.msra.mxu0 0
      %3458 = vmatprep.subr.bf16.mxu0 0
      %3459 = vmatpush1.bf16.xpose.msra.mxu0 0
      %3460 = vmatprep.subr.bf16.mxu0 0
      %3461 = vmatpush1.bf16.xpose.msra.mxu0 %v3444
      %3462 = vmatprep.subr.bf16.mxu0 0
      %3463 = vmatpush2.bf16.xpose.msra.mxu0 0
      %3464 = vmatprep.subr.bf16.mxu0 0
      %3465 = vmatpush2.bf16.xpose.msra.mxu0 0
      %3466 = vmatprep.subr.bf16.mxu0 0
      %3467 = vmatpush2.bf16.xpose.msra.mxu0 0
      %3468 = vmatprep.subr.bf16.mxu0 0
      %3469 = vmatpush2.bf16.xpose.msra.mxu0 0
      %3470 = vmatprep.subr.bf16.mxu0 0
      %3471 = vmatpush2.bf16.xpose.msra.mxu0 0
      %3472 = vmatprep.subr.bf16.mxu0 0
      %3473 = vmatpush2.bf16.xpose.msra.mxu0 0
      %3474 = vmatprep.subr.bf16.mxu0 0
      %3475 = vmatpush2.bf16.xpose.msra.mxu0 0
      %3476 = vmatprep.subr.bf16.mxu0 0
      %3477 = vmatpush2.bf16.xpose.msra.mxu0 0
      %3478 = vmatprep.mubr.bf16.mxu0 0
      %3479 = vmatmul.mubr.bf16.gmra.mxu0 %v3441
      %v3480 = vpop.f32.mrf.mxu0
      %v3481 = vadd.f32 %v3430, %v3480
      %v3482 = vpop.f32.mrf.mxu0
      %v3483 = vpop.f32.mrf.mxu0
      %v3484 = vadd.f32 %v3437, %v3483
      %v3485 = vpop.f32.mrf.mxu0
      %3486 = vdwg.mxu0
      %v3487 = vmul.f32 %v2922, %v2576
      %v3488 = vmul.f32 %v2923, %v2579
      %v3489 = vmul.f32 %v2922, %v2584
      %v3490 = vmul.f32 %v2923, %v2587
      %v3491 = vmul.f32 %v2922, %v2592
      %v3492 = vmul.f32 %v2923, %v2595
      %v3493 = vmul.f32 %v2922, %v2600
      %v3494 = vmul.f32 %v2923, %v2603
      %v3495 = vmul.f32 %v2922, %v2608
      %v3496 = vmul.f32 %v2923, %v2611
      %v3497 = vmul.f32 %v2922, %v2616
      %v3498 = vmul.f32 %v2923, %v2619
      %v3499 = vmul.f32 %v2922, %v2624
      %v3500 = vmul.f32 %v2923, %v2627
      %v3501 = vmul.f32 %v2922, %v2632
      %v3502 = vmul.f32 %v2923, %v2635
      %v3503 = vmul.f32 %v2922, %v2640
      %v3504 = vmul.f32 %v2923, %v2643
      %v3505 = vmul.f32 %v2922, %v2648
      %v3506 = vmul.f32 %v2923, %v2651
      %v3507 = vmul.f32 %v2922, %v2656
      %v3508 = vmul.f32 %v2923, %v2659
      %v3509 = vmul.f32 %v2922, %v2664
      %v3510 = vmul.f32 %v2923, %v2667
      %v3511 = vmul.f32 %v2922, %v2672
      %v3512 = vmul.f32 %v2923, %v2675
      %v3513 = vmul.f32 %v2922, %v2680
      %v3514 = vmul.f32 %v2923, %v2683
      %v3515 = vmul.f32 %v2922, %v2688
      %v3516 = vmul.f32 %v2923, %v2691
      %v3517 = vmul.f32 %v2922, %v2696
      %v3518 = vmul.f32 %v2923, %v2699
      %v3519 = vsel %vm3137, %v3487, 0.0
      %3520 = vadd.xlane.f32.xlu0 %v3519
      %v3521 = vpop.xlane.xlu0 %3520
      %v3522 = vsel %vm3137, %v3488, 0.0
      %3523 = vadd.xlane.f32.xlu0 %v3522
      %v3524 = vpop.xlane.xlu0 %3523
      %v3525 = vsel %vm3137, %v3489, 0.0
      %3526 = vadd.xlane.f32.xlu0 %v3525
      %v3527 = vpop.xlane.xlu0 %3526
      %v3528 = vsel %vm3137, %v3490, 0.0
      %3529 = vadd.xlane.f32.xlu0 %v3528
      %v3530 = vpop.xlane.xlu0 %3529
      %v3531 = vsel %vm3137, %v3491, 0.0
      %3532 = vadd.xlane.f32.xlu0 %v3531
      %v3533 = vpop.xlane.xlu0 %3532
      %v3534 = vsel %vm3137, %v3492, 0.0
      %3535 = vadd.xlane.f32.xlu0 %v3534
      %v3536 = vpop.xlane.xlu0 %3535
      %v3537 = vsel %vm3137, %v3493, 0.0
      %3538 = vadd.xlane.f32.xlu0 %v3537
      %v3539 = vpop.xlane.xlu0 %3538
      %v3540 = vsel %vm3137, %v3494, 0.0
      %3541 = vadd.xlane.f32.xlu0 %v3540
      %v3542 = vpop.xlane.xlu0 %3541
      %v3543 = vsel %vm3137, %v3495, 0.0
      %3544 = vadd.xlane.f32.xlu0 %v3543
      %v3545 = vpop.xlane.xlu0 %3544
      %v3546 = vsel %vm3137, %v3496, 0.0
      %3547 = vadd.xlane.f32.xlu0 %v3546
      %v3548 = vpop.xlane.xlu0 %3547
      %v3549 = vsel %vm3137, %v3497, 0.0
      %3550 = vadd.xlane.f32.xlu0 %v3549
      %v3551 = vpop.xlane.xlu0 %3550
      %v3552 = vsel %vm3137, %v3498, 0.0
      %3553 = vadd.xlane.f32.xlu0 %v3552
      %v3554 = vpop.xlane.xlu0 %3553
      %v3555 = vsel %vm3137, %v3499, 0.0
      %3556 = vadd.xlane.f32.xlu0 %v3555
      %v3557 = vpop.xlane.xlu0 %3556
      %v3558 = vsel %vm3137, %v3500, 0.0
      %3559 = vadd.xlane.f32.xlu0 %v3558
      %v3560 = vpop.xlane.xlu0 %3559
      %v3561 = vsel %vm3137, %v3501, 0.0
      %3562 = vadd.xlane.f32.xlu0 %v3561
      %v3563 = vpop.xlane.xlu0 %3562
      %v3564 = vsel %vm3137, %v3502, 0.0
      %3565 = vadd.xlane.f32.xlu0 %v3564
      %v3566 = vpop.xlane.xlu0 %3565
      %v3567 = vsel %vm3137, %v3503, 0.0
      %3568 = vadd.xlane.f32.xlu0 %v3567
      %v3569 = vpop.xlane.xlu0 %3568
      %v3570 = vsel %vm3137, %v3504, 0.0
      %3571 = vadd.xlane.f32.xlu0 %v3570
      %v3572 = vpop.xlane.xlu0 %3571
      %v3573 = vsel %vm3137, %v3505, 0.0
      %3574 = vadd.xlane.f32.xlu0 %v3573
      %v3575 = vpop.xlane.xlu0 %3574
      %v3576 = vsel %vm3137, %v3506, 0.0
      %3577 = vadd.xlane.f32.xlu0 %v3576
      %v3578 = vpop.xlane.xlu0 %3577
      %v3579 = vsel %vm3137, %v3507, 0.0
      %3580 = vadd.xlane.f32.xlu0 %v3579
      %v3581 = vpop.xlane.xlu0 %3580
      %v3582 = vsel %vm3137, %v3508, 0.0
      %3583 = vadd.xlane.f32.xlu0 %v3582
      %v3584 = vpop.xlane.xlu0 %3583
      %v3585 = vsel %vm3137, %v3509, 0.0
      %3586 = vadd.xlane.f32.xlu0 %v3585
      %v3587 = vpop.xlane.xlu0 %3586
      %v3588 = vsel %vm3137, %v3510, 0.0
      %3589 = vadd.xlane.f32.xlu0 %v3588
      %v3590 = vpop.xlane.xlu0 %3589
      %v3591 = vsel %vm3137, %v3511, 0.0
      %3592 = vadd.xlane.f32.xlu0 %v3591
      %v3593 = vpop.xlane.xlu0 %3592
      %v3594 = vsel %vm3137, %v3512, 0.0
      %3595 = vadd.xlane.f32.xlu0 %v3594
      %v3596 = vpop.xlane.xlu0 %3595
      %v3597 = vsel %vm3137, %v3513, 0.0
      %3598 = vadd.xlane.f32.xlu0 %v3597
      %v3599 = vpop.xlane.xlu0 %3598
      %v3600 = vsel %vm3137, %v3514, 0.0
      %3601 = vadd.xlane.f32.xlu0 %v3600
      %v3602 = vpop.xlane.xlu0 %3601
      %v3603 = vsel %vm3137, %v3515, 0.0
      %3604 = vadd.xlane.f32.xlu0 %v3603
      %v3605 = vpop.xlane.xlu0 %3604
      %v3606 = vsel %vm3137, %v3516, 0.0
      %3607 = vadd.xlane.f32.xlu0 %v3606
      %v3608 = vpop.xlane.xlu0 %3607
      %v3609 = vsel %vm3137, %v3517, 0.0
      %3610 = vadd.xlane.f32.xlu0 %v3609
      %v3611 = vpop.xlane.xlu0 %3610
      %v3612 = vsel %vm3137, %v3518, 0.0
      %3613 = vadd.xlane.f32.xlu0 %v3612
      %v3614 = vpop.xlane.xlu0 %3613
      %v3647 = vlaneseq
      %v3648 = vshrl.u32 %v3647, 7
      %v3649 = vsub.s32 %v394, %v3648
      %v3650 = vrot.slane %v3521, %v3649
      %v3651 = vlaneseq
      %v3652 = vshrl.u32 %v3651, 7
      %v3653 = vsub.s32 %v3275, %v3652
      %v3654 = vrot.slane %v3524, %v3653
      %v3655 = vsel %vm3280, %v3654, %v3650
      %v3656 = vlaneseq
      %v3657 = vshrl.u32 %v3656, 7
      %v3658 = vsub.s32 %v394, %v3657
      %v3659 = vrot.slane %v3527, %v3658
      %v3660 = vlaneseq
      %v3661 = vshrl.u32 %v3660, 7
      %v3662 = vsub.s32 %v3275, %v3661
      %v3663 = vrot.slane %v3530, %v3662
      %v3664 = vsel %vm3280, %v3663, %v3659
      %v3665 = vlaneseq
      %v3666 = vshrl.u32 %v3665, 7
      %v3667 = vsub.s32 %v394, %v3666
      %v3668 = vrot.slane %v3533, %v3667
      %v3669 = vlaneseq
      %v3670 = vshrl.u32 %v3669, 7
      %v3671 = vsub.s32 %v3275, %v3670
      %v3672 = vrot.slane %v3536, %v3671
      %v3673 = vsel %vm3280, %v3672, %v3668
      %v3674 = vlaneseq
      %v3675 = vshrl.u32 %v3674, 7
      %v3676 = vsub.s32 %v394, %v3675
      %v3677 = vrot.slane %v3539, %v3676
      %v3678 = vlaneseq
      %v3679 = vshrl.u32 %v3678, 7
      %v3680 = vsub.s32 %v3275, %v3679
      %v3681 = vrot.slane %v3542, %v3680
      %v3682 = vsel %vm3280, %v3681, %v3677
      %v3683 = vlaneseq
      %v3684 = vshrl.u32 %v3683, 7
      %v3685 = vsub.s32 %v394, %v3684
      %v3686 = vrot.slane %v3545, %v3685
      %v3687 = vlaneseq
      %v3688 = vshrl.u32 %v3687, 7
      %v3689 = vsub.s32 %v3275, %v3688
      %v3690 = vrot.slane %v3548, %v3689
      %v3691 = vsel %vm3280, %v3690, %v3686
      %v3692 = vlaneseq
      %v3693 = vshrl.u32 %v3692, 7
      %v3694 = vsub.s32 %v394, %v3693
      %v3695 = vrot.slane %v3551, %v3694
      %v3696 = vlaneseq
      %v3697 = vshrl.u32 %v3696, 7
      %v3698 = vsub.s32 %v3275, %v3697
      %v3699 = vrot.slane %v3554, %v3698
      %v3700 = vsel %vm3280, %v3699, %v3695
      %v3701 = vlaneseq
      %v3702 = vshrl.u32 %v3701, 7
      %v3703 = vsub.s32 %v394, %v3702
      %v3704 = vrot.slane %v3557, %v3703
      %v3705 = vlaneseq
      %v3706 = vshrl.u32 %v3705, 7
      %v3707 = vsub.s32 %v3275, %v3706
      %v3708 = vrot.slane %v3560, %v3707
      %v3709 = vsel %vm3280, %v3708, %v3704
      %v3710 = vlaneseq
      %v3711 = vshrl.u32 %v3710, 7
      %v3712 = vsub.s32 %v394, %v3711
      %v3713 = vrot.slane %v3563, %v3712
      %v3714 = vlaneseq
      %v3715 = vshrl.u32 %v3714, 7
      %v3716 = vsub.s32 %v3275, %v3715
      %v3717 = vrot.slane %v3566, %v3716
      %v3718 = vsel %vm3280, %v3717, %v3713
      %v3719 = vlaneseq
      %v3720 = vshrl.u32 %v3719, 7
      %v3721 = vsub.s32 %v394, %v3720
      %v3722 = vrot.slane %v3569, %v3721
      %v3723 = vlaneseq
      %v3724 = vshrl.u32 %v3723, 7
      %v3725 = vsub.s32 %v3275, %v3724
      %v3726 = vrot.slane %v3572, %v3725
      %v3727 = vsel %vm3280, %v3726, %v3722
      %v3728 = vlaneseq
      %v3729 = vshrl.u32 %v3728, 7
      %v3730 = vsub.s32 %v394, %v3729
      %v3731 = vrot.slane %v3575, %v3730
      %v3732 = vlaneseq
      %v3733 = vshrl.u32 %v3732, 7
      %v3734 = vsub.s32 %v3275, %v3733
      %v3735 = vrot.slane %v3578, %v3734
      %v3736 = vsel %vm3280, %v3735, %v3731
      %v3737 = vlaneseq
      %v3738 = vshrl.u32 %v3737, 7
      %v3739 = vsub.s32 %v394, %v3738
      %v3740 = vrot.slane %v3581, %v3739
      %v3741 = vlaneseq
      %v3742 = vshrl.u32 %v3741, 7
      %v3743 = vsub.s32 %v3275, %v3742
      %v3744 = vrot.slane %v3584, %v3743
      %v3745 = vsel %vm3280, %v3744, %v3740
      %v3746 = vlaneseq
      %v3747 = vshrl.u32 %v3746, 7
      %v3748 = vsub.s32 %v394, %v3747
      %v3749 = vrot.slane %v3587, %v3748
      %v3750 = vlaneseq
      %v3751 = vshrl.u32 %v3750, 7
      %v3752 = vsub.s32 %v3275, %v3751
      %v3753 = vrot.slane %v3590, %v3752
      %v3754 = vsel %vm3280, %v3753, %v3749
      %v3755 = vlaneseq
      %v3756 = vshrl.u32 %v3755, 7
      %v3757 = vsub.s32 %v394, %v3756
      %v3758 = vrot.slane %v3593, %v3757
      %v3759 = vlaneseq
      %v3760 = vshrl.u32 %v3759, 7
      %v3761 = vsub.s32 %v3275, %v3760
      %v3762 = vrot.slane %v3596, %v3761
      %v3763 = vsel %vm3280, %v3762, %v3758
      %v3764 = vlaneseq
      %v3765 = vshrl.u32 %v3764, 7
      %v3766 = vsub.s32 %v394, %v3765
      %v3767 = vrot.slane %v3599, %v3766
      %v3768 = vlaneseq
      %v3769 = vshrl.u32 %v3768, 7
      %v3770 = vsub.s32 %v3275, %v3769
      %v3771 = vrot.slane %v3602, %v3770
      %v3772 = vsel %vm3280, %v3771, %v3767
      %v3773 = vlaneseq
      %v3774 = vshrl.u32 %v3773, 7
      %v3775 = vsub.s32 %v394, %v3774
      %v3776 = vrot.slane %v3605, %v3775
      %v3777 = vlaneseq
      %v3778 = vshrl.u32 %v3777, 7
      %v3779 = vsub.s32 %v3275, %v3778
      %v3780 = vrot.slane %v3608, %v3779
      %v3781 = vsel %vm3280, %v3780, %v3776
      %v3782 = vlaneseq
      %v3783 = vshrl.u32 %v3782, 7
      %v3784 = vsub.s32 %v394, %v3783
      %v3785 = vrot.slane %v3611, %v3784
      %v3786 = vlaneseq
      %v3787 = vshrl.u32 %v3786, 7
      %v3788 = vsub.s32 %v3275, %v3787
      %v3789 = vrot.slane %v3614, %v3788
      %v3790 = vsel %vm3280, %v3789, %v3785
      %v3791 = vsel %vm3417, %v3664, %v3655
      %v3792 = vsel %vm3419, %v3673, %v3791
      %v3793 = vsel %vm3421, %v3682, %v3792
      %v3794 = vsel %vm3423, %v3691, %v3793
      %v3795 = vsel %vm3425, %v3700, %v3794
      %v3796 = vsel %vm3427, %v3709, %v3795
      %v3797 = vsel %vm3429, %v3718, %v3796
      %v3798 = vsel %vm3417, %v3736, %v3727
      %v3799 = vsel %vm3419, %v3745, %v3798
      %v3800 = vsel %vm3421, %v3754, %v3799
      %v3801 = vsel %vm3423, %v3763, %v3800
      %v3802 = vsel %vm3425, %v3772, %v3801
      %v3803 = vsel %vm3427, %v3781, %v3802
      %v3804 = vsel %vm3429, %v3790, %v3803
      %v3807 = vadd.f32 %v3481, %v3797
      %v3808 = vadd.f32 %v3484, %v3804
      %v3810 = vlaneseq
      %v3811 = vshrl.u32 %v3810, 7
      %v3812 = vsub.s32 0, %v3811
      %v3813 = vrot.slane %v2917, %v3812
      %v3815 = vadd.f32 %v3807, %v3813
      %v3816 = vadd.f32 %v3808, %v3813
      %v3817 = vsel %vm3137, %v3815, -inf
      %3818 = vmax.xlane.f32.xlu0 %v3817
      %v3819 = vpop.xlane.xlu0 %3818
      %v3820 = vsel %vm3137, %v3816, -inf
      %3821 = vmax.xlane.f32.xlu0 %v3820
      %v3822 = vpop.xlane.xlu0 %3821
      %v3823 = vsub.f32 %v3815, %v3819
      %v3824 = vsub.f32 %v3816, %v3822
      %v3825 = vmul.f32 %v3823, 1.442695
      %v3826 = vpow.pop %v3825
      %v3827 = vmul.f32 %v3824, 1.442695
      %v3828 = vpow.pop %v3827
      %v3829 = vsel %vm3137, %v3826, 0.0
      %3830 = vadd.xlane.f32.xlu0 %v3829
      %v3831 = vpop.xlane.xlu0 %3830
      %v3832 = vsel %vm3137, %v3828, 0.0
      %3833 = vadd.xlane.f32.xlu0 %v3832
      %v3834 = vpop.xlane.xlu0 %3833
      %v3835 = vrcp.pop %v3831
      %v3836 = vrcp.pop %v3834
      %v3837 = vmul.f32 %v3826, %v3835
      %v3838 = vmul.f32 %v3828, %v3836
      %v3839 = vpack.c.bf16 %v3838, %v3837
      %v3840 = vlaneseq
      %v3841 = vshrl.u32 %v3840, 7
      %v3842 = vsub.s32 0, %v3841
      %v3843 = vrot.slane %v3837, %v3842
      %3845 = vbcast.lane.b32.xlu0 %v3843, 256
      %v3846 = vpop.permute.xlu0 %3845
      %s3848 = sor.u32 256, 8
      %3849 = vbcast.lane.b32.xlu0 %v3843, %s3848
      %v3850 = vpop.permute.xlu0 %3849
      %v3851 = vlaneseq
      %v3852 = vshrl.u32 %v3851, 7
      %v3853 = vsub.s32 1, %v3852
      %v3854 = vrot.slane %v3837, %v3853
      %3856 = vbcast.lane.b32.xlu0 %v3854, 256
      %v3857 = vpop.permute.xlu0 %3856
      %s3859 = sor.u32 256, 8
      %3860 = vbcast.lane.b32.xlu0 %v3854, %s3859
      %v3861 = vpop.permute.xlu0 %3860
      %v3862 = vlaneseq
      %v3863 = vshrl.u32 %v3862, 7
      %v3864 = vsub.s32 2, %v3863
      %v3865 = vrot.slane %v3837, %v3864
      %3867 = vbcast.lane.b32.xlu0 %v3865, 256
      %v3868 = vpop.permute.xlu0 %3867
      %s3870 = sor.u32 256, 8
      %3871 = vbcast.lane.b32.xlu0 %v3865, %s3870
      %v3872 = vpop.permute.xlu0 %3871
      %v3873 = vlaneseq
      %v3874 = vshrl.u32 %v3873, 7
      %v3875 = vsub.s32 3, %v3874
      %v3876 = vrot.slane %v3837, %v3875
      %3878 = vbcast.lane.b32.xlu0 %v3876, 256
      %v3879 = vpop.permute.xlu0 %3878
      %s3881 = sor.u32 256, 8
      %3882 = vbcast.lane.b32.xlu0 %v3876, %s3881
      %v3883 = vpop.permute.xlu0 %3882
      %v3884 = vlaneseq
      %v3885 = vshrl.u32 %v3884, 7
      %v3886 = vsub.s32 4, %v3885
      %v3887 = vrot.slane %v3837, %v3886
      %3889 = vbcast.lane.b32.xlu0 %v3887, 256
      %v3890 = vpop.permute.xlu0 %3889
      %s3892 = sor.u32 256, 8
      %3893 = vbcast.lane.b32.xlu0 %v3887, %s3892
      %v3894 = vpop.permute.xlu0 %3893
      %v3895 = vlaneseq
      %v3896 = vshrl.u32 %v3895, 7
      %v3897 = vsub.s32 5, %v3896
      %v3898 = vrot.slane %v3837, %v3897
      %3900 = vbcast.lane.b32.xlu0 %v3898, 256
      %v3901 = vpop.permute.xlu0 %3900
      %s3903 = sor.u32 256, 8
      %3904 = vbcast.lane.b32.xlu0 %v3898, %s3903
      %v3905 = vpop.permute.xlu0 %3904
      %v3906 = vlaneseq
      %v3907 = vshrl.u32 %v3906, 7
      %v3908 = vsub.s32 6, %v3907
      %v3909 = vrot.slane %v3837, %v3908
      %3911 = vbcast.lane.b32.xlu0 %v3909, 256
      %v3912 = vpop.permute.xlu0 %3911
      %s3914 = sor.u32 256, 8
      %3915 = vbcast.lane.b32.xlu0 %v3909, %s3914
      %v3916 = vpop.permute.xlu0 %3915
      %v3917 = vlaneseq
      %v3918 = vshrl.u32 %v3917, 7
      %v3919 = vsub.s32 7, %v3918
      %v3920 = vrot.slane %v3837, %v3919
      %3922 = vbcast.lane.b32.xlu0 %v3920, 256
      %v3923 = vpop.permute.xlu0 %3922
      %s3925 = sor.u32 256, 8
      %3926 = vbcast.lane.b32.xlu0 %v3920, %s3925
      %v3927 = vpop.permute.xlu0 %3926
      %v3928 = vlaneseq
      %v3929 = vshrl.u32 %v3928, 7
      %v3930 = vsub.s32 0, %v3929
      %v3931 = vrot.slane %v3838, %v3930
      %3933 = vbcast.lane.b32.xlu0 %v3931, 256
      %v3934 = vpop.permute.xlu0 %3933
      %s3936 = sor.u32 256, 8
      %3937 = vbcast.lane.b32.xlu0 %v3931, %s3936
      %v3938 = vpop.permute.xlu0 %3937
      %v3939 = vlaneseq
      %v3940 = vshrl.u32 %v3939, 7
      %v3941 = vsub.s32 1, %v3940
      %v3942 = vrot.slane %v3838, %v3941
      %3944 = vbcast.lane.b32.xlu0 %v3942, 256
      %v3945 = vpop.permute.xlu0 %3944
      %s3947 = sor.u32 256, 8
      %3948 = vbcast.lane.b32.xlu0 %v3942, %s3947
      %v3949 = vpop.permute.xlu0 %3948
      %v3950 = vlaneseq
      %v3951 = vshrl.u32 %v3950, 7
      %v3952 = vsub.s32 2, %v3951
      %v3953 = vrot.slane %v3838, %v3952
      %3955 = vbcast.lane.b32.xlu0 %v3953, 256
      %v3956 = vpop.permute.xlu0 %3955
      %s3958 = sor.u32 256, 8
      %3959 = vbcast.lane.b32.xlu0 %v3953, %s3958
      %v3960 = vpop.permute.xlu0 %3959
      %v3961 = vlaneseq
      %v3962 = vshrl.u32 %v3961, 7
      %v3963 = vsub.s32 3, %v3962
      %v3964 = vrot.slane %v3838, %v3963
      %3966 = vbcast.lane.b32.xlu0 %v3964, 256
      %v3967 = vpop.permute.xlu0 %3966
      %s3969 = sor.u32 256, 8
      %3970 = vbcast.lane.b32.xlu0 %v3964, %s3969
      %v3971 = vpop.permute.xlu0 %3970
      %v3972 = vlaneseq
      %v3973 = vshrl.u32 %v3972, 7
      %v3974 = vsub.s32 4, %v3973
      %v3975 = vrot.slane %v3838, %v3974
      %3977 = vbcast.lane.b32.xlu0 %v3975, 256
      %v3978 = vpop.permute.xlu0 %3977
      %s3980 = sor.u32 256, 8
      %3981 = vbcast.lane.b32.xlu0 %v3975, %s3980
      %v3982 = vpop.permute.xlu0 %3981
      %v3983 = vlaneseq
      %v3984 = vshrl.u32 %v3983, 7
      %v3985 = vsub.s32 5, %v3984
      %v3986 = vrot.slane %v3838, %v3985
      %3988 = vbcast.lane.b32.xlu0 %v3986, 256
      %v3989 = vpop.permute.xlu0 %3988
      %s3991 = sor.u32 256, 8
      %3992 = vbcast.lane.b32.xlu0 %v3986, %s3991
      %v3993 = vpop.permute.xlu0 %3992
      %v3994 = vlaneseq
      %v3995 = vshrl.u32 %v3994, 7
      %v3996 = vsub.s32 6, %v3995
      %v3997 = vrot.slane %v3838, %v3996
      %3999 = vbcast.lane.b32.xlu0 %v3997, 256
      %v4000 = vpop.permute.xlu0 %3999
      %s4002 = sor.u32 256, 8
      %4003 = vbcast.lane.b32.xlu0 %v3997, %s4002
      %v4004 = vpop.permute.xlu0 %4003
      %v4005 = vlaneseq
      %v4006 = vshrl.u32 %v4005, 7
      %v4007 = vsub.s32 7, %v4006
      %v4008 = vrot.slane %v3838, %v4007
      %4010 = vbcast.lane.b32.xlu0 %v4008, 256
      %v4011 = vpop.permute.xlu0 %4010
      %s4013 = sor.u32 256, 8
      %4014 = vbcast.lane.b32.xlu0 %v4008, %s4013
      %v4015 = vpop.permute.xlu0 %4014
      %v4016 = vmul.f32 %v3846, %v2785
      %v4017 = vmul.f32 %v3850, %v2788
      %v4018 = vmul.f32 %v3857, %v2793
      %v4019 = vmul.f32 %v3861, %v2796
      %v4020 = vmul.f32 %v3868, %v2801
      %v4021 = vmul.f32 %v3872, %v2804
      %v4022 = vmul.f32 %v3879, %v2809
      %v4023 = vmul.f32 %v3883, %v2812
      %v4024 = vmul.f32 %v3890, %v2817
      %v4025 = vmul.f32 %v3894, %v2820
      %v4026 = vmul.f32 %v3901, %v2825
      %v4027 = vmul.f32 %v3905, %v2828
      %v4028 = vmul.f32 %v3912, %v2833
      %v4029 = vmul.f32 %v3916, %v2836
      %v4030 = vmul.f32 %v3923, %v2841
      %v4031 = vmul.f32 %v3927, %v2844
      %v4032 = vmul.f32 %v3934, %v2849
      %v4033 = vmul.f32 %v3938, %v2852
      %v4034 = vmul.f32 %v3945, %v2857
      %v4035 = vmul.f32 %v3949, %v2860
      %v4036 = vmul.f32 %v3956, %v2865
      %v4037 = vmul.f32 %v3960, %v2868
      %v4038 = vmul.f32 %v3967, %v2873
      %v4039 = vmul.f32 %v3971, %v2876
      %v4040 = vmul.f32 %v3978, %v2881
      %v4041 = vmul.f32 %v3982, %v2884
      %v4042 = vmul.f32 %v3989, %v2889
      %v4043 = vmul.f32 %v3993, %v2892
      %v4044 = vmul.f32 %v4000, %v2897
      %v4045 = vmul.f32 %v4004, %v2900
      %v4046 = vmul.f32 %v4011, %v2905
      %v4047 = vmul.f32 %v4015, %v2908
      %v4048 = vsel %vm3137, %v4016, 0.0
      %v4049 = vsel %vm3137, %v4017, 0.0
      %v4050 = vadd.f32 %v4048, %v4049
      %v4051 = vrot.slane %v4050, 4
      %v4052 = vadd.f32 %v4050, %v4051
      %v4053 = vrot.slane %v4052, 2
      %v4054 = vadd.f32 %v4052, %v4053
      %v4055 = vrot.slane %v4054, 1
      %v4056 = vadd.f32 %v4054, %v4055
      %v4057 = vsel %vm3137, %v4018, 0.0
      %v4058 = vsel %vm3137, %v4019, 0.0
      %v4059 = vadd.f32 %v4057, %v4058
      %v4060 = vrot.slane %v4059, 4
      %v4061 = vadd.f32 %v4059, %v4060
      %v4062 = vrot.slane %v4061, 2
      %v4063 = vadd.f32 %v4061, %v4062
      %v4064 = vrot.slane %v4063, 1
      %v4065 = vadd.f32 %v4063, %v4064
      %v4066 = vsel %vm3137, %v4020, 0.0
      %v4067 = vsel %vm3137, %v4021, 0.0
      %v4068 = vadd.f32 %v4066, %v4067
      %v4069 = vrot.slane %v4068, 4
      %v4070 = vadd.f32 %v4068, %v4069
      %v4071 = vrot.slane %v4070, 2
      %v4072 = vadd.f32 %v4070, %v4071
      %v4073 = vrot.slane %v4072, 1
      %v4074 = vadd.f32 %v4072, %v4073
      %v4075 = vsel %vm3137, %v4022, 0.0
      %v4076 = vsel %vm3137, %v4023, 0.0
      %v4077 = vadd.f32 %v4075, %v4076
      %v4078 = vrot.slane %v4077, 4
      %v4079 = vadd.f32 %v4077, %v4078
      %v4080 = vrot.slane %v4079, 2
      %v4081 = vadd.f32 %v4079, %v4080
      %v4082 = vrot.slane %v4081, 1
      %v4083 = vadd.f32 %v4081, %v4082
      %v4084 = vsel %vm3137, %v4024, 0.0
      %v4085 = vsel %vm3137, %v4025, 0.0
      %v4086 = vadd.f32 %v4084, %v4085
      %v4087 = vrot.slane %v4086, 4
      %v4088 = vadd.f32 %v4086, %v4087
      %v4089 = vrot.slane %v4088, 2
      %v4090 = vadd.f32 %v4088, %v4089
      %v4091 = vrot.slane %v4090, 1
      %v4092 = vadd.f32 %v4090, %v4091
      %v4093 = vsel %vm3137, %v4026, 0.0
      %v4094 = vsel %vm3137, %v4027, 0.0
      %v4095 = vadd.f32 %v4093, %v4094
      %v4096 = vrot.slane %v4095, 4
      %v4097 = vadd.f32 %v4095, %v4096
      %v4098 = vrot.slane %v4097, 2
      %v4099 = vadd.f32 %v4097, %v4098
      %v4100 = vrot.slane %v4099, 1
      %v4101 = vadd.f32 %v4099, %v4100
      %v4102 = vsel %vm3137, %v4028, 0.0
      %v4103 = vsel %vm3137, %v4029, 0.0
      %v4104 = vadd.f32 %v4102, %v4103
      %v4105 = vrot.slane %v4104, 4
      %v4106 = vadd.f32 %v4104, %v4105
      %v4107 = vrot.slane %v4106, 2
      %v4108 = vadd.f32 %v4106, %v4107
      %v4109 = vrot.slane %v4108, 1
      %v4110 = vadd.f32 %v4108, %v4109
      %v4111 = vsel %vm3137, %v4030, 0.0
      %v4112 = vsel %vm3137, %v4031, 0.0
      %v4113 = vadd.f32 %v4111, %v4112
      %v4114 = vrot.slane %v4113, 4
      %v4115 = vadd.f32 %v4113, %v4114
      %v4116 = vrot.slane %v4115, 2
      %v4117 = vadd.f32 %v4115, %v4116
      %v4118 = vrot.slane %v4117, 1
      %v4119 = vadd.f32 %v4117, %v4118
      %v4120 = vsel %vm3137, %v4032, 0.0
      %v4121 = vsel %vm3137, %v4033, 0.0
      %v4122 = vadd.f32 %v4120, %v4121
      %v4123 = vrot.slane %v4122, 4
      %v4124 = vadd.f32 %v4122, %v4123
      %v4125 = vrot.slane %v4124, 2
      %v4126 = vadd.f32 %v4124, %v4125
      %v4127 = vrot.slane %v4126, 1
      %v4128 = vadd.f32 %v4126, %v4127
      %v4129 = vsel %vm3137, %v4034, 0.0
      %v4130 = vsel %vm3137, %v4035, 0.0
      %v4131 = vadd.f32 %v4129, %v4130
      %v4132 = vrot.slane %v4131, 4
      %v4133 = vadd.f32 %v4131, %v4132
      %v4134 = vrot.slane %v4133, 2
      %v4135 = vadd.f32 %v4133, %v4134
      %v4136 = vrot.slane %v4135, 1
      %v4137 = vadd.f32 %v4135, %v4136
      %v4138 = vsel %vm3137, %v4036, 0.0
      %v4139 = vsel %vm3137, %v4037, 0.0
      %v4140 = vadd.f32 %v4138, %v4139
      %v4141 = vrot.slane %v4140, 4
      %v4142 = vadd.f32 %v4140, %v4141
      %v4143 = vrot.slane %v4142, 2
      %v4144 = vadd.f32 %v4142, %v4143
      %v4145 = vrot.slane %v4144, 1
      %v4146 = vadd.f32 %v4144, %v4145
      %v4147 = vsel %vm3137, %v4038, 0.0
      %v4148 = vsel %vm3137, %v4039, 0.0
      %v4149 = vadd.f32 %v4147, %v4148
      %v4150 = vrot.slane %v4149, 4
      %v4151 = vadd.f32 %v4149, %v4150
      %v4152 = vrot.slane %v4151, 2
      %v4153 = vadd.f32 %v4151, %v4152
      %v4154 = vrot.slane %v4153, 1
      %v4155 = vadd.f32 %v4153, %v4154
      %v4156 = vsel %vm3137, %v4040, 0.0
      %v4157 = vsel %vm3137, %v4041, 0.0
      %v4158 = vadd.f32 %v4156, %v4157
      %v4159 = vrot.slane %v4158, 4
      %v4160 = vadd.f32 %v4158, %v4159
      %v4161 = vrot.slane %v4160, 2
      %v4162 = vadd.f32 %v4160, %v4161
      %v4163 = vrot.slane %v4162, 1
      %v4164 = vadd.f32 %v4162, %v4163
      %v4165 = vsel %vm3137, %v4042, 0.0
      %v4166 = vsel %vm3137, %v4043, 0.0
      %v4167 = vadd.f32 %v4165, %v4166
      %v4168 = vrot.slane %v4167, 4
      %v4169 = vadd.f32 %v4167, %v4168
      %v4170 = vrot.slane %v4169, 2
      %v4171 = vadd.f32 %v4169, %v4170
      %v4172 = vrot.slane %v4171, 1
      %v4173 = vadd.f32 %v4171, %v4172
      %v4174 = vsel %vm3137, %v4044, 0.0
      %v4175 = vsel %vm3137, %v4045, 0.0
      %v4176 = vadd.f32 %v4174, %v4175
      %v4177 = vrot.slane %v4176, 4
      %v4178 = vadd.f32 %v4176, %v4177
      %v4179 = vrot.slane %v4178, 2
      %v4180 = vadd.f32 %v4178, %v4179
      %v4181 = vrot.slane %v4180, 1
      %v4182 = vadd.f32 %v4180, %v4181
      %v4183 = vsel %vm3137, %v4046, 0.0
      %v4184 = vsel %vm3137, %v4047, 0.0
      %v4185 = vadd.f32 %v4183, %v4184
      %v4186 = vrot.slane %v4185, 4
      %v4187 = vadd.f32 %v4185, %v4186
      %v4188 = vrot.slane %v4187, 2
      %v4189 = vadd.f32 %v4187, %v4188
      %v4190 = vrot.slane %v4189, 1
      %v4191 = vadd.f32 %v4189, %v4190
      %v4194 = vunpack.c.l.b16 %v2915
      %v4195 = vunpack.c.l.b16 %v2916
      %v4196 = vpack.c.b16 %v4195, %v4194
      %v4214 = vsel %vm3417, %v4065, %v4056
      %v4215 = vsel %vm3419, %v4074, %v4214
      %v4216 = vsel %vm3421, %v4083, %v4215
      %v4217 = vsel %vm3423, %v4092, %v4216
      %v4218 = vsel %vm3425, %v4101, %v4217
      %v4219 = vsel %vm3427, %v4110, %v4218
      %v4220 = vsel %vm3429, %v4119, %v4219
      %v4221 = vsel %vm3417, %v4137, %v4128
      %v4222 = vsel %vm3419, %v4146, %v4221
      %v4223 = vsel %vm3421, %v4155, %v4222
      %v4224 = vsel %vm3423, %v4164, %v4223
      %v4225 = vsel %vm3425, %v4173, %v4224
      %v4226 = vsel %vm3427, %v4182, %v4225
      %v4227 = vsel %vm3429, %v4191, %v4226
      %v4231 = vsel %vm3137, %v3839, 0
      %4233 = vmatprep.subr.bf16.mxu0 0
      %4234 = vmatpush1.bf16.msra.mxu0 0
      %4235 = vmatprep.subr.bf16.mxu0 0
      %4236 = vmatpush1.bf16.msra.mxu0 0
      %4237 = vmatprep.subr.bf16.mxu0 0
      %4238 = vmatpush1.bf16.msra.mxu0 0
      %4239 = vmatprep.subr.bf16.mxu0 0
      %4240 = vmatpush1.bf16.msra.mxu0 0
      %4241 = vmatprep.subr.bf16.mxu0 0
      %4242 = vmatpush1.bf16.msra.mxu0 0
      %4243 = vmatprep.subr.bf16.mxu0 0
      %4244 = vmatpush1.bf16.msra.mxu0 0
      %4245 = vmatprep.subr.bf16.mxu0 0
      %4246 = vmatpush1.bf16.msra.mxu0 0
      %4247 = vmatprep.subr.bf16.mxu0 0
      %4248 = vmatpush1.bf16.msra.mxu0 %v4196
      %4249 = vmatprep.subr.bf16.mxu0 0
      %4250 = vmatpush2.bf16.msra.mxu0 0
      %4251 = vmatprep.subr.bf16.mxu0 0
      %4252 = vmatpush2.bf16.msra.mxu0 0
      %4253 = vmatprep.subr.bf16.mxu0 0
      %4254 = vmatpush2.bf16.msra.mxu0 0
      %4255 = vmatprep.subr.bf16.mxu0 0
      %4256 = vmatpush2.bf16.msra.mxu0 0
      %4257 = vmatprep.subr.bf16.mxu0 0
      %4258 = vmatpush2.bf16.msra.mxu0 0
      %4259 = vmatprep.subr.bf16.mxu0 0
      %4260 = vmatpush2.bf16.msra.mxu0 0
      %4261 = vmatprep.subr.bf16.mxu0 0
      %4262 = vmatpush2.bf16.msra.mxu0 0
      %4263 = vmatprep.subr.bf16.mxu0 0
      %4264 = vmatpush2.bf16.msra.mxu0 0
      %4265 = vmatprep.mubr.bf16.mxu0 0
      %4266 = vmatmul.mubr.bf16.gmra.mxu0 %v4231
      %v4267 = vpop.f32.mrf.mxu0
      %v4268 = vadd.f32 %v4220, %v4267
      %v4269 = vpop.f32.mrf.mxu0
      %v4270 = vpop.f32.mrf.mxu0
      %v4271 = vadd.f32 %v4227, %v4270
      %v4272 = vpop.f32.mrf.mxu0
      %4273 = vdwg.mxu0
      %4306 = vrot.lane.b32.xlu0 %v3105, 112
      %v4307 = vpop.permute.xlu0 %4306
      %4308 = vrot.lane.b32.xlu0 %v3106, 112
      %v4309 = vpop.permute.xlu0 %4308
      %4310 = vrot.lane.b32.xlu0 %v3107, 112
      %v4311 = vpop.permute.xlu0 %4310
      %4312 = vrot.lane.b32.xlu0 %v3108, 112
      %v4313 = vpop.permute.xlu0 %4312
      %4314 = vrot.lane.b32.xlu0 %v3109, 112
      %v4315 = vpop.permute.xlu0 %4314
      %4316 = vrot.lane.b32.xlu0 %v3110, 112
      %v4317 = vpop.permute.xlu0 %4316
      %4318 = vrot.lane.b32.xlu0 %v3111, 112
      %v4319 = vpop.permute.xlu0 %4318
      %4320 = vrot.lane.b32.xlu0 %v3112, 112
      %v4321 = vpop.permute.xlu0 %4320
      %4322 = vrot.lane.b32.xlu0 %v3113, 112
      %v4323 = vpop.permute.xlu0 %4322
      %4324 = vrot.lane.b32.xlu0 %v3114, 112
      %v4325 = vpop.permute.xlu0 %4324
      %4326 = vrot.lane.b32.xlu0 %v3115, 112
      %v4327 = vpop.permute.xlu0 %4326
      %4328 = vrot.lane.b32.xlu0 %v3116, 112
      %v4329 = vpop.permute.xlu0 %4328
      %4330 = vrot.lane.b32.xlu0 %v3117, 112
      %v4331 = vpop.permute.xlu0 %4330
      %4332 = vrot.lane.b32.xlu0 %v3118, 112
      %v4333 = vpop.permute.xlu0 %4332
      %4334 = vrot.lane.b32.xlu0 %v3119, 112
      %v4335 = vpop.permute.xlu0 %4334
      %4336 = vrot.lane.b32.xlu0 %v3120, 112
      %v4337 = vpop.permute.xlu0 %4336
      %4338 = vrot.lane.b32.xlu0 %v3121, 112
      %v4339 = vpop.permute.xlu0 %4338
      %4340 = vrot.lane.b32.xlu0 %v3122, 112
      %v4341 = vpop.permute.xlu0 %4340
      %4342 = vrot.lane.b32.xlu0 %v3123, 112
      %v4343 = vpop.permute.xlu0 %4342
      %4344 = vrot.lane.b32.xlu0 %v3124, 112
      %v4345 = vpop.permute.xlu0 %4344
      %4346 = vrot.lane.b32.xlu0 %v3125, 112
      %v4347 = vpop.permute.xlu0 %4346
      %4348 = vrot.lane.b32.xlu0 %v3126, 112
      %v4349 = vpop.permute.xlu0 %4348
      %4350 = vrot.lane.b32.xlu0 %v3127, 112
      %v4351 = vpop.permute.xlu0 %4350
      %4352 = vrot.lane.b32.xlu0 %v3128, 112
      %v4353 = vpop.permute.xlu0 %4352
      %4354 = vrot.lane.b32.xlu0 %v3129, 112
      %v4355 = vpop.permute.xlu0 %4354
      %4356 = vrot.lane.b32.xlu0 %v3130, 112
      %v4357 = vpop.permute.xlu0 %4356
      %4358 = vrot.lane.b32.xlu0 %v3131, 112
      %v4359 = vpop.permute.xlu0 %4358
      %4360 = vrot.lane.b32.xlu0 %v3132, 112
      %v4361 = vpop.permute.xlu0 %4360
      %4362 = vrot.lane.b32.xlu0 %v3133, 112
      %v4363 = vpop.permute.xlu0 %4362
      %4364 = vrot.lane.b32.xlu0 %v3134, 112
      %v4365 = vpop.permute.xlu0 %4364
      %4366 = vrot.lane.b32.xlu0 %v3135, 112
      %v4367 = vpop.permute.xlu0 %4366
      %4368 = vrot.lane.b32.xlu0 %v3136, 112
      %v4369 = vpop.permute.xlu0 %4368
      %v4402 = vsel %vm3137, %v4307, 0.0
      %4403 = vadd.xlane.f32.xlu0 %v4402
      %v4404 = vpop.xlane.xlu0 %4403
      %v4405 = vsel %vm3137, %v4309, 0.0
      %4406 = vadd.xlane.f32.xlu0 %v4405
      %v4407 = vpop.xlane.xlu0 %4406
      %v4408 = vsel %vm3137, %v4311, 0.0
      %4409 = vadd.xlane.f32.xlu0 %v4408
      %v4410 = vpop.xlane.xlu0 %4409
      %v4411 = vsel %vm3137, %v4313, 0.0
      %4412 = vadd.xlane.f32.xlu0 %v4411
      %v4413 = vpop.xlane.xlu0 %4412
      %v4414 = vsel %vm3137, %v4315, 0.0
      %4415 = vadd.xlane.f32.xlu0 %v4414
      %v4416 = vpop.xlane.xlu0 %4415
      %v4417 = vsel %vm3137, %v4317, 0.0
      %4418 = vadd.xlane.f32.xlu0 %v4417
      %v4419 = vpop.xlane.xlu0 %4418
      %v4420 = vsel %vm3137, %v4319, 0.0
      %4421 = vadd.xlane.f32.xlu0 %v4420
      %v4422 = vpop.xlane.xlu0 %4421
      %v4423 = vsel %vm3137, %v4321, 0.0
      %4424 = vadd.xlane.f32.xlu0 %v4423
      %v4425 = vpop.xlane.xlu0 %4424
      %v4426 = vsel %vm3137, %v4323, 0.0
      %4427 = vadd.xlane.f32.xlu0 %v4426
      %v4428 = vpop.xlane.xlu0 %4427
      %v4429 = vsel %vm3137, %v4325, 0.0
      %4430 = vadd.xlane.f32.xlu0 %v4429
      %v4431 = vpop.xlane.xlu0 %4430
      %v4432 = vsel %vm3137, %v4327, 0.0
      %4433 = vadd.xlane.f32.xlu0 %v4432
      %v4434 = vpop.xlane.xlu0 %4433
      %v4435 = vsel %vm3137, %v4329, 0.0
      %4436 = vadd.xlane.f32.xlu0 %v4435
      %v4437 = vpop.xlane.xlu0 %4436
      %v4438 = vsel %vm3137, %v4331, 0.0
      %4439 = vadd.xlane.f32.xlu0 %v4438
      %v4440 = vpop.xlane.xlu0 %4439
      %v4441 = vsel %vm3137, %v4333, 0.0
      %4442 = vadd.xlane.f32.xlu0 %v4441
      %v4443 = vpop.xlane.xlu0 %4442
      %v4444 = vsel %vm3137, %v4335, 0.0
      %4445 = vadd.xlane.f32.xlu0 %v4444
      %v4446 = vpop.xlane.xlu0 %4445
      %v4447 = vsel %vm3137, %v4337, 0.0
      %4448 = vadd.xlane.f32.xlu0 %v4447
      %v4449 = vpop.xlane.xlu0 %4448
      %v4450 = vsel %vm3137, %v4339, 0.0
      %4451 = vadd.xlane.f32.xlu0 %v4450
      %v4452 = vpop.xlane.xlu0 %4451
      %v4453 = vsel %vm3137, %v4341, 0.0
      %4454 = vadd.xlane.f32.xlu0 %v4453
      %v4455 = vpop.xlane.xlu0 %4454
      %v4456 = vsel %vm3137, %v4343, 0.0
      %4457 = vadd.xlane.f32.xlu0 %v4456
      %v4458 = vpop.xlane.xlu0 %4457
      %v4459 = vsel %vm3137, %v4345, 0.0
      %4460 = vadd.xlane.f32.xlu0 %v4459
      %v4461 = vpop.xlane.xlu0 %4460
      %v4462 = vsel %vm3137, %v4347, 0.0
      %4463 = vadd.xlane.f32.xlu0 %v4462
      %v4464 = vpop.xlane.xlu0 %4463
      %v4465 = vsel %vm3137, %v4349, 0.0
      %4466 = vadd.xlane.f32.xlu0 %v4465
      %v4467 = vpop.xlane.xlu0 %4466
      %v4468 = vsel %vm3137, %v4351, 0.0
      %4469 = vadd.xlane.f32.xlu0 %v4468
      %v4470 = vpop.xlane.xlu0 %4469
      %v4471 = vsel %vm3137, %v4353, 0.0
      %4472 = vadd.xlane.f32.xlu0 %v4471
      %v4473 = vpop.xlane.xlu0 %4472
      %v4474 = vsel %vm3137, %v4355, 0.0
      %4475 = vadd.xlane.f32.xlu0 %v4474
      %v4476 = vpop.xlane.xlu0 %4475
      %v4477 = vsel %vm3137, %v4357, 0.0
      %4478 = vadd.xlane.f32.xlu0 %v4477
      %v4479 = vpop.xlane.xlu0 %4478
      %v4480 = vsel %vm3137, %v4359, 0.0
      %4481 = vadd.xlane.f32.xlu0 %v4480
      %v4482 = vpop.xlane.xlu0 %4481
      %v4483 = vsel %vm3137, %v4361, 0.0
      %4484 = vadd.xlane.f32.xlu0 %v4483
      %v4485 = vpop.xlane.xlu0 %4484
      %v4486 = vsel %vm3137, %v4363, 0.0
      %4487 = vadd.xlane.f32.xlu0 %v4486
      %v4488 = vpop.xlane.xlu0 %4487
      %v4489 = vsel %vm3137, %v4365, 0.0
      %4490 = vadd.xlane.f32.xlu0 %v4489
      %v4491 = vpop.xlane.xlu0 %4490
      %v4492 = vsel %vm3137, %v4367, 0.0
      %4493 = vadd.xlane.f32.xlu0 %v4492
      %v4494 = vpop.xlane.xlu0 %4493
      %v4495 = vsel %vm3137, %v4369, 0.0
      %4496 = vadd.xlane.f32.xlu0 %v4495
      %v4497 = vpop.xlane.xlu0 %4496
      %4499 = vrot.lane.b32.xlu0 %v2924, 112
      %v4500 = vpop.permute.xlu0 %4499
      %4501 = vrot.lane.b32.xlu0 %v3238, 112
      %v4502 = vpop.permute.xlu0 %4501
      %v4535 = vlaneseq
      %v4536 = vshrl.u32 %v4535, 7
      %v4537 = vsub.s32 %v394, %v4536
      %v4538 = vrot.slane %v4404, %v4537
      %v4539 = vlaneseq
      %v4540 = vshrl.u32 %v4539, 7
      %v4541 = vsub.s32 %v3275, %v4540
      %v4542 = vrot.slane %v4407, %v4541
      %v4543 = vsel %vm3280, %v4542, %v4538
      %v4544 = vlaneseq
      %v4545 = vshrl.u32 %v4544, 7
      %v4546 = vsub.s32 %v394, %v4545
      %v4547 = vrot.slane %v4410, %v4546
      %v4548 = vlaneseq
      %v4549 = vshrl.u32 %v4548, 7
      %v4550 = vsub.s32 %v3275, %v4549
      %v4551 = vrot.slane %v4413, %v4550
      %v4552 = vsel %vm3280, %v4551, %v4547
      %v4553 = vlaneseq
      %v4554 = vshrl.u32 %v4553, 7
      %v4555 = vsub.s32 %v394, %v4554
      %v4556 = vrot.slane %v4416, %v4555
      %v4557 = vlaneseq
      %v4558 = vshrl.u32 %v4557, 7
      %v4559 = vsub.s32 %v3275, %v4558
      %v4560 = vrot.slane %v4419, %v4559
      %v4561 = vsel %vm3280, %v4560, %v4556
      %v4562 = vlaneseq
      %v4563 = vshrl.u32 %v4562, 7
      %v4564 = vsub.s32 %v394, %v4563
      %v4565 = vrot.slane %v4422, %v4564
      %v4566 = vlaneseq
      %v4567 = vshrl.u32 %v4566, 7
      %v4568 = vsub.s32 %v3275, %v4567
      %v4569 = vrot.slane %v4425, %v4568
      %v4570 = vsel %vm3280, %v4569, %v4565
      %v4571 = vlaneseq
      %v4572 = vshrl.u32 %v4571, 7
      %v4573 = vsub.s32 %v394, %v4572
      %v4574 = vrot.slane %v4428, %v4573
      %v4575 = vlaneseq
      %v4576 = vshrl.u32 %v4575, 7
      %v4577 = vsub.s32 %v3275, %v4576
      %v4578 = vrot.slane %v4431, %v4577
      %v4579 = vsel %vm3280, %v4578, %v4574
      %v4580 = vlaneseq
      %v4581 = vshrl.u32 %v4580, 7
      %v4582 = vsub.s32 %v394, %v4581
      %v4583 = vrot.slane %v4434, %v4582
      %v4584 = vlaneseq
      %v4585 = vshrl.u32 %v4584, 7
      %v4586 = vsub.s32 %v3275, %v4585
      %v4587 = vrot.slane %v4437, %v4586
      %v4588 = vsel %vm3280, %v4587, %v4583
      %v4589 = vlaneseq
      %v4590 = vshrl.u32 %v4589, 7
      %v4591 = vsub.s32 %v394, %v4590
      %v4592 = vrot.slane %v4440, %v4591
      %v4593 = vlaneseq
      %v4594 = vshrl.u32 %v4593, 7
      %v4595 = vsub.s32 %v3275, %v4594
      %v4596 = vrot.slane %v4443, %v4595
      %v4597 = vsel %vm3280, %v4596, %v4592
      %v4598 = vlaneseq
      %v4599 = vshrl.u32 %v4598, 7
      %v4600 = vsub.s32 %v394, %v4599
      %v4601 = vrot.slane %v4446, %v4600
      %v4602 = vlaneseq
      %v4603 = vshrl.u32 %v4602, 7
      %v4604 = vsub.s32 %v3275, %v4603
      %v4605 = vrot.slane %v4449, %v4604
      %v4606 = vsel %vm3280, %v4605, %v4601
      %v4607 = vlaneseq
      %v4608 = vshrl.u32 %v4607, 7
      %v4609 = vsub.s32 %v394, %v4608
      %v4610 = vrot.slane %v4452, %v4609
      %v4611 = vlaneseq
      %v4612 = vshrl.u32 %v4611, 7
      %v4613 = vsub.s32 %v3275, %v4612
      %v4614 = vrot.slane %v4455, %v4613
      %v4615 = vsel %vm3280, %v4614, %v4610
      %v4616 = vlaneseq
      %v4617 = vshrl.u32 %v4616, 7
      %v4618 = vsub.s32 %v394, %v4617
      %v4619 = vrot.slane %v4458, %v4618
      %v4620 = vlaneseq
      %v4621 = vshrl.u32 %v4620, 7
      %v4622 = vsub.s32 %v3275, %v4621
      %v4623 = vrot.slane %v4461, %v4622
      %v4624 = vsel %vm3280, %v4623, %v4619
      %v4625 = vlaneseq
      %v4626 = vshrl.u32 %v4625, 7
      %v4627 = vsub.s32 %v394, %v4626
      %v4628 = vrot.slane %v4464, %v4627
      %v4629 = vlaneseq
      %v4630 = vshrl.u32 %v4629, 7
      %v4631 = vsub.s32 %v3275, %v4630
      %v4632 = vrot.slane %v4467, %v4631
      %v4633 = vsel %vm3280, %v4632, %v4628
      %v4634 = vlaneseq
      %v4635 = vshrl.u32 %v4634, 7
      %v4636 = vsub.s32 %v394, %v4635
      %v4637 = vrot.slane %v4470, %v4636
      %v4638 = vlaneseq
      %v4639 = vshrl.u32 %v4638, 7
      %v4640 = vsub.s32 %v3275, %v4639
      %v4641 = vrot.slane %v4473, %v4640
      %v4642 = vsel %vm3280, %v4641, %v4637
      %v4643 = vlaneseq
      %v4644 = vshrl.u32 %v4643, 7
      %v4645 = vsub.s32 %v394, %v4644
      %v4646 = vrot.slane %v4476, %v4645
      %v4647 = vlaneseq
      %v4648 = vshrl.u32 %v4647, 7
      %v4649 = vsub.s32 %v3275, %v4648
      %v4650 = vrot.slane %v4479, %v4649
      %v4651 = vsel %vm3280, %v4650, %v4646
      %v4652 = vlaneseq
      %v4653 = vshrl.u32 %v4652, 7
      %v4654 = vsub.s32 %v394, %v4653
      %v4655 = vrot.slane %v4482, %v4654
      %v4656 = vlaneseq
      %v4657 = vshrl.u32 %v4656, 7
      %v4658 = vsub.s32 %v3275, %v4657
      %v4659 = vrot.slane %v4485, %v4658
      %v4660 = vsel %vm3280, %v4659, %v4655
      %v4661 = vlaneseq
      %v4662 = vshrl.u32 %v4661, 7
      %v4663 = vsub.s32 %v394, %v4662
      %v4664 = vrot.slane %v4488, %v4663
      %v4665 = vlaneseq
      %v4666 = vshrl.u32 %v4665, 7
      %v4667 = vsub.s32 %v3275, %v4666
      %v4668 = vrot.slane %v4491, %v4667
      %v4669 = vsel %vm3280, %v4668, %v4664
      %v4670 = vlaneseq
      %v4671 = vshrl.u32 %v4670, 7
      %v4672 = vsub.s32 %v394, %v4671
      %v4673 = vrot.slane %v4494, %v4672
      %v4674 = vlaneseq
      %v4675 = vshrl.u32 %v4674, 7
      %v4676 = vsub.s32 %v3275, %v4675
      %v4677 = vrot.slane %v4497, %v4676
      %v4678 = vsel %vm3280, %v4677, %v4673
      %v4679 = vsel %vm3417, %v4552, %v4543
      %v4680 = vsel %vm3419, %v4561, %v4679
      %v4681 = vsel %vm3421, %v4570, %v4680
      %v4682 = vsel %vm3423, %v4579, %v4681
      %v4683 = vsel %vm3425, %v4588, %v4682
      %v4684 = vsel %vm3427, %v4597, %v4683
      %v4685 = vsel %vm3429, %v4606, %v4684
      %v4686 = vsel %vm3417, %v4624, %v4615
      %v4687 = vsel %vm3419, %v4633, %v4686
      %v4688 = vsel %vm3421, %v4642, %v4687
      %v4689 = vsel %vm3423, %v4651, %v4688
      %v4690 = vsel %vm3425, %v4660, %v4689
      %v4691 = vsel %vm3427, %v4669, %v4690
      %v4692 = vsel %vm3429, %v4678, %v4691
      %v4696 = vsel %vm3137, %v4500, 0
      %v4699 = vsel %vm3137, %v4502, 0
      %4701 = vmatprep.subr.bf16.mxu0 0
      %4702 = vmatpush1.bf16.xpose.msra.mxu0 0
      %4703 = vmatprep.subr.bf16.mxu0 0
      %4704 = vmatpush1.bf16.xpose.msra.mxu0 0
      %4705 = vmatprep.subr.bf16.mxu0 0
      %4706 = vmatpush1.bf16.xpose.msra.mxu0 0
      %4707 = vmatprep.subr.bf16.mxu0 0
      %4708 = vmatpush1.bf16.xpose.msra.mxu0 0
      %4709 = vmatprep.subr.bf16.mxu0 0
      %4710 = vmatpush1.bf16.xpose.msra.mxu0 0
      %4711 = vmatprep.subr.bf16.mxu0 0
      %4712 = vmatpush1.bf16.xpose.msra.mxu0 0
      %4713 = vmatprep.subr.bf16.mxu0 0
      %4714 = vmatpush1.bf16.xpose.msra.mxu0 0
      %4715 = vmatprep.subr.bf16.mxu0 0
      %4716 = vmatpush1.bf16.xpose.msra.mxu0 %v4699
      %4717 = vmatprep.subr.bf16.mxu0 0
      %4718 = vmatpush2.bf16.xpose.msra.mxu0 0
      %4719 = vmatprep.subr.bf16.mxu0 0
      %4720 = vmatpush2.bf16.xpose.msra.mxu0 0
      %4721 = vmatprep.subr.bf16.mxu0 0
      %4722 = vmatpush2.bf16.xpose.msra.mxu0 0
      %4723 = vmatprep.subr.bf16.mxu0 0
      %4724 = vmatpush2.bf16.xpose.msra.mxu0 0
      %4725 = vmatprep.subr.bf16.mxu0 0
      %4726 = vmatpush2.bf16.xpose.msra.mxu0 0
      %4727 = vmatprep.subr.bf16.mxu0 0
      %4728 = vmatpush2.bf16.xpose.msra.mxu0 0
      %4729 = vmatprep.subr.bf16.mxu0 0
      %4730 = vmatpush2.bf16.xpose.msra.mxu0 0
      %4731 = vmatprep.subr.bf16.mxu0 0
      %4732 = vmatpush2.bf16.xpose.msra.mxu0 0
      %4733 = vmatprep.mubr.bf16.mxu0 0
      %4734 = vmatmul.mubr.bf16.gmra.mxu0 %v4696
      %v4735 = vpop.f32.mrf.mxu0
      %v4736 = vadd.f32 %v4685, %v4735
      %v4737 = vpop.f32.mrf.mxu0
      %v4738 = vpop.f32.mrf.mxu0
      %v4739 = vadd.f32 %v4692, %v4738
      %v4740 = vpop.f32.mrf.mxu0
      %4741 = vdwg.mxu0
      %4774 = vrot.lane.b32.xlu0 %v3487, 112
      %v4775 = vpop.permute.xlu0 %4774
      %4776 = vrot.lane.b32.xlu0 %v3488, 112
      %v4777 = vpop.permute.xlu0 %4776
      %4778 = vrot.lane.b32.xlu0 %v3489, 112
      %v4779 = vpop.permute.xlu0 %4778
      %4780 = vrot.lane.b32.xlu0 %v3490, 112
      %v4781 = vpop.permute.xlu0 %4780
      %4782 = vrot.lane.b32.xlu0 %v3491, 112
      %v4783 = vpop.permute.xlu0 %4782
      %4784 = vrot.lane.b32.xlu0 %v3492, 112
      %v4785 = vpop.permute.xlu0 %4784
      %4786 = vrot.lane.b32.xlu0 %v3493, 112
      %v4787 = vpop.permute.xlu0 %4786
      %4788 = vrot.lane.b32.xlu0 %v3494, 112
      %v4789 = vpop.permute.xlu0 %4788
      %4790 = vrot.lane.b32.xlu0 %v3495, 112
      %v4791 = vpop.permute.xlu0 %4790
      %4792 = vrot.lane.b32.xlu0 %v3496, 112
      %v4793 = vpop.permute.xlu0 %4792
      %4794 = vrot.lane.b32.xlu0 %v3497, 112
      %v4795 = vpop.permute.xlu0 %4794
      %4796 = vrot.lane.b32.xlu0 %v3498, 112
      %v4797 = vpop.permute.xlu0 %4796
      %4798 = vrot.lane.b32.xlu0 %v3499, 112
      %v4799 = vpop.permute.xlu0 %4798
      %4800 = vrot.lane.b32.xlu0 %v3500, 112
      %v4801 = vpop.permute.xlu0 %4800
      %4802 = vrot.lane.b32.xlu0 %v3501, 112
      %v4803 = vpop.permute.xlu0 %4802
      %4804 = vrot.lane.b32.xlu0 %v3502, 112
      %v4805 = vpop.permute.xlu0 %4804
      %4806 = vrot.lane.b32.xlu0 %v3503, 112
      %v4807 = vpop.permute.xlu0 %4806
      %4808 = vrot.lane.b32.xlu0 %v3504, 112
      %v4809 = vpop.permute.xlu0 %4808
      %4810 = vrot.lane.b32.xlu0 %v3505, 112
      %v4811 = vpop.permute.xlu0 %4810
      %4812 = vrot.lane.b32.xlu0 %v3506, 112
      %v4813 = vpop.permute.xlu0 %4812
      %4814 = vrot.lane.b32.xlu0 %v3507, 112
      %v4815 = vpop.permute.xlu0 %4814
      %4816 = vrot.lane.b32.xlu0 %v3508, 112
      %v4817 = vpop.permute.xlu0 %4816
      %4818 = vrot.lane.b32.xlu0 %v3509, 112
      %v4819 = vpop.permute.xlu0 %4818
      %4820 = vrot.lane.b32.xlu0 %v3510, 112
      %v4821 = vpop.permute.xlu0 %4820
      %4822 = vrot.lane.b32.xlu0 %v3511, 112
      %v4823 = vpop.permute.xlu0 %4822
      %4824 = vrot.lane.b32.xlu0 %v3512, 112
      %v4825 = vpop.permute.xlu0 %4824
      %4826 = vrot.lane.b32.xlu0 %v3513, 112
      %v4827 = vpop.permute.xlu0 %4826
      %4828 = vrot.lane.b32.xlu0 %v3514, 112
      %v4829 = vpop.permute.xlu0 %4828
      %4830 = vrot.lane.b32.xlu0 %v3515, 112
      %v4831 = vpop.permute.xlu0 %4830
      %4832 = vrot.lane.b32.xlu0 %v3516, 112
      %v4833 = vpop.permute.xlu0 %4832
      %4834 = vrot.lane.b32.xlu0 %v3517, 112
      %v4835 = vpop.permute.xlu0 %4834
      %4836 = vrot.lane.b32.xlu0 %v3518, 112
      %v4837 = vpop.permute.xlu0 %4836
      %v4870 = vsel %vm3137, %v4775, 0.0
      %4871 = vadd.xlane.f32.xlu0 %v4870
      %v4872 = vpop.xlane.xlu0 %4871
      %v4873 = vsel %vm3137, %v4777, 0.0
      %4874 = vadd.xlane.f32.xlu0 %v4873
      %v4875 = vpop.xlane.xlu0 %4874
      %v4876 = vsel %vm3137, %v4779, 0.0
      %4877 = vadd.xlane.f32.xlu0 %v4876
      %v4878 = vpop.xlane.xlu0 %4877
      %v4879 = vsel %vm3137, %v4781, 0.0
      %4880 = vadd.xlane.f32.xlu0 %v4879
      %v4881 = vpop.xlane.xlu0 %4880
      %v4882 = vsel %vm3137, %v4783, 0.0
      %4883 = vadd.xlane.f32.xlu0 %v4882
      %v4884 = vpop.xlane.xlu0 %4883
      %v4885 = vsel %vm3137, %v4785, 0.0
      %4886 = vadd.xlane.f32.xlu0 %v4885
      %v4887 = vpop.xlane.xlu0 %4886
      %v4888 = vsel %vm3137, %v4787, 0.0
      %4889 = vadd.xlane.f32.xlu0 %v4888
      %v4890 = vpop.xlane.xlu0 %4889
      %v4891 = vsel %vm3137, %v4789, 0.0
      %4892 = vadd.xlane.f32.xlu0 %v4891
      %v4893 = vpop.xlane.xlu0 %4892
      %v4894 = vsel %vm3137, %v4791, 0.0
      %4895 = vadd.xlane.f32.xlu0 %v4894
      %v4896 = vpop.xlane.xlu0 %4895
      %v4897 = vsel %vm3137, %v4793, 0.0
      %4898 = vadd.xlane.f32.xlu0 %v4897
      %v4899 = vpop.xlane.xlu0 %4898
      %v4900 = vsel %vm3137, %v4795, 0.0
      %4901 = vadd.xlane.f32.xlu0 %v4900
      %v4902 = vpop.xlane.xlu0 %4901
      %v4903 = vsel %vm3137, %v4797, 0.0
      %4904 = vadd.xlane.f32.xlu0 %v4903
      %v4905 = vpop.xlane.xlu0 %4904
      %v4906 = vsel %vm3137, %v4799, 0.0
      %4907 = vadd.xlane.f32.xlu0 %v4906
      %v4908 = vpop.xlane.xlu0 %4907
      %v4909 = vsel %vm3137, %v4801, 0.0
      %4910 = vadd.xlane.f32.xlu0 %v4909
      %v4911 = vpop.xlane.xlu0 %4910
      %v4912 = vsel %vm3137, %v4803, 0.0
      %4913 = vadd.xlane.f32.xlu0 %v4912
      %v4914 = vpop.xlane.xlu0 %4913
      %v4915 = vsel %vm3137, %v4805, 0.0
      %4916 = vadd.xlane.f32.xlu0 %v4915
      %v4917 = vpop.xlane.xlu0 %4916
      %v4918 = vsel %vm3137, %v4807, 0.0
      %4919 = vadd.xlane.f32.xlu0 %v4918
      %v4920 = vpop.xlane.xlu0 %4919
      %v4921 = vsel %vm3137, %v4809, 0.0
      %4922 = vadd.xlane.f32.xlu0 %v4921
      %v4923 = vpop.xlane.xlu0 %4922
      %v4924 = vsel %vm3137, %v4811, 0.0
      %4925 = vadd.xlane.f32.xlu0 %v4924
      %v4926 = vpop.xlane.xlu0 %4925
      %v4927 = vsel %vm3137, %v4813, 0.0
      %4928 = vadd.xlane.f32.xlu0 %v4927
      %v4929 = vpop.xlane.xlu0 %4928
      %v4930 = vsel %vm3137, %v4815, 0.0
      %4931 = vadd.xlane.f32.xlu0 %v4930
      %v4932 = vpop.xlane.xlu0 %4931
      %v4933 = vsel %vm3137, %v4817, 0.0
      %4934 = vadd.xlane.f32.xlu0 %v4933
      %v4935 = vpop.xlane.xlu0 %4934
      %v4936 = vsel %vm3137, %v4819, 0.0
      %4937 = vadd.xlane.f32.xlu0 %v4936
      %v4938 = vpop.xlane.xlu0 %4937
      %v4939 = vsel %vm3137, %v4821, 0.0
      %4940 = vadd.xlane.f32.xlu0 %v4939
      %v4941 = vpop.xlane.xlu0 %4940
      %v4942 = vsel %vm3137, %v4823, 0.0
      %4943 = vadd.xlane.f32.xlu0 %v4942
      %v4944 = vpop.xlane.xlu0 %4943
      %v4945 = vsel %vm3137, %v4825, 0.0
      %4946 = vadd.xlane.f32.xlu0 %v4945
      %v4947 = vpop.xlane.xlu0 %4946
      %v4948 = vsel %vm3137, %v4827, 0.0
      %4949 = vadd.xlane.f32.xlu0 %v4948
      %v4950 = vpop.xlane.xlu0 %4949
      %v4951 = vsel %vm3137, %v4829, 0.0
      %4952 = vadd.xlane.f32.xlu0 %v4951
      %v4953 = vpop.xlane.xlu0 %4952
      %v4954 = vsel %vm3137, %v4831, 0.0
      %4955 = vadd.xlane.f32.xlu0 %v4954
      %v4956 = vpop.xlane.xlu0 %4955
      %v4957 = vsel %vm3137, %v4833, 0.0
      %4958 = vadd.xlane.f32.xlu0 %v4957
      %v4959 = vpop.xlane.xlu0 %4958
      %v4960 = vsel %vm3137, %v4835, 0.0
      %4961 = vadd.xlane.f32.xlu0 %v4960
      %v4962 = vpop.xlane.xlu0 %4961
      %v4963 = vsel %vm3137, %v4837, 0.0
      %4964 = vadd.xlane.f32.xlu0 %v4963
      %v4965 = vpop.xlane.xlu0 %4964
      %v4998 = vlaneseq
      %v4999 = vshrl.u32 %v4998, 7
      %v5000 = vsub.s32 %v394, %v4999
      %v5001 = vrot.slane %v4872, %v5000
      %v5002 = vlaneseq
      %v5003 = vshrl.u32 %v5002, 7
      %v5004 = vsub.s32 %v3275, %v5003
      %v5005 = vrot.slane %v4875, %v5004
      %v5006 = vsel %vm3280, %v5005, %v5001
      %v5007 = vlaneseq
      %v5008 = vshrl.u32 %v5007, 7
      %v5009 = vsub.s32 %v394, %v5008
      %v5010 = vrot.slane %v4878, %v5009
      %v5011 = vlaneseq
      %v5012 = vshrl.u32 %v5011, 7
      %v5013 = vsub.s32 %v3275, %v5012
      %v5014 = vrot.slane %v4881, %v5013
      %v5015 = vsel %vm3280, %v5014, %v5010
      %v5016 = vlaneseq
      %v5017 = vshrl.u32 %v5016, 7
      %v5018 = vsub.s32 %v394, %v5017
      %v5019 = vrot.slane %v4884, %v5018
      %v5020 = vlaneseq
      %v5021 = vshrl.u32 %v5020, 7
      %v5022 = vsub.s32 %v3275, %v5021
      %v5023 = vrot.slane %v4887, %v5022
      %v5024 = vsel %vm3280, %v5023, %v5019
      %v5025 = vlaneseq
      %v5026 = vshrl.u32 %v5025, 7
      %v5027 = vsub.s32 %v394, %v5026
      %v5028 = vrot.slane %v4890, %v5027
      %v5029 = vlaneseq
      %v5030 = vshrl.u32 %v5029, 7
      %v5031 = vsub.s32 %v3275, %v5030
      %v5032 = vrot.slane %v4893, %v5031
      %v5033 = vsel %vm3280, %v5032, %v5028
      %v5034 = vlaneseq
      %v5035 = vshrl.u32 %v5034, 7
      %v5036 = vsub.s32 %v394, %v5035
      %v5037 = vrot.slane %v4896, %v5036
      %v5038 = vlaneseq
      %v5039 = vshrl.u32 %v5038, 7
      %v5040 = vsub.s32 %v3275, %v5039
      %v5041 = vrot.slane %v4899, %v5040
      %v5042 = vsel %vm3280, %v5041, %v5037
      %v5043 = vlaneseq
      %v5044 = vshrl.u32 %v5043, 7
      %v5045 = vsub.s32 %v394, %v5044
      %v5046 = vrot.slane %v4902, %v5045
      %v5047 = vlaneseq
      %v5048 = vshrl.u32 %v5047, 7
      %v5049 = vsub.s32 %v3275, %v5048
      %v5050 = vrot.slane %v4905, %v5049
      %v5051 = vsel %vm3280, %v5050, %v5046
      %v5052 = vlaneseq
      %v5053 = vshrl.u32 %v5052, 7
      %v5054 = vsub.s32 %v394, %v5053
      %v5055 = vrot.slane %v4908, %v5054
      %v5056 = vlaneseq
      %v5057 = vshrl.u32 %v5056, 7
      %v5058 = vsub.s32 %v3275, %v5057
      %v5059 = vrot.slane %v4911, %v5058
      %v5060 = vsel %vm3280, %v5059, %v5055
      %v5061 = vlaneseq
      %v5062 = vshrl.u32 %v5061, 7
      %v5063 = vsub.s32 %v394, %v5062
      %v5064 = vrot.slane %v4914, %v5063
      %v5065 = vlaneseq
      %v5066 = vshrl.u32 %v5065, 7
      %v5067 = vsub.s32 %v3275, %v5066
      %v5068 = vrot.slane %v4917, %v5067
      %v5069 = vsel %vm3280, %v5068, %v5064
      %v5070 = vlaneseq
      %v5071 = vshrl.u32 %v5070, 7
      %v5072 = vsub.s32 %v394, %v5071
      %v5073 = vrot.slane %v4920, %v5072
      %v5074 = vlaneseq
      %v5075 = vshrl.u32 %v5074, 7
      %v5076 = vsub.s32 %v3275, %v5075
      %v5077 = vrot.slane %v4923, %v5076
      %v5078 = vsel %vm3280, %v5077, %v5073
      %v5079 = vlaneseq
      %v5080 = vshrl.u32 %v5079, 7
      %v5081 = vsub.s32 %v394, %v5080
      %v5082 = vrot.slane %v4926, %v5081
      %v5083 = vlaneseq
      %v5084 = vshrl.u32 %v5083, 7
      %v5085 = vsub.s32 %v3275, %v5084
      %v5086 = vrot.slane %v4929, %v5085
      %v5087 = vsel %vm3280, %v5086, %v5082
      %v5088 = vlaneseq
      %v5089 = vshrl.u32 %v5088, 7
      %v5090 = vsub.s32 %v394, %v5089
      %v5091 = vrot.slane %v4932, %v5090
      %v5092 = vlaneseq
      %v5093 = vshrl.u32 %v5092, 7
      %v5094 = vsub.s32 %v3275, %v5093
      %v5095 = vrot.slane %v4935, %v5094
      %v5096 = vsel %vm3280, %v5095, %v5091
      %v5097 = vlaneseq
      %v5098 = vshrl.u32 %v5097, 7
      %v5099 = vsub.s32 %v394, %v5098
      %v5100 = vrot.slane %v4938, %v5099
      %v5101 = vlaneseq
      %v5102 = vshrl.u32 %v5101, 7
      %v5103 = vsub.s32 %v3275, %v5102
      %v5104 = vrot.slane %v4941, %v5103
      %v5105 = vsel %vm3280, %v5104, %v5100
      %v5106 = vlaneseq
      %v5107 = vshrl.u32 %v5106, 7
      %v5108 = vsub.s32 %v394, %v5107
      %v5109 = vrot.slane %v4944, %v5108
      %v5110 = vlaneseq
      %v5111 = vshrl.u32 %v5110, 7
      %v5112 = vsub.s32 %v3275, %v5111
      %v5113 = vrot.slane %v4947, %v5112
      %v5114 = vsel %vm3280, %v5113, %v5109
      %v5115 = vlaneseq
      %v5116 = vshrl.u32 %v5115, 7
      %v5117 = vsub.s32 %v394, %v5116
      %v5118 = vrot.slane %v4950, %v5117
      %v5119 = vlaneseq
      %v5120 = vshrl.u32 %v5119, 7
      %v5121 = vsub.s32 %v3275, %v5120
      %v5122 = vrot.slane %v4953, %v5121
      %v5123 = vsel %vm3280, %v5122, %v5118
      %v5124 = vlaneseq
      %v5125 = vshrl.u32 %v5124, 7
      %v5126 = vsub.s32 %v394, %v5125
      %v5127 = vrot.slane %v4956, %v5126
      %v5128 = vlaneseq
      %v5129 = vshrl.u32 %v5128, 7
      %v5130 = vsub.s32 %v3275, %v5129
      %v5131 = vrot.slane %v4959, %v5130
      %v5132 = vsel %vm3280, %v5131, %v5127
      %v5133 = vlaneseq
      %v5134 = vshrl.u32 %v5133, 7
      %v5135 = vsub.s32 %v394, %v5134
      %v5136 = vrot.slane %v4962, %v5135
      %v5137 = vlaneseq
      %v5138 = vshrl.u32 %v5137, 7
      %v5139 = vsub.s32 %v3275, %v5138
      %v5140 = vrot.slane %v4965, %v5139
      %v5141 = vsel %vm3280, %v5140, %v5136
      %v5142 = vsel %vm3417, %v5015, %v5006
      %v5143 = vsel %vm3419, %v5024, %v5142
      %v5144 = vsel %vm3421, %v5033, %v5143
      %v5145 = vsel %vm3423, %v5042, %v5144
      %v5146 = vsel %vm3425, %v5051, %v5145
      %v5147 = vsel %vm3427, %v5060, %v5146
      %v5148 = vsel %vm3429, %v5069, %v5147
      %v5149 = vsel %vm3417, %v5087, %v5078
      %v5150 = vsel %vm3419, %v5096, %v5149
      %v5151 = vsel %vm3421, %v5105, %v5150
      %v5152 = vsel %vm3423, %v5114, %v5151
      %v5153 = vsel %vm3425, %v5123, %v5152
      %v5154 = vsel %vm3427, %v5132, %v5153
      %v5155 = vsel %vm3429, %v5141, %v5154
      %v5158 = vadd.f32 %v4736, %v5148
      %v5159 = vadd.f32 %v4739, %v5155
      %v5160 = vadd.f32 %v5158, %v3813
      %v5161 = vadd.f32 %v5159, %v3813
      %v5162 = vsel %vm3137, %v5160, -inf
      %5163 = vmax.xlane.f32.xlu0 %v5162
      %v5164 = vpop.xlane.xlu0 %5163
      %v5165 = vsel %vm3137, %v5161, -inf
      %5166 = vmax.xlane.f32.xlu0 %v5165
      %v5167 = vpop.xlane.xlu0 %5166
      %v5168 = vsub.f32 %v5160, %v5164
      %v5169 = vsub.f32 %v5161, %v5167
      %v5170 = vmul.f32 %v5168, 1.442695
      %v5171 = vpow.pop %v5170
      %v5172 = vmul.f32 %v5169, 1.442695
      %v5173 = vpow.pop %v5172
      %v5174 = vsel %vm3137, %v5171, 0.0
      %5175 = vadd.xlane.f32.xlu0 %v5174
      %v5176 = vpop.xlane.xlu0 %5175
      %v5177 = vsel %vm3137, %v5173, 0.0
      %5178 = vadd.xlane.f32.xlu0 %v5177
      %v5179 = vpop.xlane.xlu0 %5178
      %v5180 = vrcp.pop %v5176
      %v5181 = vrcp.pop %v5179
      %v5182 = vmul.f32 %v5171, %v5180
      %v5183 = vmul.f32 %v5173, %v5181
      %v5184 = vpack.c.bf16 %v5183, %v5182
      %v5185 = vlaneseq
      %v5186 = vshrl.u32 %v5185, 7
      %v5187 = vsub.s32 0, %v5186
      %v5188 = vrot.slane %v5182, %v5187
      %5190 = vbcast.lane.b32.xlu0 %v5188, 256
      %v5191 = vpop.permute.xlu0 %5190
      %s5193 = sor.u32 256, 8
      %5194 = vbcast.lane.b32.xlu0 %v5188, %s5193
      %v5195 = vpop.permute.xlu0 %5194
      %v5196 = vlaneseq
      %v5197 = vshrl.u32 %v5196, 7
      %v5198 = vsub.s32 1, %v5197
      %v5199 = vrot.slane %v5182, %v5198
      %5201 = vbcast.lane.b32.xlu0 %v5199, 256
      %v5202 = vpop.permute.xlu0 %5201
      %s5204 = sor.u32 256, 8
      %5205 = vbcast.lane.b32.xlu0 %v5199, %s5204
      %v5206 = vpop.permute.xlu0 %5205
      %v5207 = vlaneseq
      %v5208 = vshrl.u32 %v5207, 7
      %v5209 = vsub.s32 2, %v5208
      %v5210 = vrot.slane %v5182, %v5209
      %5212 = vbcast.lane.b32.xlu0 %v5210, 256
      %v5213 = vpop.permute.xlu0 %5212
      %s5215 = sor.u32 256, 8
      %5216 = vbcast.lane.b32.xlu0 %v5210, %s5215
      %v5217 = vpop.permute.xlu0 %5216
      %v5218 = vlaneseq
      %v5219 = vshrl.u32 %v5218, 7
      %v5220 = vsub.s32 3, %v5219
      %v5221 = vrot.slane %v5182, %v5220
      %5223 = vbcast.lane.b32.xlu0 %v5221, 256
      %v5224 = vpop.permute.xlu0 %5223
      %s5226 = sor.u32 256, 8
      %5227 = vbcast.lane.b32.xlu0 %v5221, %s5226
      %v5228 = vpop.permute.xlu0 %5227
      %v5229 = vlaneseq
      %v5230 = vshrl.u32 %v5229, 7
      %v5231 = vsub.s32 4, %v5230
      %v5232 = vrot.slane %v5182, %v5231
      %5234 = vbcast.lane.b32.xlu0 %v5232, 256
      %v5235 = vpop.permute.xlu0 %5234
      %s5237 = sor.u32 256, 8
      %5238 = vbcast.lane.b32.xlu0 %v5232, %s5237
      %v5239 = vpop.permute.xlu0 %5238
      %v5240 = vlaneseq
      %v5241 = vshrl.u32 %v5240, 7
      %v5242 = vsub.s32 5, %v5241
      %v5243 = vrot.slane %v5182, %v5242
      %5245 = vbcast.lane.b32.xlu0 %v5243, 256
      %v5246 = vpop.permute.xlu0 %5245
      %s5248 = sor.u32 256, 8
      %5249 = vbcast.lane.b32.xlu0 %v5243, %s5248
      %v5250 = vpop.permute.xlu0 %5249
      %v5251 = vlaneseq
      %v5252 = vshrl.u32 %v5251, 7
      %v5253 = vsub.s32 6, %v5252
      %v5254 = vrot.slane %v5182, %v5253
      %5256 = vbcast.lane.b32.xlu0 %v5254, 256
      %v5257 = vpop.permute.xlu0 %5256
      %s5259 = sor.u32 256, 8
      %5260 = vbcast.lane.b32.xlu0 %v5254, %s5259
      %v5261 = vpop.permute.xlu0 %5260
      %v5262 = vlaneseq
      %v5263 = vshrl.u32 %v5262, 7
      %v5264 = vsub.s32 7, %v5263
      %v5265 = vrot.slane %v5182, %v5264
      %5267 = vbcast.lane.b32.xlu0 %v5265, 256
      %v5268 = vpop.permute.xlu0 %5267
      %s5270 = sor.u32 256, 8
      %5271 = vbcast.lane.b32.xlu0 %v5265, %s5270
      %v5272 = vpop.permute.xlu0 %5271
      %v5273 = vlaneseq
      %v5274 = vshrl.u32 %v5273, 7
      %v5275 = vsub.s32 0, %v5274
      %v5276 = vrot.slane %v5183, %v5275
      %5278 = vbcast.lane.b32.xlu0 %v5276, 256
      %v5279 = vpop.permute.xlu0 %5278
      %s5281 = sor.u32 256, 8
      %5282 = vbcast.lane.b32.xlu0 %v5276, %s5281
      %v5283 = vpop.permute.xlu0 %5282
      %v5284 = vlaneseq
      %v5285 = vshrl.u32 %v5284, 7
      %v5286 = vsub.s32 1, %v5285
      %v5287 = vrot.slane %v5183, %v5286
      %5289 = vbcast.lane.b32.xlu0 %v5287, 256
      %v5290 = vpop.permute.xlu0 %5289
      %s5292 = sor.u32 256, 8
      %5293 = vbcast.lane.b32.xlu0 %v5287, %s5292
      %v5294 = vpop.permute.xlu0 %5293
      %v5295 = vlaneseq
      %v5296 = vshrl.u32 %v5295, 7
      %v5297 = vsub.s32 2, %v5296
      %v5298 = vrot.slane %v5183, %v5297
      %5300 = vbcast.lane.b32.xlu0 %v5298, 256
      %v5301 = vpop.permute.xlu0 %5300
      %s5303 = sor.u32 256, 8
      %5304 = vbcast.lane.b32.xlu0 %v5298, %s5303
      %v5305 = vpop.permute.xlu0 %5304
      %v5306 = vlaneseq
      %v5307 = vshrl.u32 %v5306, 7
      %v5308 = vsub.s32 3, %v5307
      %v5309 = vrot.slane %v5183, %v5308
      %5311 = vbcast.lane.b32.xlu0 %v5309, 256
      %v5312 = vpop.permute.xlu0 %5311
      %s5314 = sor.u32 256, 8
      %5315 = vbcast.lane.b32.xlu0 %v5309, %s5314
      %v5316 = vpop.permute.xlu0 %5315
      %v5317 = vlaneseq
      %v5318 = vshrl.u32 %v5317, 7
      %v5319 = vsub.s32 4, %v5318
      %v5320 = vrot.slane %v5183, %v5319
      %5322 = vbcast.lane.b32.xlu0 %v5320, 256
      %v5323 = vpop.permute.xlu0 %5322
      %s5325 = sor.u32 256, 8
      %5326 = vbcast.lane.b32.xlu0 %v5320, %s5325
      %v5327 = vpop.permute.xlu0 %5326
      %v5328 = vlaneseq
      %v5329 = vshrl.u32 %v5328, 7
      %v5330 = vsub.s32 5, %v5329
      %v5331 = vrot.slane %v5183, %v5330
      %5333 = vbcast.lane.b32.xlu0 %v5331, 256
      %v5334 = vpop.permute.xlu0 %5333
      %s5336 = sor.u32 256, 8
      %5337 = vbcast.lane.b32.xlu0 %v5331, %s5336
      %v5338 = vpop.permute.xlu0 %5337
      %v5339 = vlaneseq
      %v5340 = vshrl.u32 %v5339, 7
      %v5341 = vsub.s32 6, %v5340
      %v5342 = vrot.slane %v5183, %v5341
      %5344 = vbcast.lane.b32.xlu0 %v5342, 256
      %v5345 = vpop.permute.xlu0 %5344
      %s5347 = sor.u32 256, 8
      %5348 = vbcast.lane.b32.xlu0 %v5342, %s5347
      %v5349 = vpop.permute.xlu0 %5348
      %v5350 = vlaneseq
      %v5351 = vshrl.u32 %v5350, 7
      %v5352 = vsub.s32 7, %v5351
      %v5353 = vrot.slane %v5183, %v5352
      %5355 = vbcast.lane.b32.xlu0 %v5353, 256
      %v5356 = vpop.permute.xlu0 %5355
      %s5358 = sor.u32 256, 8
      %5359 = vbcast.lane.b32.xlu0 %v5353, %s5358
      %v5360 = vpop.permute.xlu0 %5359
      %v5361 = vmul.f32 %v5191, %v2785
      %v5362 = vmul.f32 %v5195, %v2788
      %v5363 = vmul.f32 %v5202, %v2793
      %v5364 = vmul.f32 %v5206, %v2796
      %v5365 = vmul.f32 %v5213, %v2801
      %v5366 = vmul.f32 %v5217, %v2804
      %v5367 = vmul.f32 %v5224, %v2809
      %v5368 = vmul.f32 %v5228, %v2812
      %v5369 = vmul.f32 %v5235, %v2817
      %v5370 = vmul.f32 %v5239, %v2820
      %v5371 = vmul.f32 %v5246, %v2825
      %v5372 = vmul.f32 %v5250, %v2828
      %v5373 = vmul.f32 %v5257, %v2833
      %v5374 = vmul.f32 %v5261, %v2836
      %v5375 = vmul.f32 %v5268, %v2841
      %v5376 = vmul.f32 %v5272, %v2844
      %v5377 = vmul.f32 %v5279, %v2849
      %v5378 = vmul.f32 %v5283, %v2852
      %v5379 = vmul.f32 %v5290, %v2857
      %v5380 = vmul.f32 %v5294, %v2860
      %v5381 = vmul.f32 %v5301, %v2865
      %v5382 = vmul.f32 %v5305, %v2868
      %v5383 = vmul.f32 %v5312, %v2873
      %v5384 = vmul.f32 %v5316, %v2876
      %v5385 = vmul.f32 %v5323, %v2881
      %v5386 = vmul.f32 %v5327, %v2884
      %v5387 = vmul.f32 %v5334, %v2889
      %v5388 = vmul.f32 %v5338, %v2892
      %v5389 = vmul.f32 %v5345, %v2897
      %v5390 = vmul.f32 %v5349, %v2900
      %v5391 = vmul.f32 %v5356, %v2905
      %v5392 = vmul.f32 %v5360, %v2908
      %vm5393 = vcmask 261248
      %v5394 = vsel %vm5393, %v5361, 0.0
      %v5395 = vsel %vm5393, %v5362, 0.0
      %v5396 = vadd.f32 %v5394, %v5395
      %v5397 = vrot.slane %v5396, 4
      %v5398 = vadd.f32 %v5396, %v5397
      %v5399 = vrot.slane %v5398, 2
      %v5400 = vadd.f32 %v5398, %v5399
      %v5401 = vrot.slane %v5400, 1
      %v5402 = vadd.f32 %v5400, %v5401
      %v5403 = vsel %vm5393, %v5363, 0.0
      %v5404 = vsel %vm5393, %v5364, 0.0
      %v5405 = vadd.f32 %v5403, %v5404
      %v5406 = vrot.slane %v5405, 4
      %v5407 = vadd.f32 %v5405, %v5406
      %v5408 = vrot.slane %v5407, 2
      %v5409 = vadd.f32 %v5407, %v5408
      %v5410 = vrot.slane %v5409, 1
      %v5411 = vadd.f32 %v5409, %v5410
      %v5412 = vsel %vm5393, %v5365, 0.0
      %v5413 = vsel %vm5393, %v5366, 0.0
      %v5414 = vadd.f32 %v5412, %v5413
      %v5415 = vrot.slane %v5414, 4
      %v5416 = vadd.f32 %v5414, %v5415
      %v5417 = vrot.slane %v5416, 2
      %v5418 = vadd.f32 %v5416, %v5417
      %v5419 = vrot.slane %v5418, 1
      %v5420 = vadd.f32 %v5418, %v5419
      %v5421 = vsel %vm5393, %v5367, 0.0
      %v5422 = vsel %vm5393, %v5368, 0.0
      %v5423 = vadd.f32 %v5421, %v5422
      %v5424 = vrot.slane %v5423, 4
      %v5425 = vadd.f32 %v5423, %v5424
      %v5426 = vrot.slane %v5425, 2
      %v5427 = vadd.f32 %v5425, %v5426
      %v5428 = vrot.slane %v5427, 1
      %v5429 = vadd.f32 %v5427, %v5428
      %v5430 = vsel %vm5393, %v5369, 0.0
      %v5431 = vsel %vm5393, %v5370, 0.0
      %v5432 = vadd.f32 %v5430, %v5431
      %v5433 = vrot.slane %v5432, 4
      %v5434 = vadd.f32 %v5432, %v5433
      %v5435 = vrot.slane %v5434, 2
      %v5436 = vadd.f32 %v5434, %v5435
      %v5437 = vrot.slane %v5436, 1
      %v5438 = vadd.f32 %v5436, %v5437
      %v5439 = vsel %vm5393, %v5371, 0.0
      %v5440 = vsel %vm5393, %v5372, 0.0
      %v5441 = vadd.f32 %v5439, %v5440
      %v5442 = vrot.slane %v5441, 4
      %v5443 = vadd.f32 %v5441, %v5442
      %v5444 = vrot.slane %v5443, 2
      %v5445 = vadd.f32 %v5443, %v5444
      %v5446 = vrot.slane %v5445, 1
      %v5447 = vadd.f32 %v5445, %v5446
      %v5448 = vsel %vm5393, %v5373, 0.0
      %v5449 = vsel %vm5393, %v5374, 0.0
      %v5450 = vadd.f32 %v5448, %v5449
      %v5451 = vrot.slane %v5450, 4
      %v5452 = vadd.f32 %v5450, %v5451
      %v5453 = vrot.slane %v5452, 2
      %v5454 = vadd.f32 %v5452, %v5453
      %v5455 = vrot.slane %v5454, 1
      %v5456 = vadd.f32 %v5454, %v5455
      %v5457 = vsel %vm5393, %v5375, 0.0
      %v5458 = vsel %vm5393, %v5376, 0.0
      %v5459 = vadd.f32 %v5457, %v5458
      %v5460 = vrot.slane %v5459, 4
      %v5461 = vadd.f32 %v5459, %v5460
      %v5462 = vrot.slane %v5461, 2
      %v5463 = vadd.f32 %v5461, %v5462
      %v5464 = vrot.slane %v5463, 1
      %v5465 = vadd.f32 %v5463, %v5464
      %v5466 = vsel %vm5393, %v5377, 0.0
      %v5467 = vsel %vm5393, %v5378, 0.0
      %v5468 = vadd.f32 %v5466, %v5467
      %v5469 = vrot.slane %v5468, 4
      %v5470 = vadd.f32 %v5468, %v5469
      %v5471 = vrot.slane %v5470, 2
      %v5472 = vadd.f32 %v5470, %v5471
      %v5473 = vrot.slane %v5472, 1
      %v5474 = vadd.f32 %v5472, %v5473
      %v5475 = vsel %vm5393, %v5379, 0.0
      %v5476 = vsel %vm5393, %v5380, 0.0
      %v5477 = vadd.f32 %v5475, %v5476
      %v5478 = vrot.slane %v5477, 4
      %v5479 = vadd.f32 %v5477, %v5478
      %v5480 = vrot.slane %v5479, 2
      %v5481 = vadd.f32 %v5479, %v5480
      %v5482 = vrot.slane %v5481, 1
      %v5483 = vadd.f32 %v5481, %v5482
      %v5484 = vsel %vm5393, %v5381, 0.0
      %v5485 = vsel %vm5393, %v5382, 0.0
      %v5486 = vadd.f32 %v5484, %v5485
      %v5487 = vrot.slane %v5486, 4
      %v5488 = vadd.f32 %v5486, %v5487
      %v5489 = vrot.slane %v5488, 2
      %v5490 = vadd.f32 %v5488, %v5489
      %v5491 = vrot.slane %v5490, 1
      %v5492 = vadd.f32 %v5490, %v5491
      %v5493 = vsel %vm5393, %v5383, 0.0
      %v5494 = vsel %vm5393, %v5384, 0.0
      %v5495 = vadd.f32 %v5493, %v5494
      %v5496 = vrot.slane %v5495, 4
      %v5497 = vadd.f32 %v5495, %v5496
      %v5498 = vrot.slane %v5497, 2
      %v5499 = vadd.f32 %v5497, %v5498
      %v5500 = vrot.slane %v5499, 1
      %v5501 = vadd.f32 %v5499, %v5500
      %v5502 = vsel %vm5393, %v5385, 0.0
      %v5503 = vsel %vm5393, %v5386, 0.0
      %v5504 = vadd.f32 %v5502, %v5503
      %v5505 = vrot.slane %v5504, 4
      %v5506 = vadd.f32 %v5504, %v5505
      %v5507 = vrot.slane %v5506, 2
      %v5508 = vadd.f32 %v5506, %v5507
      %v5509 = vrot.slane %v5508, 1
      %v5510 = vadd.f32 %v5508, %v5509
      %v5511 = vsel %vm5393, %v5387, 0.0
      %v5512 = vsel %vm5393, %v5388, 0.0
      %v5513 = vadd.f32 %v5511, %v5512
      %v5514 = vrot.slane %v5513, 4
      %v5515 = vadd.f32 %v5513, %v5514
      %v5516 = vrot.slane %v5515, 2
      %v5517 = vadd.f32 %v5515, %v5516
      %v5518 = vrot.slane %v5517, 1
      %v5519 = vadd.f32 %v5517, %v5518
      %v5520 = vsel %vm5393, %v5389, 0.0
      %v5521 = vsel %vm5393, %v5390, 0.0
      %v5522 = vadd.f32 %v5520, %v5521
      %v5523 = vrot.slane %v5522, 4
      %v5524 = vadd.f32 %v5522, %v5523
      %v5525 = vrot.slane %v5524, 2
      %v5526 = vadd.f32 %v5524, %v5525
      %v5527 = vrot.slane %v5526, 1
      %v5528 = vadd.f32 %v5526, %v5527
      %v5529 = vsel %vm5393, %v5391, 0.0
      %v5530 = vsel %vm5393, %v5392, 0.0
      %v5531 = vadd.f32 %v5529, %v5530
      %v5532 = vrot.slane %v5531, 4
      %v5533 = vadd.f32 %v5531, %v5532
      %v5534 = vrot.slane %v5533, 2
      %v5535 = vadd.f32 %v5533, %v5534
      %v5536 = vrot.slane %v5535, 1
      %v5537 = vadd.f32 %v5535, %v5536
      %5538 = vrot.lane.b32.xlu0 %v4196, 112
      %v5539 = vpop.permute.xlu0 %5538
      %v5557 = vsel %vm3417, %v5411, %v5402
      %v5558 = vsel %vm3419, %v5420, %v5557
      %v5559 = vsel %vm3421, %v5429, %v5558
      %v5560 = vsel %vm3423, %v5438, %v5559
      %v5561 = vsel %vm3425, %v5447, %v5560
      %v5562 = vsel %vm3427, %v5456, %v5561
      %v5563 = vsel %vm3429, %v5465, %v5562
      %v5564 = vsel %vm3417, %v5483, %v5474
      %v5565 = vsel %vm3419, %v5492, %v5564
      %v5566 = vsel %vm3421, %v5501, %v5565
      %v5567 = vsel %vm3423, %v5510, %v5566
      %v5568 = vsel %vm3425, %v5519, %v5567
      %v5569 = vsel %vm3427, %v5528, %v5568
      %v5570 = vsel %vm3429, %v5537, %v5569
      %5571 = vrot.lane.b32.xlu0 %v5563, 112
      %v5572 = vpop.permute.xlu0 %5571
      %5573 = vrot.lane.b32.xlu0 %v5570, 112
      %v5574 = vpop.permute.xlu0 %5573
      %v5578 = vsel %vm3137, %v5184, 0
      %5580 = vmatprep.subr.bf16.mxu0 0
      %5581 = vmatpush1.bf16.msra.mxu0 0
      %5582 = vmatprep.subr.bf16.mxu0 0
      %5583 = vmatpush1.bf16.msra.mxu0 0
      %5584 = vmatprep.subr.bf16.mxu0 0
      %5585 = vmatpush1.bf16.msra.mxu0 0
      %5586 = vmatprep.subr.bf16.mxu0 0
      %5587 = vmatpush1.bf16.msra.mxu0 0
      %5588 = vmatprep.subr.bf16.mxu0 0
      %5589 = vmatpush1.bf16.msra.mxu0 0
      %5590 = vmatprep.subr.bf16.mxu0 0
      %5591 = vmatpush1.bf16.msra.mxu0 0
      %5592 = vmatprep.subr.bf16.mxu0 0
      %5593 = vmatpush1.bf16.msra.mxu0 0
      %5594 = vmatprep.subr.bf16.mxu0 0
      %5595 = vmatpush1.bf16.msra.mxu0 %v5539
      %5596 = vmatprep.subr.bf16.mxu0 0
      %5597 = vmatpush2.bf16.msra.mxu0 0
      %5598 = vmatprep.subr.bf16.mxu0 0
      %5599 = vmatpush2.bf16.msra.mxu0 0
      %5600 = vmatprep.subr.bf16.mxu0 0
      %5601 = vmatpush2.bf16.msra.mxu0 0
      %5602 = vmatprep.subr.bf16.mxu0 0
      %5603 = vmatpush2.bf16.msra.mxu0 0
      %5604 = vmatprep.subr.bf16.mxu0 0
      %5605 = vmatpush2.bf16.msra.mxu0 0
      %5606 = vmatprep.subr.bf16.mxu0 0
      %5607 = vmatpush2.bf16.msra.mxu0 0
      %5608 = vmatprep.subr.bf16.mxu0 0
      %5609 = vmatpush2.bf16.msra.mxu0 0
      %5610 = vmatprep.subr.bf16.mxu0 0
      %5611 = vmatpush2.bf16.msra.mxu0 0
      %5612 = vmatprep.mubr.bf16.mxu0 0
      %5613 = vmatmul.mubr.bf16.gmra.mxu0 %v5578
      %v5614 = vpop.f32.mrf.mxu0
      %v5615 = vadd.f32 %v5572, %v5614
      %v5616 = vpop.f32.mrf.mxu0
      %v5617 = vpop.f32.mrf.mxu0
      %v5618 = vadd.f32 %v5574, %v5617
      %v5619 = vpop.f32.mrf.mxu0
      %5620 = vdwg.mxu0
      %5623 = vrot.lane.b32.xlu0 %v5615, 16
      %v5624 = vpop.permute.xlu0 %5623
      %5625 = vrot.lane.b32.xlu0 %v5618, 16
      %v5626 = vpop.permute.xlu0 %5625
      %v5629 = vsel %vm3137, %v4268, %v5624
      %v5630 = vsel %vm3137, %v4271, %v5626
      %v5631 = vpack.c.bf16 %v5630, %v5629
      %v5633 = vunpack.c.l.b16 %v5631
      %v5634 = vunpack.c.h.b16 %v5631
      %v5635 = vpack.c.b16 %v5633, %v5633
      %v5636 = vpack.c.b16 %v5634, %v5634
      %vm5639 = vcmask 257024
      %5640 = vst.msk [vmem:[%s379] sm:$0xf] %vm5639, %v5635
      %5641 = vst.msk [vmem:[%s379 + $0x4] sm:$0xf] %vm5639, %v5636
      %p5642 = scmp.lt.s32.totalorder %s19, 7
      %s5643 = scalar_select %p5642, %s19, 7
      %s5644 = smul.addr %s5643, 2
      %s5645 = smul.addr %s5644, 4
      %s5646 = scalar_lea.vmem %s8, %s5645
      // Predicated region
      $region53: #{_block_forward.6} parent=51 // pred_check
        %p5647 = pneg %p230
      $region54: #{_block_forward.6} parent=51 // pred_check_branch
        %5649 = sbr.rel (%p5647) target = $region56
      $region55: #{_block_forward.6} parent=51 // pred_region
        _
      $region56: #{_block_forward.6} parent=51 // pred_fallthru
        _
    $region52: #{_block_forward.6} parent=5 // pred_fallthru
      _
    %p5650 = scmp.le.s32.totalorder 2, %s14
    // Predicated region
    $region57: #{_block_forward.6} parent=5 // pred_check
      %p5651 = pneg %p5650
    $region58: #{_block_forward.6} parent=5 // pred_check_branch
      %5653 = sbr.rel (%p5651) target = $region60
    $region59: #{_block_forward.6} parent=5 // pred_region
      %s5654 = ssub.s32 %s14, 2
      // Predicated region
      $region61: #{_block_forward.6} parent=59 // pred_check
        %p5655 = pneg %p236
      $region62: #{_block_forward.6} parent=59 // pred_check_branch
        %5657 = sbr.rel (%p5655) target = $region64
      $region63: #{_block_forward.6} parent=59 // pred_region
        %p5658 = scmp.lt.s32.totalorder %s20, 7
        %s5659 = scalar_select %p5658, %s20, 7
        %s5660 = smul.addr %s5659, 2
        %s5661 = smul.addr %s5660, 4
        %s5662 = scalar_lea.vmem %s8, %s5661
      $region64: #{_block_forward.6} parent=59 // pred_fallthru
        _
    $region60: #{_block_forward.6} parent=5 // pred_fallthru
      _
  $region6: #{_block_forward.6} parent=0 // loop_footer
    %s18 = sadd.s32 1, %s14
  $region7: #{_block_forward.6} parent=0 // loop_footer_branch
    %13 = sbr.rel target = $region3
  $region8: #{_block_forward.6} parent=0 // loop_exit
    _

</llo_original>
